<compile_context>
chip_gen: v5e
topology: v5e:2x2
jax: 0.10.0
libtpu: 0.0.40
codegen_flags: <defaults>
</compile_context>

<pallas_src>
import functools

import jax
import jax.numpy as jnp
from jax.experimental import pallas as pl
from jax.experimental.pallas import tpu as pltpu


def _round_up(x, m):
    return (x + m - 1) // m * m


# ----------------------------------------------------------------------------
# Pallas kernel 1: fused conv(+pool) matmul
#   out = relu( max_g(A_g @ W) + b ) [+ shift]      (pool layers, 4 phase mats)
#   out = relu( A @ W + b ) [+ shift]               (no-pool layer)
# A/W are bf16, accumulation and epilogue are f32.
# ----------------------------------------------------------------------------
def _conv_pool_kernel(*refs, has_shift):
    if has_shift:
        a0, a1, a2, a3, w_ref, b_ref, sh_ref, o_ref = refs
    else:
        a0, a1, a2, a3, w_ref, b_ref, o_ref = refs
        sh_ref = None
    w = w_ref[...]
    m = jnp.dot(a0[...], w, preferred_element_type=jnp.float32)
    m = jnp.maximum(m, jnp.dot(a1[...], w, preferred_element_type=jnp.float32))
    m = jnp.maximum(m, jnp.dot(a2[...], w, preferred_element_type=jnp.float32))
    m = jnp.maximum(m, jnp.dot(a3[...], w, preferred_element_type=jnp.float32))
    y = jnp.maximum(m + b_ref[...], 0.0)
    if sh_ref is not None:
        y = y + sh_ref[...]
    o_ref[...] = y.astype(o_ref.dtype)


def _conv_kernel(*refs, has_shift):
    if has_shift:
        a_ref, w_ref, b_ref, sh_ref, o_ref = refs
    else:
        a_ref, w_ref, b_ref, o_ref = refs
        sh_ref = None
    y = jnp.dot(a_ref[...], w_ref[...], preferred_element_type=jnp.float32)
    y = jnp.maximum(y + b_ref[...], 0.0)
    if sh_ref is not None:
        y = y + sh_ref[...]
    o_ref[...] = y.astype(o_ref.dtype)


def _fused_conv_matmul(a_groups, w, b, shift, out_dtype, *, tm=1024):
    """a_groups: 1 (no pool) or 4 (2x2-pool phases) patch matrices of shape (R, K)."""
    R, K = a_groups[0].shape
    N = w.shape[1]
    tm = min(tm, _round_up(R, 8))
    grid = (pl.cdiv(R, tm),)

    row_spec = pl.BlockSpec((tm, K), lambda i: (i, 0))
    const2 = lambda i: (0, 0)
    in_specs = [row_spec] * len(a_groups) + [
        pl.BlockSpec((K, N), const2),   # weights (bf16), resident across steps
        pl.BlockSpec((1, N), const2),   # bias (f32)
    ]
    args = list(a_groups) + [w.astype(jnp.bfloat16),
                             b.reshape(1, N).astype(jnp.float32)]
    has_shift = shift is not None
    if has_shift:
        in_specs.append(pl.BlockSpec((1, N), const2))
        args.append(shift.reshape(1, N).astype(jnp.float32))

    kernel = functools.partial(
        _conv_pool_kernel if len(a_groups) == 4 else _conv_kernel,
        has_shift=has_shift)

    return pl.pallas_call(
        kernel,
        out_shape=jax.ShapeDtypeStruct((R, N), out_dtype),
        grid=grid,
        in_specs=in_specs,
        out_specs=pl.BlockSpec((tm, N), lambda i: (i, 0)),
        compiler_params=pltpu.CompilerParams(
            dimension_semantics=("parallel",)),
    )(*args)


# ----------------------------------------------------------------------------
# Pallas kernel 2: fused FC head  (Linear 2048->128, Linear 128->2, softmax)
# ----------------------------------------------------------------------------
def _head_kernel(x_ref, w1_ref, b1_ref, w2_ref, b2_ref, o_ref):
    h = jnp.dot(x_ref[...], w1_ref[...],
                preferred_element_type=jnp.float32) + b1_ref[...]
    logits = jnp.dot(h, w2_ref[...],
                     preferred_element_type=jnp.float32) + b2_ref[...]
    m = jnp.max(logits, axis=-1, keepdims=True)
    e = jnp.exp(logits - m)
    o_ref[...] = (e / jnp.sum(e, axis=-1, keepdims=True)).astype(o_ref.dtype)


# ----------------------------------------------------------------------------
# im2col glue (XLA slices/concat only; reshape to the matmul layout is free)
# ----------------------------------------------------------------------------
def _im2col(x, k=3):
    B, H, W, C = x.shape
    Ho, Wo = H - k + 1, W - k + 1
    taps = [x[:, di:di + Ho, dj:dj + Wo, :]
            for di in range(k) for dj in range(k)]
    a = jnp.concatenate(taps, axis=-1).reshape(B * Ho * Wo, k * k * C)
    return a, Ho, Wo


def _im2col_pooled(x, k=3):
    """Patch matrices for the four 2x2 pool phases (rows/cols dropped by the
    floor pool are never materialized)."""
    B, H, W, C = x.shape
    Ho, Wo = H - k + 1, W - k + 1
    Hp, Wp = Ho // 2, Wo // 2
    groups = []
    for hpar in range(2):
        for wpar in range(2):
            taps = [x[:, hpar + di: hpar + di + 2 * Hp - 1: 2,
                      wpar + dj: wpar + dj + 2 * Wp - 1: 2, :]
                    for di in range(k) for dj in range(k)]
            groups.append(
                jnp.concatenate(taps, axis=-1).reshape(B * Hp * Wp, k * k * C))
    return groups, Hp, Wp


def conv_relu_pool(x, w, b, shift=None, *, out_dtype=jnp.bfloat16):
    """Conv2d(k=3, valid) + ReLU [+ BN shift] + MaxPool2d(2,2), one Pallas call."""
    B = x.shape[0]
    groups, Hp, Wp = _im2col_pooled(x)
    y = _fused_conv_matmul(groups, w, b, shift, out_dtype)
    return y.reshape(B, Hp, Wp, w.shape[1])


def conv_relu(x, w, b, shift=None, *, out_dtype=jnp.float32):
    """Conv2d(k=3, valid) + ReLU [+ BN shift], one Pallas call."""
    B = x.shape[0]
    a, Ho, Wo = _im2col(x)
    y = _fused_conv_matmul([a], w, b, shift, out_dtype)
    return y.reshape(B, Ho, Wo, w.shape[1])


# ----------------------------------------------------------------------------
# Parameter init (deterministic, in-script)
# ----------------------------------------------------------------------------
def init_params(key):
    ks = jax.random.split(key, 12)

    def conv_w(k, cin, cout, ksz=3):
        fan_in = cin * ksz * ksz
        w = jax.random.normal(k, (ksz, ksz, cin, cout), jnp.float32) / jnp.sqrt(fan_in)
        return w.reshape(ksz * ksz * cin, cout)   # rows ordered (kh, kw, cin)

    def lin_w(k, fin, fout):
        return jax.random.normal(k, (fin, fout), jnp.float32) / jnp.sqrt(fin)

    def bias(k, n):
        return 0.01 * jax.random.normal(k, (n,), jnp.float32)

    eps = 1e-5

    def bn_affine(n):
        # BatchNorm eval-mode with PyTorch defaults: gamma=1, beta=0, mean=0, var=1.
        gamma, beta = jnp.ones((n,), jnp.float32), jnp.zeros((n,), jnp.float32)
        mean, var = jnp.zeros((n,), jnp.float32), jnp.ones((n,), jnp.float32)
        scale = gamma / jnp.sqrt(var + eps)     # > 0, required for the folding
        shift = beta - mean * scale
        return scale, shift

    p = {}
    p["w1"], p["b1"] = conv_w(ks[0], 3, 32), bias(ks[1], 32)
    p["w2"], p["b2"] = conv_w(ks[2], 32, 64), bias(ks[3], 64)
    p["w3"], p["b3"] = conv_w(ks[4], 64, 96), bias(ks[5], 96)
    p["s3"], p["h3"] = bn_affine(96)
    p["w4"], p["b4"] = conv_w(ks[6], 96, 128), bias(ks[7], 128)
    p["s4"], p["h4"] = bn_affine(128)
    p["wf1"], p["bf1"] = lin_w(ks[8], 128 * 4 * 4, 128), bias(ks[9], 128)
    p["wf2"], p["bf2"] = lin_w(ks[10], 128, 2), bias(ks[11], 2)
    return p


# ----------------------------------------------------------------------------
# Forward pass (inference)
# ----------------------------------------------------------------------------
@jax.jit
def kkkc_forward(x_nchw, p):
    # NCHW -> NHWC; bf16 activations (MXU-native), f32 epilogues inside kernels.
    x = jnp.transpose(x_nchw, (0, 2, 3, 1)).astype(jnp.bfloat16)

    # Fold the eval-mode BatchNorm scale into W / bias (valid since scale > 0);
    # only the shift is added in-kernel after ReLU.
    w3 = p["w3"] * p["s3"][None, :]
    b3 = p["b3"] * p["s3"]
    w4 = p["w4"] * p["s4"][None, :]
    b4 = p["b4"] * p["s4"]

    # TODO(synk): Dropout layers omitted (inference-mode identity).
    x = conv_relu_pool(x, p["w1"], p["b1"])            # (B, 31, 31,  32)
    x = conv_relu_pool(x, p["w2"], p["b2"])            # (B, 14, 14,  64)
    x = conv_relu_pool(x, w3, b3, shift=p["h3"])       # (B,  6,  6,  96)
    x = conv_relu(x, w4, b4, shift=p["h4"])            # (B,  4,  4, 128) f32

    # Flatten in (C, H, W) order to mirror torch's x.view(B, -1) on NCHW.
    B = x.shape[0]
    feat = jnp.transpose(x, (0, 3, 1, 2)).reshape(B, -1).astype(jnp.float32)

    # Fused FC head: Linear(2048->128) -> Linear(128->2) -> softmax, one kernel.
    return pl.pallas_call(
        _head_kernel,
        out_shape=jax.ShapeDtypeStruct((B, 2), jnp.float32),
    )(feat, p["wf1"], p["bf1"].reshape(1, -1), p["wf2"], p["bf2"].reshape(1, -1))


if __name__ == "__main__":
    key = jax.random.PRNGKey(0)
    k_x, k_p = jax.random.split(key)

    # 64x64 input is the canonical spatial size implied by the 128*4*4 flatten.
    x = jax.random.normal(k_x, (2, 3, 64, 64), jnp.float32)
    params = init_params(k_p)

    y = kkkc_forward(x, params)
    y = jax.block_until_ready(y)

    assert y.shape == (2, 2), y.shape
    assert bool(jnp.all(jnp.isfinite(y)))
    row_sums = jnp.sum(y, axis=-1)
    assert bool(jnp.all(jnp.abs(row_sums - 1.0) < 1e-4)), row_sums
    print("KERNEL_OK")
</pallas_src>

<mosaic_0001>
module attributes {stable_mosaic.version = 11 : i64} {
  func.func @_conv_pool_kernel(%arg0: i32, %arg1: memref<1024x27xbf16, #tpu.memory_space<vmem>>, %arg2: memref<1024x27xbf16, #tpu.memory_space<vmem>>, %arg3: memref<1024x27xbf16, #tpu.memory_space<vmem>>, %arg4: memref<1024x27xbf16, #tpu.memory_space<vmem>>, %arg5: memref<27x32xbf16, #tpu.memory_space<vmem>>, %arg6: memref<1x32xf32, #tpu.memory_space<vmem>>, %arg7: memref<1024x32xbf16, #tpu.memory_space<vmem>>) attributes {dimension_semantics = [#tpu.dimension_semantics<parallel>], iteration_bounds = array<i64: 2>, scalar_prefetch = 0 : i64, scratch_operands = 0 : i64, tpu.core_type = #tpu.core_type<tc>, window_params = [{transform_indices = @transform_0, window_bounds = array<i64: 1024, 27>}, {transform_indices = @transform_1, window_bounds = array<i64: 1024, 27>}, {transform_indices = @transform_2, window_bounds = array<i64: 1024, 27>}, {transform_indices = @transform_3, window_bounds = array<i64: 1024, 27>}, {pipeline_mode = #tpu.pipeline_mode<synchronous>, transform_indices = @transform_4, window_bounds = array<i64: 27, 32>}, {pipeline_mode = #tpu.pipeline_mode<synchronous>, transform_indices = @transform_5, window_bounds = array<i64: 1, 32>}, {transform_indices = @transform_6, window_bounds = array<i64: 1024, 32>}]} {
    %c0 = arith.constant 0 : index
    %c0_0 = arith.constant 0 : index
    %0 = vector.load %arg5[%c0, %c0_0] : memref<27x32xbf16, #tpu.memory_space<vmem>>, vector<27x32xbf16>
    %c0_1 = arith.constant 0 : index
    %c0_2 = arith.constant 0 : index
    %1 = vector.load %arg1[%c0_1, %c0_2] : memref<1024x27xbf16, #tpu.memory_space<vmem>>, vector<1024x27xbf16>
    %cst = arith.constant dense<0.000000e+00> : vector<1024x32xf32>
    %2 = tpu.matmul %1, %0, %cst {dimension_numbers = #tpu.dot_dimension_numbers<[1], [0], [0], [1], [0, 0, 1, 1], [], []>} : vector<1024x27xbf16>, vector<27x32xbf16>, vector<1024x32xf32> -> vector<1024x32xf32>
    %c0_3 = arith.constant 0 : index
    %c0_4 = arith.constant 0 : index
    %3 = vector.load %arg2[%c0_3, %c0_4] : memref<1024x27xbf16, #tpu.memory_space<vmem>>, vector<1024x27xbf16>
    %cst_5 = arith.constant dense<0.000000e+00> : vector<1024x32xf32>
    %4 = tpu.matmul %3, %0, %cst_5 {dimension_numbers = #tpu.dot_dimension_numbers<[1], [0], [0], [1], [0, 0, 1, 1], [], []>} : vector<1024x27xbf16>, vector<27x32xbf16>, vector<1024x32xf32> -> vector<1024x32xf32>
    %5 = arith.maximumf %2, %4 : vector<1024x32xf32>
    %c0_6 = arith.constant 0 : index
    %c0_7 = arith.constant 0 : index
    %6 = vector.load %arg3[%c0_6, %c0_7] : memref<1024x27xbf16, #tpu.memory_space<vmem>>, vector<1024x27xbf16>
    %cst_8 = arith.constant dense<0.000000e+00> : vector<1024x32xf32>
    %7 = tpu.matmul %6, %0, %cst_8 {dimension_numbers = #tpu.dot_dimension_numbers<[1], [0], [0], [1], [0, 0, 1, 1], [], []>} : vector<1024x27xbf16>, vector<27x32xbf16>, vector<1024x32xf32> -> vector<1024x32xf32>
    %8 = arith.maximumf %5, %7 : vector<1024x32xf32>
    %c0_9 = arith.constant 0 : index
    %c0_10 = arith.constant 0 : index
    %9 = vector.load %arg4[%c0_9, %c0_10] : memref<1024x27xbf16, #tpu.memory_space<vmem>>, vector<1024x27xbf16>
    %cst_11 = arith.constant dense<0.000000e+00> : vector<1024x32xf32>
    %10 = tpu.matmul %9, %0, %cst_11 {dimension_numbers = #tpu.dot_dimension_numbers<[1], [0], [0], [1], [0, 0, 1, 1], [], []>} : vector<1024x27xbf16>, vector<27x32xbf16>, vector<1024x32xf32> -> vector<1024x32xf32>
    %11 = arith.maximumf %8, %10 : vector<1024x32xf32>
    %c0_12 = arith.constant 0 : index
    %c0_13 = arith.constant 0 : index
    %12 = vector.load %arg6[%c0_12, %c0_13] : memref<1x32xf32, #tpu.memory_space<vmem>>, vector<1x32xf32>
    %13 = vector.broadcast %12 : vector<1x32xf32> to vector<1024x32xf32>
    %14 = arith.addf %11, %13 : vector<1024x32xf32>
    %cst_14 = arith.constant 0.000000e+00 : f32
    %15 = vector.broadcast %cst_14 : f32 to vector<1024x32xf32>
    %16 = arith.maximumf %14, %15 : vector<1024x32xf32>
    %17 = arith.truncf %16 : vector<1024x32xf32> to vector<1024x32xbf16>
    %c0_15 = arith.constant 0 : index
    %c0_16 = arith.constant 0 : index
    %18 = vector.load %arg7[%c0_15, %c0_16] : memref<1024x32xbf16, #tpu.memory_space<vmem>>, vector<1024x32xbf16>
    tpu.vector_store %arg7[%c0_15, %c0_16], %17 {strides = array<i32>} : memref<1024x32xbf16, #tpu.memory_space<vmem>>, vector<1024x32xbf16>,
    return
  }
  func.func @transform_0(%arg0: i32) -> (i32, i32) {
    %c0_i32 = arith.constant 0 : i32
    %c0_i32_0 = arith.constant 0 : i32
    return %arg0, %c0_i32 : i32, i32
  }
  func.func @transform_1(%arg0: i32) -> (i32, i32) {
    %c0_i32 = arith.constant 0 : i32
    %c0_i32_0 = arith.constant 0 : i32
    return %arg0, %c0_i32 : i32, i32
  }
  func.func @transform_2(%arg0: i32) -> (i32, i32) {
    %c0_i32 = arith.constant 0 : i32
    %c0_i32_0 = arith.constant 0 : i32
    return %arg0, %c0_i32 : i32, i32
  }
  func.func @transform_3(%arg0: i32) -> (i32, i32) {
    %c0_i32 = arith.constant 0 : i32
    %c0_i32_0 = arith.constant 0 : i32
    return %arg0, %c0_i32 : i32, i32
  }
  func.func @transform_4(%arg0: i32) -> (i32, i32) {
    %c0_i32 = arith.constant 0 : i32
    %c0_i32_0 = arith.constant 0 : i32
    %c0_i32_1 = arith.constant 0 : i32
    return %c0_i32, %c0_i32_0 : i32, i32
  }
  func.func @transform_5(%arg0: i32) -> (i32, i32) {
    %c0_i32 = arith.constant 0 : i32
    %c0_i32_0 = arith.constant 0 : i32
    %c0_i32_1 = arith.constant 0 : i32
    return %c0_i32, %c0_i32_0 : i32, i32
  }
  func.func @transform_6(%arg0: i32) -> (i32, i32) {
    %c0_i32 = arith.constant 0 : i32
    %c0_i32_0 = arith.constant 0 : i32
    return %arg0, %c0_i32 : i32, i32
  }
}

module attributes {stable_mosaic.version = 11 : i64} {
  func.func @_conv_pool_kernel(%arg0: i32, %arg1: memref<392x288xbf16, #tpu.memory_space<vmem>>, %arg2: memref<392x288xbf16, #tpu.memory_space<vmem>>, %arg3: memref<392x288xbf16, #tpu.memory_space<vmem>>, %arg4: memref<392x288xbf16, #tpu.memory_space<vmem>>, %arg5: memref<288x64xbf16, #tpu.memory_space<vmem>>, %arg6: memref<1x64xf32, #tpu.memory_space<vmem>>, %arg7: memref<392x64xbf16, #tpu.memory_space<vmem>>) attributes {dimension_semantics = [#tpu.dimension_semantics<parallel>], iteration_bounds = array<i64: 1>, scalar_prefetch = 0 : i64, scratch_operands = 0 : i64, tpu.core_type = #tpu.core_type<tc>, window_params = [{transform_indices = @transform_0, window_bounds = array<i64: 392, 288>}, {transform_indices = @transform_1, window_bounds = array<i64: 392, 288>}, {transform_indices = @transform_2, window_bounds = array<i64: 392, 288>}, {transform_indices = @transform_3, window_bounds = array<i64: 392, 288>}, {pipeline_mode = #tpu.pipeline_mode<synchronous>, transform_indices = @transform_4, window_bounds = array<i64: 288, 64>}, {pipeline_mode = #tpu.pipeline_mode<synchronous>, transform_indices = @transform_5, window_bounds = array<i64: 1, 64>}, {transform_indices = @transform_6, window_bounds = array<i64: 392, 64>}]} {
    %c0 = arith.constant 0 : index
    %c0_0 = arith.constant 0 : index
    %0 = vector.load %arg5[%c0, %c0_0] : memref<288x64xbf16, #tpu.memory_space<vmem>>, vector<288x64xbf16>
    %c0_1 = arith.constant 0 : index
    %c0_2 = arith.constant 0 : index
    %1 = vector.load %arg1[%c0_1, %c0_2] : memref<392x288xbf16, #tpu.memory_space<vmem>>, vector<392x288xbf16>
    %cst = arith.constant dense<0.000000e+00> : vector<392x64xf32>
    %2 = tpu.matmul %1, %0, %cst {dimension_numbers = #tpu.dot_dimension_numbers<[1], [0], [0], [1], [0, 0, 1, 1], [], []>} : vector<392x288xbf16>, vector<288x64xbf16>, vector<392x64xf32> -> vector<392x64xf32>
    %c0_3 = arith.constant 0 : index
    %c0_4 = arith.constant 0 : index
    %3 = vector.load %arg2[%c0_3, %c0_4] : memref<392x288xbf16, #tpu.memory_space<vmem>>, vector<392x288xbf16>
    %cst_5 = arith.constant dense<0.000000e+00> : vector<392x64xf32>
    %4 = tpu.matmul %3, %0, %cst_5 {dimension_numbers = #tpu.dot_dimension_numbers<[1], [0], [0], [1], [0, 0, 1, 1], [], []>} : vector<392x288xbf16>, vector<288x64xbf16>, vector<392x64xf32> -> vector<392x64xf32>
    %5 = arith.maximumf %2, %4 : vector<392x64xf32>
    %c0_6 = arith.constant 0 : index
    %c0_7 = arith.constant 0 : index
    %6 = vector.load %arg3[%c0_6, %c0_7] : memref<392x288xbf16, #tpu.memory_space<vmem>>, vector<392x288xbf16>
    %cst_8 = arith.constant dense<0.000000e+00> : vector<392x64xf32>
    %7 = tpu.matmul %6, %0, %cst_8 {dimension_numbers = #tpu.dot_dimension_numbers<[1], [0], [0], [1], [0, 0, 1, 1], [], []>} : vector<392x288xbf16>, vector<288x64xbf16>, vector<392x64xf32> -> vector<392x64xf32>
    %8 = arith.maximumf %5, %7 : vector<392x64xf32>
    %c0_9 = arith.constant 0 : index
    %c0_10 = arith.constant 0 : index
    %9 = vector.load %arg4[%c0_9, %c0_10] : memref<392x288xbf16, #tpu.memory_space<vmem>>, vector<392x288xbf16>
    %cst_11 = arith.constant dense<0.000000e+00> : vector<392x64xf32>
    %10 = tpu.matmul %9, %0, %cst_11 {dimension_numbers = #tpu.dot_dimension_numbers<[1], [0], [0], [1], [0, 0, 1, 1], [], []>} : vector<392x288xbf16>, vector<288x64xbf16>, vector<392x64xf32> -> vector<392x64xf32>
    %11 = arith.maximumf %8, %10 : vector<392x64xf32>
    %c0_12 = arith.constant 0 : index
    %c0_13 = arith.constant 0 : index
    %12 = vector.load %arg6[%c0_12, %c0_13] : memref<1x64xf32, #tpu.memory_space<vmem>>, vector<1x64xf32>
    %13 = vector.broadcast %12 : vector<1x64xf32> to vector<392x64xf32>
    %14 = arith.addf %11, %13 : vector<392x64xf32>
    %cst_14 = arith.constant 0.000000e+00 : f32
    %15 = vector.broadcast %cst_14 : f32 to vector<392x64xf32>
    %16 = arith.maximumf %14, %15 : vector<392x64xf32>
    %17 = arith.truncf %16 : vector<392x64xf32> to vector<392x64xbf16>
    %c0_15 = arith.constant 0 : index
    %c0_16 = arith.constant 0 : index
    %18 = vector.load %arg7[%c0_15, %c0_16] : memref<392x64xbf16, #tpu.memory_space<vmem>>, vector<392x64xbf16>
    tpu.vector_store %arg7[%c0_15, %c0_16], %17 {strides = array<i32>} : memref<392x64xbf16, #tpu.memory_space<vmem>>, vector<392x64xbf16>,
    return
  }
  func.func @transform_0(%arg0: i32) -> (i32, i32) {
    %c0_i32 = arith.constant 0 : i32
    %c0_i32_0 = arith.constant 0 : i32
    return %arg0, %c0_i32 : i32, i32
  }
  func.func @transform_1(%arg0: i32) -> (i32, i32) {
    %c0_i32 = arith.constant 0 : i32
    %c0_i32_0 = arith.constant 0 : i32
    return %arg0, %c0_i32 : i32, i32
  }
  func.func @transform_2(%arg0: i32) -> (i32, i32) {
    %c0_i32 = arith.constant 0 : i32
    %c0_i32_0 = arith.constant 0 : i32
    return %arg0, %c0_i32 : i32, i32
  }
  func.func @transform_3(%arg0: i32) -> (i32, i32) {
    %c0_i32 = arith.constant 0 : i32
    %c0_i32_0 = arith.constant 0 : i32
    return %arg0, %c0_i32 : i32, i32
  }
  func.func @transform_4(%arg0: i32) -> (i32, i32) {
    %c0_i32 = arith.constant 0 : i32
    %c0_i32_0 = arith.constant 0 : i32
    %c0_i32_1 = arith.constant 0 : i32
    return %c0_i32, %c0_i32_0 : i32, i32
  }
  func.func @transform_5(%arg0: i32) -> (i32, i32) {
    %c0_i32 = arith.constant 0 : i32
    %c0_i32_0 = arith.constant 0 : i32
    %c0_i32_1 = arith.constant 0 : i32
    return %c0_i32, %c0_i32_0 : i32, i32
  }
  func.func @transform_6(%arg0: i32) -> (i32, i32) {
    %c0_i32 = arith.constant 0 : i32
    %c0_i32_0 = arith.constant 0 : i32
    return %arg0, %c0_i32 : i32, i32
  }
}

module attributes {stable_mosaic.version = 11 : i64} {
  func.func @_conv_pool_kernel(%arg0: i32, %arg1: memref<72x576xbf16, #tpu.memory_space<vmem>>, %arg2: memref<72x576xbf16, #tpu.memory_space<vmem>>, %arg3: memref<72x576xbf16, #tpu.memory_space<vmem>>, %arg4: memref<72x576xbf16, #tpu.memory_space<vmem>>, %arg5: memref<576x96xbf16, #tpu.memory_space<vmem>>, %arg6: memref<1x96xf32, #tpu.memory_space<vmem>>, %arg7: memref<1x96xf32, #tpu.memory_space<vmem>>, %arg8: memref<72x96xbf16, #tpu.memory_space<vmem>>) attributes {dimension_semantics = [#tpu.dimension_semantics<parallel>], iteration_bounds = array<i64: 1>, scalar_prefetch = 0 : i64, scratch_operands = 0 : i64, tpu.core_type = #tpu.core_type<tc>, window_params = [{transform_indices = @transform_0, window_bounds = array<i64: 72, 576>}, {transform_indices = @transform_1, window_bounds = array<i64: 72, 576>}, {transform_indices = @transform_2, window_bounds = array<i64: 72, 576>}, {transform_indices = @transform_3, window_bounds = array<i64: 72, 576>}, {pipeline_mode = #tpu.pipeline_mode<synchronous>, transform_indices = @transform_4, window_bounds = array<i64: 576, 96>}, {pipeline_mode = #tpu.pipeline_mode<synchronous>, transform_indices = @transform_5, window_bounds = array<i64: 1, 96>}, {pipeline_mode = #tpu.pipeline_mode<synchronous>, transform_indices = @transform_6, window_bounds = array<i64: 1, 96>}, {transform_indices = @transform_7, window_bounds = array<i64: 72, 96>}]} {
    %c0 = arith.constant 0 : index
    %c0_0 = arith.constant 0 : index
    %0 = vector.load %arg5[%c0, %c0_0] : memref<576x96xbf16, #tpu.memory_space<vmem>>, vector<576x96xbf16>
    %c0_1 = arith.constant 0 : index
    %c0_2 = arith.constant 0 : index
    %1 = vector.load %arg1[%c0_1, %c0_2] : memref<72x576xbf16, #tpu.memory_space<vmem>>, vector<72x576xbf16>
    %cst = arith.constant dense<0.000000e+00> : vector<72x96xf32>
    %2 = tpu.matmul %1, %0, %cst {dimension_numbers = #tpu.dot_dimension_numbers<[1], [0], [0], [1], [0, 0, 1, 1], [], []>} : vector<72x576xbf16>, vector<576x96xbf16>, vector<72x96xf32> -> vector<72x96xf32>
    %c0_3 = arith.constant 0 : index
    %c0_4 = arith.constant 0 : index
    %3 = vector.load %arg2[%c0_3, %c0_4] : memref<72x576xbf16, #tpu.memory_space<vmem>>, vector<72x576xbf16>
    %cst_5 = arith.constant dense<0.000000e+00> : vector<72x96xf32>
    %4 = tpu.matmul %3, %0, %cst_5 {dimension_numbers = #tpu.dot_dimension_numbers<[1], [0], [0], [1], [0, 0, 1, 1], [], []>} : vector<72x576xbf16>, vector<576x96xbf16>, vector<72x96xf32> -> vector<72x96xf32>
    %5 = arith.maximumf %2, %4 : vector<72x96xf32>
    %c0_6 = arith.constant 0 : index
    %c0_7 = arith.constant 0 : index
    %6 = vector.load %arg3[%c0_6, %c0_7] : memref<72x576xbf16, #tpu.memory_space<vmem>>, vector<72x576xbf16>
    %cst_8 = arith.constant dense<0.000000e+00> : vector<72x96xf32>
    %7 = tpu.matmul %6, %0, %cst_8 {dimension_numbers = #tpu.dot_dimension_numbers<[1], [0], [0], [1], [0, 0, 1, 1], [], []>} : vector<72x576xbf16>, vector<576x96xbf16>, vector<72x96xf32> -> vector<72x96xf32>
    %8 = arith.maximumf %5, %7 : vector<72x96xf32>
    %c0_9 = arith.constant 0 : index
    %c0_10 = arith.constant 0 : index
    %9 = vector.load %arg4[%c0_9, %c0_10] : memref<72x576xbf16, #tpu.memory_space<vmem>>, vector<72x576xbf16>
    %cst_11 = arith.constant dense<0.000000e+00> : vector<72x96xf32>
    %10 = tpu.matmul %9, %0, %cst_11 {dimension_numbers = #tpu.dot_dimension_numbers<[1], [0], [0], [1], [0, 0, 1, 1], [], []>} : vector<72x576xbf16>, vector<576x96xbf16>, vector<72x96xf32> -> vector<72x96xf32>
    %11 = arith.maximumf %8, %10 : vector<72x96xf32>
    %c0_12 = arith.constant 0 : index
    %c0_13 = arith.constant 0 : index
    %12 = vector.load %arg6[%c0_12, %c0_13] : memref<1x96xf32, #tpu.memory_space<vmem>>, vector<1x96xf32>
    %13 = vector.broadcast %12 : vector<1x96xf32> to vector<72x96xf32>
    %14 = arith.addf %11, %13 : vector<72x96xf32>
    %cst_14 = arith.constant 0.000000e+00 : f32
    %15 = vector.broadcast %cst_14 : f32 to vector<72x96xf32>
    %16 = arith.maximumf %14, %15 : vector<72x96xf32>
    %c0_15 = arith.constant 0 : index
    %c0_16 = arith.constant 0 : index
    %17 = vector.load %arg7[%c0_15, %c0_16] : memref<1x96xf32, #tpu.memory_space<vmem>>, vector<1x96xf32>
    %18 = vector.broadcast %17 : vector<1x96xf32> to vector<72x96xf32>
    %19 = arith.addf %16, %18 : vector<72x96xf32>
    %20 = arith.truncf %19 : vector<72x96xf32> to vector<72x96xbf16>
    %c0_17 = arith.constant 0 : index
    %c0_18 = arith.constant 0 : index
    %21 = vector.load %arg8[%c0_17, %c0_18] : memref<72x96xbf16, #tpu.memory_space<vmem>>, vector<72x96xbf16>
    tpu.vector_store %arg8[%c0_17, %c0_18], %20 {strides = array<i32>} : memref<72x96xbf16, #tpu.memory_space<vmem>>, vector<72x96xbf16>,
    return
  }
  func.func @transform_0(%arg0: i32) -> (i32, i32) {
    %c0_i32 = arith.constant 0 : i32
    %c0_i32_0 = arith.constant 0 : i32
    return %arg0, %c0_i32 : i32, i32
  }
  func.func @transform_1(%arg0: i32) -> (i32, i32) {
    %c0_i32 = arith.constant 0 : i32
    %c0_i32_0 = arith.constant 0 : i32
    return %arg0, %c0_i32 : i32, i32
  }
  func.func @transform_2(%arg0: i32) -> (i32, i32) {
    %c0_i32 = arith.constant 0 : i32
    %c0_i32_0 = arith.constant 0 : i32
    return %arg0, %c0_i32 : i32, i32
  }
  func.func @transform_3(%arg0: i32) -> (i32, i32) {
    %c0_i32 = arith.constant 0 : i32
    %c0_i32_0 = arith.constant 0 : i32
    return %arg0, %c0_i32 : i32, i32
  }
  func.func @transform_4(%arg0: i32) -> (i32, i32) {
    %c0_i32 = arith.constant 0 : i32
    %c0_i32_0 = arith.constant 0 : i32
    %c0_i32_1 = arith.constant 0 : i32
    return %c0_i32, %c0_i32_0 : i32, i32
  }
  func.func @transform_5(%arg0: i32) -> (i32, i32) {
    %c0_i32 = arith.constant 0 : i32
    %c0_i32_0 = arith.constant 0 : i32
    %c0_i32_1 = arith.constant 0 : i32
    return %c0_i32, %c0_i32_0 : i32, i32
  }
  func.func @transform_6(%arg0: i32) -> (i32, i32) {
    %c0_i32 = arith.constant 0 : i32
    %c0_i32_0 = arith.constant 0 : i32
    %c0_i32_1 = arith.constant 0 : i32
    return %c0_i32, %c0_i32_0 : i32, i32
  }
  func.func @transform_7(%arg0: i32) -> (i32, i32) {
    %c0_i32 = arith.constant 0 : i32
    %c0_i32_0 = arith.constant 0 : i32
    return %arg0, %c0_i32 : i32, i32
  }
}

module attributes {stable_mosaic.version = 11 : i64} {
  func.func @_conv_kernel(%arg0: i32, %arg1: memref<32x864xbf16, #tpu.memory_space<vmem>>, %arg2: memref<864x128xbf16, #tpu.memory_space<vmem>>, %arg3: memref<1x128xf32, #tpu.memory_space<vmem>>, %arg4: memref<1x128xf32, #tpu.memory_space<vmem>>, %arg5: memref<32x128xf32, #tpu.memory_space<vmem>>) attributes {dimension_semantics = [#tpu.dimension_semantics<parallel>], iteration_bounds = array<i64: 1>, scalar_prefetch = 0 : i64, scratch_operands = 0 : i64, tpu.core_type = #tpu.core_type<tc>, window_params = [{transform_indices = @transform_0, window_bounds = array<i64: 32, 864>}, {pipeline_mode = #tpu.pipeline_mode<synchronous>, transform_indices = @transform_1, window_bounds = array<i64: 864, 128>}, {pipeline_mode = #tpu.pipeline_mode<synchronous>, transform_indices = @transform_2, window_bounds = array<i64: 1, 128>}, {pipeline_mode = #tpu.pipeline_mode<synchronous>, transform_indices = @transform_3, window_bounds = array<i64: 1, 128>}, {transform_indices = @transform_4, window_bounds = array<i64: 32, 128>}]} {
    %c0 = arith.constant 0 : index
    %c0_0 = arith.constant 0 : index
    %0 = vector.load %arg1[%c0, %c0_0] : memref<32x864xbf16, #tpu.memory_space<vmem>>, vector<32x864xbf16>
    %c0_1 = arith.constant 0 : index
    %c0_2 = arith.constant 0 : index
    %1 = vector.load %arg2[%c0_1, %c0_2] : memref<864x128xbf16, #tpu.memory_space<vmem>>, vector<864x128xbf16>
    %cst = arith.constant dense<0.000000e+00> : vector<32x128xf32>
    %2 = tpu.matmul %0, %1, %cst {dimension_numbers = #tpu.dot_dimension_numbers<[1], [0], [0], [1], [0, 0, 1, 1], [], []>} : vector<32x864xbf16>, vector<864x128xbf16>, vector<32x128xf32> -> vector<32x128xf32>
    %c0_3 = arith.constant 0 : index
    %c0_4 = arith.constant 0 : index
    %3 = vector.load %arg3[%c0_3, %c0_4] : memref<1x128xf32, #tpu.memory_space<vmem>>, vector<1x128xf32>
    %4 = vector.broadcast %3 : vector<1x128xf32> to vector<32x128xf32>
    %5 = arith.addf %2, %4 : vector<32x128xf32>
    %cst_5 = arith.constant 0.000000e+00 : f32
    %6 = vector.broadcast %cst_5 : f32 to vector<32x128xf32>
    %7 = arith.maximumf %5, %6 : vector<32x128xf32>
    %c0_6 = arith.constant 0 : index
    %c0_7 = arith.constant 0 : index
    %8 = vector.load %arg4[%c0_6, %c0_7] : memref<1x128xf32, #tpu.memory_space<vmem>>, vector<1x128xf32>
    %9 = vector.broadcast %8 : vector<1x128xf32> to vector<32x128xf32>
    %10 = arith.addf %7, %9 : vector<32x128xf32>
    %c0_8 = arith.constant 0 : index
    %c0_9 = arith.constant 0 : index
    %11 = vector.load %arg5[%c0_8, %c0_9] : memref<32x128xf32, #tpu.memory_space<vmem>>, vector<32x128xf32>
    tpu.vector_store %arg5[%c0_8, %c0_9], %10 {strides = array<i32>} : memref<32x128xf32, #tpu.memory_space<vmem>>, vector<32x128xf32>,
    return
  }
  func.func @transform_0(%arg0: i32) -> (i32, i32) {
    %c0_i32 = arith.constant 0 : i32
    %c0_i32_0 = arith.constant 0 : i32
    return %arg0, %c0_i32 : i32, i32
  }
  func.func @transform_1(%arg0: i32) -> (i32, i32) {
    %c0_i32 = arith.constant 0 : i32
    %c0_i32_0 = arith.constant 0 : i32
    %c0_i32_1 = arith.constant 0 : i32
    return %c0_i32, %c0_i32_0 : i32, i32
  }
  func.func @transform_2(%arg0: i32) -> (i32, i32) {
    %c0_i32 = arith.constant 0 : i32
    %c0_i32_0 = arith.constant 0 : i32
    %c0_i32_1 = arith.constant 0 : i32
    return %c0_i32, %c0_i32_0 : i32, i32
  }
  func.func @transform_3(%arg0: i32) -> (i32, i32) {
    %c0_i32 = arith.constant 0 : i32
    %c0_i32_0 = arith.constant 0 : i32
    %c0_i32_1 = arith.constant 0 : i32
    return %c0_i32, %c0_i32_0 : i32, i32
  }
  func.func @transform_4(%arg0: i32) -> (i32, i32) {
    %c0_i32 = arith.constant 0 : i32
    %c0_i32_0 = arith.constant 0 : i32
    return %arg0, %c0_i32 : i32, i32
  }
}

module attributes {stable_mosaic.version = 11 : i64} {
  func.func @_head_kernel(%arg0: memref<2x2048xf32, #tpu.memory_space<vmem>>, %arg1: memref<2048x128xf32, #tpu.memory_space<vmem>>, %arg2: memref<1x128xf32, #tpu.memory_space<vmem>>, %arg3: memref<128x2xf32, #tpu.memory_space<vmem>>, %arg4: memref<1x2xf32, #tpu.memory_space<vmem>>, %arg5: memref<2x2xf32, #tpu.memory_space<vmem>>) attributes {dimension_semantics = [], scalar_prefetch = 0 : i64, scratch_operands = 0 : i64, tpu.core_type = #tpu.core_type<tc>} {
    %c0 = arith.constant 0 : index
    %c0_0 = arith.constant 0 : index
    %0 = vector.load %arg0[%c0, %c0_0] : memref<2x2048xf32, #tpu.memory_space<vmem>>, vector<2x2048xf32>
    %c0_1 = arith.constant 0 : index
    %c0_2 = arith.constant 0 : index
    %1 = vector.load %arg1[%c0_1, %c0_2] : memref<2048x128xf32, #tpu.memory_space<vmem>>, vector<2048x128xf32>
    %cst = arith.constant dense<0.000000e+00> : vector<2x128xf32>
    %2 = tpu.matmul %0, %1, %cst {dimension_numbers = #tpu.dot_dimension_numbers<[1], [0], [0], [1], [0, 0, 1, 1], [], []>} : vector<2x2048xf32>, vector<2048x128xf32>, vector<2x128xf32> -> vector<2x128xf32>
    %c0_3 = arith.constant 0 : index
    %c0_4 = arith.constant 0 : index
    %3 = vector.load %arg2[%c0_3, %c0_4] : memref<1x128xf32, #tpu.memory_space<vmem>>, vector<1x128xf32>
    %4 = vector.broadcast %3 : vector<1x128xf32> to vector<2x128xf32>
    %5 = arith.addf %2, %4 : vector<2x128xf32>
    %c0_5 = arith.constant 0 : index
    %c0_6 = arith.constant 0 : index
    %6 = vector.load %arg3[%c0_5, %c0_6] : memref<128x2xf32, #tpu.memory_space<vmem>>, vector<128x2xf32>
    %cst_7 = arith.constant dense<0.000000e+00> : vector<2x2xf32>
    %7 = tpu.matmul %5, %6, %cst_7 {dimension_numbers = #tpu.dot_dimension_numbers<[1], [0], [0], [1], [0, 0, 1, 1], [], []>} : vector<2x128xf32>, vector<128x2xf32>, vector<2x2xf32> -> vector<2x2xf32>
    %c0_8 = arith.constant 0 : index
    %c0_9 = arith.constant 0 : index
    %8 = vector.load %arg4[%c0_8, %c0_9] : memref<1x2xf32, #tpu.memory_space<vmem>>, vector<1x2xf32>
    %9 = vector.broadcast %8 : vector<1x2xf32> to vector<2x2xf32>
    %10 = arith.addf %7, %9 : vector<2x2xf32>
    %cst_10 = arith.constant dense<0xFF800000> : vector<2xf32>
    %11 = vector.multi_reduction <maximumf>, %10, %cst_10 [1] : vector<2x2xf32> to vector<2xf32>
    %12 = vector.shape_cast %11 : vector<2xf32> to vector<2x1xf32>
    %13 = vector.broadcast %12 : vector<2x1xf32> to vector<2x2xf32>
    %14 = arith.subf %10, %13 : vector<2x2xf32>
    %15 = math.exp %14 : vector<2x2xf32>
    %cst_11 = arith.constant dense<0.000000e+00> : vector<2xf32>
    %16 = vector.multi_reduction <add>, %15, %cst_11 [1] : vector<2x2xf32> to vector<2xf32>
    %17 = vector.shape_cast %16 : vector<2xf32> to vector<2x1xf32>
    %18 = vector.broadcast %17 : vector<2x1xf32> to vector<2x2xf32>
    %19 = arith.divf %15, %18 : vector<2x2xf32>
    %c0_12 = arith.constant 0 : index
    %c0_13 = arith.constant 0 : index
    %20 = vector.load %arg5[%c0_12, %c0_13] : memref<2x2xf32, #tpu.memory_space<vmem>>, vector<2x2xf32>
    tpu.vector_store %arg5[%c0_12, %c0_13], %19 {strides = array<i32>} : memref<2x2xf32, #tpu.memory_space<vmem>>, vector<2x2xf32>,
    return
  }
}

</mosaic_0001>

<llo_original>
// kernel: kkkc_forward.5
$region0: #{kkkc_forward.5}
  #allocation0 [shape = 'u32[]', space=smem, size = 0x4, offset = 0x4, fixed_abs, tag = 'smem constant byte address 0x4 - core index']
  #allocation1 [shape = 'u32[72,128]{1,0:T(1,128)}', space=vmem, size = 0x9000, scoped, tag = 'internal scratch']
  %s0 = inlined_call_operand.vmem [shape: bf16[1922,27], index: 0, kind: input, shape index: {}]
  %s1 = inlined_call_operand.vmem [shape: bf16[1922,27], index: 1, kind: input, shape index: {}]
  %s2 = inlined_call_operand.vmem [shape: bf16[1922,27], index: 2, kind: input, shape index: {}]
  %s3 = inlined_call_operand.vmem [shape: bf16[1922,27], index: 3, kind: input, shape index: {}]
  %s4 = inlined_call_operand.vmem [shape: bf16[27,32], index: 4, kind: input, shape index: {}]
  %s5 = inlined_call_operand.vmem [shape: f32[1,32], index: 5, kind: input, shape index: {}]
  %s6 = inlined_call_operand.vmem [shape: bf16[1922,32], index: 6, kind: output, shape index: {}]
  %s7 = sld [smem:[#allocation0]]
  $region101: #{kkkc_forward.5} parent=0
    _
  %s9 = ssub.s32 1, %s7
  %s10 = scalar_select 0, %s9, %s7
  $region1: #{kkkc_forward.5} parent=0
    #allocation2 [shape = 'u8[524288]{0}', space=vmem, size = 0x80000, scoped, tag = 'output window, operand 0']
    loop: start=0, step=1, limit=4
    $region2: #{kkkc_forward.5} parent=1 // loop_pre_header
      _
    $region3: #{kkkc_forward.5} parent=1 // loop_header
      %s12 = sphi 0, %s16
      %p13 = scmp.ge.s32.totalorder %s12, 4
      %s22 = sphi 0, %s24
      %s25 = sphi 0, %s22
      %s26 = sphi 0, %s25
      %s42 = sphi 0, %s26
      %s48 = sphi 0, %s50
      %s51 = sphi 0, %s48
      %s52 = sphi 0, %s51
      %s68 = sphi 0, %s52
      %s74 = sphi 0, %s76
      %s77 = sphi 0, %s74
      %s78 = sphi 0, %s77
      %s94 = sphi 0, %s78
      %s100 = sphi 0, %s102
      %s103 = sphi 0, %s100
      %s104 = sphi 0, %s103
      %s120 = sphi 0, %s104
      %s124 = sphi 0, %s124
      %s126 = sphi 0, %s124
      %s127 = sphi 0, %s126
      %s141 = sphi 0, %s127
      %s145 = sphi 0, %s145
      %s147 = sphi 0, %s145
      %s148 = sphi 0, %s147
      %s162 = sphi 0, %s148
      %s168 = sphi 0, %s170
      %s171 = sphi 0, %s168
      %s172 = sphi 0, %s171
      %s188 = sphi 0, %s172
    $region4: #{kkkc_forward.5} parent=1 // loop_header_branch
      %15 = sbr.rel (%p13) target = $region8
    $region5: #{kkkc_forward.5} parent=1 // loop_body
      %s17 = ssub.s32 %s12, 1
      %s18 = ssub.s32 %s12, 2
      %s19 = sadd.s32 %s12, 1
      %s20 = ssub.s32 %s12, %s19
      %p21 = scmp.eq.s32.totalorder %s20, 0
      %s23 = sadd.s32 %s22, 1
      %s24 = scalar_select %p21, %s22, %s23
      %p27 = pneg %p21
      %p28 = scmp.eq.s32.totalorder %s12, 1
      %p29 = por %p27, %p28
      %p30 = scmp.ne.s32.totalorder %s22, %s25
      %p31 = scmp.eq.s32.totalorder %s12, 0
      %p32 = por %p30, %p31
      %p33 = scmp.ne.s32.totalorder %s22, %s25
      %p34 = scmp.eq.s32.totalorder %s17, 1
      %p35 = por %p33, %p34
      %p36 = scmp.ne.s32.totalorder %s25, %s26
      %p37 = scmp.eq.s32.totalorder %s17, 0
      %p38 = por %p36, %p37
      %p39 = scmp.ne.s32.totalorder %s25, %s26
      %p40 = scmp.eq.s32.totalorder %s18, 1
      %p41 = por %p39, %p40
      %p43 = scmp.ne.s32.totalorder %s26, %s42
      %p44 = scmp.eq.s32.totalorder %s18, 0
      %p45 = por %p43, %p44
      %s46 = ssub.s32 %s12, %s19
      %p47 = scmp.eq.s32.totalorder %s46, 0
      %s49 = sadd.s32 %s48, 1
      %s50 = scalar_select %p47, %s48, %s49
      %p53 = pneg %p47
      %p54 = scmp.eq.s32.totalorder %s12, 1
      %p55 = por %p53, %p54
      %p56 = scmp.ne.s32.totalorder %s48, %s51
      %p57 = scmp.eq.s32.totalorder %s12, 0
      %p58 = por %p56, %p57
      %p59 = scmp.ne.s32.totalorder %s48, %s51
      %p60 = scmp.eq.s32.totalorder %s17, 1
      %p61 = por %p59, %p60
      %p62 = scmp.ne.s32.totalorder %s51, %s52
      %p63 = scmp.eq.s32.totalorder %s17, 0
      %p64 = por %p62, %p63
      %p65 = scmp.ne.s32.totalorder %s51, %s52
      %p66 = scmp.eq.s32.totalorder %s18, 1
      %p67 = por %p65, %p66
      %p69 = scmp.ne.s32.totalorder %s52, %s68
      %p70 = scmp.eq.s32.totalorder %s18, 0
      %p71 = por %p69, %p70
      %s72 = ssub.s32 %s12, %s19
      %p73 = scmp.eq.s32.totalorder %s72, 0
      %s75 = sadd.s32 %s74, 1
      %s76 = scalar_select %p73, %s74, %s75
      %p79 = pneg %p73
      %p80 = scmp.eq.s32.totalorder %s12, 1
      %p81 = por %p79, %p80
      %p82 = scmp.ne.s32.totalorder %s74, %s77
      %p83 = scmp.eq.s32.totalorder %s12, 0
      %p84 = por %p82, %p83
      %p85 = scmp.ne.s32.totalorder %s74, %s77
      %p86 = scmp.eq.s32.totalorder %s17, 1
      %p87 = por %p85, %p86
      %p88 = scmp.ne.s32.totalorder %s77, %s78
      %p89 = scmp.eq.s32.totalorder %s17, 0
      %p90 = por %p88, %p89
      %p91 = scmp.ne.s32.totalorder %s77, %s78
      %p92 = scmp.eq.s32.totalorder %s18, 1
      %p93 = por %p91, %p92
      %p95 = scmp.ne.s32.totalorder %s78, %s94
      %p96 = scmp.eq.s32.totalorder %s18, 0
      %p97 = por %p95, %p96
      %s98 = ssub.s32 %s12, %s19
      %p99 = scmp.eq.s32.totalorder %s98, 0
      %s101 = sadd.s32 %s100, 1
      %s102 = scalar_select %p99, %s100, %s101
      %p105 = pneg %p99
      %p106 = scmp.eq.s32.totalorder %s12, 1
      %p107 = por %p105, %p106
      %p108 = scmp.ne.s32.totalorder %s100, %s103
      %p109 = scmp.eq.s32.totalorder %s12, 0
      %p110 = por %p108, %p109
      %p111 = scmp.ne.s32.totalorder %s100, %s103
      %p112 = scmp.eq.s32.totalorder %s17, 1
      %p113 = por %p111, %p112
      %p114 = scmp.ne.s32.totalorder %s103, %s104
      %p115 = scmp.eq.s32.totalorder %s17, 0
      %p116 = por %p114, %p115
      %p117 = scmp.ne.s32.totalorder %s103, %s104
      %p118 = scmp.eq.s32.totalorder %s18, 1
      %p119 = por %p117, %p118
      %p121 = scmp.ne.s32.totalorder %s104, %s120
      %p122 = scmp.eq.s32.totalorder %s18, 0
      %p123 = por %p121, %p122
      %s125 = sadd.s32 %s124, 1
      %p128 = scmp.eq.s32.totalorder %s12, 1
      %p129 = scmp.ne.s32.totalorder %s124, %s126
      %p130 = scmp.eq.s32.totalorder %s12, 0
      %p131 = por %p129, %p130
      %p132 = scmp.ne.s32.totalorder %s124, %s126
      %p133 = scmp.eq.s32.totalorder %s17, 1
      %p134 = por %p132, %p133
      %p135 = scmp.ne.s32.totalorder %s126, %s127
      %p136 = scmp.eq.s32.totalorder %s17, 0
      %p137 = por %p135, %p136
      %p138 = scmp.ne.s32.totalorder %s126, %s127
      %p139 = scmp.eq.s32.totalorder %s18, 1
      %p140 = por %p138, %p139
      %p142 = scmp.ne.s32.totalorder %s127, %s141
      %p143 = scmp.eq.s32.totalorder %s18, 0
      %p144 = por %p142, %p143
      %s146 = sadd.s32 %s145, 1
      %p149 = scmp.eq.s32.totalorder %s12, 1
      %p150 = scmp.ne.s32.totalorder %s145, %s147
      %p151 = scmp.eq.s32.totalorder %s12, 0
      %p152 = por %p150, %p151
      %p153 = scmp.ne.s32.totalorder %s145, %s147
      %p154 = scmp.eq.s32.totalorder %s17, 1
      %p155 = por %p153, %p154
      %p156 = scmp.ne.s32.totalorder %s147, %s148
      %p157 = scmp.eq.s32.totalorder %s17, 0
      %p158 = por %p156, %p157
      %p159 = scmp.ne.s32.totalorder %s147, %s148
      %p160 = scmp.eq.s32.totalorder %s18, 1
      %p161 = por %p159, %p160
      %p163 = scmp.ne.s32.totalorder %s148, %s162
      %p164 = scmp.eq.s32.totalorder %s18, 0
      %p165 = por %p163, %p164
      %s166 = ssub.s32 %s12, %s19
      %p167 = scmp.eq.s32.totalorder %s166, 0
      %s169 = sadd.s32 %s168, 1
      %s170 = scalar_select %p167, %s168, %s169
      %p173 = pneg %p167
      %p174 = scmp.eq.s32.totalorder %s12, 1
      %p175 = por %p173, %p174
      %p176 = scmp.ne.s32.totalorder %s168, %s171
      %p177 = scmp.eq.s32.totalorder %s12, 0
      %p178 = por %p176, %p177
      %p179 = scmp.ne.s32.totalorder %s168, %s171
      %p180 = scmp.eq.s32.totalorder %s17, 1
      %p181 = por %p179, %p180
      %p182 = scmp.ne.s32.totalorder %s171, %s172
      %p183 = scmp.eq.s32.totalorder %s17, 0
      %p184 = por %p182, %p183
      %p185 = scmp.ne.s32.totalorder %s171, %s172
      %p186 = scmp.eq.s32.totalorder %s18, 1
      %p187 = por %p185, %p186
      %p189 = scmp.ne.s32.totalorder %s172, %s188
      %p190 = scmp.eq.s32.totalorder %s18, 0
      %p191 = por %p189, %p190
      %p192 = scmp.le.s32.totalorder 1, %s12
      %p193 = scmp.lt.s32.totalorder %s12, 3
      %p194 = pnand %p192, %p193
      %p195 = pneg %p194
      // Predicated region
      $region9: #{kkkc_forward.5} parent=5 // pred_check
        _
      $region10: #{kkkc_forward.5} parent=5 // pred_check_branch
        %197 = sbr.rel (%p194) target = $region12
      $region11: #{kkkc_forward.5} parent=5 // pred_region
        %s198 = ssub.s32 %s12, 1
        // Predicated region
        $region13: #{kkkc_forward.5} parent=11 // pred_check
          %p199 = pneg %p137
        $region14: #{kkkc_forward.5} parent=11 // pred_check_branch
          %201 = sbr.rel (%p199) target = $region16
        $region15: #{kkkc_forward.5} parent=11 // pred_region
          _
        $region16: #{kkkc_forward.5} parent=11 // pred_fallthru
          _
        // Predicated region
        $region17: #{kkkc_forward.5} parent=11 // pred_check
          %p202 = pneg %p158
        $region18: #{kkkc_forward.5} parent=11 // pred_check_branch
          %204 = sbr.rel (%p202) target = $region20
        $region19: #{kkkc_forward.5} parent=11 // pred_region
          _
        $region20: #{kkkc_forward.5} parent=11 // pred_fallthru
          _
      $region12: #{kkkc_forward.5} parent=5 // pred_fallthru
        _
      %p205 = scmp.lt.s32.totalorder %s12, 2
      // Predicated region
      $region21: #{kkkc_forward.5} parent=5 // pred_check
        %p206 = pneg %p205
      $region22: #{kkkc_forward.5} parent=5 // pred_check_branch
        %208 = sbr.rel (%p206) target = $region24
      $region23: #{kkkc_forward.5} parent=5 // pred_region
        // Predicated region
        $region25: #{kkkc_forward.5} parent=23 // pred_check
          %p209 = pneg %p32
        $region26: #{kkkc_forward.5} parent=23 // pred_check_branch
          %211 = sbr.rel (%p209) target = $region28
        $region27: #{kkkc_forward.5} parent=23 // pred_region
          %s212 = smul.u32 128, %s12
          %s213 = ssub.s32 241, %s212
          %p214 = scmp.lt.s32.totalorder %s213, 128
          %s215 = scalar_select %p214, %s213, 128
          %s216 = smul.u32 4, %s215
          %p217 = scmp.lt.s32.totalorder %s212, 240
          %s218 = scalar_select %p217, %s212, 240
          %s219 = smul.addr %s218, 4
          %s220 = scalar_lea.vmem %s0, %s219
          %s221 = smul.u32 128, %s12
          %s222 = ssub.s32 241, %s221
          %p223 = scmp.lt.s32.totalorder %s222, 128
          %s224 = scalar_select %p223, %s222, 128
          %s225 = smul.u32 4, %s224
        $region28: #{kkkc_forward.5} parent=23 // pred_fallthru
          _
        // Predicated region
        $region29: #{kkkc_forward.5} parent=23 // pred_check
          %p226 = pneg %p58
        $region30: #{kkkc_forward.5} parent=23 // pred_check_branch
          %228 = sbr.rel (%p226) target = $region32
        $region31: #{kkkc_forward.5} parent=23 // pred_region
          %s229 = smul.u32 128, %s12
          %s230 = ssub.s32 241, %s229
          %p231 = scmp.lt.s32.totalorder %s230, 128
          %s232 = scalar_select %p231, %s230, 128
          %s233 = smul.u32 4, %s232
          %p234 = scmp.lt.s32.totalorder %s229, 240
          %s235 = scalar_select %p234, %s229, 240
          %s236 = smul.addr %s235, 4
          %s237 = scalar_lea.vmem %s1, %s236
          %s238 = smul.u32 128, %s12
          %s239 = ssub.s32 241, %s238
          %p240 = scmp.lt.s32.totalorder %s239, 128
          %s241 = scalar_select %p240, %s239, 128
          %s242 = smul.u32 4, %s241
        $region32: #{kkkc_forward.5} parent=23 // pred_fallthru
          _
        // Predicated region
        $region33: #{kkkc_forward.5} parent=23 // pred_check
          %p243 = pneg %p84
        $region34: #{kkkc_forward.5} parent=23 // pred_check_branch
          %245 = sbr.rel (%p243) target = $region36
        $region35: #{kkkc_forward.5} parent=23 // pred_region
          %s246 = smul.u32 128, %s12
          %s247 = ssub.s32 241, %s246
          %p248 = scmp.lt.s32.totalorder %s247, 128
          %s249 = scalar_select %p248, %s247, 128
          %s250 = smul.u32 4, %s249
          %p251 = scmp.lt.s32.totalorder %s246, 240
          %s252 = scalar_select %p251, %s246, 240
          %s253 = smul.addr %s252, 4
          %s254 = scalar_lea.vmem %s2, %s253
          %s255 = smul.u32 128, %s12
          %s256 = ssub.s32 241, %s255
          %p257 = scmp.lt.s32.totalorder %s256, 128
          %s258 = scalar_select %p257, %s256, 128
          %s259 = smul.u32 4, %s258
        $region36: #{kkkc_forward.5} parent=23 // pred_fallthru
          _
        // Predicated region
        $region37: #{kkkc_forward.5} parent=23 // pred_check
          %p260 = pneg %p110
        $region38: #{kkkc_forward.5} parent=23 // pred_check_branch
          %262 = sbr.rel (%p260) target = $region40
        $region39: #{kkkc_forward.5} parent=23 // pred_region
          %s263 = smul.u32 128, %s12
          %s264 = ssub.s32 241, %s263
          %p265 = scmp.lt.s32.totalorder %s264, 128
          %s266 = scalar_select %p265, %s264, 128
          %s267 = smul.u32 4, %s266
          %p268 = scmp.lt.s32.totalorder %s263, 240
          %s269 = scalar_select %p268, %s263, 240
          %s270 = smul.addr %s269, 4
          %s271 = scalar_lea.vmem %s3, %s270
          %s272 = smul.u32 128, %s12
          %s273 = ssub.s32 241, %s272
          %p274 = scmp.lt.s32.totalorder %s273, 128
          %s275 = scalar_select %p274, %s273, 128
          %s276 = smul.u32 4, %s275
        $region40: #{kkkc_forward.5} parent=23 // pred_fallthru
          _
      $region24: #{kkkc_forward.5} parent=5 // pred_fallthru
        _
      %p277 = scmp.le.s32.totalorder 1, %s12
      %p278 = scmp.lt.s32.totalorder %s12, 3
      %p279 = pnand %p277, %p278
      %p280 = pneg %p279
      // Predicated region
      $region41: #{kkkc_forward.5} parent=5 // pred_check
        _
      $region42: #{kkkc_forward.5} parent=5 // pred_check_branch
        %282 = sbr.rel (%p279) target = $region44
      $region43: #{kkkc_forward.5} parent=5 // pred_region
        %s283 = ssub.s32 %s12, 1
        %s284 = smul.u32 128, %s17
        %s285 = ssub.s32 241, %s284
        %p286 = scmp.lt.s32.totalorder %s285, 128
        %s287 = scalar_select %p286, %s285, 128
        %s288 = smul.u32 4, %s287
        %p289 = scmp.lt.s32.totalorder %s284, 240
        %s290 = scalar_select %p289, %s284, 240
        %s291 = smul.addr %s290, 4
        %s292 = scalar_lea.vmem %s0, %s291
        %p293 = pneg %p38
        %p294 = pneg %p35
        %s295 = smul.u32 128, %s17
        %s296 = ssub.s32 241, %s295
        %p297 = scmp.lt.s32.totalorder %s296, 128
        %s298 = scalar_select %p297, %s296, 128
        %s299 = smul.u32 4, %s298
        %p300 = scmp.lt.s32.totalorder %s295, 240
        %s301 = scalar_select %p300, %s295, 240
        %s302 = smul.addr %s301, 4
        %s303 = scalar_lea.vmem %s1, %s302
        %p304 = pneg %p64
        %p305 = pneg %p61
        %s306 = smul.u32 128, %s17
        %s307 = ssub.s32 241, %s306
        %p308 = scmp.lt.s32.totalorder %s307, 128
        %s309 = scalar_select %p308, %s307, 128
        %s310 = smul.u32 4, %s309
        %p311 = scmp.lt.s32.totalorder %s306, 240
        %s312 = scalar_select %p311, %s306, 240
        %s313 = smul.addr %s312, 4
        %s314 = scalar_lea.vmem %s2, %s313
        %p315 = pneg %p90
        %p316 = pneg %p87
        %s317 = smul.u32 128, %s17
        %s318 = ssub.s32 241, %s317
        %p319 = scmp.lt.s32.totalorder %s318, 128
        %s320 = scalar_select %p319, %s318, 128
        %s321 = smul.u32 4, %s320
        %p322 = scmp.lt.s32.totalorder %s317, 240
        %s323 = scalar_select %p322, %s317, 240
        %s324 = smul.addr %s323, 4
        %s325 = scalar_lea.vmem %s3, %s324
        %p326 = pneg %p116
        %p327 = pneg %p113
        %p328 = pneg %p137
        %p329 = pneg %p134
        %p330 = pneg %p158
        %p331 = pneg %p155
        %p332 = pneg %p184
        %p333 = pneg %p181
        %s334 = sand.u32 %s171, 1
        %s335 = sand.u32 %s171, 1
        %s336 = smul.addr %s335, 512
        %s337 = scalar_lea.vmem [#allocation2], %s336
        %s338 = smul.u32 128, %s17
        %s339 = ssub.s32 241, %s338
        %p340 = scmp.lt.s32.totalorder %s339, 128
        %s341 = scalar_select %p340, %s339, 128
        %s342 = smul.u32 4, %s341
        %p343 = scmp.lt.s32.totalorder %s338, 240
        %s344 = scalar_select %p343, %s338, 240
        %s345 = smul.addr %s344, 4
        %s346 = scalar_lea.vmem %s0, %s345
        %s347 = smul.u32 128, %s17
        %s348 = ssub.s32 241, %s347
        %p349 = scmp.lt.s32.totalorder %s348, 128
        %s350 = scalar_select %p349, %s348, 128
        %s351 = smul.u32 4, %s350
        %s352 = smul.u32 128, %s17
        %s353 = ssub.s32 241, %s352
        %p354 = scmp.lt.s32.totalorder %s353, 128
        %s355 = scalar_select %p354, %s353, 128
        %s356 = smul.u32 4, %s355
        %p357 = scmp.lt.s32.totalorder %s352, 240
        %s358 = scalar_select %p357, %s352, 240
        %s359 = smul.addr %s358, 4
        %s360 = scalar_lea.vmem %s1, %s359
        %s361 = smul.u32 128, %s17
        %s362 = ssub.s32 241, %s361
        %p363 = scmp.lt.s32.totalorder %s362, 128
        %s364 = scalar_select %p363, %s362, 128
        %s365 = smul.u32 4, %s364
        %s366 = smul.u32 128, %s17
        %s367 = ssub.s32 241, %s366
        %p368 = scmp.lt.s32.totalorder %s367, 128
        %s369 = scalar_select %p368, %s367, 128
        %s370 = smul.u32 4, %s369
        %p371 = scmp.lt.s32.totalorder %s366, 240
        %s372 = scalar_select %p371, %s366, 240
        %s373 = smul.addr %s372, 4
        %s374 = scalar_lea.vmem %s2, %s373
        %s375 = smul.u32 128, %s17
        %s376 = ssub.s32 241, %s375
        %p377 = scmp.lt.s32.totalorder %s376, 128
        %s378 = scalar_select %p377, %s376, 128
        %s379 = smul.u32 4, %s378
        %s380 = smul.u32 128, %s17
        %s381 = ssub.s32 241, %s380
        %p382 = scmp.lt.s32.totalorder %s381, 128
        %s383 = scalar_select %p382, %s381, 128
        %s384 = smul.u32 4, %s383
        %p385 = scmp.lt.s32.totalorder %s380, 240
        %s386 = scalar_select %p385, %s380, 240
        %s387 = smul.addr %s386, 4
        %s388 = scalar_lea.vmem %s3, %s387
        %s389 = smul.u32 128, %s17
        %s390 = ssub.s32 241, %s389
        %p391 = scmp.lt.s32.totalorder %s390, 128
        %s392 = scalar_select %p391, %s390, 128
        %s393 = smul.u32 4, %s392
        %s394 = smul.u32 128, %s17
        %s395 = ssub.s32 241, %s394
        %p396 = scmp.lt.s32.totalorder %s395, 128
        %s397 = scalar_select %p396, %s395, 128
        %s398 = smul.u32 4, %s397
        %v400 = vld [vmem:[%s4] sm:$0xf]
        %v401 = vld [vmem:[%s4 + $0x4] sm:$0xf]
        %v402 = vld [vmem:[%s4 + $0x8] sm:$0xf]
        %v403 = vld [vmem:[%s4 + $0xc] sm:$0x3]
        %v404 = vld [vmem:[%s346] sm:$0xf]
        %v405 = vld [vmem:[%s346 + $0x4] sm:$0xf]
        %v406 = vld [vmem:[%s346 + $0x8] sm:$0xf]
        %v407 = vld [vmem:[%s346 + $0xc] sm:$0xf]
        %v408 = vld [vmem:[%s346 + $0x10] sm:$0xf]
        %v409 = vld [vmem:[%s346 + $0x14] sm:$0xf]
        %v410 = vld [vmem:[%s346 + $0x18] sm:$0xf]
        %v411 = vld [vmem:[%s346 + $0x1c] sm:$0xf]
        %v412 = vld [vmem:[%s346 + $0x20] sm:$0xf]
        %v413 = vld [vmem:[%s346 + $0x24] sm:$0xf]
        %v414 = vld [vmem:[%s346 + $0x28] sm:$0xf]
        %v415 = vld [vmem:[%s346 + $0x2c] sm:$0xf]
        %v416 = vld [vmem:[%s346 + $0x30] sm:$0xf]
        %v417 = vld [vmem:[%s346 + $0x34] sm:$0xf]
        %v418 = vld [vmem:[%s346 + $0x38] sm:$0xf]
        %v419 = vld [vmem:[%s346 + $0x3c] sm:$0xf]
        %v420 = vld [vmem:[%s346 + $0x40] sm:$0xf]
        %v421 = vld [vmem:[%s346 + $0x44] sm:$0xf]
        %v422 = vld [vmem:[%s346 + $0x48] sm:$0xf]
        %v423 = vld [vmem:[%s346 + $0x4c] sm:$0xf]
        %v424 = vld [vmem:[%s346 + $0x50] sm:$0xf]
        %v425 = vld [vmem:[%s346 + $0x54] sm:$0xf]
        %v426 = vld [vmem:[%s346 + $0x58] sm:$0xf]
        %v427 = vld [vmem:[%s346 + $0x5c] sm:$0xf]
        %v428 = vld [vmem:[%s346 + $0x60] sm:$0xf]
        %v429 = vld [vmem:[%s346 + $0x64] sm:$0xf]
        %v430 = vld [vmem:[%s346 + $0x68] sm:$0xf]
        %v431 = vld [vmem:[%s346 + $0x6c] sm:$0xf]
        %v432 = vld [vmem:[%s346 + $0x70] sm:$0xf]
        %v433 = vld [vmem:[%s346 + $0x74] sm:$0xf]
        %v434 = vld [vmem:[%s346 + $0x78] sm:$0xf]
        %v435 = vld [vmem:[%s346 + $0x7c] sm:$0xf]
        %v436 = vld [vmem:[%s346 + $0x80] sm:$0xf]
        %v437 = vld [vmem:[%s346 + $0x84] sm:$0xf]
        %v438 = vld [vmem:[%s346 + $0x88] sm:$0xf]
        %v439 = vld [vmem:[%s346 + $0x8c] sm:$0xf]
        %v440 = vld [vmem:[%s346 + $0x90] sm:$0xf]
        %v441 = vld [vmem:[%s346 + $0x94] sm:$0xf]
        %v442 = vld [vmem:[%s346 + $0x98] sm:$0xf]
        %v443 = vld [vmem:[%s346 + $0x9c] sm:$0xf]
        %v444 = vld [vmem:[%s346 + $0xa0] sm:$0xf]
        %v445 = vld [vmem:[%s346 + $0xa4] sm:$0xf]
        %v446 = vld [vmem:[%s346 + $0xa8] sm:$0xf]
        %v447 = vld [vmem:[%s346 + $0xac] sm:$0xf]
        %v448 = vld [vmem:[%s346 + $0xb0] sm:$0xf]
        %v449 = vld [vmem:[%s346 + $0xb4] sm:$0xf]
        %v450 = vld [vmem:[%s346 + $0xb8] sm:$0xf]
        %v451 = vld [vmem:[%s346 + $0xbc] sm:$0xf]
        %v452 = vld [vmem:[%s346 + $0xc0] sm:$0xf]
        %v453 = vld [vmem:[%s346 + $0xc4] sm:$0xf]
        %v454 = vld [vmem:[%s346 + $0xc8] sm:$0xf]
        %v455 = vld [vmem:[%s346 + $0xcc] sm:$0xf]
        %v456 = vld [vmem:[%s346 + $0xd0] sm:$0xf]
        %v457 = vld [vmem:[%s346 + $0xd4] sm:$0xf]
        %v458 = vld [vmem:[%s346 + $0xd8] sm:$0xf]
        %v459 = vld [vmem:[%s346 + $0xdc] sm:$0xf]
        %v460 = vld [vmem:[%s346 + $0xe0] sm:$0xf]
        %v461 = vld [vmem:[%s346 + $0xe4] sm:$0xf]
        %v462 = vld [vmem:[%s346 + $0xe8] sm:$0xf]
        %v463 = vld [vmem:[%s346 + $0xec] sm:$0xf]
        %v464 = vld [vmem:[%s346 + $0xf0] sm:$0xf]
        %v465 = vld [vmem:[%s346 + $0xf4] sm:$0xf]
        %v466 = vld [vmem:[%s346 + $0xf8] sm:$0xf]
        %v467 = vld [vmem:[%s346 + $0xfc] sm:$0xf]
        %v468 = vld [vmem:[%s346 + $0x100] sm:$0xf]
        %v469 = vld [vmem:[%s346 + $0x104] sm:$0xf]
        %v470 = vld [vmem:[%s346 + $0x108] sm:$0xf]
        %v471 = vld [vmem:[%s346 + $0x10c] sm:$0xf]
        %v472 = vld [vmem:[%s346 + $0x110] sm:$0xf]
        %v473 = vld [vmem:[%s346 + $0x114] sm:$0xf]
        %v474 = vld [vmem:[%s346 + $0x118] sm:$0xf]
        %v475 = vld [vmem:[%s346 + $0x11c] sm:$0xf]
        %v476 = vld [vmem:[%s346 + $0x120] sm:$0xf]
        %v477 = vld [vmem:[%s346 + $0x124] sm:$0xf]
        %v478 = vld [vmem:[%s346 + $0x128] sm:$0xf]
        %v479 = vld [vmem:[%s346 + $0x12c] sm:$0xf]
        %v480 = vld [vmem:[%s346 + $0x130] sm:$0xf]
        %v481 = vld [vmem:[%s346 + $0x134] sm:$0xf]
        %v482 = vld [vmem:[%s346 + $0x138] sm:$0xf]
        %v483 = vld [vmem:[%s346 + $0x13c] sm:$0xf]
        %v484 = vld [vmem:[%s346 + $0x140] sm:$0xf]
        %v485 = vld [vmem:[%s346 + $0x144] sm:$0xf]
        %v486 = vld [vmem:[%s346 + $0x148] sm:$0xf]
        %v487 = vld [vmem:[%s346 + $0x14c] sm:$0xf]
        %v488 = vld [vmem:[%s346 + $0x150] sm:$0xf]
        %v489 = vld [vmem:[%s346 + $0x154] sm:$0xf]
        %v490 = vld [vmem:[%s346 + $0x158] sm:$0xf]
        %v491 = vld [vmem:[%s346 + $0x15c] sm:$0xf]
        %v492 = vld [vmem:[%s346 + $0x160] sm:$0xf]
        %v493 = vld [vmem:[%s346 + $0x164] sm:$0xf]
        %v494 = vld [vmem:[%s346 + $0x168] sm:$0xf]
        %v495 = vld [vmem:[%s346 + $0x16c] sm:$0xf]
        %v496 = vld [vmem:[%s346 + $0x170] sm:$0xf]
        %v497 = vld [vmem:[%s346 + $0x174] sm:$0xf]
        %v498 = vld [vmem:[%s346 + $0x178] sm:$0xf]
        %v499 = vld [vmem:[%s346 + $0x17c] sm:$0xf]
        %v500 = vld [vmem:[%s346 + $0x180] sm:$0xf]
        %v501 = vld [vmem:[%s346 + $0x184] sm:$0xf]
        %v502 = vld [vmem:[%s346 + $0x188] sm:$0xf]
        %v503 = vld [vmem:[%s346 + $0x18c] sm:$0xf]
        %v504 = vld [vmem:[%s346 + $0x190] sm:$0xf]
        %v505 = vld [vmem:[%s346 + $0x194] sm:$0xf]
        %v506 = vld [vmem:[%s346 + $0x198] sm:$0xf]
        %v507 = vld [vmem:[%s346 + $0x19c] sm:$0xf]
        %v508 = vld [vmem:[%s346 + $0x1a0] sm:$0xf]
        %v509 = vld [vmem:[%s346 + $0x1a4] sm:$0xf]
        %v510 = vld [vmem:[%s346 + $0x1a8] sm:$0xf]
        %v511 = vld [vmem:[%s346 + $0x1ac] sm:$0xf]
        %v512 = vld [vmem:[%s346 + $0x1b0] sm:$0xf]
        %v513 = vld [vmem:[%s346 + $0x1b4] sm:$0xf]
        %v514 = vld [vmem:[%s346 + $0x1b8] sm:$0xf]
        %v515 = vld [vmem:[%s346 + $0x1bc] sm:$0xf]
        %v516 = vld [vmem:[%s346 + $0x1c0] sm:$0xf]
        %v517 = vld [vmem:[%s346 + $0x1c4] sm:$0xf]
        %v518 = vld [vmem:[%s346 + $0x1c8] sm:$0xf]
        %v519 = vld [vmem:[%s346 + $0x1cc] sm:$0xf]
        %v520 = vld [vmem:[%s346 + $0x1d0] sm:$0xf]
        %v521 = vld [vmem:[%s346 + $0x1d4] sm:$0xf]
        %v522 = vld [vmem:[%s346 + $0x1d8] sm:$0xf]
        %v523 = vld [vmem:[%s346 + $0x1dc] sm:$0xf]
        %v524 = vld [vmem:[%s346 + $0x1e0] sm:$0xf]
        %v525 = vld [vmem:[%s346 + $0x1e4] sm:$0xf]
        %v526 = vld [vmem:[%s346 + $0x1e8] sm:$0xf]
        %v527 = vld [vmem:[%s346 + $0x1ec] sm:$0xf]
        %v528 = vld [vmem:[%s346 + $0x1f0] sm:$0xf]
        %v529 = vld [vmem:[%s346 + $0x1f4] sm:$0xf]
        %v530 = vld [vmem:[%s346 + $0x1f8] sm:$0xf]
        %v531 = vld [vmem:[%s346 + $0x1fc] sm:$0xf]
        %v660 = vunpack.c.l.b16 %v404
        %v661 = vunpack.c.l.b16 %v405
        %v662 = vunpack.c.l.b16 %v406
        %v663 = vunpack.c.l.b16 %v407
        %v664 = vunpack.c.l.b16 %v408
        %v665 = vunpack.c.l.b16 %v409
        %v666 = vunpack.c.l.b16 %v410
        %v667 = vunpack.c.l.b16 %v411
        %v668 = vunpack.c.l.b16 %v412
        %v669 = vunpack.c.l.b16 %v413
        %v670 = vunpack.c.l.b16 %v414
        %v671 = vunpack.c.l.b16 %v415
        %v672 = vunpack.c.l.b16 %v416
        %v673 = vunpack.c.l.b16 %v417
        %v674 = vunpack.c.l.b16 %v418
        %v675 = vunpack.c.l.b16 %v419
        %v676 = vunpack.c.l.b16 %v420
        %v677 = vunpack.c.l.b16 %v421
        %v678 = vunpack.c.l.b16 %v422
        %v679 = vunpack.c.l.b16 %v423
        %v680 = vunpack.c.l.b16 %v424
        %v681 = vunpack.c.l.b16 %v425
        %v682 = vunpack.c.l.b16 %v426
        %v683 = vunpack.c.l.b16 %v427
        %v684 = vunpack.c.l.b16 %v428
        %v685 = vunpack.c.l.b16 %v429
        %v686 = vunpack.c.l.b16 %v430
        %v687 = vunpack.c.l.b16 %v431
        %v688 = vunpack.c.l.b16 %v432
        %v689 = vunpack.c.l.b16 %v433
        %v690 = vunpack.c.l.b16 %v434
        %v691 = vunpack.c.l.b16 %v435
        %v692 = vunpack.c.l.b16 %v436
        %v693 = vunpack.c.l.b16 %v437
        %v694 = vunpack.c.l.b16 %v438
        %v695 = vunpack.c.l.b16 %v439
        %v696 = vunpack.c.l.b16 %v440
        %v697 = vunpack.c.l.b16 %v441
        %v698 = vunpack.c.l.b16 %v442
        %v699 = vunpack.c.l.b16 %v443
        %v700 = vunpack.c.l.b16 %v444
        %v701 = vunpack.c.l.b16 %v445
        %v702 = vunpack.c.l.b16 %v446
        %v703 = vunpack.c.l.b16 %v447
        %v704 = vunpack.c.l.b16 %v448
        %v705 = vunpack.c.l.b16 %v449
        %v706 = vunpack.c.l.b16 %v450
        %v707 = vunpack.c.l.b16 %v451
        %v708 = vunpack.c.l.b16 %v452
        %v709 = vunpack.c.l.b16 %v453
        %v710 = vunpack.c.l.b16 %v454
        %v711 = vunpack.c.l.b16 %v455
        %v712 = vunpack.c.l.b16 %v456
        %v713 = vunpack.c.l.b16 %v457
        %v714 = vunpack.c.l.b16 %v458
        %v715 = vunpack.c.l.b16 %v459
        %v716 = vunpack.c.l.b16 %v460
        %v717 = vunpack.c.l.b16 %v461
        %v718 = vunpack.c.l.b16 %v462
        %v719 = vunpack.c.l.b16 %v463
        %v720 = vunpack.c.l.b16 %v464
        %v721 = vunpack.c.l.b16 %v465
        %v722 = vunpack.c.l.b16 %v466
        %v723 = vunpack.c.l.b16 %v467
        %v724 = vunpack.c.l.b16 %v468
        %v725 = vunpack.c.l.b16 %v469
        %v726 = vunpack.c.l.b16 %v470
        %v727 = vunpack.c.l.b16 %v471
        %v728 = vunpack.c.l.b16 %v472
        %v729 = vunpack.c.l.b16 %v473
        %v730 = vunpack.c.l.b16 %v474
        %v731 = vunpack.c.l.b16 %v475
        %v732 = vunpack.c.l.b16 %v476
        %v733 = vunpack.c.l.b16 %v477
        %v734 = vunpack.c.l.b16 %v478
        %v735 = vunpack.c.l.b16 %v479
        %v736 = vunpack.c.l.b16 %v480
        %v737 = vunpack.c.l.b16 %v481
        %v738 = vunpack.c.l.b16 %v482
        %v739 = vunpack.c.l.b16 %v483
        %v740 = vunpack.c.l.b16 %v484
        %v741 = vunpack.c.l.b16 %v485
        %v742 = vunpack.c.l.b16 %v486
        %v743 = vunpack.c.l.b16 %v487
        %v744 = vunpack.c.l.b16 %v488
        %v745 = vunpack.c.l.b16 %v489
        %v746 = vunpack.c.l.b16 %v490
        %v747 = vunpack.c.l.b16 %v491
        %v748 = vunpack.c.l.b16 %v492
        %v749 = vunpack.c.l.b16 %v493
        %v750 = vunpack.c.l.b16 %v494
        %v751 = vunpack.c.l.b16 %v495
        %v752 = vunpack.c.l.b16 %v496
        %v753 = vunpack.c.l.b16 %v497
        %v754 = vunpack.c.l.b16 %v498
        %v755 = vunpack.c.l.b16 %v499
        %v756 = vunpack.c.l.b16 %v500
        %v757 = vunpack.c.l.b16 %v501
        %v758 = vunpack.c.l.b16 %v502
        %v759 = vunpack.c.l.b16 %v503
        %v760 = vunpack.c.l.b16 %v504
        %v761 = vunpack.c.l.b16 %v505
        %v762 = vunpack.c.l.b16 %v506
        %v763 = vunpack.c.l.b16 %v507
        %v764 = vunpack.c.l.b16 %v508
        %v765 = vunpack.c.l.b16 %v509
        %v766 = vunpack.c.l.b16 %v510
        %v767 = vunpack.c.l.b16 %v511
        %v768 = vunpack.c.l.b16 %v512
        %v769 = vunpack.c.l.b16 %v513
        %v770 = vunpack.c.l.b16 %v514
        %v771 = vunpack.c.l.b16 %v515
        %v772 = vunpack.c.l.b16 %v516
        %v773 = vunpack.c.l.b16 %v517
        %v774 = vunpack.c.l.b16 %v518
        %v775 = vunpack.c.l.b16 %v519
        %v776 = vunpack.c.l.b16 %v520
        %v777 = vunpack.c.l.b16 %v521
        %v778 = vunpack.c.l.b16 %v522
        %v779 = vunpack.c.l.b16 %v523
        %v780 = vunpack.c.l.b16 %v524
        %v781 = vunpack.c.l.b16 %v525
        %v782 = vunpack.c.l.b16 %v526
        %v783 = vunpack.c.l.b16 %v527
        %v784 = vunpack.c.l.b16 %v528
        %v785 = vunpack.c.l.b16 %v529
        %v786 = vunpack.c.l.b16 %v530
        %v787 = vunpack.c.l.b16 %v531
        %v788 = vpack.c.b16 %v661, %v660
        %v789 = vpack.c.b16 %v663, %v662
        %v790 = vpack.c.b16 %v665, %v664
        %v791 = vpack.c.b16 %v667, %v666
        %v792 = vpack.c.b16 %v669, %v668
        %v793 = vpack.c.b16 %v671, %v670
        %v794 = vpack.c.b16 %v673, %v672
        %v795 = vpack.c.b16 %v675, %v674
        %v796 = vpack.c.b16 %v677, %v676
        %v797 = vpack.c.b16 %v679, %v678
        %v798 = vpack.c.b16 %v681, %v680
        %v799 = vpack.c.b16 %v683, %v682
        %v800 = vpack.c.b16 %v685, %v684
        %v801 = vpack.c.b16 %v687, %v686
        %v802 = vpack.c.b16 %v689, %v688
        %v803 = vpack.c.b16 %v691, %v690
        %v804 = vpack.c.b16 %v693, %v692
        %v805 = vpack.c.b16 %v695, %v694
        %v806 = vpack.c.b16 %v697, %v696
        %v807 = vpack.c.b16 %v699, %v698
        %v808 = vpack.c.b16 %v701, %v700
        %v809 = vpack.c.b16 %v703, %v702
        %v810 = vpack.c.b16 %v705, %v704
        %v811 = vpack.c.b16 %v707, %v706
        %v812 = vpack.c.b16 %v709, %v708
        %v813 = vpack.c.b16 %v711, %v710
        %v814 = vpack.c.b16 %v713, %v712
        %v815 = vpack.c.b16 %v715, %v714
        %v816 = vpack.c.b16 %v717, %v716
        %v817 = vpack.c.b16 %v719, %v718
        %v818 = vpack.c.b16 %v721, %v720
        %v819 = vpack.c.b16 %v723, %v722
        %v820 = vpack.c.b16 %v725, %v724
        %v821 = vpack.c.b16 %v727, %v726
        %v822 = vpack.c.b16 %v729, %v728
        %v823 = vpack.c.b16 %v731, %v730
        %v824 = vpack.c.b16 %v733, %v732
        %v825 = vpack.c.b16 %v735, %v734
        %v826 = vpack.c.b16 %v737, %v736
        %v827 = vpack.c.b16 %v739, %v738
        %v828 = vpack.c.b16 %v741, %v740
        %v829 = vpack.c.b16 %v743, %v742
        %v830 = vpack.c.b16 %v745, %v744
        %v831 = vpack.c.b16 %v747, %v746
        %v832 = vpack.c.b16 %v749, %v748
        %v833 = vpack.c.b16 %v751, %v750
        %v834 = vpack.c.b16 %v753, %v752
        %v835 = vpack.c.b16 %v755, %v754
        %v836 = vpack.c.b16 %v757, %v756
        %v837 = vpack.c.b16 %v759, %v758
        %v838 = vpack.c.b16 %v761, %v760
        %v839 = vpack.c.b16 %v763, %v762
        %v840 = vpack.c.b16 %v765, %v764
        %v841 = vpack.c.b16 %v767, %v766
        %v842 = vpack.c.b16 %v769, %v768
        %v843 = vpack.c.b16 %v771, %v770
        %v844 = vpack.c.b16 %v773, %v772
        %v845 = vpack.c.b16 %v775, %v774
        %v846 = vpack.c.b16 %v777, %v776
        %v847 = vpack.c.b16 %v779, %v778
        %v848 = vpack.c.b16 %v781, %v780
        %v849 = vpack.c.b16 %v783, %v782
        %v850 = vpack.c.b16 %v785, %v784
        %v851 = vpack.c.b16 %v787, %v786
        %v856 = vunpack.c.l.b16 %v400
        %v857 = vunpack.c.l.b16 %v401
        %v858 = vunpack.c.l.b16 %v402
        %v859 = vunpack.c.l.b16 %v403
        %v860 = vpack.c.b16 %v857, %v856
        %v861 = vpack.c.b16 %v859, %v858
        %vm863 = vcmask 220160
        %v865 = vsel %vm863, %v788, 0
        %v868 = vsel %vm863, %v789, 0
        %v871 = vsel %vm863, %v790, 0
        %v874 = vsel %vm863, %v791, 0
        %v877 = vsel %vm863, %v792, 0
        %v880 = vsel %vm863, %v793, 0
        %v883 = vsel %vm863, %v794, 0
        %v886 = vsel %vm863, %v795, 0
        %v889 = vsel %vm863, %v796, 0
        %v892 = vsel %vm863, %v797, 0
        %v895 = vsel %vm863, %v798, 0
        %v898 = vsel %vm863, %v799, 0
        %v901 = vsel %vm863, %v800, 0
        %v904 = vsel %vm863, %v801, 0
        %v907 = vsel %vm863, %v802, 0
        %v910 = vsel %vm863, %v803, 0
        %v913 = vsel %vm863, %v804, 0
        %v916 = vsel %vm863, %v805, 0
        %v919 = vsel %vm863, %v806, 0
        %v922 = vsel %vm863, %v807, 0
        %v925 = vsel %vm863, %v808, 0
        %v928 = vsel %vm863, %v809, 0
        %v931 = vsel %vm863, %v810, 0
        %v934 = vsel %vm863, %v811, 0
        %v937 = vsel %vm863, %v812, 0
        %v940 = vsel %vm863, %v813, 0
        %v943 = vsel %vm863, %v814, 0
        %v946 = vsel %vm863, %v815, 0
        %v949 = vsel %vm863, %v816, 0
        %v952 = vsel %vm863, %v817, 0
        %v955 = vsel %vm863, %v818, 0
        %v958 = vsel %vm863, %v819, 0
        %v961 = vsel %vm863, %v820, 0
        %v964 = vsel %vm863, %v821, 0
        %v967 = vsel %vm863, %v822, 0
        %v970 = vsel %vm863, %v823, 0
        %v973 = vsel %vm863, %v824, 0
        %v976 = vsel %vm863, %v825, 0
        %v979 = vsel %vm863, %v826, 0
        %v982 = vsel %vm863, %v827, 0
        %v985 = vsel %vm863, %v828, 0
        %v988 = vsel %vm863, %v829, 0
        %v991 = vsel %vm863, %v830, 0
        %v994 = vsel %vm863, %v831, 0
        %v997 = vsel %vm863, %v832, 0
        %v1000 = vsel %vm863, %v833, 0
        %v1003 = vsel %vm863, %v834, 0
        %v1006 = vsel %vm863, %v835, 0
        %v1009 = vsel %vm863, %v836, 0
        %v1012 = vsel %vm863, %v837, 0
        %v1015 = vsel %vm863, %v838, 0
        %v1018 = vsel %vm863, %v839, 0
        %v1021 = vsel %vm863, %v840, 0
        %v1024 = vsel %vm863, %v841, 0
        %v1027 = vsel %vm863, %v842, 0
        %v1030 = vsel %vm863, %v843, 0
        %v1033 = vsel %vm863, %v844, 0
        %v1036 = vsel %vm863, %v845, 0
        %v1039 = vsel %vm863, %v846, 0
        %v1042 = vsel %vm863, %v847, 0
        %v1045 = vsel %vm863, %v848, 0
        %v1048 = vsel %vm863, %v849, 0
        %v1051 = vsel %vm863, %v850, 0
        %v1054 = vsel %vm863, %v851, 0
        %vm1056 = vcmask 1044480
        %vm1057 = vcmask 1045504
        %v1058 = vsel %vm1056, 4294967295, 65535
        %v1059 = vsel %vm1057, %v1058, 0
        %v1061 = vand.u32 %v861, %v1059
        %1063 = vmatpush.bf16.msra.mxu0 0
        %1064 = vmatpush.bf16.msra.mxu0 0
        %1065 = vmatpush.bf16.msra.mxu0 0
        %1066 = vmatpush.bf16.msra.mxu0 0
        %1067 = vmatpush.bf16.msra.mxu0 0
        %1068 = vmatpush.bf16.msra.mxu0 0
        %1069 = vmatpush.bf16.msra.mxu0 %v1061
        %1070 = vmatpush.bf16.msra.mxu0 %v860
        %1071 = vmatmul.bf16.gmra.mxu0 %v865
        %v1072 = vpop.f32.mrf.mxu0
        %v1073 = vadd.f32 0.0, %v1072
        %v1074 = vpop.f32.mrf.mxu0
        %v1075 = vadd.f32 0.0, %v1074
        %1076 = vmatmul.bf16.gmra.mxu0 %v868
        %v1077 = vpop.f32.mrf.mxu0
        %v1078 = vadd.f32 0.0, %v1077
        %v1079 = vpop.f32.mrf.mxu0
        %v1080 = vadd.f32 0.0, %v1079
        %1081 = vmatmul.bf16.gmra.mxu0 %v871
        %v1082 = vpop.f32.mrf.mxu0
        %v1083 = vadd.f32 0.0, %v1082
        %v1084 = vpop.f32.mrf.mxu0
        %v1085 = vadd.f32 0.0, %v1084
        %1086 = vmatmul.bf16.gmra.mxu0 %v874
        %v1087 = vpop.f32.mrf.mxu0
        %v1088 = vadd.f32 0.0, %v1087
        %v1089 = vpop.f32.mrf.mxu0
        %v1090 = vadd.f32 0.0, %v1089
        %1091 = vmatmul.bf16.gmra.mxu0 %v877
        %v1092 = vpop.f32.mrf.mxu0
        %v1093 = vadd.f32 0.0, %v1092
        %v1094 = vpop.f32.mrf.mxu0
        %v1095 = vadd.f32 0.0, %v1094
        %1096 = vmatmul.bf16.gmra.mxu0 %v880
        %v1097 = vpop.f32.mrf.mxu0
        %v1098 = vadd.f32 0.0, %v1097
        %v1099 = vpop.f32.mrf.mxu0
        %v1100 = vadd.f32 0.0, %v1099
        %1101 = vmatmul.bf16.gmra.mxu0 %v883
        %v1102 = vpop.f32.mrf.mxu0
        %v1103 = vadd.f32 0.0, %v1102
        %v1104 = vpop.f32.mrf.mxu0
        %v1105 = vadd.f32 0.0, %v1104
        %1106 = vmatmul.bf16.gmra.mxu0 %v886
        %v1107 = vpop.f32.mrf.mxu0
        %v1108 = vadd.f32 0.0, %v1107
        %v1109 = vpop.f32.mrf.mxu0
        %v1110 = vadd.f32 0.0, %v1109
        %1111 = vmatmul.bf16.gmra.mxu0 %v889
        %v1112 = vpop.f32.mrf.mxu0
        %v1113 = vadd.f32 0.0, %v1112
        %v1114 = vpop.f32.mrf.mxu0
        %v1115 = vadd.f32 0.0, %v1114
        %1116 = vmatmul.bf16.gmra.mxu0 %v892
        %v1117 = vpop.f32.mrf.mxu0
        %v1118 = vadd.f32 0.0, %v1117
        %v1119 = vpop.f32.mrf.mxu0
        %v1120 = vadd.f32 0.0, %v1119
        %1121 = vmatmul.bf16.gmra.mxu0 %v895
        %v1122 = vpop.f32.mrf.mxu0
        %v1123 = vadd.f32 0.0, %v1122
        %v1124 = vpop.f32.mrf.mxu0
        %v1125 = vadd.f32 0.0, %v1124
        %1126 = vmatmul.bf16.gmra.mxu0 %v898
        %v1127 = vpop.f32.mrf.mxu0
        %v1128 = vadd.f32 0.0, %v1127
        %v1129 = vpop.f32.mrf.mxu0
        %v1130 = vadd.f32 0.0, %v1129
        %1131 = vmatmul.bf16.gmra.mxu0 %v901
        %v1132 = vpop.f32.mrf.mxu0
        %v1133 = vadd.f32 0.0, %v1132
        %v1134 = vpop.f32.mrf.mxu0
        %v1135 = vadd.f32 0.0, %v1134
        %1136 = vmatmul.bf16.gmra.mxu0 %v904
        %v1137 = vpop.f32.mrf.mxu0
        %v1138 = vadd.f32 0.0, %v1137
        %v1139 = vpop.f32.mrf.mxu0
        %v1140 = vadd.f32 0.0, %v1139
        %1141 = vmatmul.bf16.gmra.mxu0 %v907
        %v1142 = vpop.f32.mrf.mxu0
        %v1143 = vadd.f32 0.0, %v1142
        %v1144 = vpop.f32.mrf.mxu0
        %v1145 = vadd.f32 0.0, %v1144
        %1146 = vmatmul.bf16.gmra.mxu0 %v910
        %v1147 = vpop.f32.mrf.mxu0
        %v1148 = vadd.f32 0.0, %v1147
        %v1149 = vpop.f32.mrf.mxu0
        %v1150 = vadd.f32 0.0, %v1149
        %1151 = vmatmul.bf16.gmra.mxu0 %v913
        %v1152 = vpop.f32.mrf.mxu0
        %v1153 = vadd.f32 0.0, %v1152
        %v1154 = vpop.f32.mrf.mxu0
        %v1155 = vadd.f32 0.0, %v1154
        %1156 = vmatmul.bf16.gmra.mxu0 %v916
        %v1157 = vpop.f32.mrf.mxu0
        %v1158 = vadd.f32 0.0, %v1157
        %v1159 = vpop.f32.mrf.mxu0
        %v1160 = vadd.f32 0.0, %v1159
        %1161 = vmatmul.bf16.gmra.mxu0 %v919
        %v1162 = vpop.f32.mrf.mxu0
        %v1163 = vadd.f32 0.0, %v1162
        %v1164 = vpop.f32.mrf.mxu0
        %v1165 = vadd.f32 0.0, %v1164
        %1166 = vmatmul.bf16.gmra.mxu0 %v922
        %v1167 = vpop.f32.mrf.mxu0
        %v1168 = vadd.f32 0.0, %v1167
        %v1169 = vpop.f32.mrf.mxu0
        %v1170 = vadd.f32 0.0, %v1169
        %1171 = vmatmul.bf16.gmra.mxu0 %v925
        %v1172 = vpop.f32.mrf.mxu0
        %v1173 = vadd.f32 0.0, %v1172
        %v1174 = vpop.f32.mrf.mxu0
        %v1175 = vadd.f32 0.0, %v1174
        %1176 = vmatmul.bf16.gmra.mxu0 %v928
        %v1177 = vpop.f32.mrf.mxu0
        %v1178 = vadd.f32 0.0, %v1177
        %v1179 = vpop.f32.mrf.mxu0
        %v1180 = vadd.f32 0.0, %v1179
        %1181 = vmatmul.bf16.gmra.mxu0 %v931
        %v1182 = vpop.f32.mrf.mxu0
        %v1183 = vadd.f32 0.0, %v1182
        %v1184 = vpop.f32.mrf.mxu0
        %v1185 = vadd.f32 0.0, %v1184
        %1186 = vmatmul.bf16.gmra.mxu0 %v934
        %v1187 = vpop.f32.mrf.mxu0
        %v1188 = vadd.f32 0.0, %v1187
        %v1189 = vpop.f32.mrf.mxu0
        %v1190 = vadd.f32 0.0, %v1189
        %1191 = vmatmul.bf16.gmra.mxu0 %v937
        %v1192 = vpop.f32.mrf.mxu0
        %v1193 = vadd.f32 0.0, %v1192
        %v1194 = vpop.f32.mrf.mxu0
        %v1195 = vadd.f32 0.0, %v1194
        %1196 = vmatmul.bf16.gmra.mxu0 %v940
        %v1197 = vpop.f32.mrf.mxu0
        %v1198 = vadd.f32 0.0, %v1197
        %v1199 = vpop.f32.mrf.mxu0
        %v1200 = vadd.f32 0.0, %v1199
        %1201 = vmatmul.bf16.gmra.mxu0 %v943
        %v1202 = vpop.f32.mrf.mxu0
        %v1203 = vadd.f32 0.0, %v1202
        %v1204 = vpop.f32.mrf.mxu0
        %v1205 = vadd.f32 0.0, %v1204
        %1206 = vmatmul.bf16.gmra.mxu0 %v946
        %v1207 = vpop.f32.mrf.mxu0
        %v1208 = vadd.f32 0.0, %v1207
        %v1209 = vpop.f32.mrf.mxu0
        %v1210 = vadd.f32 0.0, %v1209
        %1211 = vmatmul.bf16.gmra.mxu0 %v949
        %v1212 = vpop.f32.mrf.mxu0
        %v1213 = vadd.f32 0.0, %v1212
        %v1214 = vpop.f32.mrf.mxu0
        %v1215 = vadd.f32 0.0, %v1214
        %1216 = vmatmul.bf16.gmra.mxu0 %v952
        %v1217 = vpop.f32.mrf.mxu0
        %v1218 = vadd.f32 0.0, %v1217
        %v1219 = vpop.f32.mrf.mxu0
        %v1220 = vadd.f32 0.0, %v1219
        %1221 = vmatmul.bf16.gmra.mxu0 %v955
        %v1222 = vpop.f32.mrf.mxu0
        %v1223 = vadd.f32 0.0, %v1222
        %v1224 = vpop.f32.mrf.mxu0
        %v1225 = vadd.f32 0.0, %v1224
        %1226 = vmatmul.bf16.gmra.mxu0 %v958
        %v1227 = vpop.f32.mrf.mxu0
        %v1228 = vadd.f32 0.0, %v1227
        %v1229 = vpop.f32.mrf.mxu0
        %v1230 = vadd.f32 0.0, %v1229
        %1231 = vmatmul.bf16.gmra.mxu0 %v961
        %v1232 = vpop.f32.mrf.mxu0
        %v1233 = vadd.f32 0.0, %v1232
        %v1234 = vpop.f32.mrf.mxu0
        %v1235 = vadd.f32 0.0, %v1234
        %1236 = vmatmul.bf16.gmra.mxu0 %v964
        %v1237 = vpop.f32.mrf.mxu0
        %v1238 = vadd.f32 0.0, %v1237
        %v1239 = vpop.f32.mrf.mxu0
        %v1240 = vadd.f32 0.0, %v1239
        %1241 = vmatmul.bf16.gmra.mxu0 %v967
        %v1242 = vpop.f32.mrf.mxu0
        %v1243 = vadd.f32 0.0, %v1242
        %v1244 = vpop.f32.mrf.mxu0
        %v1245 = vadd.f32 0.0, %v1244
        %1246 = vmatmul.bf16.gmra.mxu0 %v970
        %v1247 = vpop.f32.mrf.mxu0
        %v1248 = vadd.f32 0.0, %v1247
        %v1249 = vpop.f32.mrf.mxu0
        %v1250 = vadd.f32 0.0, %v1249
        %1251 = vmatmul.bf16.gmra.mxu0 %v973
        %v1252 = vpop.f32.mrf.mxu0
        %v1253 = vadd.f32 0.0, %v1252
        %v1254 = vpop.f32.mrf.mxu0
        %v1255 = vadd.f32 0.0, %v1254
        %1256 = vmatmul.bf16.gmra.mxu0 %v976
        %v1257 = vpop.f32.mrf.mxu0
        %v1258 = vadd.f32 0.0, %v1257
        %v1259 = vpop.f32.mrf.mxu0
        %v1260 = vadd.f32 0.0, %v1259
        %1261 = vmatmul.bf16.gmra.mxu0 %v979
        %v1262 = vpop.f32.mrf.mxu0
        %v1263 = vadd.f32 0.0, %v1262
        %v1264 = vpop.f32.mrf.mxu0
        %v1265 = vadd.f32 0.0, %v1264
        %1266 = vmatmul.bf16.gmra.mxu0 %v982
        %v1267 = vpop.f32.mrf.mxu0
        %v1268 = vadd.f32 0.0, %v1267
        %v1269 = vpop.f32.mrf.mxu0
        %v1270 = vadd.f32 0.0, %v1269
        %1271 = vmatmul.bf16.gmra.mxu0 %v985
        %v1272 = vpop.f32.mrf.mxu0
        %v1273 = vadd.f32 0.0, %v1272
        %v1274 = vpop.f32.mrf.mxu0
        %v1275 = vadd.f32 0.0, %v1274
        %1276 = vmatmul.bf16.gmra.mxu0 %v988
        %v1277 = vpop.f32.mrf.mxu0
        %v1278 = vadd.f32 0.0, %v1277
        %v1279 = vpop.f32.mrf.mxu0
        %v1280 = vadd.f32 0.0, %v1279
        %1281 = vmatmul.bf16.gmra.mxu0 %v991
        %v1282 = vpop.f32.mrf.mxu0
        %v1283 = vadd.f32 0.0, %v1282
        %v1284 = vpop.f32.mrf.mxu0
        %v1285 = vadd.f32 0.0, %v1284
        %1286 = vmatmul.bf16.gmra.mxu0 %v994
        %v1287 = vpop.f32.mrf.mxu0
        %v1288 = vadd.f32 0.0, %v1287
        %v1289 = vpop.f32.mrf.mxu0
        %v1290 = vadd.f32 0.0, %v1289
        %1291 = vmatmul.bf16.gmra.mxu0 %v997
        %v1292 = vpop.f32.mrf.mxu0
        %v1293 = vadd.f32 0.0, %v1292
        %v1294 = vpop.f32.mrf.mxu0
        %v1295 = vadd.f32 0.0, %v1294
        %1296 = vmatmul.bf16.gmra.mxu0 %v1000
        %v1297 = vpop.f32.mrf.mxu0
        %v1298 = vadd.f32 0.0, %v1297
        %v1299 = vpop.f32.mrf.mxu0
        %v1300 = vadd.f32 0.0, %v1299
        %1301 = vmatmul.bf16.gmra.mxu0 %v1003
        %v1302 = vpop.f32.mrf.mxu0
        %v1303 = vadd.f32 0.0, %v1302
        %v1304 = vpop.f32.mrf.mxu0
        %v1305 = vadd.f32 0.0, %v1304
        %1306 = vmatmul.bf16.gmra.mxu0 %v1006
        %v1307 = vpop.f32.mrf.mxu0
        %v1308 = vadd.f32 0.0, %v1307
        %v1309 = vpop.f32.mrf.mxu0
        %v1310 = vadd.f32 0.0, %v1309
        %1311 = vmatmul.bf16.gmra.mxu0 %v1009
        %v1312 = vpop.f32.mrf.mxu0
        %v1313 = vadd.f32 0.0, %v1312
        %v1314 = vpop.f32.mrf.mxu0
        %v1315 = vadd.f32 0.0, %v1314
        %1316 = vmatmul.bf16.gmra.mxu0 %v1012
        %v1317 = vpop.f32.mrf.mxu0
        %v1318 = vadd.f32 0.0, %v1317
        %v1319 = vpop.f32.mrf.mxu0
        %v1320 = vadd.f32 0.0, %v1319
        %1321 = vmatmul.bf16.gmra.mxu0 %v1015
        %v1322 = vpop.f32.mrf.mxu0
        %v1323 = vadd.f32 0.0, %v1322
        %v1324 = vpop.f32.mrf.mxu0
        %v1325 = vadd.f32 0.0, %v1324
        %1326 = vmatmul.bf16.gmra.mxu0 %v1018
        %v1327 = vpop.f32.mrf.mxu0
        %v1328 = vadd.f32 0.0, %v1327
        %v1329 = vpop.f32.mrf.mxu0
        %v1330 = vadd.f32 0.0, %v1329
        %1331 = vmatmul.bf16.gmra.mxu0 %v1021
        %v1332 = vpop.f32.mrf.mxu0
        %v1333 = vadd.f32 0.0, %v1332
        %v1334 = vpop.f32.mrf.mxu0
        %v1335 = vadd.f32 0.0, %v1334
        %1336 = vmatmul.bf16.gmra.mxu0 %v1024
        %v1337 = vpop.f32.mrf.mxu0
        %v1338 = vadd.f32 0.0, %v1337
        %v1339 = vpop.f32.mrf.mxu0
        %v1340 = vadd.f32 0.0, %v1339
        %1341 = vmatmul.bf16.gmra.mxu0 %v1027
        %v1342 = vpop.f32.mrf.mxu0
        %v1343 = vadd.f32 0.0, %v1342
        %v1344 = vpop.f32.mrf.mxu0
        %v1345 = vadd.f32 0.0, %v1344
        %1346 = vmatmul.bf16.gmra.mxu0 %v1030
        %v1347 = vpop.f32.mrf.mxu0
        %v1348 = vadd.f32 0.0, %v1347
        %v1349 = vpop.f32.mrf.mxu0
        %v1350 = vadd.f32 0.0, %v1349
        %1351 = vmatmul.bf16.gmra.mxu0 %v1033
        %v1352 = vpop.f32.mrf.mxu0
        %v1353 = vadd.f32 0.0, %v1352
        %v1354 = vpop.f32.mrf.mxu0
        %v1355 = vadd.f32 0.0, %v1354
        %1356 = vmatmul.bf16.gmra.mxu0 %v1036
        %v1357 = vpop.f32.mrf.mxu0
        %v1358 = vadd.f32 0.0, %v1357
        %v1359 = vpop.f32.mrf.mxu0
        %v1360 = vadd.f32 0.0, %v1359
        %1361 = vmatmul.bf16.gmra.mxu0 %v1039
        %v1362 = vpop.f32.mrf.mxu0
        %v1363 = vadd.f32 0.0, %v1362
        %v1364 = vpop.f32.mrf.mxu0
        %v1365 = vadd.f32 0.0, %v1364
        %1366 = vmatmul.bf16.gmra.mxu0 %v1042
        %v1367 = vpop.f32.mrf.mxu0
        %v1368 = vadd.f32 0.0, %v1367
        %v1369 = vpop.f32.mrf.mxu0
        %v1370 = vadd.f32 0.0, %v1369
        %1371 = vmatmul.bf16.gmra.mxu0 %v1045
        %v1372 = vpop.f32.mrf.mxu0
        %v1373 = vadd.f32 0.0, %v1372
        %v1374 = vpop.f32.mrf.mxu0
        %v1375 = vadd.f32 0.0, %v1374
        %1376 = vmatmul.bf16.gmra.mxu0 %v1048
        %v1377 = vpop.f32.mrf.mxu0
        %v1378 = vadd.f32 0.0, %v1377
        %v1379 = vpop.f32.mrf.mxu0
        %v1380 = vadd.f32 0.0, %v1379
        %1381 = vmatmul.bf16.gmra.mxu0 %v1051
        %v1382 = vpop.f32.mrf.mxu0
        %v1383 = vadd.f32 0.0, %v1382
        %v1384 = vpop.f32.mrf.mxu0
        %v1385 = vadd.f32 0.0, %v1384
        %1386 = vmatmul.bf16.gmra.mxu0 %v1054
        %v1387 = vpop.f32.mrf.mxu0
        %v1388 = vadd.f32 0.0, %v1387
        %v1389 = vpop.f32.mrf.mxu0
        %v1390 = vadd.f32 0.0, %v1389
        %1391 = vdwg.mxu0
        %v1392 = vld [vmem:[%s360] sm:$0xf]
        %v1393 = vld [vmem:[%s360 + $0x4] sm:$0xf]
        %v1394 = vld [vmem:[%s360 + $0x8] sm:$0xf]
        %v1395 = vld [vmem:[%s360 + $0xc] sm:$0xf]
        %v1396 = vld [vmem:[%s360 + $0x10] sm:$0xf]
        %v1397 = vld [vmem:[%s360 + $0x14] sm:$0xf]
        %v1398 = vld [vmem:[%s360 + $0x18] sm:$0xf]
        %v1399 = vld [vmem:[%s360 + $0x1c] sm:$0xf]
        %v1400 = vld [vmem:[%s360 + $0x20] sm:$0xf]
        %v1401 = vld [vmem:[%s360 + $0x24] sm:$0xf]
        %v1402 = vld [vmem:[%s360 + $0x28] sm:$0xf]
        %v1403 = vld [vmem:[%s360 + $0x2c] sm:$0xf]
        %v1404 = vld [vmem:[%s360 + $0x30] sm:$0xf]
        %v1405 = vld [vmem:[%s360 + $0x34] sm:$0xf]
        %v1406 = vld [vmem:[%s360 + $0x38] sm:$0xf]
        %v1407 = vld [vmem:[%s360 + $0x3c] sm:$0xf]
        %v1408 = vld [vmem:[%s360 + $0x40] sm:$0xf]
        %v1409 = vld [vmem:[%s360 + $0x44] sm:$0xf]
        %v1410 = vld [vmem:[%s360 + $0x48] sm:$0xf]
        %v1411 = vld [vmem:[%s360 + $0x4c] sm:$0xf]
        %v1412 = vld [vmem:[%s360 + $0x50] sm:$0xf]
        %v1413 = vld [vmem:[%s360 + $0x54] sm:$0xf]
        %v1414 = vld [vmem:[%s360 + $0x58] sm:$0xf]
        %v1415 = vld [vmem:[%s360 + $0x5c] sm:$0xf]
        %v1416 = vld [vmem:[%s360 + $0x60] sm:$0xf]
        %v1417 = vld [vmem:[%s360 + $0x64] sm:$0xf]
        %v1418 = vld [vmem:[%s360 + $0x68] sm:$0xf]
        %v1419 = vld [vmem:[%s360 + $0x6c] sm:$0xf]
        %v1420 = vld [vmem:[%s360 + $0x70] sm:$0xf]
        %v1421 = vld [vmem:[%s360 + $0x74] sm:$0xf]
        %v1422 = vld [vmem:[%s360 + $0x78] sm:$0xf]
        %v1423 = vld [vmem:[%s360 + $0x7c] sm:$0xf]
        %v1424 = vld [vmem:[%s360 + $0x80] sm:$0xf]
        %v1425 = vld [vmem:[%s360 + $0x84] sm:$0xf]
        %v1426 = vld [vmem:[%s360 + $0x88] sm:$0xf]
        %v1427 = vld [vmem:[%s360 + $0x8c] sm:$0xf]
        %v1428 = vld [vmem:[%s360 + $0x90] sm:$0xf]
        %v1429 = vld [vmem:[%s360 + $0x94] sm:$0xf]
        %v1430 = vld [vmem:[%s360 + $0x98] sm:$0xf]
        %v1431 = vld [vmem:[%s360 + $0x9c] sm:$0xf]
        %v1432 = vld [vmem:[%s360 + $0xa0] sm:$0xf]
        %v1433 = vld [vmem:[%s360 + $0xa4] sm:$0xf]
        %v1434 = vld [vmem:[%s360 + $0xa8] sm:$0xf]
        %v1435 = vld [vmem:[%s360 + $0xac] sm:$0xf]
        %v1436 = vld [vmem:[%s360 + $0xb0] sm:$0xf]
        %v1437 = vld [vmem:[%s360 + $0xb4] sm:$0xf]
        %v1438 = vld [vmem:[%s360 + $0xb8] sm:$0xf]
        %v1439 = vld [vmem:[%s360 + $0xbc] sm:$0xf]
        %v1440 = vld [vmem:[%s360 + $0xc0] sm:$0xf]
        %v1441 = vld [vmem:[%s360 + $0xc4] sm:$0xf]
        %v1442 = vld [vmem:[%s360 + $0xc8] sm:$0xf]
        %v1443 = vld [vmem:[%s360 + $0xcc] sm:$0xf]
        %v1444 = vld [vmem:[%s360 + $0xd0] sm:$0xf]
        %v1445 = vld [vmem:[%s360 + $0xd4] sm:$0xf]
        %v1446 = vld [vmem:[%s360 + $0xd8] sm:$0xf]
        %v1447 = vld [vmem:[%s360 + $0xdc] sm:$0xf]
        %v1448 = vld [vmem:[%s360 + $0xe0] sm:$0xf]
        %v1449 = vld [vmem:[%s360 + $0xe4] sm:$0xf]
        %v1450 = vld [vmem:[%s360 + $0xe8] sm:$0xf]
        %v1451 = vld [vmem:[%s360 + $0xec] sm:$0xf]
        %v1452 = vld [vmem:[%s360 + $0xf0] sm:$0xf]
        %v1453 = vld [vmem:[%s360 + $0xf4] sm:$0xf]
        %v1454 = vld [vmem:[%s360 + $0xf8] sm:$0xf]
        %v1455 = vld [vmem:[%s360 + $0xfc] sm:$0xf]
        %v1456 = vld [vmem:[%s360 + $0x100] sm:$0xf]
        %v1457 = vld [vmem:[%s360 + $0x104] sm:$0xf]
        %v1458 = vld [vmem:[%s360 + $0x108] sm:$0xf]
        %v1459 = vld [vmem:[%s360 + $0x10c] sm:$0xf]
        %v1460 = vld [vmem:[%s360 + $0x110] sm:$0xf]
        %v1461 = vld [vmem:[%s360 + $0x114] sm:$0xf]
        %v1462 = vld [vmem:[%s360 + $0x118] sm:$0xf]
        %v1463 = vld [vmem:[%s360 + $0x11c] sm:$0xf]
        %v1464 = vld [vmem:[%s360 + $0x120] sm:$0xf]
        %v1465 = vld [vmem:[%s360 + $0x124] sm:$0xf]
        %v1466 = vld [vmem:[%s360 + $0x128] sm:$0xf]
        %v1467 = vld [vmem:[%s360 + $0x12c] sm:$0xf]
        %v1468 = vld [vmem:[%s360 + $0x130] sm:$0xf]
        %v1469 = vld [vmem:[%s360 + $0x134] sm:$0xf]
        %v1470 = vld [vmem:[%s360 + $0x138] sm:$0xf]
        %v1471 = vld [vmem:[%s360 + $0x13c] sm:$0xf]
        %v1472 = vld [vmem:[%s360 + $0x140] sm:$0xf]
        %v1473 = vld [vmem:[%s360 + $0x144] sm:$0xf]
        %v1474 = vld [vmem:[%s360 + $0x148] sm:$0xf]
        %v1475 = vld [vmem:[%s360 + $0x14c] sm:$0xf]
        %v1476 = vld [vmem:[%s360 + $0x150] sm:$0xf]
        %v1477 = vld [vmem:[%s360 + $0x154] sm:$0xf]
        %v1478 = vld [vmem:[%s360 + $0x158] sm:$0xf]
        %v1479 = vld [vmem:[%s360 + $0x15c] sm:$0xf]
        %v1480 = vld [vmem:[%s360 + $0x160] sm:$0xf]
        %v1481 = vld [vmem:[%s360 + $0x164] sm:$0xf]
        %v1482 = vld [vmem:[%s360 + $0x168] sm:$0xf]
        %v1483 = vld [vmem:[%s360 + $0x16c] sm:$0xf]
        %v1484 = vld [vmem:[%s360 + $0x170] sm:$0xf]
        %v1485 = vld [vmem:[%s360 + $0x174] sm:$0xf]
        %v1486 = vld [vmem:[%s360 + $0x178] sm:$0xf]
        %v1487 = vld [vmem:[%s360 + $0x17c] sm:$0xf]
        %v1488 = vld [vmem:[%s360 + $0x180] sm:$0xf]
        %v1489 = vld [vmem:[%s360 + $0x184] sm:$0xf]
        %v1490 = vld [vmem:[%s360 + $0x188] sm:$0xf]
        %v1491 = vld [vmem:[%s360 + $0x18c] sm:$0xf]
        %v1492 = vld [vmem:[%s360 + $0x190] sm:$0xf]
        %v1493 = vld [vmem:[%s360 + $0x194] sm:$0xf]
        %v1494 = vld [vmem:[%s360 + $0x198] sm:$0xf]
        %v1495 = vld [vmem:[%s360 + $0x19c] sm:$0xf]
        %v1496 = vld [vmem:[%s360 + $0x1a0] sm:$0xf]
        %v1497 = vld [vmem:[%s360 + $0x1a4] sm:$0xf]
        %v1498 = vld [vmem:[%s360 + $0x1a8] sm:$0xf]
        %v1499 = vld [vmem:[%s360 + $0x1ac] sm:$0xf]
        %v1500 = vld [vmem:[%s360 + $0x1b0] sm:$0xf]
        %v1501 = vld [vmem:[%s360 + $0x1b4] sm:$0xf]
        %v1502 = vld [vmem:[%s360 + $0x1b8] sm:$0xf]
        %v1503 = vld [vmem:[%s360 + $0x1bc] sm:$0xf]
        %v1504 = vld [vmem:[%s360 + $0x1c0] sm:$0xf]
        %v1505 = vld [vmem:[%s360 + $0x1c4] sm:$0xf]
        %v1506 = vld [vmem:[%s360 + $0x1c8] sm:$0xf]
        %v1507 = vld [vmem:[%s360 + $0x1cc] sm:$0xf]
        %v1508 = vld [vmem:[%s360 + $0x1d0] sm:$0xf]
        %v1509 = vld [vmem:[%s360 + $0x1d4] sm:$0xf]
        %v1510 = vld [vmem:[%s360 + $0x1d8] sm:$0xf]
        %v1511 = vld [vmem:[%s360 + $0x1dc] sm:$0xf]
        %v1512 = vld [vmem:[%s360 + $0x1e0] sm:$0xf]
        %v1513 = vld [vmem:[%s360 + $0x1e4] sm:$0xf]
        %v1514 = vld [vmem:[%s360 + $0x1e8] sm:$0xf]
        %v1515 = vld [vmem:[%s360 + $0x1ec] sm:$0xf]
        %v1516 = vld [vmem:[%s360 + $0x1f0] sm:$0xf]
        %v1517 = vld [vmem:[%s360 + $0x1f4] sm:$0xf]
        %v1518 = vld [vmem:[%s360 + $0x1f8] sm:$0xf]
        %v1519 = vld [vmem:[%s360 + $0x1fc] sm:$0xf]
        %v1648 = vunpack.c.l.b16 %v1392
        %v1649 = vunpack.c.l.b16 %v1393
        %v1650 = vunpack.c.l.b16 %v1394
        %v1651 = vunpack.c.l.b16 %v1395
        %v1652 = vunpack.c.l.b16 %v1396
        %v1653 = vunpack.c.l.b16 %v1397
        %v1654 = vunpack.c.l.b16 %v1398
        %v1655 = vunpack.c.l.b16 %v1399
        %v1656 = vunpack.c.l.b16 %v1400
        %v1657 = vunpack.c.l.b16 %v1401
        %v1658 = vunpack.c.l.b16 %v1402
        %v1659 = vunpack.c.l.b16 %v1403
        %v1660 = vunpack.c.l.b16 %v1404
        %v1661 = vunpack.c.l.b16 %v1405
        %v1662 = vunpack.c.l.b16 %v1406
        %v1663 = vunpack.c.l.b16 %v1407
        %v1664 = vunpack.c.l.b16 %v1408
        %v1665 = vunpack.c.l.b16 %v1409
        %v1666 = vunpack.c.l.b16 %v1410
        %v1667 = vunpack.c.l.b16 %v1411
        %v1668 = vunpack.c.l.b16 %v1412
        %v1669 = vunpack.c.l.b16 %v1413
        %v1670 = vunpack.c.l.b16 %v1414
        %v1671 = vunpack.c.l.b16 %v1415
        %v1672 = vunpack.c.l.b16 %v1416
        %v1673 = vunpack.c.l.b16 %v1417
        %v1674 = vunpack.c.l.b16 %v1418
        %v1675 = vunpack.c.l.b16 %v1419
        %v1676 = vunpack.c.l.b16 %v1420
        %v1677 = vunpack.c.l.b16 %v1421
        %v1678 = vunpack.c.l.b16 %v1422
        %v1679 = vunpack.c.l.b16 %v1423
        %v1680 = vunpack.c.l.b16 %v1424
        %v1681 = vunpack.c.l.b16 %v1425
        %v1682 = vunpack.c.l.b16 %v1426
        %v1683 = vunpack.c.l.b16 %v1427
        %v1684 = vunpack.c.l.b16 %v1428
        %v1685 = vunpack.c.l.b16 %v1429
        %v1686 = vunpack.c.l.b16 %v1430
        %v1687 = vunpack.c.l.b16 %v1431
        %v1688 = vunpack.c.l.b16 %v1432
        %v1689 = vunpack.c.l.b16 %v1433
        %v1690 = vunpack.c.l.b16 %v1434
        %v1691 = vunpack.c.l.b16 %v1435
        %v1692 = vunpack.c.l.b16 %v1436
        %v1693 = vunpack.c.l.b16 %v1437
        %v1694 = vunpack.c.l.b16 %v1438
        %v1695 = vunpack.c.l.b16 %v1439
        %v1696 = vunpack.c.l.b16 %v1440
        %v1697 = vunpack.c.l.b16 %v1441
        %v1698 = vunpack.c.l.b16 %v1442
        %v1699 = vunpack.c.l.b16 %v1443
        %v1700 = vunpack.c.l.b16 %v1444
        %v1701 = vunpack.c.l.b16 %v1445
        %v1702 = vunpack.c.l.b16 %v1446
        %v1703 = vunpack.c.l.b16 %v1447
        %v1704 = vunpack.c.l.b16 %v1448
        %v1705 = vunpack.c.l.b16 %v1449
        %v1706 = vunpack.c.l.b16 %v1450
        %v1707 = vunpack.c.l.b16 %v1451
        %v1708 = vunpack.c.l.b16 %v1452
        %v1709 = vunpack.c.l.b16 %v1453
        %v1710 = vunpack.c.l.b16 %v1454
        %v1711 = vunpack.c.l.b16 %v1455
        %v1712 = vunpack.c.l.b16 %v1456
        %v1713 = vunpack.c.l.b16 %v1457
        %v1714 = vunpack.c.l.b16 %v1458
        %v1715 = vunpack.c.l.b16 %v1459
        %v1716 = vunpack.c.l.b16 %v1460
        %v1717 = vunpack.c.l.b16 %v1461
        %v1718 = vunpack.c.l.b16 %v1462
        %v1719 = vunpack.c.l.b16 %v1463
        %v1720 = vunpack.c.l.b16 %v1464
        %v1721 = vunpack.c.l.b16 %v1465
        %v1722 = vunpack.c.l.b16 %v1466
        %v1723 = vunpack.c.l.b16 %v1467
        %v1724 = vunpack.c.l.b16 %v1468
        %v1725 = vunpack.c.l.b16 %v1469
        %v1726 = vunpack.c.l.b16 %v1470
        %v1727 = vunpack.c.l.b16 %v1471
        %v1728 = vunpack.c.l.b16 %v1472
        %v1729 = vunpack.c.l.b16 %v1473
        %v1730 = vunpack.c.l.b16 %v1474
        %v1731 = vunpack.c.l.b16 %v1475
        %v1732 = vunpack.c.l.b16 %v1476
        %v1733 = vunpack.c.l.b16 %v1477
        %v1734 = vunpack.c.l.b16 %v1478
        %v1735 = vunpack.c.l.b16 %v1479
        %v1736 = vunpack.c.l.b16 %v1480
        %v1737 = vunpack.c.l.b16 %v1481
        %v1738 = vunpack.c.l.b16 %v1482
        %v1739 = vunpack.c.l.b16 %v1483
        %v1740 = vunpack.c.l.b16 %v1484
        %v1741 = vunpack.c.l.b16 %v1485
        %v1742 = vunpack.c.l.b16 %v1486
        %v1743 = vunpack.c.l.b16 %v1487
        %v1744 = vunpack.c.l.b16 %v1488
        %v1745 = vunpack.c.l.b16 %v1489
        %v1746 = vunpack.c.l.b16 %v1490
        %v1747 = vunpack.c.l.b16 %v1491
        %v1748 = vunpack.c.l.b16 %v1492
        %v1749 = vunpack.c.l.b16 %v1493
        %v1750 = vunpack.c.l.b16 %v1494
        %v1751 = vunpack.c.l.b16 %v1495
        %v1752 = vunpack.c.l.b16 %v1496
        %v1753 = vunpack.c.l.b16 %v1497
        %v1754 = vunpack.c.l.b16 %v1498
        %v1755 = vunpack.c.l.b16 %v1499
        %v1756 = vunpack.c.l.b16 %v1500
        %v1757 = vunpack.c.l.b16 %v1501
        %v1758 = vunpack.c.l.b16 %v1502
        %v1759 = vunpack.c.l.b16 %v1503
        %v1760 = vunpack.c.l.b16 %v1504
        %v1761 = vunpack.c.l.b16 %v1505
        %v1762 = vunpack.c.l.b16 %v1506
        %v1763 = vunpack.c.l.b16 %v1507
        %v1764 = vunpack.c.l.b16 %v1508
        %v1765 = vunpack.c.l.b16 %v1509
        %v1766 = vunpack.c.l.b16 %v1510
        %v1767 = vunpack.c.l.b16 %v1511
        %v1768 = vunpack.c.l.b16 %v1512
        %v1769 = vunpack.c.l.b16 %v1513
        %v1770 = vunpack.c.l.b16 %v1514
        %v1771 = vunpack.c.l.b16 %v1515
        %v1772 = vunpack.c.l.b16 %v1516
        %v1773 = vunpack.c.l.b16 %v1517
        %v1774 = vunpack.c.l.b16 %v1518
        %v1775 = vunpack.c.l.b16 %v1519
        %v1776 = vpack.c.b16 %v1649, %v1648
        %v1777 = vpack.c.b16 %v1651, %v1650
        %v1778 = vpack.c.b16 %v1653, %v1652
        %v1779 = vpack.c.b16 %v1655, %v1654
        %v1780 = vpack.c.b16 %v1657, %v1656
        %v1781 = vpack.c.b16 %v1659, %v1658
        %v1782 = vpack.c.b16 %v1661, %v1660
        %v1783 = vpack.c.b16 %v1663, %v1662
        %v1784 = vpack.c.b16 %v1665, %v1664
        %v1785 = vpack.c.b16 %v1667, %v1666
        %v1786 = vpack.c.b16 %v1669, %v1668
        %v1787 = vpack.c.b16 %v1671, %v1670
        %v1788 = vpack.c.b16 %v1673, %v1672
        %v1789 = vpack.c.b16 %v1675, %v1674
        %v1790 = vpack.c.b16 %v1677, %v1676
        %v1791 = vpack.c.b16 %v1679, %v1678
        %v1792 = vpack.c.b16 %v1681, %v1680
        %v1793 = vpack.c.b16 %v1683, %v1682
        %v1794 = vpack.c.b16 %v1685, %v1684
        %v1795 = vpack.c.b16 %v1687, %v1686
        %v1796 = vpack.c.b16 %v1689, %v1688
        %v1797 = vpack.c.b16 %v1691, %v1690
        %v1798 = vpack.c.b16 %v1693, %v1692
        %v1799 = vpack.c.b16 %v1695, %v1694
        %v1800 = vpack.c.b16 %v1697, %v1696
        %v1801 = vpack.c.b16 %v1699, %v1698
        %v1802 = vpack.c.b16 %v1701, %v1700
        %v1803 = vpack.c.b16 %v1703, %v1702
        %v1804 = vpack.c.b16 %v1705, %v1704
        %v1805 = vpack.c.b16 %v1707, %v1706
        %v1806 = vpack.c.b16 %v1709, %v1708
        %v1807 = vpack.c.b16 %v1711, %v1710
        %v1808 = vpack.c.b16 %v1713, %v1712
        %v1809 = vpack.c.b16 %v1715, %v1714
        %v1810 = vpack.c.b16 %v1717, %v1716
        %v1811 = vpack.c.b16 %v1719, %v1718
        %v1812 = vpack.c.b16 %v1721, %v1720
        %v1813 = vpack.c.b16 %v1723, %v1722
        %v1814 = vpack.c.b16 %v1725, %v1724
        %v1815 = vpack.c.b16 %v1727, %v1726
        %v1816 = vpack.c.b16 %v1729, %v1728
        %v1817 = vpack.c.b16 %v1731, %v1730
        %v1818 = vpack.c.b16 %v1733, %v1732
        %v1819 = vpack.c.b16 %v1735, %v1734
        %v1820 = vpack.c.b16 %v1737, %v1736
        %v1821 = vpack.c.b16 %v1739, %v1738
        %v1822 = vpack.c.b16 %v1741, %v1740
        %v1823 = vpack.c.b16 %v1743, %v1742
        %v1824 = vpack.c.b16 %v1745, %v1744
        %v1825 = vpack.c.b16 %v1747, %v1746
        %v1826 = vpack.c.b16 %v1749, %v1748
        %v1827 = vpack.c.b16 %v1751, %v1750
        %v1828 = vpack.c.b16 %v1753, %v1752
        %v1829 = vpack.c.b16 %v1755, %v1754
        %v1830 = vpack.c.b16 %v1757, %v1756
        %v1831 = vpack.c.b16 %v1759, %v1758
        %v1832 = vpack.c.b16 %v1761, %v1760
        %v1833 = vpack.c.b16 %v1763, %v1762
        %v1834 = vpack.c.b16 %v1765, %v1764
        %v1835 = vpack.c.b16 %v1767, %v1766
        %v1836 = vpack.c.b16 %v1769, %v1768
        %v1837 = vpack.c.b16 %v1771, %v1770
        %v1838 = vpack.c.b16 %v1773, %v1772
        %v1839 = vpack.c.b16 %v1775, %v1774
        %v1841 = vsel %vm863, %v1776, 0
        %v1844 = vsel %vm863, %v1777, 0
        %v1847 = vsel %vm863, %v1778, 0
        %v1850 = vsel %vm863, %v1779, 0
        %v1853 = vsel %vm863, %v1780, 0
        %v1856 = vsel %vm863, %v1781, 0
        %v1859 = vsel %vm863, %v1782, 0
        %v1862 = vsel %vm863, %v1783, 0
        %v1865 = vsel %vm863, %v1784, 0
        %v1868 = vsel %vm863, %v1785, 0
        %v1871 = vsel %vm863, %v1786, 0
        %v1874 = vsel %vm863, %v1787, 0
        %v1877 = vsel %vm863, %v1788, 0
        %v1880 = vsel %vm863, %v1789, 0
        %v1883 = vsel %vm863, %v1790, 0
        %v1886 = vsel %vm863, %v1791, 0
        %v1889 = vsel %vm863, %v1792, 0
        %v1892 = vsel %vm863, %v1793, 0
        %v1895 = vsel %vm863, %v1794, 0
        %v1898 = vsel %vm863, %v1795, 0
        %v1901 = vsel %vm863, %v1796, 0
        %v1904 = vsel %vm863, %v1797, 0
        %v1907 = vsel %vm863, %v1798, 0
        %v1910 = vsel %vm863, %v1799, 0
        %v1913 = vsel %vm863, %v1800, 0
        %v1916 = vsel %vm863, %v1801, 0
        %v1919 = vsel %vm863, %v1802, 0
        %v1922 = vsel %vm863, %v1803, 0
        %v1925 = vsel %vm863, %v1804, 0
        %v1928 = vsel %vm863, %v1805, 0
        %v1931 = vsel %vm863, %v1806, 0
        %v1934 = vsel %vm863, %v1807, 0
        %v1937 = vsel %vm863, %v1808, 0
        %v1940 = vsel %vm863, %v1809, 0
        %v1943 = vsel %vm863, %v1810, 0
        %v1946 = vsel %vm863, %v1811, 0
        %v1949 = vsel %vm863, %v1812, 0
        %v1952 = vsel %vm863, %v1813, 0
        %v1955 = vsel %vm863, %v1814, 0
        %v1958 = vsel %vm863, %v1815, 0
        %v1961 = vsel %vm863, %v1816, 0
        %v1964 = vsel %vm863, %v1817, 0
        %v1967 = vsel %vm863, %v1818, 0
        %v1970 = vsel %vm863, %v1819, 0
        %v1973 = vsel %vm863, %v1820, 0
        %v1976 = vsel %vm863, %v1821, 0
        %v1979 = vsel %vm863, %v1822, 0
        %v1982 = vsel %vm863, %v1823, 0
        %v1985 = vsel %vm863, %v1824, 0
        %v1988 = vsel %vm863, %v1825, 0
        %v1991 = vsel %vm863, %v1826, 0
        %v1994 = vsel %vm863, %v1827, 0
        %v1997 = vsel %vm863, %v1828, 0
        %v2000 = vsel %vm863, %v1829, 0
        %v2003 = vsel %vm863, %v1830, 0
        %v2006 = vsel %vm863, %v1831, 0
        %v2009 = vsel %vm863, %v1832, 0
        %v2012 = vsel %vm863, %v1833, 0
        %v2015 = vsel %vm863, %v1834, 0
        %v2018 = vsel %vm863, %v1835, 0
        %v2021 = vsel %vm863, %v1836, 0
        %v2024 = vsel %vm863, %v1837, 0
        %v2027 = vsel %vm863, %v1838, 0
        %v2030 = vsel %vm863, %v1839, 0
        %2032 = vmatpush.bf16.msra.mxu0 0
        %2033 = vmatpush.bf16.msra.mxu0 0
        %2034 = vmatpush.bf16.msra.mxu0 0
        %2035 = vmatpush.bf16.msra.mxu0 0
        %2036 = vmatpush.bf16.msra.mxu0 0
        %2037 = vmatpush.bf16.msra.mxu0 0
        %2038 = vmatpush.bf16.msra.mxu0 %v1061
        %2039 = vmatpush.bf16.msra.mxu0 %v860
        %2040 = vmatmul.bf16.gmra.mxu0 %v1841
        %v2041 = vpop.f32.mrf.mxu0
        %v2042 = vadd.f32 0.0, %v2041
        %v2043 = vpop.f32.mrf.mxu0
        %v2044 = vadd.f32 0.0, %v2043
        %2045 = vmatmul.bf16.gmra.mxu0 %v1844
        %v2046 = vpop.f32.mrf.mxu0
        %v2047 = vadd.f32 0.0, %v2046
        %v2048 = vpop.f32.mrf.mxu0
        %v2049 = vadd.f32 0.0, %v2048
        %2050 = vmatmul.bf16.gmra.mxu0 %v1847
        %v2051 = vpop.f32.mrf.mxu0
        %v2052 = vadd.f32 0.0, %v2051
        %v2053 = vpop.f32.mrf.mxu0
        %v2054 = vadd.f32 0.0, %v2053
        %2055 = vmatmul.bf16.gmra.mxu0 %v1850
        %v2056 = vpop.f32.mrf.mxu0
        %v2057 = vadd.f32 0.0, %v2056
        %v2058 = vpop.f32.mrf.mxu0
        %v2059 = vadd.f32 0.0, %v2058
        %2060 = vmatmul.bf16.gmra.mxu0 %v1853
        %v2061 = vpop.f32.mrf.mxu0
        %v2062 = vadd.f32 0.0, %v2061
        %v2063 = vpop.f32.mrf.mxu0
        %v2064 = vadd.f32 0.0, %v2063
        %2065 = vmatmul.bf16.gmra.mxu0 %v1856
        %v2066 = vpop.f32.mrf.mxu0
        %v2067 = vadd.f32 0.0, %v2066
        %v2068 = vpop.f32.mrf.mxu0
        %v2069 = vadd.f32 0.0, %v2068
        %2070 = vmatmul.bf16.gmra.mxu0 %v1859
        %v2071 = vpop.f32.mrf.mxu0
        %v2072 = vadd.f32 0.0, %v2071
        %v2073 = vpop.f32.mrf.mxu0
        %v2074 = vadd.f32 0.0, %v2073
        %2075 = vmatmul.bf16.gmra.mxu0 %v1862
        %v2076 = vpop.f32.mrf.mxu0
        %v2077 = vadd.f32 0.0, %v2076
        %v2078 = vpop.f32.mrf.mxu0
        %v2079 = vadd.f32 0.0, %v2078
        %2080 = vmatmul.bf16.gmra.mxu0 %v1865
        %v2081 = vpop.f32.mrf.mxu0
        %v2082 = vadd.f32 0.0, %v2081
        %v2083 = vpop.f32.mrf.mxu0
        %v2084 = vadd.f32 0.0, %v2083
        %2085 = vmatmul.bf16.gmra.mxu0 %v1868
        %v2086 = vpop.f32.mrf.mxu0
        %v2087 = vadd.f32 0.0, %v2086
        %v2088 = vpop.f32.mrf.mxu0
        %v2089 = vadd.f32 0.0, %v2088
        %2090 = vmatmul.bf16.gmra.mxu0 %v1871
        %v2091 = vpop.f32.mrf.mxu0
        %v2092 = vadd.f32 0.0, %v2091
        %v2093 = vpop.f32.mrf.mxu0
        %v2094 = vadd.f32 0.0, %v2093
        %2095 = vmatmul.bf16.gmra.mxu0 %v1874
        %v2096 = vpop.f32.mrf.mxu0
        %v2097 = vadd.f32 0.0, %v2096
        %v2098 = vpop.f32.mrf.mxu0
        %v2099 = vadd.f32 0.0, %v2098
        %2100 = vmatmul.bf16.gmra.mxu0 %v1877
        %v2101 = vpop.f32.mrf.mxu0
        %v2102 = vadd.f32 0.0, %v2101
        %v2103 = vpop.f32.mrf.mxu0
        %v2104 = vadd.f32 0.0, %v2103
        %2105 = vmatmul.bf16.gmra.mxu0 %v1880
        %v2106 = vpop.f32.mrf.mxu0
        %v2107 = vadd.f32 0.0, %v2106
        %v2108 = vpop.f32.mrf.mxu0
        %v2109 = vadd.f32 0.0, %v2108
        %2110 = vmatmul.bf16.gmra.mxu0 %v1883
        %v2111 = vpop.f32.mrf.mxu0
        %v2112 = vadd.f32 0.0, %v2111
        %v2113 = vpop.f32.mrf.mxu0
        %v2114 = vadd.f32 0.0, %v2113
        %2115 = vmatmul.bf16.gmra.mxu0 %v1886
        %v2116 = vpop.f32.mrf.mxu0
        %v2117 = vadd.f32 0.0, %v2116
        %v2118 = vpop.f32.mrf.mxu0
        %v2119 = vadd.f32 0.0, %v2118
        %2120 = vmatmul.bf16.gmra.mxu0 %v1889
        %v2121 = vpop.f32.mrf.mxu0
        %v2122 = vadd.f32 0.0, %v2121
        %v2123 = vpop.f32.mrf.mxu0
        %v2124 = vadd.f32 0.0, %v2123
        %2125 = vmatmul.bf16.gmra.mxu0 %v1892
        %v2126 = vpop.f32.mrf.mxu0
        %v2127 = vadd.f32 0.0, %v2126
        %v2128 = vpop.f32.mrf.mxu0
        %v2129 = vadd.f32 0.0, %v2128
        %2130 = vmatmul.bf16.gmra.mxu0 %v1895
        %v2131 = vpop.f32.mrf.mxu0
        %v2132 = vadd.f32 0.0, %v2131
        %v2133 = vpop.f32.mrf.mxu0
        %v2134 = vadd.f32 0.0, %v2133
        %2135 = vmatmul.bf16.gmra.mxu0 %v1898
        %v2136 = vpop.f32.mrf.mxu0
        %v2137 = vadd.f32 0.0, %v2136
        %v2138 = vpop.f32.mrf.mxu0
        %v2139 = vadd.f32 0.0, %v2138
        %2140 = vmatmul.bf16.gmra.mxu0 %v1901
        %v2141 = vpop.f32.mrf.mxu0
        %v2142 = vadd.f32 0.0, %v2141
        %v2143 = vpop.f32.mrf.mxu0
        %v2144 = vadd.f32 0.0, %v2143
        %2145 = vmatmul.bf16.gmra.mxu0 %v1904
        %v2146 = vpop.f32.mrf.mxu0
        %v2147 = vadd.f32 0.0, %v2146
        %v2148 = vpop.f32.mrf.mxu0
        %v2149 = vadd.f32 0.0, %v2148
        %2150 = vmatmul.bf16.gmra.mxu0 %v1907
        %v2151 = vpop.f32.mrf.mxu0
        %v2152 = vadd.f32 0.0, %v2151
        %v2153 = vpop.f32.mrf.mxu0
        %v2154 = vadd.f32 0.0, %v2153
        %2155 = vmatmul.bf16.gmra.mxu0 %v1910
        %v2156 = vpop.f32.mrf.mxu0
        %v2157 = vadd.f32 0.0, %v2156
        %v2158 = vpop.f32.mrf.mxu0
        %v2159 = vadd.f32 0.0, %v2158
        %2160 = vmatmul.bf16.gmra.mxu0 %v1913
        %v2161 = vpop.f32.mrf.mxu0
        %v2162 = vadd.f32 0.0, %v2161
        %v2163 = vpop.f32.mrf.mxu0
        %v2164 = vadd.f32 0.0, %v2163
        %2165 = vmatmul.bf16.gmra.mxu0 %v1916
        %v2166 = vpop.f32.mrf.mxu0
        %v2167 = vadd.f32 0.0, %v2166
        %v2168 = vpop.f32.mrf.mxu0
        %v2169 = vadd.f32 0.0, %v2168
        %2170 = vmatmul.bf16.gmra.mxu0 %v1919
        %v2171 = vpop.f32.mrf.mxu0
        %v2172 = vadd.f32 0.0, %v2171
        %v2173 = vpop.f32.mrf.mxu0
        %v2174 = vadd.f32 0.0, %v2173
        %2175 = vmatmul.bf16.gmra.mxu0 %v1922
        %v2176 = vpop.f32.mrf.mxu0
        %v2177 = vadd.f32 0.0, %v2176
        %v2178 = vpop.f32.mrf.mxu0
        %v2179 = vadd.f32 0.0, %v2178
        %2180 = vmatmul.bf16.gmra.mxu0 %v1925
        %v2181 = vpop.f32.mrf.mxu0
        %v2182 = vadd.f32 0.0, %v2181
        %v2183 = vpop.f32.mrf.mxu0
        %v2184 = vadd.f32 0.0, %v2183
        %2185 = vmatmul.bf16.gmra.mxu0 %v1928
        %v2186 = vpop.f32.mrf.mxu0
        %v2187 = vadd.f32 0.0, %v2186
        %v2188 = vpop.f32.mrf.mxu0
        %v2189 = vadd.f32 0.0, %v2188
        %2190 = vmatmul.bf16.gmra.mxu0 %v1931
        %v2191 = vpop.f32.mrf.mxu0
        %v2192 = vadd.f32 0.0, %v2191
        %v2193 = vpop.f32.mrf.mxu0
        %v2194 = vadd.f32 0.0, %v2193
        %2195 = vmatmul.bf16.gmra.mxu0 %v1934
        %v2196 = vpop.f32.mrf.mxu0
        %v2197 = vadd.f32 0.0, %v2196
        %v2198 = vpop.f32.mrf.mxu0
        %v2199 = vadd.f32 0.0, %v2198
        %2200 = vmatmul.bf16.gmra.mxu0 %v1937
        %v2201 = vpop.f32.mrf.mxu0
        %v2202 = vadd.f32 0.0, %v2201
        %v2203 = vpop.f32.mrf.mxu0
        %v2204 = vadd.f32 0.0, %v2203
        %2205 = vmatmul.bf16.gmra.mxu0 %v1940
        %v2206 = vpop.f32.mrf.mxu0
        %v2207 = vadd.f32 0.0, %v2206
        %v2208 = vpop.f32.mrf.mxu0
        %v2209 = vadd.f32 0.0, %v2208
        %2210 = vmatmul.bf16.gmra.mxu0 %v1943
        %v2211 = vpop.f32.mrf.mxu0
        %v2212 = vadd.f32 0.0, %v2211
        %v2213 = vpop.f32.mrf.mxu0
        %v2214 = vadd.f32 0.0, %v2213
        %2215 = vmatmul.bf16.gmra.mxu0 %v1946
        %v2216 = vpop.f32.mrf.mxu0
        %v2217 = vadd.f32 0.0, %v2216
        %v2218 = vpop.f32.mrf.mxu0
        %v2219 = vadd.f32 0.0, %v2218
        %2220 = vmatmul.bf16.gmra.mxu0 %v1949
        %v2221 = vpop.f32.mrf.mxu0
        %v2222 = vadd.f32 0.0, %v2221
        %v2223 = vpop.f32.mrf.mxu0
        %v2224 = vadd.f32 0.0, %v2223
        %2225 = vmatmul.bf16.gmra.mxu0 %v1952
        %v2226 = vpop.f32.mrf.mxu0
        %v2227 = vadd.f32 0.0, %v2226
        %v2228 = vpop.f32.mrf.mxu0
        %v2229 = vadd.f32 0.0, %v2228
        %2230 = vmatmul.bf16.gmra.mxu0 %v1955
        %v2231 = vpop.f32.mrf.mxu0
        %v2232 = vadd.f32 0.0, %v2231
        %v2233 = vpop.f32.mrf.mxu0
        %v2234 = vadd.f32 0.0, %v2233
        %2235 = vmatmul.bf16.gmra.mxu0 %v1958
        %v2236 = vpop.f32.mrf.mxu0
        %v2237 = vadd.f32 0.0, %v2236
        %v2238 = vpop.f32.mrf.mxu0
        %v2239 = vadd.f32 0.0, %v2238
        %2240 = vmatmul.bf16.gmra.mxu0 %v1961
        %v2241 = vpop.f32.mrf.mxu0
        %v2242 = vadd.f32 0.0, %v2241
        %v2243 = vpop.f32.mrf.mxu0
        %v2244 = vadd.f32 0.0, %v2243
        %2245 = vmatmul.bf16.gmra.mxu0 %v1964
        %v2246 = vpop.f32.mrf.mxu0
        %v2247 = vadd.f32 0.0, %v2246
        %v2248 = vpop.f32.mrf.mxu0
        %v2249 = vadd.f32 0.0, %v2248
        %2250 = vmatmul.bf16.gmra.mxu0 %v1967
        %v2251 = vpop.f32.mrf.mxu0
        %v2252 = vadd.f32 0.0, %v2251
        %v2253 = vpop.f32.mrf.mxu0
        %v2254 = vadd.f32 0.0, %v2253
        %2255 = vmatmul.bf16.gmra.mxu0 %v1970
        %v2256 = vpop.f32.mrf.mxu0
        %v2257 = vadd.f32 0.0, %v2256
        %v2258 = vpop.f32.mrf.mxu0
        %v2259 = vadd.f32 0.0, %v2258
        %2260 = vmatmul.bf16.gmra.mxu0 %v1973
        %v2261 = vpop.f32.mrf.mxu0
        %v2262 = vadd.f32 0.0, %v2261
        %v2263 = vpop.f32.mrf.mxu0
        %v2264 = vadd.f32 0.0, %v2263
        %2265 = vmatmul.bf16.gmra.mxu0 %v1976
        %v2266 = vpop.f32.mrf.mxu0
        %v2267 = vadd.f32 0.0, %v2266
        %v2268 = vpop.f32.mrf.mxu0
        %v2269 = vadd.f32 0.0, %v2268
        %2270 = vmatmul.bf16.gmra.mxu0 %v1979
        %v2271 = vpop.f32.mrf.mxu0
        %v2272 = vadd.f32 0.0, %v2271
        %v2273 = vpop.f32.mrf.mxu0
        %v2274 = vadd.f32 0.0, %v2273
        %2275 = vmatmul.bf16.gmra.mxu0 %v1982
        %v2276 = vpop.f32.mrf.mxu0
        %v2277 = vadd.f32 0.0, %v2276
        %v2278 = vpop.f32.mrf.mxu0
        %v2279 = vadd.f32 0.0, %v2278
        %2280 = vmatmul.bf16.gmra.mxu0 %v1985
        %v2281 = vpop.f32.mrf.mxu0
        %v2282 = vadd.f32 0.0, %v2281
        %v2283 = vpop.f32.mrf.mxu0
        %v2284 = vadd.f32 0.0, %v2283
        %2285 = vmatmul.bf16.gmra.mxu0 %v1988
        %v2286 = vpop.f32.mrf.mxu0
        %v2287 = vadd.f32 0.0, %v2286
        %v2288 = vpop.f32.mrf.mxu0
        %v2289 = vadd.f32 0.0, %v2288
        %2290 = vmatmul.bf16.gmra.mxu0 %v1991
        %v2291 = vpop.f32.mrf.mxu0
        %v2292 = vadd.f32 0.0, %v2291
        %v2293 = vpop.f32.mrf.mxu0
        %v2294 = vadd.f32 0.0, %v2293
        %2295 = vmatmul.bf16.gmra.mxu0 %v1994
        %v2296 = vpop.f32.mrf.mxu0
        %v2297 = vadd.f32 0.0, %v2296
        %v2298 = vpop.f32.mrf.mxu0
        %v2299 = vadd.f32 0.0, %v2298
        %2300 = vmatmul.bf16.gmra.mxu0 %v1997
        %v2301 = vpop.f32.mrf.mxu0
        %v2302 = vadd.f32 0.0, %v2301
        %v2303 = vpop.f32.mrf.mxu0
        %v2304 = vadd.f32 0.0, %v2303
        %2305 = vmatmul.bf16.gmra.mxu0 %v2000
        %v2306 = vpop.f32.mrf.mxu0
        %v2307 = vadd.f32 0.0, %v2306
        %v2308 = vpop.f32.mrf.mxu0
        %v2309 = vadd.f32 0.0, %v2308
        %2310 = vmatmul.bf16.gmra.mxu0 %v2003
        %v2311 = vpop.f32.mrf.mxu0
        %v2312 = vadd.f32 0.0, %v2311
        %v2313 = vpop.f32.mrf.mxu0
        %v2314 = vadd.f32 0.0, %v2313
        %2315 = vmatmul.bf16.gmra.mxu0 %v2006
        %v2316 = vpop.f32.mrf.mxu0
        %v2317 = vadd.f32 0.0, %v2316
        %v2318 = vpop.f32.mrf.mxu0
        %v2319 = vadd.f32 0.0, %v2318
        %2320 = vmatmul.bf16.gmra.mxu0 %v2009
        %v2321 = vpop.f32.mrf.mxu0
        %v2322 = vadd.f32 0.0, %v2321
        %v2323 = vpop.f32.mrf.mxu0
        %v2324 = vadd.f32 0.0, %v2323
        %2325 = vmatmul.bf16.gmra.mxu0 %v2012
        %v2326 = vpop.f32.mrf.mxu0
        %v2327 = vadd.f32 0.0, %v2326
        %v2328 = vpop.f32.mrf.mxu0
        %v2329 = vadd.f32 0.0, %v2328
        %2330 = vmatmul.bf16.gmra.mxu0 %v2015
        %v2331 = vpop.f32.mrf.mxu0
        %v2332 = vadd.f32 0.0, %v2331
        %v2333 = vpop.f32.mrf.mxu0
        %v2334 = vadd.f32 0.0, %v2333
        %2335 = vmatmul.bf16.gmra.mxu0 %v2018
        %v2336 = vpop.f32.mrf.mxu0
        %v2337 = vadd.f32 0.0, %v2336
        %v2338 = vpop.f32.mrf.mxu0
        %v2339 = vadd.f32 0.0, %v2338
        %2340 = vmatmul.bf16.gmra.mxu0 %v2021
        %v2341 = vpop.f32.mrf.mxu0
        %v2342 = vadd.f32 0.0, %v2341
        %v2343 = vpop.f32.mrf.mxu0
        %v2344 = vadd.f32 0.0, %v2343
        %2345 = vmatmul.bf16.gmra.mxu0 %v2024
        %v2346 = vpop.f32.mrf.mxu0
        %v2347 = vadd.f32 0.0, %v2346
        %v2348 = vpop.f32.mrf.mxu0
        %v2349 = vadd.f32 0.0, %v2348
        %2350 = vmatmul.bf16.gmra.mxu0 %v2027
        %v2351 = vpop.f32.mrf.mxu0
        %v2352 = vadd.f32 0.0, %v2351
        %v2353 = vpop.f32.mrf.mxu0
        %v2354 = vadd.f32 0.0, %v2353
        %2355 = vmatmul.bf16.gmra.mxu0 %v2030
        %v2356 = vpop.f32.mrf.mxu0
        %v2357 = vadd.f32 0.0, %v2356
        %v2358 = vpop.f32.mrf.mxu0
        %v2359 = vadd.f32 0.0, %v2358
        %2360 = vdwg.mxu0
        %v2361 = vmax.f32 %v1073, %v2042
        %v2362 = vmax.f32 %v1075, %v2044
        %v2363 = vmax.f32 %v1078, %v2047
        %v2364 = vmax.f32 %v1080, %v2049
        %v2365 = vmax.f32 %v1083, %v2052
        %v2366 = vmax.f32 %v1085, %v2054
        %v2367 = vmax.f32 %v1088, %v2057
        %v2368 = vmax.f32 %v1090, %v2059
        %v2369 = vmax.f32 %v1093, %v2062
        %v2370 = vmax.f32 %v1095, %v2064
        %v2371 = vmax.f32 %v1098, %v2067
        %v2372 = vmax.f32 %v1100, %v2069
        %v2373 = vmax.f32 %v1103, %v2072
        %v2374 = vmax.f32 %v1105, %v2074
        %v2375 = vmax.f32 %v1108, %v2077
        %v2376 = vmax.f32 %v1110, %v2079
        %v2377 = vmax.f32 %v1113, %v2082
        %v2378 = vmax.f32 %v1115, %v2084
        %v2379 = vmax.f32 %v1118, %v2087
        %v2380 = vmax.f32 %v1120, %v2089
        %v2381 = vmax.f32 %v1123, %v2092
        %v2382 = vmax.f32 %v1125, %v2094
        %v2383 = vmax.f32 %v1128, %v2097
        %v2384 = vmax.f32 %v1130, %v2099
        %v2385 = vmax.f32 %v1133, %v2102
        %v2386 = vmax.f32 %v1135, %v2104
        %v2387 = vmax.f32 %v1138, %v2107
        %v2388 = vmax.f32 %v1140, %v2109
        %v2389 = vmax.f32 %v1143, %v2112
        %v2390 = vmax.f32 %v1145, %v2114
        %v2391 = vmax.f32 %v1148, %v2117
        %v2392 = vmax.f32 %v1150, %v2119
        %v2393 = vmax.f32 %v1153, %v2122
        %v2394 = vmax.f32 %v1155, %v2124
        %v2395 = vmax.f32 %v1158, %v2127
        %v2396 = vmax.f32 %v1160, %v2129
        %v2397 = vmax.f32 %v1163, %v2132
        %v2398 = vmax.f32 %v1165, %v2134
        %v2399 = vmax.f32 %v1168, %v2137
        %v2400 = vmax.f32 %v1170, %v2139
        %v2401 = vmax.f32 %v1173, %v2142
        %v2402 = vmax.f32 %v1175, %v2144
        %v2403 = vmax.f32 %v1178, %v2147
        %v2404 = vmax.f32 %v1180, %v2149
        %v2405 = vmax.f32 %v1183, %v2152
        %v2406 = vmax.f32 %v1185, %v2154
        %v2407 = vmax.f32 %v1188, %v2157
        %v2408 = vmax.f32 %v1190, %v2159
        %v2409 = vmax.f32 %v1193, %v2162
        %v2410 = vmax.f32 %v1195, %v2164
        %v2411 = vmax.f32 %v1198, %v2167
        %v2412 = vmax.f32 %v1200, %v2169
        %v2413 = vmax.f32 %v1203, %v2172
        %v2414 = vmax.f32 %v1205, %v2174
        %v2415 = vmax.f32 %v1208, %v2177
        %v2416 = vmax.f32 %v1210, %v2179
        %v2417 = vmax.f32 %v1213, %v2182
        %v2418 = vmax.f32 %v1215, %v2184
        %v2419 = vmax.f32 %v1218, %v2187
        %v2420 = vmax.f32 %v1220, %v2189
        %v2421 = vmax.f32 %v1223, %v2192
        %v2422 = vmax.f32 %v1225, %v2194
        %v2423 = vmax.f32 %v1228, %v2197
        %v2424 = vmax.f32 %v1230, %v2199
        %v2425 = vmax.f32 %v1233, %v2202
        %v2426 = vmax.f32 %v1235, %v2204
        %v2427 = vmax.f32 %v1238, %v2207
        %v2428 = vmax.f32 %v1240, %v2209
        %v2429 = vmax.f32 %v1243, %v2212
        %v2430 = vmax.f32 %v1245, %v2214
        %v2431 = vmax.f32 %v1248, %v2217
        %v2432 = vmax.f32 %v1250, %v2219
        %v2433 = vmax.f32 %v1253, %v2222
        %v2434 = vmax.f32 %v1255, %v2224
        %v2435 = vmax.f32 %v1258, %v2227
        %v2436 = vmax.f32 %v1260, %v2229
        %v2437 = vmax.f32 %v1263, %v2232
        %v2438 = vmax.f32 %v1265, %v2234
        %v2439 = vmax.f32 %v1268, %v2237
        %v2440 = vmax.f32 %v1270, %v2239
        %v2441 = vmax.f32 %v1273, %v2242
        %v2442 = vmax.f32 %v1275, %v2244
        %v2443 = vmax.f32 %v1278, %v2247
        %v2444 = vmax.f32 %v1280, %v2249
        %v2445 = vmax.f32 %v1283, %v2252
        %v2446 = vmax.f32 %v1285, %v2254
        %v2447 = vmax.f32 %v1288, %v2257
        %v2448 = vmax.f32 %v1290, %v2259
        %v2449 = vmax.f32 %v1293, %v2262
        %v2450 = vmax.f32 %v1295, %v2264
        %v2451 = vmax.f32 %v1298, %v2267
        %v2452 = vmax.f32 %v1300, %v2269
        %v2453 = vmax.f32 %v1303, %v2272
        %v2454 = vmax.f32 %v1305, %v2274
        %v2455 = vmax.f32 %v1308, %v2277
        %v2456 = vmax.f32 %v1310, %v2279
        %v2457 = vmax.f32 %v1313, %v2282
        %v2458 = vmax.f32 %v1315, %v2284
        %v2459 = vmax.f32 %v1318, %v2287
        %v2460 = vmax.f32 %v1320, %v2289
        %v2461 = vmax.f32 %v1323, %v2292
        %v2462 = vmax.f32 %v1325, %v2294
        %v2463 = vmax.f32 %v1328, %v2297
        %v2464 = vmax.f32 %v1330, %v2299
        %v2465 = vmax.f32 %v1333, %v2302
        %v2466 = vmax.f32 %v1335, %v2304
        %v2467 = vmax.f32 %v1338, %v2307
        %v2468 = vmax.f32 %v1340, %v2309
        %v2469 = vmax.f32 %v1343, %v2312
        %v2470 = vmax.f32 %v1345, %v2314
        %v2471 = vmax.f32 %v1348, %v2317
        %v2472 = vmax.f32 %v1350, %v2319
        %v2473 = vmax.f32 %v1353, %v2322
        %v2474 = vmax.f32 %v1355, %v2324
        %v2475 = vmax.f32 %v1358, %v2327
        %v2476 = vmax.f32 %v1360, %v2329
        %v2477 = vmax.f32 %v1363, %v2332
        %v2478 = vmax.f32 %v1365, %v2334
        %v2479 = vmax.f32 %v1368, %v2337
        %v2480 = vmax.f32 %v1370, %v2339
        %v2481 = vmax.f32 %v1373, %v2342
        %v2482 = vmax.f32 %v1375, %v2344
        %v2483 = vmax.f32 %v1378, %v2347
        %v2484 = vmax.f32 %v1380, %v2349
        %v2485 = vmax.f32 %v1383, %v2352
        %v2486 = vmax.f32 %v1385, %v2354
        %v2487 = vmax.f32 %v1388, %v2357
        %v2488 = vmax.f32 %v1390, %v2359
        %v2489 = vld [vmem:[%s374] sm:$0xf]
        %v2490 = vld [vmem:[%s374 + $0x4] sm:$0xf]
        %v2491 = vld [vmem:[%s374 + $0x8] sm:$0xf]
        %v2492 = vld [vmem:[%s374 + $0xc] sm:$0xf]
        %v2493 = vld [vmem:[%s374 + $0x10] sm:$0xf]
        %v2494 = vld [vmem:[%s374 + $0x14] sm:$0xf]
        %v2495 = vld [vmem:[%s374 + $0x18] sm:$0xf]
        %v2496 = vld [vmem:[%s374 + $0x1c] sm:$0xf]
        %v2497 = vld [vmem:[%s374 + $0x20] sm:$0xf]
        %v2498 = vld [vmem:[%s374 + $0x24] sm:$0xf]
        %v2499 = vld [vmem:[%s374 + $0x28] sm:$0xf]
        %v2500 = vld [vmem:[%s374 + $0x2c] sm:$0xf]
        %v2501 = vld [vmem:[%s374 + $0x30] sm:$0xf]
        %v2502 = vld [vmem:[%s374 + $0x34] sm:$0xf]
        %v2503 = vld [vmem:[%s374 + $0x38] sm:$0xf]
        %v2504 = vld [vmem:[%s374 + $0x3c] sm:$0xf]
        %v2505 = vld [vmem:[%s374 + $0x40] sm:$0xf]
        %v2506 = vld [vmem:[%s374 + $0x44] sm:$0xf]
        %v2507 = vld [vmem:[%s374 + $0x48] sm:$0xf]
        %v2508 = vld [vmem:[%s374 + $0x4c] sm:$0xf]
        %v2509 = vld [vmem:[%s374 + $0x50] sm:$0xf]
        %v2510 = vld [vmem:[%s374 + $0x54] sm:$0xf]
        %v2511 = vld [vmem:[%s374 + $0x58] sm:$0xf]
        %v2512 = vld [vmem:[%s374 + $0x5c] sm:$0xf]
        %v2513 = vld [vmem:[%s374 + $0x60] sm:$0xf]
        %v2514 = vld [vmem:[%s374 + $0x64] sm:$0xf]
        %v2515 = vld [vmem:[%s374 + $0x68] sm:$0xf]
        %v2516 = vld [vmem:[%s374 + $0x6c] sm:$0xf]
        %v2517 = vld [vmem:[%s374 + $0x70] sm:$0xf]
        %v2518 = vld [vmem:[%s374 + $0x74] sm:$0xf]
        %v2519 = vld [vmem:[%s374 + $0x78] sm:$0xf]
        %v2520 = vld [vmem:[%s374 + $0x7c] sm:$0xf]
        %v2521 = vld [vmem:[%s374 + $0x80] sm:$0xf]
        %v2522 = vld [vmem:[%s374 + $0x84] sm:$0xf]
        %v2523 = vld [vmem:[%s374 + $0x88] sm:$0xf]
        %v2524 = vld [vmem:[%s374 + $0x8c] sm:$0xf]
        %v2525 = vld [vmem:[%s374 + $0x90] sm:$0xf]
        %v2526 = vld [vmem:[%s374 + $0x94] sm:$0xf]
        %v2527 = vld [vmem:[%s374 + $0x98] sm:$0xf]
        %v2528 = vld [vmem:[%s374 + $0x9c] sm:$0xf]
        %v2529 = vld [vmem:[%s374 + $0xa0] sm:$0xf]
        %v2530 = vld [vmem:[%s374 + $0xa4] sm:$0xf]
        %v2531 = vld [vmem:[%s374 + $0xa8] sm:$0xf]
        %v2532 = vld [vmem:[%s374 + $0xac] sm:$0xf]
        %v2533 = vld [vmem:[%s374 + $0xb0] sm:$0xf]
        %v2534 = vld [vmem:[%s374 + $0xb4] sm:$0xf]
        %v2535 = vld [vmem:[%s374 + $0xb8] sm:$0xf]
        %v2536 = vld [vmem:[%s374 + $0xbc] sm:$0xf]
        %v2537 = vld [vmem:[%s374 + $0xc0] sm:$0xf]
        %v2538 = vld [vmem:[%s374 + $0xc4] sm:$0xf]
        %v2539 = vld [vmem:[%s374 + $0xc8] sm:$0xf]
        %v2540 = vld [vmem:[%s374 + $0xcc] sm:$0xf]
        %v2541 = vld [vmem:[%s374 + $0xd0] sm:$0xf]
        %v2542 = vld [vmem:[%s374 + $0xd4] sm:$0xf]
        %v2543 = vld [vmem:[%s374 + $0xd8] sm:$0xf]
        %v2544 = vld [vmem:[%s374 + $0xdc] sm:$0xf]
        %v2545 = vld [vmem:[%s374 + $0xe0] sm:$0xf]
        %v2546 = vld [vmem:[%s374 + $0xe4] sm:$0xf]
        %v2547 = vld [vmem:[%s374 + $0xe8] sm:$0xf]
        %v2548 = vld [vmem:[%s374 + $0xec] sm:$0xf]
        %v2549 = vld [vmem:[%s374 + $0xf0] sm:$0xf]
        %v2550 = vld [vmem:[%s374 + $0xf4] sm:$0xf]
        %v2551 = vld [vmem:[%s374 + $0xf8] sm:$0xf]
        %v2552 = vld [vmem:[%s374 + $0xfc] sm:$0xf]
        %v2553 = vld [vmem:[%s374 + $0x100] sm:$0xf]
        %v2554 = vld [vmem:[%s374 + $0x104] sm:$0xf]
        %v2555 = vld [vmem:[%s374 + $0x108] sm:$0xf]
        %v2556 = vld [vmem:[%s374 + $0x10c] sm:$0xf]
        %v2557 = vld [vmem:[%s374 + $0x110] sm:$0xf]
        %v2558 = vld [vmem:[%s374 + $0x114] sm:$0xf]
        %v2559 = vld [vmem:[%s374 + $0x118] sm:$0xf]
        %v2560 = vld [vmem:[%s374 + $0x11c] sm:$0xf]
        %v2561 = vld [vmem:[%s374 + $0x120] sm:$0xf]
        %v2562 = vld [vmem:[%s374 + $0x124] sm:$0xf]
        %v2563 = vld [vmem:[%s374 + $0x128] sm:$0xf]
        %v2564 = vld [vmem:[%s374 + $0x12c] sm:$0xf]
        %v2565 = vld [vmem:[%s374 + $0x130] sm:$0xf]
        %v2566 = vld [vmem:[%s374 + $0x134] sm:$0xf]
        %v2567 = vld [vmem:[%s374 + $0x138] sm:$0xf]
        %v2568 = vld [vmem:[%s374 + $0x13c] sm:$0xf]
        %v2569 = vld [vmem:[%s374 + $0x140] sm:$0xf]
        %v2570 = vld [vmem:[%s374 + $0x144] sm:$0xf]
        %v2571 = vld [vmem:[%s374 + $0x148] sm:$0xf]
        %v2572 = vld [vmem:[%s374 + $0x14c] sm:$0xf]
        %v2573 = vld [vmem:[%s374 + $0x150] sm:$0xf]
        %v2574 = vld [vmem:[%s374 + $0x154] sm:$0xf]
        %v2575 = vld [vmem:[%s374 + $0x158] sm:$0xf]
        %v2576 = vld [vmem:[%s374 + $0x15c] sm:$0xf]
        %v2577 = vld [vmem:[%s374 + $0x160] sm:$0xf]
        %v2578 = vld [vmem:[%s374 + $0x164] sm:$0xf]
        %v2579 = vld [vmem:[%s374 + $0x168] sm:$0xf]
        %v2580 = vld [vmem:[%s374 + $0x16c] sm:$0xf]
        %v2581 = vld [vmem:[%s374 + $0x170] sm:$0xf]
        %v2582 = vld [vmem:[%s374 + $0x174] sm:$0xf]
        %v2583 = vld [vmem:[%s374 + $0x178] sm:$0xf]
        %v2584 = vld [vmem:[%s374 + $0x17c] sm:$0xf]
        %v2585 = vld [vmem:[%s374 + $0x180] sm:$0xf]
        %v2586 = vld [vmem:[%s374 + $0x184] sm:$0xf]
        %v2587 = vld [vmem:[%s374 + $0x188] sm:$0xf]
        %v2588 = vld [vmem:[%s374 + $0x18c] sm:$0xf]
        %v2589 = vld [vmem:[%s374 + $0x190] sm:$0xf]
        %v2590 = vld [vmem:[%s374 + $0x194] sm:$0xf]
        %v2591 = vld [vmem:[%s374 + $0x198] sm:$0xf]
        %v2592 = vld [vmem:[%s374 + $0x19c] sm:$0xf]
        %v2593 = vld [vmem:[%s374 + $0x1a0] sm:$0xf]
        %v2594 = vld [vmem:[%s374 + $0x1a4] sm:$0xf]
        %v2595 = vld [vmem:[%s374 + $0x1a8] sm:$0xf]
        %v2596 = vld [vmem:[%s374 + $0x1ac] sm:$0xf]
        %v2597 = vld [vmem:[%s374 + $0x1b0] sm:$0xf]
        %v2598 = vld [vmem:[%s374 + $0x1b4] sm:$0xf]
        %v2599 = vld [vmem:[%s374 + $0x1b8] sm:$0xf]
        %v2600 = vld [vmem:[%s374 + $0x1bc] sm:$0xf]
        %v2601 = vld [vmem:[%s374 + $0x1c0] sm:$0xf]
        %v2602 = vld [vmem:[%s374 + $0x1c4] sm:$0xf]
        %v2603 = vld [vmem:[%s374 + $0x1c8] sm:$0xf]
        %v2604 = vld [vmem:[%s374 + $0x1cc] sm:$0xf]
        %v2605 = vld [vmem:[%s374 + $0x1d0] sm:$0xf]
        %v2606 = vld [vmem:[%s374 + $0x1d4] sm:$0xf]
        %v2607 = vld [vmem:[%s374 + $0x1d8] sm:$0xf]
        %v2608 = vld [vmem:[%s374 + $0x1dc] sm:$0xf]
        %v2609 = vld [vmem:[%s374 + $0x1e0] sm:$0xf]
        %v2610 = vld [vmem:[%s374 + $0x1e4] sm:$0xf]
        %v2611 = vld [vmem:[%s374 + $0x1e8] sm:$0xf]
        %v2612 = vld [vmem:[%s374 + $0x1ec] sm:$0xf]
        %v2613 = vld [vmem:[%s374 + $0x1f0] sm:$0xf]
        %v2614 = vld [vmem:[%s374 + $0x1f4] sm:$0xf]
        %v2615 = vld [vmem:[%s374 + $0x1f8] sm:$0xf]
        %v2616 = vld [vmem:[%s374 + $0x1fc] sm:$0xf]
        %v2745 = vunpack.c.l.b16 %v2489
        %v2746 = vunpack.c.l.b16 %v2490
        %v2747 = vunpack.c.l.b16 %v2491
        %v2748 = vunpack.c.l.b16 %v2492
        %v2749 = vunpack.c.l.b16 %v2493
        %v2750 = vunpack.c.l.b16 %v2494
        %v2751 = vunpack.c.l.b16 %v2495
        %v2752 = vunpack.c.l.b16 %v2496
        %v2753 = vunpack.c.l.b16 %v2497
        %v2754 = vunpack.c.l.b16 %v2498
        %v2755 = vunpack.c.l.b16 %v2499
        %v2756 = vunpack.c.l.b16 %v2500
        %v2757 = vunpack.c.l.b16 %v2501
        %v2758 = vunpack.c.l.b16 %v2502
        %v2759 = vunpack.c.l.b16 %v2503
        %v2760 = vunpack.c.l.b16 %v2504
        %v2761 = vunpack.c.l.b16 %v2505
        %v2762 = vunpack.c.l.b16 %v2506
        %v2763 = vunpack.c.l.b16 %v2507
        %v2764 = vunpack.c.l.b16 %v2508
        %v2765 = vunpack.c.l.b16 %v2509
        %v2766 = vunpack.c.l.b16 %v2510
        %v2767 = vunpack.c.l.b16 %v2511
        %v2768 = vunpack.c.l.b16 %v2512
        %v2769 = vunpack.c.l.b16 %v2513
        %v2770 = vunpack.c.l.b16 %v2514
        %v2771 = vunpack.c.l.b16 %v2515
        %v2772 = vunpack.c.l.b16 %v2516
        %v2773 = vunpack.c.l.b16 %v2517
        %v2774 = vunpack.c.l.b16 %v2518
        %v2775 = vunpack.c.l.b16 %v2519
        %v2776 = vunpack.c.l.b16 %v2520
        %v2777 = vunpack.c.l.b16 %v2521
        %v2778 = vunpack.c.l.b16 %v2522
        %v2779 = vunpack.c.l.b16 %v2523
        %v2780 = vunpack.c.l.b16 %v2524
        %v2781 = vunpack.c.l.b16 %v2525
        %v2782 = vunpack.c.l.b16 %v2526
        %v2783 = vunpack.c.l.b16 %v2527
        %v2784 = vunpack.c.l.b16 %v2528
        %v2785 = vunpack.c.l.b16 %v2529
        %v2786 = vunpack.c.l.b16 %v2530
        %v2787 = vunpack.c.l.b16 %v2531
        %v2788 = vunpack.c.l.b16 %v2532
        %v2789 = vunpack.c.l.b16 %v2533
        %v2790 = vunpack.c.l.b16 %v2534
        %v2791 = vunpack.c.l.b16 %v2535
        %v2792 = vunpack.c.l.b16 %v2536
        %v2793 = vunpack.c.l.b16 %v2537
        %v2794 = vunpack.c.l.b16 %v2538
        %v2795 = vunpack.c.l.b16 %v2539
        %v2796 = vunpack.c.l.b16 %v2540
        %v2797 = vunpack.c.l.b16 %v2541
        %v2798 = vunpack.c.l.b16 %v2542
        %v2799 = vunpack.c.l.b16 %v2543
        %v2800 = vunpack.c.l.b16 %v2544
        %v2801 = vunpack.c.l.b16 %v2545
        %v2802 = vunpack.c.l.b16 %v2546
        %v2803 = vunpack.c.l.b16 %v2547
        %v2804 = vunpack.c.l.b16 %v2548
        %v2805 = vunpack.c.l.b16 %v2549
        %v2806 = vunpack.c.l.b16 %v2550
        %v2807 = vunpack.c.l.b16 %v2551
        %v2808 = vunpack.c.l.b16 %v2552
        %v2809 = vunpack.c.l.b16 %v2553
        %v2810 = vunpack.c.l.b16 %v2554
        %v2811 = vunpack.c.l.b16 %v2555
        %v2812 = vunpack.c.l.b16 %v2556
        %v2813 = vunpack.c.l.b16 %v2557
        %v2814 = vunpack.c.l.b16 %v2558
        %v2815 = vunpack.c.l.b16 %v2559
        %v2816 = vunpack.c.l.b16 %v2560
        %v2817 = vunpack.c.l.b16 %v2561
        %v2818 = vunpack.c.l.b16 %v2562
        %v2819 = vunpack.c.l.b16 %v2563
        %v2820 = vunpack.c.l.b16 %v2564
        %v2821 = vunpack.c.l.b16 %v2565
        %v2822 = vunpack.c.l.b16 %v2566
        %v2823 = vunpack.c.l.b16 %v2567
        %v2824 = vunpack.c.l.b16 %v2568
        %v2825 = vunpack.c.l.b16 %v2569
        %v2826 = vunpack.c.l.b16 %v2570
        %v2827 = vunpack.c.l.b16 %v2571
        %v2828 = vunpack.c.l.b16 %v2572
        %v2829 = vunpack.c.l.b16 %v2573
        %v2830 = vunpack.c.l.b16 %v2574
        %v2831 = vunpack.c.l.b16 %v2575
        %v2832 = vunpack.c.l.b16 %v2576
        %v2833 = vunpack.c.l.b16 %v2577
        %v2834 = vunpack.c.l.b16 %v2578
        %v2835 = vunpack.c.l.b16 %v2579
        %v2836 = vunpack.c.l.b16 %v2580
        %v2837 = vunpack.c.l.b16 %v2581
        %v2838 = vunpack.c.l.b16 %v2582
        %v2839 = vunpack.c.l.b16 %v2583
        %v2840 = vunpack.c.l.b16 %v2584
        %v2841 = vunpack.c.l.b16 %v2585
        %v2842 = vunpack.c.l.b16 %v2586
        %v2843 = vunpack.c.l.b16 %v2587
        %v2844 = vunpack.c.l.b16 %v2588
        %v2845 = vunpack.c.l.b16 %v2589
        %v2846 = vunpack.c.l.b16 %v2590
        %v2847 = vunpack.c.l.b16 %v2591
        %v2848 = vunpack.c.l.b16 %v2592
        %v2849 = vunpack.c.l.b16 %v2593
        %v2850 = vunpack.c.l.b16 %v2594
        %v2851 = vunpack.c.l.b16 %v2595
        %v2852 = vunpack.c.l.b16 %v2596
        %v2853 = vunpack.c.l.b16 %v2597
        %v2854 = vunpack.c.l.b16 %v2598
        %v2855 = vunpack.c.l.b16 %v2599
        %v2856 = vunpack.c.l.b16 %v2600
        %v2857 = vunpack.c.l.b16 %v2601
        %v2858 = vunpack.c.l.b16 %v2602
        %v2859 = vunpack.c.l.b16 %v2603
        %v2860 = vunpack.c.l.b16 %v2604
        %v2861 = vunpack.c.l.b16 %v2605
        %v2862 = vunpack.c.l.b16 %v2606
        %v2863 = vunpack.c.l.b16 %v2607
        %v2864 = vunpack.c.l.b16 %v2608
        %v2865 = vunpack.c.l.b16 %v2609
        %v2866 = vunpack.c.l.b16 %v2610
        %v2867 = vunpack.c.l.b16 %v2611
        %v2868 = vunpack.c.l.b16 %v2612
        %v2869 = vunpack.c.l.b16 %v2613
        %v2870 = vunpack.c.l.b16 %v2614
        %v2871 = vunpack.c.l.b16 %v2615
        %v2872 = vunpack.c.l.b16 %v2616
        %v2873 = vpack.c.b16 %v2746, %v2745
        %v2874 = vpack.c.b16 %v2748, %v2747
        %v2875 = vpack.c.b16 %v2750, %v2749
        %v2876 = vpack.c.b16 %v2752, %v2751
        %v2877 = vpack.c.b16 %v2754, %v2753
        %v2878 = vpack.c.b16 %v2756, %v2755
        %v2879 = vpack.c.b16 %v2758, %v2757
        %v2880 = vpack.c.b16 %v2760, %v2759
        %v2881 = vpack.c.b16 %v2762, %v2761
        %v2882 = vpack.c.b16 %v2764, %v2763
        %v2883 = vpack.c.b16 %v2766, %v2765
        %v2884 = vpack.c.b16 %v2768, %v2767
        %v2885 = vpack.c.b16 %v2770, %v2769
        %v2886 = vpack.c.b16 %v2772, %v2771
        %v2887 = vpack.c.b16 %v2774, %v2773
        %v2888 = vpack.c.b16 %v2776, %v2775
        %v2889 = vpack.c.b16 %v2778, %v2777
        %v2890 = vpack.c.b16 %v2780, %v2779
        %v2891 = vpack.c.b16 %v2782, %v2781
        %v2892 = vpack.c.b16 %v2784, %v2783
        %v2893 = vpack.c.b16 %v2786, %v2785
        %v2894 = vpack.c.b16 %v2788, %v2787
        %v2895 = vpack.c.b16 %v2790, %v2789
        %v2896 = vpack.c.b16 %v2792, %v2791
        %v2897 = vpack.c.b16 %v2794, %v2793
        %v2898 = vpack.c.b16 %v2796, %v2795
        %v2899 = vpack.c.b16 %v2798, %v2797
        %v2900 = vpack.c.b16 %v2800, %v2799
        %v2901 = vpack.c.b16 %v2802, %v2801
        %v2902 = vpack.c.b16 %v2804, %v2803
        %v2903 = vpack.c.b16 %v2806, %v2805
        %v2904 = vpack.c.b16 %v2808, %v2807
        %v2905 = vpack.c.b16 %v2810, %v2809
        %v2906 = vpack.c.b16 %v2812, %v2811
        %v2907 = vpack.c.b16 %v2814, %v2813
        %v2908 = vpack.c.b16 %v2816, %v2815
        %v2909 = vpack.c.b16 %v2818, %v2817
        %v2910 = vpack.c.b16 %v2820, %v2819
        %v2911 = vpack.c.b16 %v2822, %v2821
        %v2912 = vpack.c.b16 %v2824, %v2823
        %v2913 = vpack.c.b16 %v2826, %v2825
        %v2914 = vpack.c.b16 %v2828, %v2827
        %v2915 = vpack.c.b16 %v2830, %v2829
        %v2916 = vpack.c.b16 %v2832, %v2831
        %v2917 = vpack.c.b16 %v2834, %v2833
        %v2918 = vpack.c.b16 %v2836, %v2835
        %v2919 = vpack.c.b16 %v2838, %v2837
        %v2920 = vpack.c.b16 %v2840, %v2839
        %v2921 = vpack.c.b16 %v2842, %v2841
        %v2922 = vpack.c.b16 %v2844, %v2843
        %v2923 = vpack.c.b16 %v2846, %v2845
        %v2924 = vpack.c.b16 %v2848, %v2847
        %v2925 = vpack.c.b16 %v2850, %v2849
        %v2926 = vpack.c.b16 %v2852, %v2851
        %v2927 = vpack.c.b16 %v2854, %v2853
        %v2928 = vpack.c.b16 %v2856, %v2855
        %v2929 = vpack.c.b16 %v2858, %v2857
        %v2930 = vpack.c.b16 %v2860, %v2859
        %v2931 = vpack.c.b16 %v2862, %v2861
        %v2932 = vpack.c.b16 %v2864, %v2863
        %v2933 = vpack.c.b16 %v2866, %v2865
        %v2934 = vpack.c.b16 %v2868, %v2867
        %v2935 = vpack.c.b16 %v2870, %v2869
        %v2936 = vpack.c.b16 %v2872, %v2871
        %v2938 = vsel %vm863, %v2873, 0
        %v2941 = vsel %vm863, %v2874, 0
        %v2944 = vsel %vm863, %v2875, 0
        %v2947 = vsel %vm863, %v2876, 0
        %v2950 = vsel %vm863, %v2877, 0
        %v2953 = vsel %vm863, %v2878, 0
        %v2956 = vsel %vm863, %v2879, 0
        %v2959 = vsel %vm863, %v2880, 0
        %v2962 = vsel %vm863, %v2881, 0
        %v2965 = vsel %vm863, %v2882, 0
        %v2968 = vsel %vm863, %v2883, 0
        %v2971 = vsel %vm863, %v2884, 0
        %v2974 = vsel %vm863, %v2885, 0
        %v2977 = vsel %vm863, %v2886, 0
        %v2980 = vsel %vm863, %v2887, 0
        %v2983 = vsel %vm863, %v2888, 0
        %v2986 = vsel %vm863, %v2889, 0
        %v2989 = vsel %vm863, %v2890, 0
        %v2992 = vsel %vm863, %v2891, 0
        %v2995 = vsel %vm863, %v2892, 0
        %v2998 = vsel %vm863, %v2893, 0
        %v3001 = vsel %vm863, %v2894, 0
        %v3004 = vsel %vm863, %v2895, 0
        %v3007 = vsel %vm863, %v2896, 0
        %v3010 = vsel %vm863, %v2897, 0
        %v3013 = vsel %vm863, %v2898, 0
        %v3016 = vsel %vm863, %v2899, 0
        %v3019 = vsel %vm863, %v2900, 0
        %v3022 = vsel %vm863, %v2901, 0
        %v3025 = vsel %vm863, %v2902, 0
        %v3028 = vsel %vm863, %v2903, 0
        %v3031 = vsel %vm863, %v2904, 0
        %v3034 = vsel %vm863, %v2905, 0
        %v3037 = vsel %vm863, %v2906, 0
        %v3040 = vsel %vm863, %v2907, 0
        %v3043 = vsel %vm863, %v2908, 0
        %v3046 = vsel %vm863, %v2909, 0
        %v3049 = vsel %vm863, %v2910, 0
        %v3052 = vsel %vm863, %v2911, 0
        %v3055 = vsel %vm863, %v2912, 0
        %v3058 = vsel %vm863, %v2913, 0
        %v3061 = vsel %vm863, %v2914, 0
        %v3064 = vsel %vm863, %v2915, 0
        %v3067 = vsel %vm863, %v2916, 0
        %v3070 = vsel %vm863, %v2917, 0
        %v3073 = vsel %vm863, %v2918, 0
        %v3076 = vsel %vm863, %v2919, 0
        %v3079 = vsel %vm863, %v2920, 0
        %v3082 = vsel %vm863, %v2921, 0
        %v3085 = vsel %vm863, %v2922, 0
        %v3088 = vsel %vm863, %v2923, 0
        %v3091 = vsel %vm863, %v2924, 0
        %v3094 = vsel %vm863, %v2925, 0
        %v3097 = vsel %vm863, %v2926, 0
        %v3100 = vsel %vm863, %v2927, 0
        %v3103 = vsel %vm863, %v2928, 0
        %v3106 = vsel %vm863, %v2929, 0
        %v3109 = vsel %vm863, %v2930, 0
        %v3112 = vsel %vm863, %v2931, 0
        %v3115 = vsel %vm863, %v2932, 0
        %v3118 = vsel %vm863, %v2933, 0
        %v3121 = vsel %vm863, %v2934, 0
        %v3124 = vsel %vm863, %v2935, 0
        %v3127 = vsel %vm863, %v2936, 0
        %3129 = vmatpush.bf16.msra.mxu0 0
        %3130 = vmatpush.bf16.msra.mxu0 0
        %3131 = vmatpush.bf16.msra.mxu0 0
        %3132 = vmatpush.bf16.msra.mxu0 0
        %3133 = vmatpush.bf16.msra.mxu0 0
        %3134 = vmatpush.bf16.msra.mxu0 0
        %3135 = vmatpush.bf16.msra.mxu0 %v1061
        %3136 = vmatpush.bf16.msra.mxu0 %v860
        %3137 = vmatmul.bf16.gmra.mxu0 %v2938
        %v3138 = vpop.f32.mrf.mxu0
        %v3139 = vadd.f32 0.0, %v3138
        %v3140 = vpop.f32.mrf.mxu0
        %v3141 = vadd.f32 0.0, %v3140
        %3142 = vmatmul.bf16.gmra.mxu0 %v2941
        %v3143 = vpop.f32.mrf.mxu0
        %v3144 = vadd.f32 0.0, %v3143
        %v3145 = vpop.f32.mrf.mxu0
        %v3146 = vadd.f32 0.0, %v3145
        %3147 = vmatmul.bf16.gmra.mxu0 %v2944
        %v3148 = vpop.f32.mrf.mxu0
        %v3149 = vadd.f32 0.0, %v3148
        %v3150 = vpop.f32.mrf.mxu0
        %v3151 = vadd.f32 0.0, %v3150
        %3152 = vmatmul.bf16.gmra.mxu0 %v2947
        %v3153 = vpop.f32.mrf.mxu0
        %v3154 = vadd.f32 0.0, %v3153
        %v3155 = vpop.f32.mrf.mxu0
        %v3156 = vadd.f32 0.0, %v3155
        %3157 = vmatmul.bf16.gmra.mxu0 %v2950
        %v3158 = vpop.f32.mrf.mxu0
        %v3159 = vadd.f32 0.0, %v3158
        %v3160 = vpop.f32.mrf.mxu0
        %v3161 = vadd.f32 0.0, %v3160
        %3162 = vmatmul.bf16.gmra.mxu0 %v2953
        %v3163 = vpop.f32.mrf.mxu0
        %v3164 = vadd.f32 0.0, %v3163
        %v3165 = vpop.f32.mrf.mxu0
        %v3166 = vadd.f32 0.0, %v3165
        %3167 = vmatmul.bf16.gmra.mxu0 %v2956
        %v3168 = vpop.f32.mrf.mxu0
        %v3169 = vadd.f32 0.0, %v3168
        %v3170 = vpop.f32.mrf.mxu0
        %v3171 = vadd.f32 0.0, %v3170
        %3172 = vmatmul.bf16.gmra.mxu0 %v2959
        %v3173 = vpop.f32.mrf.mxu0
        %v3174 = vadd.f32 0.0, %v3173
        %v3175 = vpop.f32.mrf.mxu0
        %v3176 = vadd.f32 0.0, %v3175
        %3177 = vmatmul.bf16.gmra.mxu0 %v2962
        %v3178 = vpop.f32.mrf.mxu0
        %v3179 = vadd.f32 0.0, %v3178
        %v3180 = vpop.f32.mrf.mxu0
        %v3181 = vadd.f32 0.0, %v3180
        %3182 = vmatmul.bf16.gmra.mxu0 %v2965
        %v3183 = vpop.f32.mrf.mxu0
        %v3184 = vadd.f32 0.0, %v3183
        %v3185 = vpop.f32.mrf.mxu0
        %v3186 = vadd.f32 0.0, %v3185
        %3187 = vmatmul.bf16.gmra.mxu0 %v2968
        %v3188 = vpop.f32.mrf.mxu0
        %v3189 = vadd.f32 0.0, %v3188
        %v3190 = vpop.f32.mrf.mxu0
        %v3191 = vadd.f32 0.0, %v3190
        %3192 = vmatmul.bf16.gmra.mxu0 %v2971
        %v3193 = vpop.f32.mrf.mxu0
        %v3194 = vadd.f32 0.0, %v3193
        %v3195 = vpop.f32.mrf.mxu0
        %v3196 = vadd.f32 0.0, %v3195
        %3197 = vmatmul.bf16.gmra.mxu0 %v2974
        %v3198 = vpop.f32.mrf.mxu0
        %v3199 = vadd.f32 0.0, %v3198
        %v3200 = vpop.f32.mrf.mxu0
        %v3201 = vadd.f32 0.0, %v3200
        %3202 = vmatmul.bf16.gmra.mxu0 %v2977
        %v3203 = vpop.f32.mrf.mxu0
        %v3204 = vadd.f32 0.0, %v3203
        %v3205 = vpop.f32.mrf.mxu0
        %v3206 = vadd.f32 0.0, %v3205
        %3207 = vmatmul.bf16.gmra.mxu0 %v2980
        %v3208 = vpop.f32.mrf.mxu0
        %v3209 = vadd.f32 0.0, %v3208
        %v3210 = vpop.f32.mrf.mxu0
        %v3211 = vadd.f32 0.0, %v3210
        %3212 = vmatmul.bf16.gmra.mxu0 %v2983
        %v3213 = vpop.f32.mrf.mxu0
        %v3214 = vadd.f32 0.0, %v3213
        %v3215 = vpop.f32.mrf.mxu0
        %v3216 = vadd.f32 0.0, %v3215
        %3217 = vmatmul.bf16.gmra.mxu0 %v2986
        %v3218 = vpop.f32.mrf.mxu0
        %v3219 = vadd.f32 0.0, %v3218
        %v3220 = vpop.f32.mrf.mxu0
        %v3221 = vadd.f32 0.0, %v3220
        %3222 = vmatmul.bf16.gmra.mxu0 %v2989
        %v3223 = vpop.f32.mrf.mxu0
        %v3224 = vadd.f32 0.0, %v3223
        %v3225 = vpop.f32.mrf.mxu0
        %v3226 = vadd.f32 0.0, %v3225
        %3227 = vmatmul.bf16.gmra.mxu0 %v2992
        %v3228 = vpop.f32.mrf.mxu0
        %v3229 = vadd.f32 0.0, %v3228
        %v3230 = vpop.f32.mrf.mxu0
        %v3231 = vadd.f32 0.0, %v3230
        %3232 = vmatmul.bf16.gmra.mxu0 %v2995
        %v3233 = vpop.f32.mrf.mxu0
        %v3234 = vadd.f32 0.0, %v3233
        %v3235 = vpop.f32.mrf.mxu0
        %v3236 = vadd.f32 0.0, %v3235
        %3237 = vmatmul.bf16.gmra.mxu0 %v2998
        %v3238 = vpop.f32.mrf.mxu0
        %v3239 = vadd.f32 0.0, %v3238
        %v3240 = vpop.f32.mrf.mxu0
        %v3241 = vadd.f32 0.0, %v3240
        %3242 = vmatmul.bf16.gmra.mxu0 %v3001
        %v3243 = vpop.f32.mrf.mxu0
        %v3244 = vadd.f32 0.0, %v3243
        %v3245 = vpop.f32.mrf.mxu0
        %v3246 = vadd.f32 0.0, %v3245
        %3247 = vmatmul.bf16.gmra.mxu0 %v3004
        %v3248 = vpop.f32.mrf.mxu0
        %v3249 = vadd.f32 0.0, %v3248
        %v3250 = vpop.f32.mrf.mxu0
        %v3251 = vadd.f32 0.0, %v3250
        %3252 = vmatmul.bf16.gmra.mxu0 %v3007
        %v3253 = vpop.f32.mrf.mxu0
        %v3254 = vadd.f32 0.0, %v3253
        %v3255 = vpop.f32.mrf.mxu0
        %v3256 = vadd.f32 0.0, %v3255
        %3257 = vmatmul.bf16.gmra.mxu0 %v3010
        %v3258 = vpop.f32.mrf.mxu0
        %v3259 = vadd.f32 0.0, %v3258
        %v3260 = vpop.f32.mrf.mxu0
        %v3261 = vadd.f32 0.0, %v3260
        %3262 = vmatmul.bf16.gmra.mxu0 %v3013
        %v3263 = vpop.f32.mrf.mxu0
        %v3264 = vadd.f32 0.0, %v3263
        %v3265 = vpop.f32.mrf.mxu0
        %v3266 = vadd.f32 0.0, %v3265
        %3267 = vmatmul.bf16.gmra.mxu0 %v3016
        %v3268 = vpop.f32.mrf.mxu0
        %v3269 = vadd.f32 0.0, %v3268
        %v3270 = vpop.f32.mrf.mxu0
        %v3271 = vadd.f32 0.0, %v3270
        %3272 = vmatmul.bf16.gmra.mxu0 %v3019
        %v3273 = vpop.f32.mrf.mxu0
        %v3274 = vadd.f32 0.0, %v3273
        %v3275 = vpop.f32.mrf.mxu0
        %v3276 = vadd.f32 0.0, %v3275
        %3277 = vmatmul.bf16.gmra.mxu0 %v3022
        %v3278 = vpop.f32.mrf.mxu0
        %v3279 = vadd.f32 0.0, %v3278
        %v3280 = vpop.f32.mrf.mxu0
        %v3281 = vadd.f32 0.0, %v3280
        %3282 = vmatmul.bf16.gmra.mxu0 %v3025
        %v3283 = vpop.f32.mrf.mxu0
        %v3284 = vadd.f32 0.0, %v3283
        %v3285 = vpop.f32.mrf.mxu0
        %v3286 = vadd.f32 0.0, %v3285
        %3287 = vmatmul.bf16.gmra.mxu0 %v3028
        %v3288 = vpop.f32.mrf.mxu0
        %v3289 = vadd.f32 0.0, %v3288
        %v3290 = vpop.f32.mrf.mxu0
        %v3291 = vadd.f32 0.0, %v3290
        %3292 = vmatmul.bf16.gmra.mxu0 %v3031
        %v3293 = vpop.f32.mrf.mxu0
        %v3294 = vadd.f32 0.0, %v3293
        %v3295 = vpop.f32.mrf.mxu0
        %v3296 = vadd.f32 0.0, %v3295
        %3297 = vmatmul.bf16.gmra.mxu0 %v3034
        %v3298 = vpop.f32.mrf.mxu0
        %v3299 = vadd.f32 0.0, %v3298
        %v3300 = vpop.f32.mrf.mxu0
        %v3301 = vadd.f32 0.0, %v3300
        %3302 = vmatmul.bf16.gmra.mxu0 %v3037
        %v3303 = vpop.f32.mrf.mxu0
        %v3304 = vadd.f32 0.0, %v3303
        %v3305 = vpop.f32.mrf.mxu0
        %v3306 = vadd.f32 0.0, %v3305
        %3307 = vmatmul.bf16.gmra.mxu0 %v3040
        %v3308 = vpop.f32.mrf.mxu0
        %v3309 = vadd.f32 0.0, %v3308
        %v3310 = vpop.f32.mrf.mxu0
        %v3311 = vadd.f32 0.0, %v3310
        %3312 = vmatmul.bf16.gmra.mxu0 %v3043
        %v3313 = vpop.f32.mrf.mxu0
        %v3314 = vadd.f32 0.0, %v3313
        %v3315 = vpop.f32.mrf.mxu0
        %v3316 = vadd.f32 0.0, %v3315
        %3317 = vmatmul.bf16.gmra.mxu0 %v3046
        %v3318 = vpop.f32.mrf.mxu0
        %v3319 = vadd.f32 0.0, %v3318
        %v3320 = vpop.f32.mrf.mxu0
        %v3321 = vadd.f32 0.0, %v3320
        %3322 = vmatmul.bf16.gmra.mxu0 %v3049
        %v3323 = vpop.f32.mrf.mxu0
        %v3324 = vadd.f32 0.0, %v3323
        %v3325 = vpop.f32.mrf.mxu0
        %v3326 = vadd.f32 0.0, %v3325
        %3327 = vmatmul.bf16.gmra.mxu0 %v3052
        %v3328 = vpop.f32.mrf.mxu0
        %v3329 = vadd.f32 0.0, %v3328
        %v3330 = vpop.f32.mrf.mxu0
        %v3331 = vadd.f32 0.0, %v3330
        %3332 = vmatmul.bf16.gmra.mxu0 %v3055
        %v3333 = vpop.f32.mrf.mxu0
        %v3334 = vadd.f32 0.0, %v3333
        %v3335 = vpop.f32.mrf.mxu0
        %v3336 = vadd.f32 0.0, %v3335
        %3337 = vmatmul.bf16.gmra.mxu0 %v3058
        %v3338 = vpop.f32.mrf.mxu0
        %v3339 = vadd.f32 0.0, %v3338
        %v3340 = vpop.f32.mrf.mxu0
        %v3341 = vadd.f32 0.0, %v3340
        %3342 = vmatmul.bf16.gmra.mxu0 %v3061
        %v3343 = vpop.f32.mrf.mxu0
        %v3344 = vadd.f32 0.0, %v3343
        %v3345 = vpop.f32.mrf.mxu0
        %v3346 = vadd.f32 0.0, %v3345
        %3347 = vmatmul.bf16.gmra.mxu0 %v3064
        %v3348 = vpop.f32.mrf.mxu0
        %v3349 = vadd.f32 0.0, %v3348
        %v3350 = vpop.f32.mrf.mxu0
        %v3351 = vadd.f32 0.0, %v3350
        %3352 = vmatmul.bf16.gmra.mxu0 %v3067
        %v3353 = vpop.f32.mrf.mxu0
        %v3354 = vadd.f32 0.0, %v3353
        %v3355 = vpop.f32.mrf.mxu0
        %v3356 = vadd.f32 0.0, %v3355
        %3357 = vmatmul.bf16.gmra.mxu0 %v3070
        %v3358 = vpop.f32.mrf.mxu0
        %v3359 = vadd.f32 0.0, %v3358
        %v3360 = vpop.f32.mrf.mxu0
        %v3361 = vadd.f32 0.0, %v3360
        %3362 = vmatmul.bf16.gmra.mxu0 %v3073
        %v3363 = vpop.f32.mrf.mxu0
        %v3364 = vadd.f32 0.0, %v3363
        %v3365 = vpop.f32.mrf.mxu0
        %v3366 = vadd.f32 0.0, %v3365
        %3367 = vmatmul.bf16.gmra.mxu0 %v3076
        %v3368 = vpop.f32.mrf.mxu0
        %v3369 = vadd.f32 0.0, %v3368
        %v3370 = vpop.f32.mrf.mxu0
        %v3371 = vadd.f32 0.0, %v3370
        %3372 = vmatmul.bf16.gmra.mxu0 %v3079
        %v3373 = vpop.f32.mrf.mxu0
        %v3374 = vadd.f32 0.0, %v3373
        %v3375 = vpop.f32.mrf.mxu0
        %v3376 = vadd.f32 0.0, %v3375
        %3377 = vmatmul.bf16.gmra.mxu0 %v3082
        %v3378 = vpop.f32.mrf.mxu0
        %v3379 = vadd.f32 0.0, %v3378
        %v3380 = vpop.f32.mrf.mxu0
        %v3381 = vadd.f32 0.0, %v3380
        %3382 = vmatmul.bf16.gmra.mxu0 %v3085
        %v3383 = vpop.f32.mrf.mxu0
        %v3384 = vadd.f32 0.0, %v3383
        %v3385 = vpop.f32.mrf.mxu0
        %v3386 = vadd.f32 0.0, %v3385
        %3387 = vmatmul.bf16.gmra.mxu0 %v3088
        %v3388 = vpop.f32.mrf.mxu0
        %v3389 = vadd.f32 0.0, %v3388
        %v3390 = vpop.f32.mrf.mxu0
        %v3391 = vadd.f32 0.0, %v3390
        %3392 = vmatmul.bf16.gmra.mxu0 %v3091
        %v3393 = vpop.f32.mrf.mxu0
        %v3394 = vadd.f32 0.0, %v3393
        %v3395 = vpop.f32.mrf.mxu0
        %v3396 = vadd.f32 0.0, %v3395
        %3397 = vmatmul.bf16.gmra.mxu0 %v3094
        %v3398 = vpop.f32.mrf.mxu0
        %v3399 = vadd.f32 0.0, %v3398
        %v3400 = vpop.f32.mrf.mxu0
        %v3401 = vadd.f32 0.0, %v3400
        %3402 = vmatmul.bf16.gmra.mxu0 %v3097
        %v3403 = vpop.f32.mrf.mxu0
        %v3404 = vadd.f32 0.0, %v3403
        %v3405 = vpop.f32.mrf.mxu0
        %v3406 = vadd.f32 0.0, %v3405
        %3407 = vmatmul.bf16.gmra.mxu0 %v3100
        %v3408 = vpop.f32.mrf.mxu0
        %v3409 = vadd.f32 0.0, %v3408
        %v3410 = vpop.f32.mrf.mxu0
        %v3411 = vadd.f32 0.0, %v3410
        %3412 = vmatmul.bf16.gmra.mxu0 %v3103
        %v3413 = vpop.f32.mrf.mxu0
        %v3414 = vadd.f32 0.0, %v3413
        %v3415 = vpop.f32.mrf.mxu0
        %v3416 = vadd.f32 0.0, %v3415
        %3417 = vmatmul.bf16.gmra.mxu0 %v3106
        %v3418 = vpop.f32.mrf.mxu0
        %v3419 = vadd.f32 0.0, %v3418
        %v3420 = vpop.f32.mrf.mxu0
        %v3421 = vadd.f32 0.0, %v3420
        %3422 = vmatmul.bf16.gmra.mxu0 %v3109
        %v3423 = vpop.f32.mrf.mxu0
        %v3424 = vadd.f32 0.0, %v3423
        %v3425 = vpop.f32.mrf.mxu0
        %v3426 = vadd.f32 0.0, %v3425
        %3427 = vmatmul.bf16.gmra.mxu0 %v3112
        %v3428 = vpop.f32.mrf.mxu0
        %v3429 = vadd.f32 0.0, %v3428
        %v3430 = vpop.f32.mrf.mxu0
        %v3431 = vadd.f32 0.0, %v3430
        %3432 = vmatmul.bf16.gmra.mxu0 %v3115
        %v3433 = vpop.f32.mrf.mxu0
        %v3434 = vadd.f32 0.0, %v3433
        %v3435 = vpop.f32.mrf.mxu0
        %v3436 = vadd.f32 0.0, %v3435
        %3437 = vmatmul.bf16.gmra.mxu0 %v3118
        %v3438 = vpop.f32.mrf.mxu0
        %v3439 = vadd.f32 0.0, %v3438
        %v3440 = vpop.f32.mrf.mxu0
        %v3441 = vadd.f32 0.0, %v3440
        %3442 = vmatmul.bf16.gmra.mxu0 %v3121
        %v3443 = vpop.f32.mrf.mxu0
        %v3444 = vadd.f32 0.0, %v3443
        %v3445 = vpop.f32.mrf.mxu0
        %v3446 = vadd.f32 0.0, %v3445
        %3447 = vmatmul.bf16.gmra.mxu0 %v3124
        %v3448 = vpop.f32.mrf.mxu0
        %v3449 = vadd.f32 0.0, %v3448
        %v3450 = vpop.f32.mrf.mxu0
        %v3451 = vadd.f32 0.0, %v3450
        %3452 = vmatmul.bf16.gmra.mxu0 %v3127
        %v3453 = vpop.f32.mrf.mxu0
        %v3454 = vadd.f32 0.0, %v3453
        %v3455 = vpop.f32.mrf.mxu0
        %v3456 = vadd.f32 0.0, %v3455
        %3457 = vdwg.mxu0
        %v3458 = vmax.f32 %v2361, %v3139
        %v3459 = vmax.f32 %v2362, %v3141
        %v3460 = vmax.f32 %v2363, %v3144
        %v3461 = vmax.f32 %v2364, %v3146
        %v3462 = vmax.f32 %v2365, %v3149
        %v3463 = vmax.f32 %v2366, %v3151
        %v3464 = vmax.f32 %v2367, %v3154
        %v3465 = vmax.f32 %v2368, %v3156
        %v3466 = vmax.f32 %v2369, %v3159
        %v3467 = vmax.f32 %v2370, %v3161
        %v3468 = vmax.f32 %v2371, %v3164
        %v3469 = vmax.f32 %v2372, %v3166
        %v3470 = vmax.f32 %v2373, %v3169
        %v3471 = vmax.f32 %v2374, %v3171
        %v3472 = vmax.f32 %v2375, %v3174
        %v3473 = vmax.f32 %v2376, %v3176
        %v3474 = vmax.f32 %v2377, %v3179
        %v3475 = vmax.f32 %v2378, %v3181
        %v3476 = vmax.f32 %v2379, %v3184
        %v3477 = vmax.f32 %v2380, %v3186
        %v3478 = vmax.f32 %v2381, %v3189
        %v3479 = vmax.f32 %v2382, %v3191
        %v3480 = vmax.f32 %v2383, %v3194
        %v3481 = vmax.f32 %v2384, %v3196
        %v3482 = vmax.f32 %v2385, %v3199
        %v3483 = vmax.f32 %v2386, %v3201
        %v3484 = vmax.f32 %v2387, %v3204
        %v3485 = vmax.f32 %v2388, %v3206
        %v3486 = vmax.f32 %v2389, %v3209
        %v3487 = vmax.f32 %v2390, %v3211
        %v3488 = vmax.f32 %v2391, %v3214
        %v3489 = vmax.f32 %v2392, %v3216
        %v3490 = vmax.f32 %v2393, %v3219
        %v3491 = vmax.f32 %v2394, %v3221
        %v3492 = vmax.f32 %v2395, %v3224
        %v3493 = vmax.f32 %v2396, %v3226
        %v3494 = vmax.f32 %v2397, %v3229
        %v3495 = vmax.f32 %v2398, %v3231
        %v3496 = vmax.f32 %v2399, %v3234
        %v3497 = vmax.f32 %v2400, %v3236
        %v3498 = vmax.f32 %v2401, %v3239
        %v3499 = vmax.f32 %v2402, %v3241
        %v3500 = vmax.f32 %v2403, %v3244
        %v3501 = vmax.f32 %v2404, %v3246
        %v3502 = vmax.f32 %v2405, %v3249
        %v3503 = vmax.f32 %v2406, %v3251
        %v3504 = vmax.f32 %v2407, %v3254
        %v3505 = vmax.f32 %v2408, %v3256
        %v3506 = vmax.f32 %v2409, %v3259
        %v3507 = vmax.f32 %v2410, %v3261
        %v3508 = vmax.f32 %v2411, %v3264
        %v3509 = vmax.f32 %v2412, %v3266
        %v3510 = vmax.f32 %v2413, %v3269
        %v3511 = vmax.f32 %v2414, %v3271
        %v3512 = vmax.f32 %v2415, %v3274
        %v3513 = vmax.f32 %v2416, %v3276
        %v3514 = vmax.f32 %v2417, %v3279
        %v3515 = vmax.f32 %v2418, %v3281
        %v3516 = vmax.f32 %v2419, %v3284
        %v3517 = vmax.f32 %v2420, %v3286
        %v3518 = vmax.f32 %v2421, %v3289
        %v3519 = vmax.f32 %v2422, %v3291
        %v3520 = vmax.f32 %v2423, %v3294
        %v3521 = vmax.f32 %v2424, %v3296
        %v3522 = vmax.f32 %v2425, %v3299
        %v3523 = vmax.f32 %v2426, %v3301
        %v3524 = vmax.f32 %v2427, %v3304
        %v3525 = vmax.f32 %v2428, %v3306
        %v3526 = vmax.f32 %v2429, %v3309
        %v3527 = vmax.f32 %v2430, %v3311
        %v3528 = vmax.f32 %v2431, %v3314
        %v3529 = vmax.f32 %v2432, %v3316
        %v3530 = vmax.f32 %v2433, %v3319
        %v3531 = vmax.f32 %v2434, %v3321
        %v3532 = vmax.f32 %v2435, %v3324
        %v3533 = vmax.f32 %v2436, %v3326
        %v3534 = vmax.f32 %v2437, %v3329
        %v3535 = vmax.f32 %v2438, %v3331
        %v3536 = vmax.f32 %v2439, %v3334
        %v3537 = vmax.f32 %v2440, %v3336
        %v3538 = vmax.f32 %v2441, %v3339
        %v3539 = vmax.f32 %v2442, %v3341
        %v3540 = vmax.f32 %v2443, %v3344
        %v3541 = vmax.f32 %v2444, %v3346
        %v3542 = vmax.f32 %v2445, %v3349
        %v3543 = vmax.f32 %v2446, %v3351
        %v3544 = vmax.f32 %v2447, %v3354
        %v3545 = vmax.f32 %v2448, %v3356
        %v3546 = vmax.f32 %v2449, %v3359
        %v3547 = vmax.f32 %v2450, %v3361
        %v3548 = vmax.f32 %v2451, %v3364
        %v3549 = vmax.f32 %v2452, %v3366
        %v3550 = vmax.f32 %v2453, %v3369
        %v3551 = vmax.f32 %v2454, %v3371
        %v3552 = vmax.f32 %v2455, %v3374
        %v3553 = vmax.f32 %v2456, %v3376
        %v3554 = vmax.f32 %v2457, %v3379
        %v3555 = vmax.f32 %v2458, %v3381
        %v3556 = vmax.f32 %v2459, %v3384
        %v3557 = vmax.f32 %v2460, %v3386
        %v3558 = vmax.f32 %v2461, %v3389
        %v3559 = vmax.f32 %v2462, %v3391
        %v3560 = vmax.f32 %v2463, %v3394
        %v3561 = vmax.f32 %v2464, %v3396
        %v3562 = vmax.f32 %v2465, %v3399
        %v3563 = vmax.f32 %v2466, %v3401
        %v3564 = vmax.f32 %v2467, %v3404
        %v3565 = vmax.f32 %v2468, %v3406
        %v3566 = vmax.f32 %v2469, %v3409
        %v3567 = vmax.f32 %v2470, %v3411
        %v3568 = vmax.f32 %v2471, %v3414
        %v3569 = vmax.f32 %v2472, %v3416
        %v3570 = vmax.f32 %v2473, %v3419
        %v3571 = vmax.f32 %v2474, %v3421
        %v3572 = vmax.f32 %v2475, %v3424
        %v3573 = vmax.f32 %v2476, %v3426
        %v3574 = vmax.f32 %v2477, %v3429
        %v3575 = vmax.f32 %v2478, %v3431
        %v3576 = vmax.f32 %v2479, %v3434
        %v3577 = vmax.f32 %v2480, %v3436
        %v3578 = vmax.f32 %v2481, %v3439
        %v3579 = vmax.f32 %v2482, %v3441
        %v3580 = vmax.f32 %v2483, %v3444
        %v3581 = vmax.f32 %v2484, %v3446
        %v3582 = vmax.f32 %v2485, %v3449
        %v3583 = vmax.f32 %v2486, %v3451
        %v3584 = vmax.f32 %v2487, %v3454
        %v3585 = vmax.f32 %v2488, %v3456
        %v3586 = vld [vmem:[%s388] sm:$0xf]
        %v3587 = vld [vmem:[%s388 + $0x4] sm:$0xf]
        %v3588 = vld [vmem:[%s388 + $0x8] sm:$0xf]
        %v3589 = vld [vmem:[%s388 + $0xc] sm:$0xf]
        %v3590 = vld [vmem:[%s388 + $0x10] sm:$0xf]
        %v3591 = vld [vmem:[%s388 + $0x14] sm:$0xf]
        %v3592 = vld [vmem:[%s388 + $0x18] sm:$0xf]
        %v3593 = vld [vmem:[%s388 + $0x1c] sm:$0xf]
        %v3594 = vld [vmem:[%s388 + $0x20] sm:$0xf]
        %v3595 = vld [vmem:[%s388 + $0x24] sm:$0xf]
        %v3596 = vld [vmem:[%s388 + $0x28] sm:$0xf]
        %v3597 = vld [vmem:[%s388 + $0x2c] sm:$0xf]
        %v3598 = vld [vmem:[%s388 + $0x30] sm:$0xf]
        %v3599 = vld [vmem:[%s388 + $0x34] sm:$0xf]
        %v3600 = vld [vmem:[%s388 + $0x38] sm:$0xf]
        %v3601 = vld [vmem:[%s388 + $0x3c] sm:$0xf]
        %v3602 = vld [vmem:[%s388 + $0x40] sm:$0xf]
        %v3603 = vld [vmem:[%s388 + $0x44] sm:$0xf]
        %v3604 = vld [vmem:[%s388 + $0x48] sm:$0xf]
        %v3605 = vld [vmem:[%s388 + $0x4c] sm:$0xf]
        %v3606 = vld [vmem:[%s388 + $0x50] sm:$0xf]
        %v3607 = vld [vmem:[%s388 + $0x54] sm:$0xf]
        %v3608 = vld [vmem:[%s388 + $0x58] sm:$0xf]
        %v3609 = vld [vmem:[%s388 + $0x5c] sm:$0xf]
        %v3610 = vld [vmem:[%s388 + $0x60] sm:$0xf]
        %v3611 = vld [vmem:[%s388 + $0x64] sm:$0xf]
        %v3612 = vld [vmem:[%s388 + $0x68] sm:$0xf]
        %v3613 = vld [vmem:[%s388 + $0x6c] sm:$0xf]
        %v3614 = vld [vmem:[%s388 + $0x70] sm:$0xf]
        %v3615 = vld [vmem:[%s388 + $0x74] sm:$0xf]
        %v3616 = vld [vmem:[%s388 + $0x78] sm:$0xf]
        %v3617 = vld [vmem:[%s388 + $0x7c] sm:$0xf]
        %v3618 = vld [vmem:[%s388 + $0x80] sm:$0xf]
        %v3619 = vld [vmem:[%s388 + $0x84] sm:$0xf]
        %v3620 = vld [vmem:[%s388 + $0x88] sm:$0xf]
        %v3621 = vld [vmem:[%s388 + $0x8c] sm:$0xf]
        %v3622 = vld [vmem:[%s388 + $0x90] sm:$0xf]
        %v3623 = vld [vmem:[%s388 + $0x94] sm:$0xf]
        %v3624 = vld [vmem:[%s388 + $0x98] sm:$0xf]
        %v3625 = vld [vmem:[%s388 + $0x9c] sm:$0xf]
        %v3626 = vld [vmem:[%s388 + $0xa0] sm:$0xf]
        %v3627 = vld [vmem:[%s388 + $0xa4] sm:$0xf]
        %v3628 = vld [vmem:[%s388 + $0xa8] sm:$0xf]
        %v3629 = vld [vmem:[%s388 + $0xac] sm:$0xf]
        %v3630 = vld [vmem:[%s388 + $0xb0] sm:$0xf]
        %v3631 = vld [vmem:[%s388 + $0xb4] sm:$0xf]
        %v3632 = vld [vmem:[%s388 + $0xb8] sm:$0xf]
        %v3633 = vld [vmem:[%s388 + $0xbc] sm:$0xf]
        %v3634 = vld [vmem:[%s388 + $0xc0] sm:$0xf]
        %v3635 = vld [vmem:[%s388 + $0xc4] sm:$0xf]
        %v3636 = vld [vmem:[%s388 + $0xc8] sm:$0xf]
        %v3637 = vld [vmem:[%s388 + $0xcc] sm:$0xf]
        %v3638 = vld [vmem:[%s388 + $0xd0] sm:$0xf]
        %v3639 = vld [vmem:[%s388 + $0xd4] sm:$0xf]
        %v3640 = vld [vmem:[%s388 + $0xd8] sm:$0xf]
        %v3641 = vld [vmem:[%s388 + $0xdc] sm:$0xf]
        %v3642 = vld [vmem:[%s388 + $0xe0] sm:$0xf]
        %v3643 = vld [vmem:[%s388 + $0xe4] sm:$0xf]
        %v3644 = vld [vmem:[%s388 + $0xe8] sm:$0xf]
        %v3645 = vld [vmem:[%s388 + $0xec] sm:$0xf]
        %v3646 = vld [vmem:[%s388 + $0xf0] sm:$0xf]
        %v3647 = vld [vmem:[%s388 + $0xf4] sm:$0xf]
        %v3648 = vld [vmem:[%s388 + $0xf8] sm:$0xf]
        %v3649 = vld [vmem:[%s388 + $0xfc] sm:$0xf]
        %v3650 = vld [vmem:[%s388 + $0x100] sm:$0xf]
        %v3651 = vld [vmem:[%s388 + $0x104] sm:$0xf]
        %v3652 = vld [vmem:[%s388 + $0x108] sm:$0xf]
        %v3653 = vld [vmem:[%s388 + $0x10c] sm:$0xf]
        %v3654 = vld [vmem:[%s388 + $0x110] sm:$0xf]
        %v3655 = vld [vmem:[%s388 + $0x114] sm:$0xf]
        %v3656 = vld [vmem:[%s388 + $0x118] sm:$0xf]
        %v3657 = vld [vmem:[%s388 + $0x11c] sm:$0xf]
        %v3658 = vld [vmem:[%s388 + $0x120] sm:$0xf]
        %v3659 = vld [vmem:[%s388 + $0x124] sm:$0xf]
        %v3660 = vld [vmem:[%s388 + $0x128] sm:$0xf]
        %v3661 = vld [vmem:[%s388 + $0x12c] sm:$0xf]
        %v3662 = vld [vmem:[%s388 + $0x130] sm:$0xf]
        %v3663 = vld [vmem:[%s388 + $0x134] sm:$0xf]
        %v3664 = vld [vmem:[%s388 + $0x138] sm:$0xf]
        %v3665 = vld [vmem:[%s388 + $0x13c] sm:$0xf]
        %v3666 = vld [vmem:[%s388 + $0x140] sm:$0xf]
        %v3667 = vld [vmem:[%s388 + $0x144] sm:$0xf]
        %v3668 = vld [vmem:[%s388 + $0x148] sm:$0xf]
        %v3669 = vld [vmem:[%s388 + $0x14c] sm:$0xf]
        %v3670 = vld [vmem:[%s388 + $0x150] sm:$0xf]
        %v3671 = vld [vmem:[%s388 + $0x154] sm:$0xf]
        %v3672 = vld [vmem:[%s388 + $0x158] sm:$0xf]
        %v3673 = vld [vmem:[%s388 + $0x15c] sm:$0xf]
        %v3674 = vld [vmem:[%s388 + $0x160] sm:$0xf]
        %v3675 = vld [vmem:[%s388 + $0x164] sm:$0xf]
        %v3676 = vld [vmem:[%s388 + $0x168] sm:$0xf]
        %v3677 = vld [vmem:[%s388 + $0x16c] sm:$0xf]
        %v3678 = vld [vmem:[%s388 + $0x170] sm:$0xf]
        %v3679 = vld [vmem:[%s388 + $0x174] sm:$0xf]
        %v3680 = vld [vmem:[%s388 + $0x178] sm:$0xf]
        %v3681 = vld [vmem:[%s388 + $0x17c] sm:$0xf]
        %v3682 = vld [vmem:[%s388 + $0x180] sm:$0xf]
        %v3683 = vld [vmem:[%s388 + $0x184] sm:$0xf]
        %v3684 = vld [vmem:[%s388 + $0x188] sm:$0xf]
        %v3685 = vld [vmem:[%s388 + $0x18c] sm:$0xf]
        %v3686 = vld [vmem:[%s388 + $0x190] sm:$0xf]
        %v3687 = vld [vmem:[%s388 + $0x194] sm:$0xf]
        %v3688 = vld [vmem:[%s388 + $0x198] sm:$0xf]
        %v3689 = vld [vmem:[%s388 + $0x19c] sm:$0xf]
        %v3690 = vld [vmem:[%s388 + $0x1a0] sm:$0xf]
        %v3691 = vld [vmem:[%s388 + $0x1a4] sm:$0xf]
        %v3692 = vld [vmem:[%s388 + $0x1a8] sm:$0xf]
        %v3693 = vld [vmem:[%s388 + $0x1ac] sm:$0xf]
        %v3694 = vld [vmem:[%s388 + $0x1b0] sm:$0xf]
        %v3695 = vld [vmem:[%s388 + $0x1b4] sm:$0xf]
        %v3696 = vld [vmem:[%s388 + $0x1b8] sm:$0xf]
        %v3697 = vld [vmem:[%s388 + $0x1bc] sm:$0xf]
        %v3698 = vld [vmem:[%s388 + $0x1c0] sm:$0xf]
        %v3699 = vld [vmem:[%s388 + $0x1c4] sm:$0xf]
        %v3700 = vld [vmem:[%s388 + $0x1c8] sm:$0xf]
        %v3701 = vld [vmem:[%s388 + $0x1cc] sm:$0xf]
        %v3702 = vld [vmem:[%s388 + $0x1d0] sm:$0xf]
        %v3703 = vld [vmem:[%s388 + $0x1d4] sm:$0xf]
        %v3704 = vld [vmem:[%s388 + $0x1d8] sm:$0xf]
        %v3705 = vld [vmem:[%s388 + $0x1dc] sm:$0xf]
        %v3706 = vld [vmem:[%s388 + $0x1e0] sm:$0xf]
        %v3707 = vld [vmem:[%s388 + $0x1e4] sm:$0xf]
        %v3708 = vld [vmem:[%s388 + $0x1e8] sm:$0xf]
        %v3709 = vld [vmem:[%s388 + $0x1ec] sm:$0xf]
        %v3710 = vld [vmem:[%s388 + $0x1f0] sm:$0xf]
        %v3711 = vld [vmem:[%s388 + $0x1f4] sm:$0xf]
        %v3712 = vld [vmem:[%s388 + $0x1f8] sm:$0xf]
        %v3713 = vld [vmem:[%s388 + $0x1fc] sm:$0xf]
        %v3842 = vunpack.c.l.b16 %v3586
        %v3843 = vunpack.c.l.b16 %v3587
        %v3844 = vunpack.c.l.b16 %v3588
        %v3845 = vunpack.c.l.b16 %v3589
        %v3846 = vunpack.c.l.b16 %v3590
        %v3847 = vunpack.c.l.b16 %v3591
        %v3848 = vunpack.c.l.b16 %v3592
        %v3849 = vunpack.c.l.b16 %v3593
        %v3850 = vunpack.c.l.b16 %v3594
        %v3851 = vunpack.c.l.b16 %v3595
        %v3852 = vunpack.c.l.b16 %v3596
        %v3853 = vunpack.c.l.b16 %v3597
        %v3854 = vunpack.c.l.b16 %v3598
        %v3855 = vunpack.c.l.b16 %v3599
        %v3856 = vunpack.c.l.b16 %v3600
        %v3857 = vunpack.c.l.b16 %v3601
        %v3858 = vunpack.c.l.b16 %v3602
        %v3859 = vunpack.c.l.b16 %v3603
        %v3860 = vunpack.c.l.b16 %v3604
        %v3861 = vunpack.c.l.b16 %v3605
        %v3862 = vunpack.c.l.b16 %v3606
        %v3863 = vunpack.c.l.b16 %v3607
        %v3864 = vunpack.c.l.b16 %v3608
        %v3865 = vunpack.c.l.b16 %v3609
        %v3866 = vunpack.c.l.b16 %v3610
        %v3867 = vunpack.c.l.b16 %v3611
        %v3868 = vunpack.c.l.b16 %v3612
        %v3869 = vunpack.c.l.b16 %v3613
        %v3870 = vunpack.c.l.b16 %v3614
        %v3871 = vunpack.c.l.b16 %v3615
        %v3872 = vunpack.c.l.b16 %v3616
        %v3873 = vunpack.c.l.b16 %v3617
        %v3874 = vunpack.c.l.b16 %v3618
        %v3875 = vunpack.c.l.b16 %v3619
        %v3876 = vunpack.c.l.b16 %v3620
        %v3877 = vunpack.c.l.b16 %v3621
        %v3878 = vunpack.c.l.b16 %v3622
        %v3879 = vunpack.c.l.b16 %v3623
        %v3880 = vunpack.c.l.b16 %v3624
        %v3881 = vunpack.c.l.b16 %v3625
        %v3882 = vunpack.c.l.b16 %v3626
        %v3883 = vunpack.c.l.b16 %v3627
        %v3884 = vunpack.c.l.b16 %v3628
        %v3885 = vunpack.c.l.b16 %v3629
        %v3886 = vunpack.c.l.b16 %v3630
        %v3887 = vunpack.c.l.b16 %v3631
        %v3888 = vunpack.c.l.b16 %v3632
        %v3889 = vunpack.c.l.b16 %v3633
        %v3890 = vunpack.c.l.b16 %v3634
        %v3891 = vunpack.c.l.b16 %v3635
        %v3892 = vunpack.c.l.b16 %v3636
        %v3893 = vunpack.c.l.b16 %v3637
        %v3894 = vunpack.c.l.b16 %v3638
        %v3895 = vunpack.c.l.b16 %v3639
        %v3896 = vunpack.c.l.b16 %v3640
        %v3897 = vunpack.c.l.b16 %v3641
        %v3898 = vunpack.c.l.b16 %v3642
        %v3899 = vunpack.c.l.b16 %v3643
        %v3900 = vunpack.c.l.b16 %v3644
        %v3901 = vunpack.c.l.b16 %v3645
        %v3902 = vunpack.c.l.b16 %v3646
        %v3903 = vunpack.c.l.b16 %v3647
        %v3904 = vunpack.c.l.b16 %v3648
        %v3905 = vunpack.c.l.b16 %v3649
        %v3906 = vunpack.c.l.b16 %v3650
        %v3907 = vunpack.c.l.b16 %v3651
        %v3908 = vunpack.c.l.b16 %v3652
        %v3909 = vunpack.c.l.b16 %v3653
        %v3910 = vunpack.c.l.b16 %v3654
        %v3911 = vunpack.c.l.b16 %v3655
        %v3912 = vunpack.c.l.b16 %v3656
        %v3913 = vunpack.c.l.b16 %v3657
        %v3914 = vunpack.c.l.b16 %v3658
        %v3915 = vunpack.c.l.b16 %v3659
        %v3916 = vunpack.c.l.b16 %v3660
        %v3917 = vunpack.c.l.b16 %v3661
        %v3918 = vunpack.c.l.b16 %v3662
        %v3919 = vunpack.c.l.b16 %v3663
        %v3920 = vunpack.c.l.b16 %v3664
        %v3921 = vunpack.c.l.b16 %v3665
        %v3922 = vunpack.c.l.b16 %v3666
        %v3923 = vunpack.c.l.b16 %v3667
        %v3924 = vunpack.c.l.b16 %v3668
        %v3925 = vunpack.c.l.b16 %v3669
        %v3926 = vunpack.c.l.b16 %v3670
        %v3927 = vunpack.c.l.b16 %v3671
        %v3928 = vunpack.c.l.b16 %v3672
        %v3929 = vunpack.c.l.b16 %v3673
        %v3930 = vunpack.c.l.b16 %v3674
        %v3931 = vunpack.c.l.b16 %v3675
        %v3932 = vunpack.c.l.b16 %v3676
        %v3933 = vunpack.c.l.b16 %v3677
        %v3934 = vunpack.c.l.b16 %v3678
        %v3935 = vunpack.c.l.b16 %v3679
        %v3936 = vunpack.c.l.b16 %v3680
        %v3937 = vunpack.c.l.b16 %v3681
        %v3938 = vunpack.c.l.b16 %v3682
        %v3939 = vunpack.c.l.b16 %v3683
        %v3940 = vunpack.c.l.b16 %v3684
        %v3941 = vunpack.c.l.b16 %v3685
        %v3942 = vunpack.c.l.b16 %v3686
        %v3943 = vunpack.c.l.b16 %v3687
        %v3944 = vunpack.c.l.b16 %v3688
        %v3945 = vunpack.c.l.b16 %v3689
        %v3946 = vunpack.c.l.b16 %v3690
        %v3947 = vunpack.c.l.b16 %v3691
        %v3948 = vunpack.c.l.b16 %v3692
        %v3949 = vunpack.c.l.b16 %v3693
        %v3950 = vunpack.c.l.b16 %v3694
        %v3951 = vunpack.c.l.b16 %v3695
        %v3952 = vunpack.c.l.b16 %v3696
        %v3953 = vunpack.c.l.b16 %v3697
        %v3954 = vunpack.c.l.b16 %v3698
        %v3955 = vunpack.c.l.b16 %v3699
        %v3956 = vunpack.c.l.b16 %v3700
        %v3957 = vunpack.c.l.b16 %v3701
        %v3958 = vunpack.c.l.b16 %v3702
        %v3959 = vunpack.c.l.b16 %v3703
        %v3960 = vunpack.c.l.b16 %v3704
        %v3961 = vunpack.c.l.b16 %v3705
        %v3962 = vunpack.c.l.b16 %v3706
        %v3963 = vunpack.c.l.b16 %v3707
        %v3964 = vunpack.c.l.b16 %v3708
        %v3965 = vunpack.c.l.b16 %v3709
        %v3966 = vunpack.c.l.b16 %v3710
        %v3967 = vunpack.c.l.b16 %v3711
        %v3968 = vunpack.c.l.b16 %v3712
        %v3969 = vunpack.c.l.b16 %v3713
        %v3970 = vpack.c.b16 %v3843, %v3842
        %v3971 = vpack.c.b16 %v3845, %v3844
        %v3972 = vpack.c.b16 %v3847, %v3846
        %v3973 = vpack.c.b16 %v3849, %v3848
        %v3974 = vpack.c.b16 %v3851, %v3850
        %v3975 = vpack.c.b16 %v3853, %v3852
        %v3976 = vpack.c.b16 %v3855, %v3854
        %v3977 = vpack.c.b16 %v3857, %v3856
        %v3978 = vpack.c.b16 %v3859, %v3858
        %v3979 = vpack.c.b16 %v3861, %v3860
        %v3980 = vpack.c.b16 %v3863, %v3862
        %v3981 = vpack.c.b16 %v3865, %v3864
        %v3982 = vpack.c.b16 %v3867, %v3866
        %v3983 = vpack.c.b16 %v3869, %v3868
        %v3984 = vpack.c.b16 %v3871, %v3870
        %v3985 = vpack.c.b16 %v3873, %v3872
        %v3986 = vpack.c.b16 %v3875, %v3874
        %v3987 = vpack.c.b16 %v3877, %v3876
        %v3988 = vpack.c.b16 %v3879, %v3878
        %v3989 = vpack.c.b16 %v3881, %v3880
        %v3990 = vpack.c.b16 %v3883, %v3882
        %v3991 = vpack.c.b16 %v3885, %v3884
        %v3992 = vpack.c.b16 %v3887, %v3886
        %v3993 = vpack.c.b16 %v3889, %v3888
        %v3994 = vpack.c.b16 %v3891, %v3890
        %v3995 = vpack.c.b16 %v3893, %v3892
        %v3996 = vpack.c.b16 %v3895, %v3894
        %v3997 = vpack.c.b16 %v3897, %v3896
        %v3998 = vpack.c.b16 %v3899, %v3898
        %v3999 = vpack.c.b16 %v3901, %v3900
        %v4000 = vpack.c.b16 %v3903, %v3902
        %v4001 = vpack.c.b16 %v3905, %v3904
        %v4002 = vpack.c.b16 %v3907, %v3906
        %v4003 = vpack.c.b16 %v3909, %v3908
        %v4004 = vpack.c.b16 %v3911, %v3910
        %v4005 = vpack.c.b16 %v3913, %v3912
        %v4006 = vpack.c.b16 %v3915, %v3914
        %v4007 = vpack.c.b16 %v3917, %v3916
        %v4008 = vpack.c.b16 %v3919, %v3918
        %v4009 = vpack.c.b16 %v3921, %v3920
        %v4010 = vpack.c.b16 %v3923, %v3922
        %v4011 = vpack.c.b16 %v3925, %v3924
        %v4012 = vpack.c.b16 %v3927, %v3926
        %v4013 = vpack.c.b16 %v3929, %v3928
        %v4014 = vpack.c.b16 %v3931, %v3930
        %v4015 = vpack.c.b16 %v3933, %v3932
        %v4016 = vpack.c.b16 %v3935, %v3934
        %v4017 = vpack.c.b16 %v3937, %v3936
        %v4018 = vpack.c.b16 %v3939, %v3938
        %v4019 = vpack.c.b16 %v3941, %v3940
        %v4020 = vpack.c.b16 %v3943, %v3942
        %v4021 = vpack.c.b16 %v3945, %v3944
        %v4022 = vpack.c.b16 %v3947, %v3946
        %v4023 = vpack.c.b16 %v3949, %v3948
        %v4024 = vpack.c.b16 %v3951, %v3950
        %v4025 = vpack.c.b16 %v3953, %v3952
        %v4026 = vpack.c.b16 %v3955, %v3954
        %v4027 = vpack.c.b16 %v3957, %v3956
        %v4028 = vpack.c.b16 %v3959, %v3958
        %v4029 = vpack.c.b16 %v3961, %v3960
        %v4030 = vpack.c.b16 %v3963, %v3962
        %v4031 = vpack.c.b16 %v3965, %v3964
        %v4032 = vpack.c.b16 %v3967, %v3966
        %v4033 = vpack.c.b16 %v3969, %v3968
        %v4035 = vsel %vm863, %v3970, 0
        %v4038 = vsel %vm863, %v3971, 0
        %v4041 = vsel %vm863, %v3972, 0
        %v4044 = vsel %vm863, %v3973, 0
        %v4047 = vsel %vm863, %v3974, 0
        %v4050 = vsel %vm863, %v3975, 0
        %v4053 = vsel %vm863, %v3976, 0
        %v4056 = vsel %vm863, %v3977, 0
        %v4059 = vsel %vm863, %v3978, 0
        %v4062 = vsel %vm863, %v3979, 0
        %v4065 = vsel %vm863, %v3980, 0
        %v4068 = vsel %vm863, %v3981, 0
        %v4071 = vsel %vm863, %v3982, 0
        %v4074 = vsel %vm863, %v3983, 0
        %v4077 = vsel %vm863, %v3984, 0
        %v4080 = vsel %vm863, %v3985, 0
        %v4083 = vsel %vm863, %v3986, 0
        %v4086 = vsel %vm863, %v3987, 0
        %v4089 = vsel %vm863, %v3988, 0
        %v4092 = vsel %vm863, %v3989, 0
        %v4095 = vsel %vm863, %v3990, 0
        %v4098 = vsel %vm863, %v3991, 0
        %v4101 = vsel %vm863, %v3992, 0
        %v4104 = vsel %vm863, %v3993, 0
        %v4107 = vsel %vm863, %v3994, 0
        %v4110 = vsel %vm863, %v3995, 0
        %v4113 = vsel %vm863, %v3996, 0
        %v4116 = vsel %vm863, %v3997, 0
        %v4119 = vsel %vm863, %v3998, 0
        %v4122 = vsel %vm863, %v3999, 0
        %v4125 = vsel %vm863, %v4000, 0
        %v4128 = vsel %vm863, %v4001, 0
        %v4131 = vsel %vm863, %v4002, 0
        %v4134 = vsel %vm863, %v4003, 0
        %v4137 = vsel %vm863, %v4004, 0
        %v4140 = vsel %vm863, %v4005, 0
        %v4143 = vsel %vm863, %v4006, 0
        %v4146 = vsel %vm863, %v4007, 0
        %v4149 = vsel %vm863, %v4008, 0
        %v4152 = vsel %vm863, %v4009, 0
        %v4155 = vsel %vm863, %v4010, 0
        %v4158 = vsel %vm863, %v4011, 0
        %v4161 = vsel %vm863, %v4012, 0
        %v4164 = vsel %vm863, %v4013, 0
        %v4167 = vsel %vm863, %v4014, 0
        %v4170 = vsel %vm863, %v4015, 0
        %v4173 = vsel %vm863, %v4016, 0
        %v4176 = vsel %vm863, %v4017, 0
        %v4179 = vsel %vm863, %v4018, 0
        %v4182 = vsel %vm863, %v4019, 0
        %v4185 = vsel %vm863, %v4020, 0
        %v4188 = vsel %vm863, %v4021, 0
        %v4191 = vsel %vm863, %v4022, 0
        %v4194 = vsel %vm863, %v4023, 0
        %v4197 = vsel %vm863, %v4024, 0
        %v4200 = vsel %vm863, %v4025, 0
        %v4203 = vsel %vm863, %v4026, 0
        %v4206 = vsel %vm863, %v4027, 0
        %v4209 = vsel %vm863, %v4028, 0
        %v4212 = vsel %vm863, %v4029, 0
        %v4215 = vsel %vm863, %v4030, 0
        %v4218 = vsel %vm863, %v4031, 0
        %v4221 = vsel %vm863, %v4032, 0
        %v4224 = vsel %vm863, %v4033, 0
        %4226 = vmatpush.bf16.msra.mxu0 0
        %4227 = vmatpush.bf16.msra.mxu0 0
        %4228 = vmatpush.bf16.msra.mxu0 0
        %4229 = vmatpush.bf16.msra.mxu0 0
        %4230 = vmatpush.bf16.msra.mxu0 0
        %4231 = vmatpush.bf16.msra.mxu0 0
        %4232 = vmatpush.bf16.msra.mxu0 %v1061
        %4233 = vmatpush.bf16.msra.mxu0 %v860
        %4234 = vmatmul.bf16.gmra.mxu0 %v4035
        %v4235 = vpop.f32.mrf.mxu0
        %v4236 = vadd.f32 0.0, %v4235
        %v4237 = vpop.f32.mrf.mxu0
        %v4238 = vadd.f32 0.0, %v4237
        %4239 = vmatmul.bf16.gmra.mxu0 %v4038
        %v4240 = vpop.f32.mrf.mxu0
        %v4241 = vadd.f32 0.0, %v4240
        %v4242 = vpop.f32.mrf.mxu0
        %v4243 = vadd.f32 0.0, %v4242
        %4244 = vmatmul.bf16.gmra.mxu0 %v4041
        %v4245 = vpop.f32.mrf.mxu0
        %v4246 = vadd.f32 0.0, %v4245
        %v4247 = vpop.f32.mrf.mxu0
        %v4248 = vadd.f32 0.0, %v4247
        %4249 = vmatmul.bf16.gmra.mxu0 %v4044
        %v4250 = vpop.f32.mrf.mxu0
        %v4251 = vadd.f32 0.0, %v4250
        %v4252 = vpop.f32.mrf.mxu0
        %v4253 = vadd.f32 0.0, %v4252
        %4254 = vmatmul.bf16.gmra.mxu0 %v4047
        %v4255 = vpop.f32.mrf.mxu0
        %v4256 = vadd.f32 0.0, %v4255
        %v4257 = vpop.f32.mrf.mxu0
        %v4258 = vadd.f32 0.0, %v4257
        %4259 = vmatmul.bf16.gmra.mxu0 %v4050
        %v4260 = vpop.f32.mrf.mxu0
        %v4261 = vadd.f32 0.0, %v4260
        %v4262 = vpop.f32.mrf.mxu0
        %v4263 = vadd.f32 0.0, %v4262
        %4264 = vmatmul.bf16.gmra.mxu0 %v4053
        %v4265 = vpop.f32.mrf.mxu0
        %v4266 = vadd.f32 0.0, %v4265
        %v4267 = vpop.f32.mrf.mxu0
        %v4268 = vadd.f32 0.0, %v4267
        %4269 = vmatmul.bf16.gmra.mxu0 %v4056
        %v4270 = vpop.f32.mrf.mxu0
        %v4271 = vadd.f32 0.0, %v4270
        %v4272 = vpop.f32.mrf.mxu0
        %v4273 = vadd.f32 0.0, %v4272
        %4274 = vmatmul.bf16.gmra.mxu0 %v4059
        %v4275 = vpop.f32.mrf.mxu0
        %v4276 = vadd.f32 0.0, %v4275
        %v4277 = vpop.f32.mrf.mxu0
        %v4278 = vadd.f32 0.0, %v4277
        %4279 = vmatmul.bf16.gmra.mxu0 %v4062
        %v4280 = vpop.f32.mrf.mxu0
        %v4281 = vadd.f32 0.0, %v4280
        %v4282 = vpop.f32.mrf.mxu0
        %v4283 = vadd.f32 0.0, %v4282
        %4284 = vmatmul.bf16.gmra.mxu0 %v4065
        %v4285 = vpop.f32.mrf.mxu0
        %v4286 = vadd.f32 0.0, %v4285
        %v4287 = vpop.f32.mrf.mxu0
        %v4288 = vadd.f32 0.0, %v4287
        %4289 = vmatmul.bf16.gmra.mxu0 %v4068
        %v4290 = vpop.f32.mrf.mxu0
        %v4291 = vadd.f32 0.0, %v4290
        %v4292 = vpop.f32.mrf.mxu0
        %v4293 = vadd.f32 0.0, %v4292
        %4294 = vmatmul.bf16.gmra.mxu0 %v4071
        %v4295 = vpop.f32.mrf.mxu0
        %v4296 = vadd.f32 0.0, %v4295
        %v4297 = vpop.f32.mrf.mxu0
        %v4298 = vadd.f32 0.0, %v4297
        %4299 = vmatmul.bf16.gmra.mxu0 %v4074
        %v4300 = vpop.f32.mrf.mxu0
        %v4301 = vadd.f32 0.0, %v4300
        %v4302 = vpop.f32.mrf.mxu0
        %v4303 = vadd.f32 0.0, %v4302
        %4304 = vmatmul.bf16.gmra.mxu0 %v4077
        %v4305 = vpop.f32.mrf.mxu0
        %v4306 = vadd.f32 0.0, %v4305
        %v4307 = vpop.f32.mrf.mxu0
        %v4308 = vadd.f32 0.0, %v4307
        %4309 = vmatmul.bf16.gmra.mxu0 %v4080
        %v4310 = vpop.f32.mrf.mxu0
        %v4311 = vadd.f32 0.0, %v4310
        %v4312 = vpop.f32.mrf.mxu0
        %v4313 = vadd.f32 0.0, %v4312
        %4314 = vmatmul.bf16.gmra.mxu0 %v4083
        %v4315 = vpop.f32.mrf.mxu0
        %v4316 = vadd.f32 0.0, %v4315
        %v4317 = vpop.f32.mrf.mxu0
        %v4318 = vadd.f32 0.0, %v4317
        %4319 = vmatmul.bf16.gmra.mxu0 %v4086
        %v4320 = vpop.f32.mrf.mxu0
        %v4321 = vadd.f32 0.0, %v4320
        %v4322 = vpop.f32.mrf.mxu0
        %v4323 = vadd.f32 0.0, %v4322
        %4324 = vmatmul.bf16.gmra.mxu0 %v4089
        %v4325 = vpop.f32.mrf.mxu0
        %v4326 = vadd.f32 0.0, %v4325
        %v4327 = vpop.f32.mrf.mxu0
        %v4328 = vadd.f32 0.0, %v4327
        %4329 = vmatmul.bf16.gmra.mxu0 %v4092
        %v4330 = vpop.f32.mrf.mxu0
        %v4331 = vadd.f32 0.0, %v4330
        %v4332 = vpop.f32.mrf.mxu0
        %v4333 = vadd.f32 0.0, %v4332
        %4334 = vmatmul.bf16.gmra.mxu0 %v4095
        %v4335 = vpop.f32.mrf.mxu0
        %v4336 = vadd.f32 0.0, %v4335
        %v4337 = vpop.f32.mrf.mxu0
        %v4338 = vadd.f32 0.0, %v4337
        %4339 = vmatmul.bf16.gmra.mxu0 %v4098
        %v4340 = vpop.f32.mrf.mxu0
        %v4341 = vadd.f32 0.0, %v4340
        %v4342 = vpop.f32.mrf.mxu0
        %v4343 = vadd.f32 0.0, %v4342
        %4344 = vmatmul.bf16.gmra.mxu0 %v4101
        %v4345 = vpop.f32.mrf.mxu0
        %v4346 = vadd.f32 0.0, %v4345
        %v4347 = vpop.f32.mrf.mxu0
        %v4348 = vadd.f32 0.0, %v4347
        %4349 = vmatmul.bf16.gmra.mxu0 %v4104
        %v4350 = vpop.f32.mrf.mxu0
        %v4351 = vadd.f32 0.0, %v4350
        %v4352 = vpop.f32.mrf.mxu0
        %v4353 = vadd.f32 0.0, %v4352
        %4354 = vmatmul.bf16.gmra.mxu0 %v4107
        %v4355 = vpop.f32.mrf.mxu0
        %v4356 = vadd.f32 0.0, %v4355
        %v4357 = vpop.f32.mrf.mxu0
        %v4358 = vadd.f32 0.0, %v4357
        %4359 = vmatmul.bf16.gmra.mxu0 %v4110
        %v4360 = vpop.f32.mrf.mxu0
        %v4361 = vadd.f32 0.0, %v4360
        %v4362 = vpop.f32.mrf.mxu0
        %v4363 = vadd.f32 0.0, %v4362
        %4364 = vmatmul.bf16.gmra.mxu0 %v4113
        %v4365 = vpop.f32.mrf.mxu0
        %v4366 = vadd.f32 0.0, %v4365
        %v4367 = vpop.f32.mrf.mxu0
        %v4368 = vadd.f32 0.0, %v4367
        %4369 = vmatmul.bf16.gmra.mxu0 %v4116
        %v4370 = vpop.f32.mrf.mxu0
        %v4371 = vadd.f32 0.0, %v4370
        %v4372 = vpop.f32.mrf.mxu0
        %v4373 = vadd.f32 0.0, %v4372
        %4374 = vmatmul.bf16.gmra.mxu0 %v4119
        %v4375 = vpop.f32.mrf.mxu0
        %v4376 = vadd.f32 0.0, %v4375
        %v4377 = vpop.f32.mrf.mxu0
        %v4378 = vadd.f32 0.0, %v4377
        %4379 = vmatmul.bf16.gmra.mxu0 %v4122
        %v4380 = vpop.f32.mrf.mxu0
        %v4381 = vadd.f32 0.0, %v4380
        %v4382 = vpop.f32.mrf.mxu0
        %v4383 = vadd.f32 0.0, %v4382
        %4384 = vmatmul.bf16.gmra.mxu0 %v4125
        %v4385 = vpop.f32.mrf.mxu0
        %v4386 = vadd.f32 0.0, %v4385
        %v4387 = vpop.f32.mrf.mxu0
        %v4388 = vadd.f32 0.0, %v4387
        %4389 = vmatmul.bf16.gmra.mxu0 %v4128
        %v4390 = vpop.f32.mrf.mxu0
        %v4391 = vadd.f32 0.0, %v4390
        %v4392 = vpop.f32.mrf.mxu0
        %v4393 = vadd.f32 0.0, %v4392
        %4394 = vmatmul.bf16.gmra.mxu0 %v4131
        %v4395 = vpop.f32.mrf.mxu0
        %v4396 = vadd.f32 0.0, %v4395
        %v4397 = vpop.f32.mrf.mxu0
        %v4398 = vadd.f32 0.0, %v4397
        %4399 = vmatmul.bf16.gmra.mxu0 %v4134
        %v4400 = vpop.f32.mrf.mxu0
        %v4401 = vadd.f32 0.0, %v4400
        %v4402 = vpop.f32.mrf.mxu0
        %v4403 = vadd.f32 0.0, %v4402
        %4404 = vmatmul.bf16.gmra.mxu0 %v4137
        %v4405 = vpop.f32.mrf.mxu0
        %v4406 = vadd.f32 0.0, %v4405
        %v4407 = vpop.f32.mrf.mxu0
        %v4408 = vadd.f32 0.0, %v4407
        %4409 = vmatmul.bf16.gmra.mxu0 %v4140
        %v4410 = vpop.f32.mrf.mxu0
        %v4411 = vadd.f32 0.0, %v4410
        %v4412 = vpop.f32.mrf.mxu0
        %v4413 = vadd.f32 0.0, %v4412
        %4414 = vmatmul.bf16.gmra.mxu0 %v4143
        %v4415 = vpop.f32.mrf.mxu0
        %v4416 = vadd.f32 0.0, %v4415
        %v4417 = vpop.f32.mrf.mxu0
        %v4418 = vadd.f32 0.0, %v4417
        %4419 = vmatmul.bf16.gmra.mxu0 %v4146
        %v4420 = vpop.f32.mrf.mxu0
        %v4421 = vadd.f32 0.0, %v4420
        %v4422 = vpop.f32.mrf.mxu0
        %v4423 = vadd.f32 0.0, %v4422
        %4424 = vmatmul.bf16.gmra.mxu0 %v4149
        %v4425 = vpop.f32.mrf.mxu0
        %v4426 = vadd.f32 0.0, %v4425
        %v4427 = vpop.f32.mrf.mxu0
        %v4428 = vadd.f32 0.0, %v4427
        %4429 = vmatmul.bf16.gmra.mxu0 %v4152
        %v4430 = vpop.f32.mrf.mxu0
        %v4431 = vadd.f32 0.0, %v4430
        %v4432 = vpop.f32.mrf.mxu0
        %v4433 = vadd.f32 0.0, %v4432
        %4434 = vmatmul.bf16.gmra.mxu0 %v4155
        %v4435 = vpop.f32.mrf.mxu0
        %v4436 = vadd.f32 0.0, %v4435
        %v4437 = vpop.f32.mrf.mxu0
        %v4438 = vadd.f32 0.0, %v4437
        %4439 = vmatmul.bf16.gmra.mxu0 %v4158
        %v4440 = vpop.f32.mrf.mxu0
        %v4441 = vadd.f32 0.0, %v4440
        %v4442 = vpop.f32.mrf.mxu0
        %v4443 = vadd.f32 0.0, %v4442
        %4444 = vmatmul.bf16.gmra.mxu0 %v4161
        %v4445 = vpop.f32.mrf.mxu0
        %v4446 = vadd.f32 0.0, %v4445
        %v4447 = vpop.f32.mrf.mxu0
        %v4448 = vadd.f32 0.0, %v4447
        %4449 = vmatmul.bf16.gmra.mxu0 %v4164
        %v4450 = vpop.f32.mrf.mxu0
        %v4451 = vadd.f32 0.0, %v4450
        %v4452 = vpop.f32.mrf.mxu0
        %v4453 = vadd.f32 0.0, %v4452
        %4454 = vmatmul.bf16.gmra.mxu0 %v4167
        %v4455 = vpop.f32.mrf.mxu0
        %v4456 = vadd.f32 0.0, %v4455
        %v4457 = vpop.f32.mrf.mxu0
        %v4458 = vadd.f32 0.0, %v4457
        %4459 = vmatmul.bf16.gmra.mxu0 %v4170
        %v4460 = vpop.f32.mrf.mxu0
        %v4461 = vadd.f32 0.0, %v4460
        %v4462 = vpop.f32.mrf.mxu0
        %v4463 = vadd.f32 0.0, %v4462
        %4464 = vmatmul.bf16.gmra.mxu0 %v4173
        %v4465 = vpop.f32.mrf.mxu0
        %v4466 = vadd.f32 0.0, %v4465
        %v4467 = vpop.f32.mrf.mxu0
        %v4468 = vadd.f32 0.0, %v4467
        %4469 = vmatmul.bf16.gmra.mxu0 %v4176
        %v4470 = vpop.f32.mrf.mxu0
        %v4471 = vadd.f32 0.0, %v4470
        %v4472 = vpop.f32.mrf.mxu0
        %v4473 = vadd.f32 0.0, %v4472
        %4474 = vmatmul.bf16.gmra.mxu0 %v4179
        %v4475 = vpop.f32.mrf.mxu0
        %v4476 = vadd.f32 0.0, %v4475
        %v4477 = vpop.f32.mrf.mxu0
        %v4478 = vadd.f32 0.0, %v4477
        %4479 = vmatmul.bf16.gmra.mxu0 %v4182
        %v4480 = vpop.f32.mrf.mxu0
        %v4481 = vadd.f32 0.0, %v4480
        %v4482 = vpop.f32.mrf.mxu0
        %v4483 = vadd.f32 0.0, %v4482
        %4484 = vmatmul.bf16.gmra.mxu0 %v4185
        %v4485 = vpop.f32.mrf.mxu0
        %v4486 = vadd.f32 0.0, %v4485
        %v4487 = vpop.f32.mrf.mxu0
        %v4488 = vadd.f32 0.0, %v4487
        %4489 = vmatmul.bf16.gmra.mxu0 %v4188
        %v4490 = vpop.f32.mrf.mxu0
        %v4491 = vadd.f32 0.0, %v4490
        %v4492 = vpop.f32.mrf.mxu0
        %v4493 = vadd.f32 0.0, %v4492
        %4494 = vmatmul.bf16.gmra.mxu0 %v4191
        %v4495 = vpop.f32.mrf.mxu0
        %v4496 = vadd.f32 0.0, %v4495
        %v4497 = vpop.f32.mrf.mxu0
        %v4498 = vadd.f32 0.0, %v4497
        %4499 = vmatmul.bf16.gmra.mxu0 %v4194
        %v4500 = vpop.f32.mrf.mxu0
        %v4501 = vadd.f32 0.0, %v4500
        %v4502 = vpop.f32.mrf.mxu0
        %v4503 = vadd.f32 0.0, %v4502
        %4504 = vmatmul.bf16.gmra.mxu0 %v4197
        %v4505 = vpop.f32.mrf.mxu0
        %v4506 = vadd.f32 0.0, %v4505
        %v4507 = vpop.f32.mrf.mxu0
        %v4508 = vadd.f32 0.0, %v4507
        %4509 = vmatmul.bf16.gmra.mxu0 %v4200
        %v4510 = vpop.f32.mrf.mxu0
        %v4511 = vadd.f32 0.0, %v4510
        %v4512 = vpop.f32.mrf.mxu0
        %v4513 = vadd.f32 0.0, %v4512
        %4514 = vmatmul.bf16.gmra.mxu0 %v4203
        %v4515 = vpop.f32.mrf.mxu0
        %v4516 = vadd.f32 0.0, %v4515
        %v4517 = vpop.f32.mrf.mxu0
        %v4518 = vadd.f32 0.0, %v4517
        %4519 = vmatmul.bf16.gmra.mxu0 %v4206
        %v4520 = vpop.f32.mrf.mxu0
        %v4521 = vadd.f32 0.0, %v4520
        %v4522 = vpop.f32.mrf.mxu0
        %v4523 = vadd.f32 0.0, %v4522
        %4524 = vmatmul.bf16.gmra.mxu0 %v4209
        %v4525 = vpop.f32.mrf.mxu0
        %v4526 = vadd.f32 0.0, %v4525
        %v4527 = vpop.f32.mrf.mxu0
        %v4528 = vadd.f32 0.0, %v4527
        %4529 = vmatmul.bf16.gmra.mxu0 %v4212
        %v4530 = vpop.f32.mrf.mxu0
        %v4531 = vadd.f32 0.0, %v4530
        %v4532 = vpop.f32.mrf.mxu0
        %v4533 = vadd.f32 0.0, %v4532
        %4534 = vmatmul.bf16.gmra.mxu0 %v4215
        %v4535 = vpop.f32.mrf.mxu0
        %v4536 = vadd.f32 0.0, %v4535
        %v4537 = vpop.f32.mrf.mxu0
        %v4538 = vadd.f32 0.0, %v4537
        %4539 = vmatmul.bf16.gmra.mxu0 %v4218
        %v4540 = vpop.f32.mrf.mxu0
        %v4541 = vadd.f32 0.0, %v4540
        %v4542 = vpop.f32.mrf.mxu0
        %v4543 = vadd.f32 0.0, %v4542
        %4544 = vmatmul.bf16.gmra.mxu0 %v4221
        %v4545 = vpop.f32.mrf.mxu0
        %v4546 = vadd.f32 0.0, %v4545
        %v4547 = vpop.f32.mrf.mxu0
        %v4548 = vadd.f32 0.0, %v4547
        %4549 = vmatmul.bf16.gmra.mxu0 %v4224
        %v4550 = vpop.f32.mrf.mxu0
        %v4551 = vadd.f32 0.0, %v4550
        %v4552 = vpop.f32.mrf.mxu0
        %v4553 = vadd.f32 0.0, %v4552
        %4554 = vdwg.mxu0
        %v4555 = vmax.f32 %v3458, %v4236
        %v4556 = vmax.f32 %v3459, %v4238
        %v4557 = vmax.f32 %v3460, %v4241
        %v4558 = vmax.f32 %v3461, %v4243
        %v4559 = vmax.f32 %v3462, %v4246
        %v4560 = vmax.f32 %v3463, %v4248
        %v4561 = vmax.f32 %v3464, %v4251
        %v4562 = vmax.f32 %v3465, %v4253
        %v4563 = vmax.f32 %v3466, %v4256
        %v4564 = vmax.f32 %v3467, %v4258
        %v4565 = vmax.f32 %v3468, %v4261
        %v4566 = vmax.f32 %v3469, %v4263
        %v4567 = vmax.f32 %v3470, %v4266
        %v4568 = vmax.f32 %v3471, %v4268
        %v4569 = vmax.f32 %v3472, %v4271
        %v4570 = vmax.f32 %v3473, %v4273
        %v4571 = vmax.f32 %v3474, %v4276
        %v4572 = vmax.f32 %v3475, %v4278
        %v4573 = vmax.f32 %v3476, %v4281
        %v4574 = vmax.f32 %v3477, %v4283
        %v4575 = vmax.f32 %v3478, %v4286
        %v4576 = vmax.f32 %v3479, %v4288
        %v4577 = vmax.f32 %v3480, %v4291
        %v4578 = vmax.f32 %v3481, %v4293
        %v4579 = vmax.f32 %v3482, %v4296
        %v4580 = vmax.f32 %v3483, %v4298
        %v4581 = vmax.f32 %v3484, %v4301
        %v4582 = vmax.f32 %v3485, %v4303
        %v4583 = vmax.f32 %v3486, %v4306
        %v4584 = vmax.f32 %v3487, %v4308
        %v4585 = vmax.f32 %v3488, %v4311
        %v4586 = vmax.f32 %v3489, %v4313
        %v4587 = vmax.f32 %v3490, %v4316
        %v4588 = vmax.f32 %v3491, %v4318
        %v4589 = vmax.f32 %v3492, %v4321
        %v4590 = vmax.f32 %v3493, %v4323
        %v4591 = vmax.f32 %v3494, %v4326
        %v4592 = vmax.f32 %v3495, %v4328
        %v4593 = vmax.f32 %v3496, %v4331
        %v4594 = vmax.f32 %v3497, %v4333
        %v4595 = vmax.f32 %v3498, %v4336
        %v4596 = vmax.f32 %v3499, %v4338
        %v4597 = vmax.f32 %v3500, %v4341
        %v4598 = vmax.f32 %v3501, %v4343
        %v4599 = vmax.f32 %v3502, %v4346
        %v4600 = vmax.f32 %v3503, %v4348
        %v4601 = vmax.f32 %v3504, %v4351
        %v4602 = vmax.f32 %v3505, %v4353
        %v4603 = vmax.f32 %v3506, %v4356
        %v4604 = vmax.f32 %v3507, %v4358
        %v4605 = vmax.f32 %v3508, %v4361
        %v4606 = vmax.f32 %v3509, %v4363
        %v4607 = vmax.f32 %v3510, %v4366
        %v4608 = vmax.f32 %v3511, %v4368
        %v4609 = vmax.f32 %v3512, %v4371
        %v4610 = vmax.f32 %v3513, %v4373
        %v4611 = vmax.f32 %v3514, %v4376
        %v4612 = vmax.f32 %v3515, %v4378
        %v4613 = vmax.f32 %v3516, %v4381
        %v4614 = vmax.f32 %v3517, %v4383
        %v4615 = vmax.f32 %v3518, %v4386
        %v4616 = vmax.f32 %v3519, %v4388
        %v4617 = vmax.f32 %v3520, %v4391
        %v4618 = vmax.f32 %v3521, %v4393
        %v4619 = vmax.f32 %v3522, %v4396
        %v4620 = vmax.f32 %v3523, %v4398
        %v4621 = vmax.f32 %v3524, %v4401
        %v4622 = vmax.f32 %v3525, %v4403
        %v4623 = vmax.f32 %v3526, %v4406
        %v4624 = vmax.f32 %v3527, %v4408
        %v4625 = vmax.f32 %v3528, %v4411
        %v4626 = vmax.f32 %v3529, %v4413
        %v4627 = vmax.f32 %v3530, %v4416
        %v4628 = vmax.f32 %v3531, %v4418
        %v4629 = vmax.f32 %v3532, %v4421
        %v4630 = vmax.f32 %v3533, %v4423
        %v4631 = vmax.f32 %v3534, %v4426
        %v4632 = vmax.f32 %v3535, %v4428
        %v4633 = vmax.f32 %v3536, %v4431
        %v4634 = vmax.f32 %v3537, %v4433
        %v4635 = vmax.f32 %v3538, %v4436
        %v4636 = vmax.f32 %v3539, %v4438
        %v4637 = vmax.f32 %v3540, %v4441
        %v4638 = vmax.f32 %v3541, %v4443
        %v4639 = vmax.f32 %v3542, %v4446
        %v4640 = vmax.f32 %v3543, %v4448
        %v4641 = vmax.f32 %v3544, %v4451
        %v4642 = vmax.f32 %v3545, %v4453
        %v4643 = vmax.f32 %v3546, %v4456
        %v4644 = vmax.f32 %v3547, %v4458
        %v4645 = vmax.f32 %v3548, %v4461
        %v4646 = vmax.f32 %v3549, %v4463
        %v4647 = vmax.f32 %v3550, %v4466
        %v4648 = vmax.f32 %v3551, %v4468
        %v4649 = vmax.f32 %v3552, %v4471
        %v4650 = vmax.f32 %v3553, %v4473
        %v4651 = vmax.f32 %v3554, %v4476
        %v4652 = vmax.f32 %v3555, %v4478
        %v4653 = vmax.f32 %v3556, %v4481
        %v4654 = vmax.f32 %v3557, %v4483
        %v4655 = vmax.f32 %v3558, %v4486
        %v4656 = vmax.f32 %v3559, %v4488
        %v4657 = vmax.f32 %v3560, %v4491
        %v4658 = vmax.f32 %v3561, %v4493
        %v4659 = vmax.f32 %v3562, %v4496
        %v4660 = vmax.f32 %v3563, %v4498
        %v4661 = vmax.f32 %v3564, %v4501
        %v4662 = vmax.f32 %v3565, %v4503
        %v4663 = vmax.f32 %v3566, %v4506
        %v4664 = vmax.f32 %v3567, %v4508
        %v4665 = vmax.f32 %v3568, %v4511
        %v4666 = vmax.f32 %v3569, %v4513
        %v4667 = vmax.f32 %v3570, %v4516
        %v4668 = vmax.f32 %v3571, %v4518
        %v4669 = vmax.f32 %v3572, %v4521
        %v4670 = vmax.f32 %v3573, %v4523
        %v4671 = vmax.f32 %v3574, %v4526
        %v4672 = vmax.f32 %v3575, %v4528
        %v4673 = vmax.f32 %v3576, %v4531
        %v4674 = vmax.f32 %v3577, %v4533
        %v4675 = vmax.f32 %v3578, %v4536
        %v4676 = vmax.f32 %v3579, %v4538
        %v4677 = vmax.f32 %v3580, %v4541
        %v4678 = vmax.f32 %v3581, %v4543
        %v4679 = vmax.f32 %v3582, %v4546
        %v4680 = vmax.f32 %v3583, %v4548
        %v4681 = vmax.f32 %v3584, %v4551
        %v4682 = vmax.f32 %v3585, %v4553
        %v4683 = vld [vmem:[%s5] sm:$0x1]
        %v4685 = vperm.slane %v4683, 0
        %v4687 = vadd.f32 %v4555, %v4685
        %v4688 = vadd.f32 %v4556, %v4685
        %v4689 = vadd.f32 %v4557, %v4685
        %v4690 = vadd.f32 %v4558, %v4685
        %v4691 = vadd.f32 %v4559, %v4685
        %v4692 = vadd.f32 %v4560, %v4685
        %v4693 = vadd.f32 %v4561, %v4685
        %v4694 = vadd.f32 %v4562, %v4685
        %v4695 = vadd.f32 %v4563, %v4685
        %v4696 = vadd.f32 %v4564, %v4685
        %v4697 = vadd.f32 %v4565, %v4685
        %v4698 = vadd.f32 %v4566, %v4685
        %v4699 = vadd.f32 %v4567, %v4685
        %v4700 = vadd.f32 %v4568, %v4685
        %v4701 = vadd.f32 %v4569, %v4685
        %v4702 = vadd.f32 %v4570, %v4685
        %v4703 = vadd.f32 %v4571, %v4685
        %v4704 = vadd.f32 %v4572, %v4685
        %v4705 = vadd.f32 %v4573, %v4685
        %v4706 = vadd.f32 %v4574, %v4685
        %v4707 = vadd.f32 %v4575, %v4685
        %v4708 = vadd.f32 %v4576, %v4685
        %v4709 = vadd.f32 %v4577, %v4685
        %v4710 = vadd.f32 %v4578, %v4685
        %v4711 = vadd.f32 %v4579, %v4685
        %v4712 = vadd.f32 %v4580, %v4685
        %v4713 = vadd.f32 %v4581, %v4685
        %v4714 = vadd.f32 %v4582, %v4685
        %v4715 = vadd.f32 %v4583, %v4685
        %v4716 = vadd.f32 %v4584, %v4685
        %v4717 = vadd.f32 %v4585, %v4685
        %v4718 = vadd.f32 %v4586, %v4685
        %v4719 = vadd.f32 %v4587, %v4685
        %v4720 = vadd.f32 %v4588, %v4685
        %v4721 = vadd.f32 %v4589, %v4685
        %v4722 = vadd.f32 %v4590, %v4685
        %v4723 = vadd.f32 %v4591, %v4685
        %v4724 = vadd.f32 %v4592, %v4685
        %v4725 = vadd.f32 %v4593, %v4685
        %v4726 = vadd.f32 %v4594, %v4685
        %v4727 = vadd.f32 %v4595, %v4685
        %v4728 = vadd.f32 %v4596, %v4685
        %v4729 = vadd.f32 %v4597, %v4685
        %v4730 = vadd.f32 %v4598, %v4685
        %v4731 = vadd.f32 %v4599, %v4685
        %v4732 = vadd.f32 %v4600, %v4685
        %v4733 = vadd.f32 %v4601, %v4685
        %v4734 = vadd.f32 %v4602, %v4685
        %v4735 = vadd.f32 %v4603, %v4685
        %v4736 = vadd.f32 %v4604, %v4685
        %v4737 = vadd.f32 %v4605, %v4685
        %v4738 = vadd.f32 %v4606, %v4685
        %v4739 = vadd.f32 %v4607, %v4685
        %v4740 = vadd.f32 %v4608, %v4685
        %v4741 = vadd.f32 %v4609, %v4685
        %v4742 = vadd.f32 %v4610, %v4685
        %v4743 = vadd.f32 %v4611, %v4685
        %v4744 = vadd.f32 %v4612, %v4685
        %v4745 = vadd.f32 %v4613, %v4685
        %v4746 = vadd.f32 %v4614, %v4685
        %v4747 = vadd.f32 %v4615, %v4685
        %v4748 = vadd.f32 %v4616, %v4685
        %v4749 = vadd.f32 %v4617, %v4685
        %v4750 = vadd.f32 %v4618, %v4685
        %v4751 = vadd.f32 %v4619, %v4685
        %v4752 = vadd.f32 %v4620, %v4685
        %v4753 = vadd.f32 %v4621, %v4685
        %v4754 = vadd.f32 %v4622, %v4685
        %v4755 = vadd.f32 %v4623, %v4685
        %v4756 = vadd.f32 %v4624, %v4685
        %v4757 = vadd.f32 %v4625, %v4685
        %v4758 = vadd.f32 %v4626, %v4685
        %v4759 = vadd.f32 %v4627, %v4685
        %v4760 = vadd.f32 %v4628, %v4685
        %v4761 = vadd.f32 %v4629, %v4685
        %v4762 = vadd.f32 %v4630, %v4685
        %v4763 = vadd.f32 %v4631, %v4685
        %v4764 = vadd.f32 %v4632, %v4685
        %v4765 = vadd.f32 %v4633, %v4685
        %v4766 = vadd.f32 %v4634, %v4685
        %v4767 = vadd.f32 %v4635, %v4685
        %v4768 = vadd.f32 %v4636, %v4685
        %v4769 = vadd.f32 %v4637, %v4685
        %v4770 = vadd.f32 %v4638, %v4685
        %v4771 = vadd.f32 %v4639, %v4685
        %v4772 = vadd.f32 %v4640, %v4685
        %v4773 = vadd.f32 %v4641, %v4685
        %v4774 = vadd.f32 %v4642, %v4685
        %v4775 = vadd.f32 %v4643, %v4685
        %v4776 = vadd.f32 %v4644, %v4685
        %v4777 = vadd.f32 %v4645, %v4685
        %v4778 = vadd.f32 %v4646, %v4685
        %v4779 = vadd.f32 %v4647, %v4685
        %v4780 = vadd.f32 %v4648, %v4685
        %v4781 = vadd.f32 %v4649, %v4685
        %v4782 = vadd.f32 %v4650, %v4685
        %v4783 = vadd.f32 %v4651, %v4685
        %v4784 = vadd.f32 %v4652, %v4685
        %v4785 = vadd.f32 %v4653, %v4685
        %v4786 = vadd.f32 %v4654, %v4685
        %v4787 = vadd.f32 %v4655, %v4685
        %v4788 = vadd.f32 %v4656, %v4685
        %v4789 = vadd.f32 %v4657, %v4685
        %v4790 = vadd.f32 %v4658, %v4685
        %v4791 = vadd.f32 %v4659, %v4685
        %v4792 = vadd.f32 %v4660, %v4685
        %v4793 = vadd.f32 %v4661, %v4685
        %v4794 = vadd.f32 %v4662, %v4685
        %v4795 = vadd.f32 %v4663, %v4685
        %v4796 = vadd.f32 %v4664, %v4685
        %v4797 = vadd.f32 %v4665, %v4685
        %v4798 = vadd.f32 %v4666, %v4685
        %v4799 = vadd.f32 %v4667, %v4685
        %v4800 = vadd.f32 %v4668, %v4685
        %v4801 = vadd.f32 %v4669, %v4685
        %v4802 = vadd.f32 %v4670, %v4685
        %v4803 = vadd.f32 %v4671, %v4685
        %v4804 = vadd.f32 %v4672, %v4685
        %v4805 = vadd.f32 %v4673, %v4685
        %v4806 = vadd.f32 %v4674, %v4685
        %v4807 = vadd.f32 %v4675, %v4685
        %v4808 = vadd.f32 %v4676, %v4685
        %v4809 = vadd.f32 %v4677, %v4685
        %v4810 = vadd.f32 %v4678, %v4685
        %v4811 = vadd.f32 %v4679, %v4685
        %v4812 = vadd.f32 %v4680, %v4685
        %v4813 = vadd.f32 %v4681, %v4685
        %v4814 = vadd.f32 %v4682, %v4685
        %v4815 = vmax.f32 %v4687, 0.0
        %v4816 = vmax.f32 %v4688, 0.0
        %v4817 = vmax.f32 %v4689, 0.0
        %v4818 = vmax.f32 %v4690, 0.0
        %v4819 = vmax.f32 %v4691, 0.0
        %v4820 = vmax.f32 %v4692, 0.0
        %v4821 = vmax.f32 %v4693, 0.0
        %v4822 = vmax.f32 %v4694, 0.0
        %v4823 = vmax.f32 %v4695, 0.0
        %v4824 = vmax.f32 %v4696, 0.0
        %v4825 = vmax.f32 %v4697, 0.0
        %v4826 = vmax.f32 %v4698, 0.0
        %v4827 = vmax.f32 %v4699, 0.0
        %v4828 = vmax.f32 %v4700, 0.0
        %v4829 = vmax.f32 %v4701, 0.0
        %v4830 = vmax.f32 %v4702, 0.0
        %v4831 = vmax.f32 %v4703, 0.0
        %v4832 = vmax.f32 %v4704, 0.0
        %v4833 = vmax.f32 %v4705, 0.0
        %v4834 = vmax.f32 %v4706, 0.0
        %v4835 = vmax.f32 %v4707, 0.0
        %v4836 = vmax.f32 %v4708, 0.0
        %v4837 = vmax.f32 %v4709, 0.0
        %v4838 = vmax.f32 %v4710, 0.0
        %v4839 = vmax.f32 %v4711, 0.0
        %v4840 = vmax.f32 %v4712, 0.0
        %v4841 = vmax.f32 %v4713, 0.0
        %v4842 = vmax.f32 %v4714, 0.0
        %v4843 = vmax.f32 %v4715, 0.0
        %v4844 = vmax.f32 %v4716, 0.0
        %v4845 = vmax.f32 %v4717, 0.0
        %v4846 = vmax.f32 %v4718, 0.0
        %v4847 = vmax.f32 %v4719, 0.0
        %v4848 = vmax.f32 %v4720, 0.0
        %v4849 = vmax.f32 %v4721, 0.0
        %v4850 = vmax.f32 %v4722, 0.0
        %v4851 = vmax.f32 %v4723, 0.0
        %v4852 = vmax.f32 %v4724, 0.0
        %v4853 = vmax.f32 %v4725, 0.0
        %v4854 = vmax.f32 %v4726, 0.0
        %v4855 = vmax.f32 %v4727, 0.0
        %v4856 = vmax.f32 %v4728, 0.0
        %v4857 = vmax.f32 %v4729, 0.0
        %v4858 = vmax.f32 %v4730, 0.0
        %v4859 = vmax.f32 %v4731, 0.0
        %v4860 = vmax.f32 %v4732, 0.0
        %v4861 = vmax.f32 %v4733, 0.0
        %v4862 = vmax.f32 %v4734, 0.0
        %v4863 = vmax.f32 %v4735, 0.0
        %v4864 = vmax.f32 %v4736, 0.0
        %v4865 = vmax.f32 %v4737, 0.0
        %v4866 = vmax.f32 %v4738, 0.0
        %v4867 = vmax.f32 %v4739, 0.0
        %v4868 = vmax.f32 %v4740, 0.0
        %v4869 = vmax.f32 %v4741, 0.0
        %v4870 = vmax.f32 %v4742, 0.0
        %v4871 = vmax.f32 %v4743, 0.0
        %v4872 = vmax.f32 %v4744, 0.0
        %v4873 = vmax.f32 %v4745, 0.0
        %v4874 = vmax.f32 %v4746, 0.0
        %v4875 = vmax.f32 %v4747, 0.0
        %v4876 = vmax.f32 %v4748, 0.0
        %v4877 = vmax.f32 %v4749, 0.0
        %v4878 = vmax.f32 %v4750, 0.0
        %v4879 = vmax.f32 %v4751, 0.0
        %v4880 = vmax.f32 %v4752, 0.0
        %v4881 = vmax.f32 %v4753, 0.0
        %v4882 = vmax.f32 %v4754, 0.0
        %v4883 = vmax.f32 %v4755, 0.0
        %v4884 = vmax.f32 %v4756, 0.0
        %v4885 = vmax.f32 %v4757, 0.0
        %v4886 = vmax.f32 %v4758, 0.0
        %v4887 = vmax.f32 %v4759, 0.0
        %v4888 = vmax.f32 %v4760, 0.0
        %v4889 = vmax.f32 %v4761, 0.0
        %v4890 = vmax.f32 %v4762, 0.0
        %v4891 = vmax.f32 %v4763, 0.0
        %v4892 = vmax.f32 %v4764, 0.0
        %v4893 = vmax.f32 %v4765, 0.0
        %v4894 = vmax.f32 %v4766, 0.0
        %v4895 = vmax.f32 %v4767, 0.0
        %v4896 = vmax.f32 %v4768, 0.0
        %v4897 = vmax.f32 %v4769, 0.0
        %v4898 = vmax.f32 %v4770, 0.0
        %v4899 = vmax.f32 %v4771, 0.0
        %v4900 = vmax.f32 %v4772, 0.0
        %v4901 = vmax.f32 %v4773, 0.0
        %v4902 = vmax.f32 %v4774, 0.0
        %v4903 = vmax.f32 %v4775, 0.0
        %v4904 = vmax.f32 %v4776, 0.0
        %v4905 = vmax.f32 %v4777, 0.0
        %v4906 = vmax.f32 %v4778, 0.0
        %v4907 = vmax.f32 %v4779, 0.0
        %v4908 = vmax.f32 %v4780, 0.0
        %v4909 = vmax.f32 %v4781, 0.0
        %v4910 = vmax.f32 %v4782, 0.0
        %v4911 = vmax.f32 %v4783, 0.0
        %v4912 = vmax.f32 %v4784, 0.0
        %v4913 = vmax.f32 %v4785, 0.0
        %v4914 = vmax.f32 %v4786, 0.0
        %v4915 = vmax.f32 %v4787, 0.0
        %v4916 = vmax.f32 %v4788, 0.0
        %v4917 = vmax.f32 %v4789, 0.0
        %v4918 = vmax.f32 %v4790, 0.0
        %v4919 = vmax.f32 %v4791, 0.0
        %v4920 = vmax.f32 %v4792, 0.0
        %v4921 = vmax.f32 %v4793, 0.0
        %v4922 = vmax.f32 %v4794, 0.0
        %v4923 = vmax.f32 %v4795, 0.0
        %v4924 = vmax.f32 %v4796, 0.0
        %v4925 = vmax.f32 %v4797, 0.0
        %v4926 = vmax.f32 %v4798, 0.0
        %v4927 = vmax.f32 %v4799, 0.0
        %v4928 = vmax.f32 %v4800, 0.0
        %v4929 = vmax.f32 %v4801, 0.0
        %v4930 = vmax.f32 %v4802, 0.0
        %v4931 = vmax.f32 %v4803, 0.0
        %v4932 = vmax.f32 %v4804, 0.0
        %v4933 = vmax.f32 %v4805, 0.0
        %v4934 = vmax.f32 %v4806, 0.0
        %v4935 = vmax.f32 %v4807, 0.0
        %v4936 = vmax.f32 %v4808, 0.0
        %v4937 = vmax.f32 %v4809, 0.0
        %v4938 = vmax.f32 %v4810, 0.0
        %v4939 = vmax.f32 %v4811, 0.0
        %v4940 = vmax.f32 %v4812, 0.0
        %v4941 = vmax.f32 %v4813, 0.0
        %v4942 = vmax.f32 %v4814, 0.0
        %v4943 = vpack.c.bf16 %v4815, %v4815
        %v4944 = vpack.c.bf16 %v4816, %v4816
        %v4945 = vpack.c.bf16 %v4817, %v4817
        %v4946 = vpack.c.bf16 %v4818, %v4818
        %v4947 = vpack.c.bf16 %v4819, %v4819
        %v4948 = vpack.c.bf16 %v4820, %v4820
        %v4949 = vpack.c.bf16 %v4821, %v4821
        %v4950 = vpack.c.bf16 %v4822, %v4822
        %v4951 = vpack.c.bf16 %v4823, %v4823
        %v4952 = vpack.c.bf16 %v4824, %v4824
        %v4953 = vpack.c.bf16 %v4825, %v4825
        %v4954 = vpack.c.bf16 %v4826, %v4826
        %v4955 = vpack.c.bf16 %v4827, %v4827
        %v4956 = vpack.c.bf16 %v4828, %v4828
        %v4957 = vpack.c.bf16 %v4829, %v4829
        %v4958 = vpack.c.bf16 %v4830, %v4830
        %v4959 = vpack.c.bf16 %v4831, %v4831
        %v4960 = vpack.c.bf16 %v4832, %v4832
        %v4961 = vpack.c.bf16 %v4833, %v4833
        %v4962 = vpack.c.bf16 %v4834, %v4834
        %v4963 = vpack.c.bf16 %v4835, %v4835
        %v4964 = vpack.c.bf16 %v4836, %v4836
        %v4965 = vpack.c.bf16 %v4837, %v4837
        %v4966 = vpack.c.bf16 %v4838, %v4838
        %v4967 = vpack.c.bf16 %v4839, %v4839
        %v4968 = vpack.c.bf16 %v4840, %v4840
        %v4969 = vpack.c.bf16 %v4841, %v4841
        %v4970 = vpack.c.bf16 %v4842, %v4842
        %v4971 = vpack.c.bf16 %v4843, %v4843
        %v4972 = vpack.c.bf16 %v4844, %v4844
        %v4973 = vpack.c.bf16 %v4845, %v4845
        %v4974 = vpack.c.bf16 %v4846, %v4846
        %v4975 = vpack.c.bf16 %v4847, %v4847
        %v4976 = vpack.c.bf16 %v4848, %v4848
        %v4977 = vpack.c.bf16 %v4849, %v4849
        %v4978 = vpack.c.bf16 %v4850, %v4850
        %v4979 = vpack.c.bf16 %v4851, %v4851
        %v4980 = vpack.c.bf16 %v4852, %v4852
        %v4981 = vpack.c.bf16 %v4853, %v4853
        %v4982 = vpack.c.bf16 %v4854, %v4854
        %v4983 = vpack.c.bf16 %v4855, %v4855
        %v4984 = vpack.c.bf16 %v4856, %v4856
        %v4985 = vpack.c.bf16 %v4857, %v4857
        %v4986 = vpack.c.bf16 %v4858, %v4858
        %v4987 = vpack.c.bf16 %v4859, %v4859
        %v4988 = vpack.c.bf16 %v4860, %v4860
        %v4989 = vpack.c.bf16 %v4861, %v4861
        %v4990 = vpack.c.bf16 %v4862, %v4862
        %v4991 = vpack.c.bf16 %v4863, %v4863
        %v4992 = vpack.c.bf16 %v4864, %v4864
        %v4993 = vpack.c.bf16 %v4865, %v4865
        %v4994 = vpack.c.bf16 %v4866, %v4866
        %v4995 = vpack.c.bf16 %v4867, %v4867
        %v4996 = vpack.c.bf16 %v4868, %v4868
        %v4997 = vpack.c.bf16 %v4869, %v4869
        %v4998 = vpack.c.bf16 %v4870, %v4870
        %v4999 = vpack.c.bf16 %v4871, %v4871
        %v5000 = vpack.c.bf16 %v4872, %v4872
        %v5001 = vpack.c.bf16 %v4873, %v4873
        %v5002 = vpack.c.bf16 %v4874, %v4874
        %v5003 = vpack.c.bf16 %v4875, %v4875
        %v5004 = vpack.c.bf16 %v4876, %v4876
        %v5005 = vpack.c.bf16 %v4877, %v4877
        %v5006 = vpack.c.bf16 %v4878, %v4878
        %v5007 = vpack.c.bf16 %v4879, %v4879
        %v5008 = vpack.c.bf16 %v4880, %v4880
        %v5009 = vpack.c.bf16 %v4881, %v4881
        %v5010 = vpack.c.bf16 %v4882, %v4882
        %v5011 = vpack.c.bf16 %v4883, %v4883
        %v5012 = vpack.c.bf16 %v4884, %v4884
        %v5013 = vpack.c.bf16 %v4885, %v4885
        %v5014 = vpack.c.bf16 %v4886, %v4886
        %v5015 = vpack.c.bf16 %v4887, %v4887
        %v5016 = vpack.c.bf16 %v4888, %v4888
        %v5017 = vpack.c.bf16 %v4889, %v4889
        %v5018 = vpack.c.bf16 %v4890, %v4890
        %v5019 = vpack.c.bf16 %v4891, %v4891
        %v5020 = vpack.c.bf16 %v4892, %v4892
        %v5021 = vpack.c.bf16 %v4893, %v4893
        %v5022 = vpack.c.bf16 %v4894, %v4894
        %v5023 = vpack.c.bf16 %v4895, %v4895
        %v5024 = vpack.c.bf16 %v4896, %v4896
        %v5025 = vpack.c.bf16 %v4897, %v4897
        %v5026 = vpack.c.bf16 %v4898, %v4898
        %v5027 = vpack.c.bf16 %v4899, %v4899
        %v5028 = vpack.c.bf16 %v4900, %v4900
        %v5029 = vpack.c.bf16 %v4901, %v4901
        %v5030 = vpack.c.bf16 %v4902, %v4902
        %v5031 = vpack.c.bf16 %v4903, %v4903
        %v5032 = vpack.c.bf16 %v4904, %v4904
        %v5033 = vpack.c.bf16 %v4905, %v4905
        %v5034 = vpack.c.bf16 %v4906, %v4906
        %v5035 = vpack.c.bf16 %v4907, %v4907
        %v5036 = vpack.c.bf16 %v4908, %v4908
        %v5037 = vpack.c.bf16 %v4909, %v4909
        %v5038 = vpack.c.bf16 %v4910, %v4910
        %v5039 = vpack.c.bf16 %v4911, %v4911
        %v5040 = vpack.c.bf16 %v4912, %v4912
        %v5041 = vpack.c.bf16 %v4913, %v4913
        %v5042 = vpack.c.bf16 %v4914, %v4914
        %v5043 = vpack.c.bf16 %v4915, %v4915
        %v5044 = vpack.c.bf16 %v4916, %v4916
        %v5045 = vpack.c.bf16 %v4917, %v4917
        %v5046 = vpack.c.bf16 %v4918, %v4918
        %v5047 = vpack.c.bf16 %v4919, %v4919
        %v5048 = vpack.c.bf16 %v4920, %v4920
        %v5049 = vpack.c.bf16 %v4921, %v4921
        %v5050 = vpack.c.bf16 %v4922, %v4922
        %v5051 = vpack.c.bf16 %v4923, %v4923
        %v5052 = vpack.c.bf16 %v4924, %v4924
        %v5053 = vpack.c.bf16 %v4925, %v4925
        %v5054 = vpack.c.bf16 %v4926, %v4926
        %v5055 = vpack.c.bf16 %v4927, %v4927
        %v5056 = vpack.c.bf16 %v4928, %v4928
        %v5057 = vpack.c.bf16 %v4929, %v4929
        %v5058 = vpack.c.bf16 %v4930, %v4930
        %v5059 = vpack.c.bf16 %v4931, %v4931
        %v5060 = vpack.c.bf16 %v4932, %v4932
        %v5061 = vpack.c.bf16 %v4933, %v4933
        %v5062 = vpack.c.bf16 %v4934, %v4934
        %v5063 = vpack.c.bf16 %v4935, %v4935
        %v5064 = vpack.c.bf16 %v4936, %v4936
        %v5065 = vpack.c.bf16 %v4937, %v4937
        %v5066 = vpack.c.bf16 %v4938, %v4938
        %v5067 = vpack.c.bf16 %v4939, %v4939
        %v5068 = vpack.c.bf16 %v4940, %v4940
        %v5069 = vpack.c.bf16 %v4941, %v4941
        %v5070 = vpack.c.bf16 %v4942, %v4942
        %vm5071 = vcmask 257024
        %5072 = vst.msk [vmem:[%s337] sm:$0xf] %vm5071, %v4943
        %5073 = vst.msk [vmem:[%s337 + $0x4] sm:$0xf] %vm5071, %v4944
        %5074 = vst.msk [vmem:[%s337 + $0x8] sm:$0xf] %vm5071, %v4945
        %5075 = vst.msk [vmem:[%s337 + $0xc] sm:$0xf] %vm5071, %v4946
        %5076 = vst.msk [vmem:[%s337 + $0x10] sm:$0xf] %vm5071, %v4947
        %5077 = vst.msk [vmem:[%s337 + $0x14] sm:$0xf] %vm5071, %v4948
        %5078 = vst.msk [vmem:[%s337 + $0x18] sm:$0xf] %vm5071, %v4949
        %5079 = vst.msk [vmem:[%s337 + $0x1c] sm:$0xf] %vm5071, %v4950
        %5080 = vst.msk [vmem:[%s337 + $0x20] sm:$0xf] %vm5071, %v4951
        %5081 = vst.msk [vmem:[%s337 + $0x24] sm:$0xf] %vm5071, %v4952
        %5082 = vst.msk [vmem:[%s337 + $0x28] sm:$0xf] %vm5071, %v4953
        %5083 = vst.msk [vmem:[%s337 + $0x2c] sm:$0xf] %vm5071, %v4954
        %5084 = vst.msk [vmem:[%s337 + $0x30] sm:$0xf] %vm5071, %v4955
        %5085 = vst.msk [vmem:[%s337 + $0x34] sm:$0xf] %vm5071, %v4956
        %5086 = vst.msk [vmem:[%s337 + $0x38] sm:$0xf] %vm5071, %v4957
        %5087 = vst.msk [vmem:[%s337 + $0x3c] sm:$0xf] %vm5071, %v4958
        %5088 = vst.msk [vmem:[%s337 + $0x40] sm:$0xf] %vm5071, %v4959
        %5089 = vst.msk [vmem:[%s337 + $0x44] sm:$0xf] %vm5071, %v4960
        %5090 = vst.msk [vmem:[%s337 + $0x48] sm:$0xf] %vm5071, %v4961
        %5091 = vst.msk [vmem:[%s337 + $0x4c] sm:$0xf] %vm5071, %v4962
        %5092 = vst.msk [vmem:[%s337 + $0x50] sm:$0xf] %vm5071, %v4963
        %5093 = vst.msk [vmem:[%s337 + $0x54] sm:$0xf] %vm5071, %v4964
        %5094 = vst.msk [vmem:[%s337 + $0x58] sm:$0xf] %vm5071, %v4965
        %5095 = vst.msk [vmem:[%s337 + $0x5c] sm:$0xf] %vm5071, %v4966
        %5096 = vst.msk [vmem:[%s337 + $0x60] sm:$0xf] %vm5071, %v4967
        %5097 = vst.msk [vmem:[%s337 + $0x64] sm:$0xf] %vm5071, %v4968
        %5098 = vst.msk [vmem:[%s337 + $0x68] sm:$0xf] %vm5071, %v4969
        %5099 = vst.msk [vmem:[%s337 + $0x6c] sm:$0xf] %vm5071, %v4970
        %5100 = vst.msk [vmem:[%s337 + $0x70] sm:$0xf] %vm5071, %v4971
        %5101 = vst.msk [vmem:[%s337 + $0x74] sm:$0xf] %vm5071, %v4972
        %5102 = vst.msk [vmem:[%s337 + $0x78] sm:$0xf] %vm5071, %v4973
        %5103 = vst.msk [vmem:[%s337 + $0x7c] sm:$0xf] %vm5071, %v4974
        %5104 = vst.msk [vmem:[%s337 + $0x80] sm:$0xf] %vm5071, %v4975
        %5105 = vst.msk [vmem:[%s337 + $0x84] sm:$0xf] %vm5071, %v4976
        %5106 = vst.msk [vmem:[%s337 + $0x88] sm:$0xf] %vm5071, %v4977
        %5107 = vst.msk [vmem:[%s337 + $0x8c] sm:$0xf] %vm5071, %v4978
        %5108 = vst.msk [vmem:[%s337 + $0x90] sm:$0xf] %vm5071, %v4979
        %5109 = vst.msk [vmem:[%s337 + $0x94] sm:$0xf] %vm5071, %v4980
        %5110 = vst.msk [vmem:[%s337 + $0x98] sm:$0xf] %vm5071, %v4981
        %5111 = vst.msk [vmem:[%s337 + $0x9c] sm:$0xf] %vm5071, %v4982
        %5112 = vst.msk [vmem:[%s337 + $0xa0] sm:$0xf] %vm5071, %v4983
        %5113 = vst.msk [vmem:[%s337 + $0xa4] sm:$0xf] %vm5071, %v4984
        %5114 = vst.msk [vmem:[%s337 + $0xa8] sm:$0xf] %vm5071, %v4985
        %5115 = vst.msk [vmem:[%s337 + $0xac] sm:$0xf] %vm5071, %v4986
        %5116 = vst.msk [vmem:[%s337 + $0xb0] sm:$0xf] %vm5071, %v4987
        %5117 = vst.msk [vmem:[%s337 + $0xb4] sm:$0xf] %vm5071, %v4988
        %5118 = vst.msk [vmem:[%s337 + $0xb8] sm:$0xf] %vm5071, %v4989
        %5119 = vst.msk [vmem:[%s337 + $0xbc] sm:$0xf] %vm5071, %v4990
        %5120 = vst.msk [vmem:[%s337 + $0xc0] sm:$0xf] %vm5071, %v4991
        %5121 = vst.msk [vmem:[%s337 + $0xc4] sm:$0xf] %vm5071, %v4992
        %5122 = vst.msk [vmem:[%s337 + $0xc8] sm:$0xf] %vm5071, %v4993
        %5123 = vst.msk [vmem:[%s337 + $0xcc] sm:$0xf] %vm5071, %v4994
        %5124 = vst.msk [vmem:[%s337 + $0xd0] sm:$0xf] %vm5071, %v4995
        %5125 = vst.msk [vmem:[%s337 + $0xd4] sm:$0xf] %vm5071, %v4996
        %5126 = vst.msk [vmem:[%s337 + $0xd8] sm:$0xf] %vm5071, %v4997
        %5127 = vst.msk [vmem:[%s337 + $0xdc] sm:$0xf] %vm5071, %v4998
        %5128 = vst.msk [vmem:[%s337 + $0xe0] sm:$0xf] %vm5071, %v4999
        %5129 = vst.msk [vmem:[%s337 + $0xe4] sm:$0xf] %vm5071, %v5000
        %5130 = vst.msk [vmem:[%s337 + $0xe8] sm:$0xf] %vm5071, %v5001
        %5131 = vst.msk [vmem:[%s337 + $0xec] sm:$0xf] %vm5071, %v5002
        %5132 = vst.msk [vmem:[%s337 + $0xf0] sm:$0xf] %vm5071, %v5003
        %5133 = vst.msk [vmem:[%s337 + $0xf4] sm:$0xf] %vm5071, %v5004
        %5134 = vst.msk [vmem:[%s337 + $0xf8] sm:$0xf] %vm5071, %v5005
        %5135 = vst.msk [vmem:[%s337 + $0xfc] sm:$0xf] %vm5071, %v5006
        %5136 = vst.msk [vmem:[%s337 + $0x100] sm:$0xf] %vm5071, %v5007
        %5137 = vst.msk [vmem:[%s337 + $0x104] sm:$0xf] %vm5071, %v5008
        %5138 = vst.msk [vmem:[%s337 + $0x108] sm:$0xf] %vm5071, %v5009
        %5139 = vst.msk [vmem:[%s337 + $0x10c] sm:$0xf] %vm5071, %v5010
        %5140 = vst.msk [vmem:[%s337 + $0x110] sm:$0xf] %vm5071, %v5011
        %5141 = vst.msk [vmem:[%s337 + $0x114] sm:$0xf] %vm5071, %v5012
        %5142 = vst.msk [vmem:[%s337 + $0x118] sm:$0xf] %vm5071, %v5013
        %5143 = vst.msk [vmem:[%s337 + $0x11c] sm:$0xf] %vm5071, %v5014
        %5144 = vst.msk [vmem:[%s337 + $0x120] sm:$0xf] %vm5071, %v5015
        %5145 = vst.msk [vmem:[%s337 + $0x124] sm:$0xf] %vm5071, %v5016
        %5146 = vst.msk [vmem:[%s337 + $0x128] sm:$0xf] %vm5071, %v5017
        %5147 = vst.msk [vmem:[%s337 + $0x12c] sm:$0xf] %vm5071, %v5018
        %5148 = vst.msk [vmem:[%s337 + $0x130] sm:$0xf] %vm5071, %v5019
        %5149 = vst.msk [vmem:[%s337 + $0x134] sm:$0xf] %vm5071, %v5020
        %5150 = vst.msk [vmem:[%s337 + $0x138] sm:$0xf] %vm5071, %v5021
        %5151 = vst.msk [vmem:[%s337 + $0x13c] sm:$0xf] %vm5071, %v5022
        %5152 = vst.msk [vmem:[%s337 + $0x140] sm:$0xf] %vm5071, %v5023
        %5153 = vst.msk [vmem:[%s337 + $0x144] sm:$0xf] %vm5071, %v5024
        %5154 = vst.msk [vmem:[%s337 + $0x148] sm:$0xf] %vm5071, %v5025
        %5155 = vst.msk [vmem:[%s337 + $0x14c] sm:$0xf] %vm5071, %v5026
        %5156 = vst.msk [vmem:[%s337 + $0x150] sm:$0xf] %vm5071, %v5027
        %5157 = vst.msk [vmem:[%s337 + $0x154] sm:$0xf] %vm5071, %v5028
        %5158 = vst.msk [vmem:[%s337 + $0x158] sm:$0xf] %vm5071, %v5029
        %5159 = vst.msk [vmem:[%s337 + $0x15c] sm:$0xf] %vm5071, %v5030
        %5160 = vst.msk [vmem:[%s337 + $0x160] sm:$0xf] %vm5071, %v5031
        %5161 = vst.msk [vmem:[%s337 + $0x164] sm:$0xf] %vm5071, %v5032
        %5162 = vst.msk [vmem:[%s337 + $0x168] sm:$0xf] %vm5071, %v5033
        %5163 = vst.msk [vmem:[%s337 + $0x16c] sm:$0xf] %vm5071, %v5034
        %5164 = vst.msk [vmem:[%s337 + $0x170] sm:$0xf] %vm5071, %v5035
        %5165 = vst.msk [vmem:[%s337 + $0x174] sm:$0xf] %vm5071, %v5036
        %5166 = vst.msk [vmem:[%s337 + $0x178] sm:$0xf] %vm5071, %v5037
        %5167 = vst.msk [vmem:[%s337 + $0x17c] sm:$0xf] %vm5071, %v5038
        %5168 = vst.msk [vmem:[%s337 + $0x180] sm:$0xf] %vm5071, %v5039
        %5169 = vst.msk [vmem:[%s337 + $0x184] sm:$0xf] %vm5071, %v5040
        %5170 = vst.msk [vmem:[%s337 + $0x188] sm:$0xf] %vm5071, %v5041
        %5171 = vst.msk [vmem:[%s337 + $0x18c] sm:$0xf] %vm5071, %v5042
        %5172 = vst.msk [vmem:[%s337 + $0x190] sm:$0xf] %vm5071, %v5043
        %5173 = vst.msk [vmem:[%s337 + $0x194] sm:$0xf] %vm5071, %v5044
        %5174 = vst.msk [vmem:[%s337 + $0x198] sm:$0xf] %vm5071, %v5045
        %5175 = vst.msk [vmem:[%s337 + $0x19c] sm:$0xf] %vm5071, %v5046
        %5176 = vst.msk [vmem:[%s337 + $0x1a0] sm:$0xf] %vm5071, %v5047
        %5177 = vst.msk [vmem:[%s337 + $0x1a4] sm:$0xf] %vm5071, %v5048
        %5178 = vst.msk [vmem:[%s337 + $0x1a8] sm:$0xf] %vm5071, %v5049
        %5179 = vst.msk [vmem:[%s337 + $0x1ac] sm:$0xf] %vm5071, %v5050
        %5180 = vst.msk [vmem:[%s337 + $0x1b0] sm:$0xf] %vm5071, %v5051
        %5181 = vst.msk [vmem:[%s337 + $0x1b4] sm:$0xf] %vm5071, %v5052
        %5182 = vst.msk [vmem:[%s337 + $0x1b8] sm:$0xf] %vm5071, %v5053
        %5183 = vst.msk [vmem:[%s337 + $0x1bc] sm:$0xf] %vm5071, %v5054
        %5184 = vst.msk [vmem:[%s337 + $0x1c0] sm:$0xf] %vm5071, %v5055
        %5185 = vst.msk [vmem:[%s337 + $0x1c4] sm:$0xf] %vm5071, %v5056
        %5186 = vst.msk [vmem:[%s337 + $0x1c8] sm:$0xf] %vm5071, %v5057
        %5187 = vst.msk [vmem:[%s337 + $0x1cc] sm:$0xf] %vm5071, %v5058
        %5188 = vst.msk [vmem:[%s337 + $0x1d0] sm:$0xf] %vm5071, %v5059
        %5189 = vst.msk [vmem:[%s337 + $0x1d4] sm:$0xf] %vm5071, %v5060
        %5190 = vst.msk [vmem:[%s337 + $0x1d8] sm:$0xf] %vm5071, %v5061
        %5191 = vst.msk [vmem:[%s337 + $0x1dc] sm:$0xf] %vm5071, %v5062
        %5192 = vst.msk [vmem:[%s337 + $0x1e0] sm:$0xf] %vm5071, %v5063
        %5193 = vst.msk [vmem:[%s337 + $0x1e4] sm:$0xf] %vm5071, %v5064
        %5194 = vst.msk [vmem:[%s337 + $0x1e8] sm:$0xf] %vm5071, %v5065
        %5195 = vst.msk [vmem:[%s337 + $0x1ec] sm:$0xf] %vm5071, %v5066
        %5196 = vst.msk [vmem:[%s337 + $0x1f0] sm:$0xf] %vm5071, %v5067
        %5197 = vst.msk [vmem:[%s337 + $0x1f4] sm:$0xf] %vm5071, %v5068
        %5198 = vst.msk [vmem:[%s337 + $0x1f8] sm:$0xf] %vm5071, %v5069
        %5199 = vst.msk [vmem:[%s337 + $0x1fc] sm:$0xf] %vm5071, %v5070
        %s5200 = sand.u32 %s171, 1
        %s5201 = sand.u32 %s171, 1
        %s5202 = smul.addr %s5201, 512
        %s5203 = scalar_lea.vmem [#allocation2], %s5202
        // Predicated region
        $region45: #{kkkc_forward.5} parent=43 // pred_check
          %p5204 = pneg %p181
        $region46: #{kkkc_forward.5} parent=43 // pred_check_branch
          %5206 = sbr.rel (%p5204) target = $region48
        $region47: #{kkkc_forward.5} parent=43 // pred_region
          %s5207 = smul.u32 128, %s17
          %s5208 = ssub.s32 241, %s5207
          %p5209 = scmp.lt.s32.totalorder %s5208, 128
          %s5210 = scalar_select %p5209, %s5208, 128
          %s5211 = smul.u32 4, %s5210
          %p5212 = scmp.ne.s32.totalorder 0, %s5211
          %s5213 = smul.addr %s5207, 4
          %s5214 = scalar_lea.vmem %s6, %s5213
          // Predicated region
          $region49: #{kkkc_forward.5} parent=47 // pred_check
            %p5215 = pneg %p5212
          $region50: #{kkkc_forward.5} parent=47 // pred_check_branch
            %5217 = sbr.rel (%p5215) target = $region52
          $region51: #{kkkc_forward.5} parent=47 // pred_region
            // Predicated region
            $region53: #{kkkc_forward.5} parent=51 // pred_check
              _
            $region54: #{kkkc_forward.5} parent=51 // pred_check_branch
              %5219 = sbr.rel target = $region56
            $region55: #{kkkc_forward.5} parent=51 // pred_region
              // Predicated region
              $region75: #{kkkc_forward.5} parent=55 // pred_check
                _
              $region76: #{kkkc_forward.5} parent=55 // pred_check_branch
                %5331 = sbr.rel (0) target = $region78
              $region77: #{kkkc_forward.5} parent=55 // pred_region
                %s5333 = ssub.s32 16, 1
                %s5334 = sshrl.u32 %s5210, 5
                // While loop
                $region79: #{kkkc_forward.5} parent=77 // loop_pre_header
                  _
                $region80: #{kkkc_forward.5} parent=77 // loop_header
                  %s5336 = sphi 0, %s5338
                  %p5337 = scmp.ge.s32.totalorder %s5336, %s5334
                  %s5341 = sphi 0, %s5410
                  %s5342 = sphi %s5203, %s5413
                  %s5343 = sphi %s5214, %s5414
                $region81: #{kkkc_forward.5} parent=77 // loop_header_branch
                  %5340 = sbr.rel (%p5337) target = $region85
                $region82: #{kkkc_forward.5} parent=77 // loop_body
                  %v5344 = vld [vmem:[%s5342] sm:%s5333]
                  %5345 = vst [vmem:[%s5343] sm:%s5333] %v5344
                  %v5346 = vld [vmem:[%s5342 + $0x4] sm:%s5333]
                  %5347 = vst [vmem:[%s5343 + $0x4] sm:%s5333] %v5346
                  %v5348 = vld [vmem:[%s5342 + $0x8] sm:%s5333]
                  %5349 = vst [vmem:[%s5343 + $0x8] sm:%s5333] %v5348
                  %v5350 = vld [vmem:[%s5342 + $0xc] sm:%s5333]
                  %5351 = vst [vmem:[%s5343 + $0xc] sm:%s5333] %v5350
                  %v5352 = vld [vmem:[%s5342 + $0x10] sm:%s5333]
                  %5353 = vst [vmem:[%s5343 + $0x10] sm:%s5333] %v5352
                  %v5354 = vld [vmem:[%s5342 + $0x14] sm:%s5333]
                  %5355 = vst [vmem:[%s5343 + $0x14] sm:%s5333] %v5354
                  %v5356 = vld [vmem:[%s5342 + $0x18] sm:%s5333]
                  %5357 = vst [vmem:[%s5343 + $0x18] sm:%s5333] %v5356
                  %v5358 = vld [vmem:[%s5342 + $0x1c] sm:%s5333]
                  %5359 = vst [vmem:[%s5343 + $0x1c] sm:%s5333] %v5358
                  %v5360 = vld [vmem:[%s5342 + $0x20] sm:%s5333]
                  %5361 = vst [vmem:[%s5343 + $0x20] sm:%s5333] %v5360
                  %v5362 = vld [vmem:[%s5342 + $0x24] sm:%s5333]
                  %5363 = vst [vmem:[%s5343 + $0x24] sm:%s5333] %v5362
                  %v5364 = vld [vmem:[%s5342 + $0x28] sm:%s5333]
                  %5365 = vst [vmem:[%s5343 + $0x28] sm:%s5333] %v5364
                  %v5366 = vld [vmem:[%s5342 + $0x2c] sm:%s5333]
                  %5367 = vst [vmem:[%s5343 + $0x2c] sm:%s5333] %v5366
                  %v5368 = vld [vmem:[%s5342 + $0x30] sm:%s5333]
                  %5369 = vst [vmem:[%s5343 + $0x30] sm:%s5333] %v5368
                  %v5370 = vld [vmem:[%s5342 + $0x34] sm:%s5333]
                  %5371 = vst [vmem:[%s5343 + $0x34] sm:%s5333] %v5370
                  %v5372 = vld [vmem:[%s5342 + $0x38] sm:%s5333]
                  %5373 = vst [vmem:[%s5343 + $0x38] sm:%s5333] %v5372
                  %v5374 = vld [vmem:[%s5342 + $0x3c] sm:%s5333]
                  %5375 = vst [vmem:[%s5343 + $0x3c] sm:%s5333] %v5374
                  %v5376 = vld [vmem:[%s5342 + $0x40] sm:%s5333]
                  %5377 = vst [vmem:[%s5343 + $0x40] sm:%s5333] %v5376
                  %v5378 = vld [vmem:[%s5342 + $0x44] sm:%s5333]
                  %5379 = vst [vmem:[%s5343 + $0x44] sm:%s5333] %v5378
                  %v5380 = vld [vmem:[%s5342 + $0x48] sm:%s5333]
                  %5381 = vst [vmem:[%s5343 + $0x48] sm:%s5333] %v5380
                  %v5382 = vld [vmem:[%s5342 + $0x4c] sm:%s5333]
                  %5383 = vst [vmem:[%s5343 + $0x4c] sm:%s5333] %v5382
                  %v5384 = vld [vmem:[%s5342 + $0x50] sm:%s5333]
                  %5385 = vst [vmem:[%s5343 + $0x50] sm:%s5333] %v5384
                  %v5386 = vld [vmem:[%s5342 + $0x54] sm:%s5333]
                  %5387 = vst [vmem:[%s5343 + $0x54] sm:%s5333] %v5386
                  %v5388 = vld [vmem:[%s5342 + $0x58] sm:%s5333]
                  %5389 = vst [vmem:[%s5343 + $0x58] sm:%s5333] %v5388
                  %v5390 = vld [vmem:[%s5342 + $0x5c] sm:%s5333]
                  %5391 = vst [vmem:[%s5343 + $0x5c] sm:%s5333] %v5390
                  %v5392 = vld [vmem:[%s5342 + $0x60] sm:%s5333]
                  %5393 = vst [vmem:[%s5343 + $0x60] sm:%s5333] %v5392
                  %v5394 = vld [vmem:[%s5342 + $0x64] sm:%s5333]
                  %5395 = vst [vmem:[%s5343 + $0x64] sm:%s5333] %v5394
                  %v5396 = vld [vmem:[%s5342 + $0x68] sm:%s5333]
                  %5397 = vst [vmem:[%s5343 + $0x68] sm:%s5333] %v5396
                  %v5398 = vld [vmem:[%s5342 + $0x6c] sm:%s5333]
                  %5399 = vst [vmem:[%s5343 + $0x6c] sm:%s5333] %v5398
                  %v5400 = vld [vmem:[%s5342 + $0x70] sm:%s5333]
                  %5401 = vst [vmem:[%s5343 + $0x70] sm:%s5333] %v5400
                  %v5402 = vld [vmem:[%s5342 + $0x74] sm:%s5333]
                  %5403 = vst [vmem:[%s5343 + $0x74] sm:%s5333] %v5402
                  %v5404 = vld [vmem:[%s5342 + $0x78] sm:%s5333]
                  %5405 = vst [vmem:[%s5343 + $0x78] sm:%s5333] %v5404
                  %v5406 = vld [vmem:[%s5342 + $0x7c] sm:%s5333]
                  %5407 = vst [vmem:[%s5343 + $0x7c] sm:%s5333] %v5406
                  %s5408 = sadd.s32 1, %s5341
                  %p5409 = scmp.ge.s32.totalorder %s5408, %s5334
                  %s5410 = scalar_select %p5409, 0, %s5408
                  %s5411 = smul.u32 %s5410, 128
                  %s5412 = smul.u32 %s5410, 128
                  %s5413 = scalar_lea.vmem %s5203, %s5411 [#allocation2]
                  %s5414 = scalar_lea.vmem %s5214, %s5412
                $region83: #{kkkc_forward.5} parent=77 // loop_footer
                  %s5338 = sadd.s32 %s5336, 1
                $region84: #{kkkc_forward.5} parent=77 // loop_footer_branch
                  %5335 = sbr.rel target = $region80
                $region85: #{kkkc_forward.5} parent=77 // loop_exit
                  _
                %s5415 = sshrl.u32 %s5210, 5
                %s5416 = sand.u32 %s5210, 31
                %s5417 = smul.u32 %s5415, 32
                %s5418 = smul.u32 4, %s5417
                %s5419 = scalar_lea.vmem %s5203, %s5418 [#allocation2]
                %s5420 = smul.u32 4, %s5417
                %s5421 = scalar_lea.vmem %s5214, %s5420
                // While loop
                $region86: #{kkkc_forward.5} parent=77 // loop_pre_header
                  _
                $region87: #{kkkc_forward.5} parent=77 // loop_header
                  %s5423 = sphi 0, %s5425
                  %p5424 = scmp.ge.s32.totalorder %s5423, %s5416
                  %s5428 = sphi 0, %s5435
                  %s5429 = sphi %s5419, %s5438
                  %s5430 = sphi %s5421, %s5439
                $region88: #{kkkc_forward.5} parent=77 // loop_header_branch
                  %5427 = sbr.rel (%p5424) target = $region92
                $region89: #{kkkc_forward.5} parent=77 // loop_body
                  %v5431 = vld [vmem:[%s5429] sm:%s5333]
                  %5432 = vst [vmem:[%s5430] sm:%s5333] %v5431
                  %s5433 = sadd.s32 1, %s5428
                  %p5434 = scmp.ge.s32.totalorder %s5433, %s5416
                  %s5435 = scalar_select %p5434, 0, %s5433
                  %s5436 = smul.u32 %s5435, 4
                  %s5437 = smul.u32 %s5435, 4
                  %s5438 = scalar_lea.vmem %s5419, %s5436 [#allocation2]
                  %s5439 = scalar_lea.vmem %s5421, %s5437
                $region90: #{kkkc_forward.5} parent=77 // loop_footer
                  %s5425 = sadd.s32 %s5423, 1
                $region91: #{kkkc_forward.5} parent=77 // loop_footer_branch
                  %5422 = sbr.rel target = $region87
                $region92: #{kkkc_forward.5} parent=77 // loop_exit
                  _
              $region78: #{kkkc_forward.5} parent=55 // pred_fallthru
                _
            $region56: #{kkkc_forward.5} parent=51 // pred_fallthru
              _
            // Predicated region
            $region57: #{kkkc_forward.5} parent=51 // pred_check
              _
            $region58: #{kkkc_forward.5} parent=51 // pred_check_branch
              %5221 = sbr.rel (0) target = $region60
            $region59: #{kkkc_forward.5} parent=51 // pred_region
              %s5223 = ssub.s32 16, 1
              %s5224 = sshrl.u32 %s5210, 5
              // While loop
              $region61: #{kkkc_forward.5} parent=59 // loop_pre_header
                _
              $region62: #{kkkc_forward.5} parent=59 // loop_header
                %s5226 = sphi 0, %s5228
                %p5227 = scmp.ge.s32.totalorder %s5226, %s5224
                %s5231 = sphi 0, %s5300
                %s5232 = sphi %s5203, %s5303
                %s5233 = sphi %s5214, %s5304
              $region63: #{kkkc_forward.5} parent=59 // loop_header_branch
                %5230 = sbr.rel (%p5227) target = $region67
              $region64: #{kkkc_forward.5} parent=59 // loop_body
                %v5234 = vld [vmem:[%s5232] sm:%s5223]
                %5235 = vst [vmem:[%s5233] sm:%s5223] %v5234
                %v5236 = vld [vmem:[%s5232 + $0x4] sm:%s5223]
                %5237 = vst [vmem:[%s5233 + $0x4] sm:%s5223] %v5236
                %v5238 = vld [vmem:[%s5232 + $0x8] sm:%s5223]
                %5239 = vst [vmem:[%s5233 + $0x8] sm:%s5223] %v5238
                %v5240 = vld [vmem:[%s5232 + $0xc] sm:%s5223]
                %5241 = vst [vmem:[%s5233 + $0xc] sm:%s5223] %v5240
                %v5242 = vld [vmem:[%s5232 + $0x10] sm:%s5223]
                %5243 = vst [vmem:[%s5233 + $0x10] sm:%s5223] %v5242
                %v5244 = vld [vmem:[%s5232 + $0x14] sm:%s5223]
                %5245 = vst [vmem:[%s5233 + $0x14] sm:%s5223] %v5244
                %v5246 = vld [vmem:[%s5232 + $0x18] sm:%s5223]
                %5247 = vst [vmem:[%s5233 + $0x18] sm:%s5223] %v5246
                %v5248 = vld [vmem:[%s5232 + $0x1c] sm:%s5223]
                %5249 = vst [vmem:[%s5233 + $0x1c] sm:%s5223] %v5248
                %v5250 = vld [vmem:[%s5232 + $0x20] sm:%s5223]
                %5251 = vst [vmem:[%s5233 + $0x20] sm:%s5223] %v5250
                %v5252 = vld [vmem:[%s5232 + $0x24] sm:%s5223]
                %5253 = vst [vmem:[%s5233 + $0x24] sm:%s5223] %v5252
                %v5254 = vld [vmem:[%s5232 + $0x28] sm:%s5223]
                %5255 = vst [vmem:[%s5233 + $0x28] sm:%s5223] %v5254
                %v5256 = vld [vmem:[%s5232 + $0x2c] sm:%s5223]
                %5257 = vst [vmem:[%s5233 + $0x2c] sm:%s5223] %v5256
                %v5258 = vld [vmem:[%s5232 + $0x30] sm:%s5223]
                %5259 = vst [vmem:[%s5233 + $0x30] sm:%s5223] %v5258
                %v5260 = vld [vmem:[%s5232 + $0x34] sm:%s5223]
                %5261 = vst [vmem:[%s5233 + $0x34] sm:%s5223] %v5260
                %v5262 = vld [vmem:[%s5232 + $0x38] sm:%s5223]
                %5263 = vst [vmem:[%s5233 + $0x38] sm:%s5223] %v5262
                %v5264 = vld [vmem:[%s5232 + $0x3c] sm:%s5223]
                %5265 = vst [vmem:[%s5233 + $0x3c] sm:%s5223] %v5264
                %v5266 = vld [vmem:[%s5232 + $0x40] sm:%s5223]
                %5267 = vst [vmem:[%s5233 + $0x40] sm:%s5223] %v5266
                %v5268 = vld [vmem:[%s5232 + $0x44] sm:%s5223]
                %5269 = vst [vmem:[%s5233 + $0x44] sm:%s5223] %v5268
                %v5270 = vld [vmem:[%s5232 + $0x48] sm:%s5223]
                %5271 = vst [vmem:[%s5233 + $0x48] sm:%s5223] %v5270
                %v5272 = vld [vmem:[%s5232 + $0x4c] sm:%s5223]
                %5273 = vst [vmem:[%s5233 + $0x4c] sm:%s5223] %v5272
                %v5274 = vld [vmem:[%s5232 + $0x50] sm:%s5223]
                %5275 = vst [vmem:[%s5233 + $0x50] sm:%s5223] %v5274
                %v5276 = vld [vmem:[%s5232 + $0x54] sm:%s5223]
                %5277 = vst [vmem:[%s5233 + $0x54] sm:%s5223] %v5276
                %v5278 = vld [vmem:[%s5232 + $0x58] sm:%s5223]
                %5279 = vst [vmem:[%s5233 + $0x58] sm:%s5223] %v5278
                %v5280 = vld [vmem:[%s5232 + $0x5c] sm:%s5223]
                %5281 = vst [vmem:[%s5233 + $0x5c] sm:%s5223] %v5280
                %v5282 = vld [vmem:[%s5232 + $0x60] sm:%s5223]
                %5283 = vst [vmem:[%s5233 + $0x60] sm:%s5223] %v5282
                %v5284 = vld [vmem:[%s5232 + $0x64] sm:%s5223]
                %5285 = vst [vmem:[%s5233 + $0x64] sm:%s5223] %v5284
                %v5286 = vld [vmem:[%s5232 + $0x68] sm:%s5223]
                %5287 = vst [vmem:[%s5233 + $0x68] sm:%s5223] %v5286
                %v5288 = vld [vmem:[%s5232 + $0x6c] sm:%s5223]
                %5289 = vst [vmem:[%s5233 + $0x6c] sm:%s5223] %v5288
                %v5290 = vld [vmem:[%s5232 + $0x70] sm:%s5223]
                %5291 = vst [vmem:[%s5233 + $0x70] sm:%s5223] %v5290
                %v5292 = vld [vmem:[%s5232 + $0x74] sm:%s5223]
                %5293 = vst [vmem:[%s5233 + $0x74] sm:%s5223] %v5292
                %v5294 = vld [vmem:[%s5232 + $0x78] sm:%s5223]
                %5295 = vst [vmem:[%s5233 + $0x78] sm:%s5223] %v5294
                %v5296 = vld [vmem:[%s5232 + $0x7c] sm:%s5223]
                %5297 = vst [vmem:[%s5233 + $0x7c] sm:%s5223] %v5296
                %s5298 = sadd.s32 1, %s5231
                %p5299 = scmp.ge.s32.totalorder %s5298, %s5224
                %s5300 = scalar_select %p5299, 0, %s5298
                %s5301 = smul.u32 %s5300, 128
                %s5302 = smul.u32 %s5300, 128
                %s5303 = scalar_lea.vmem %s5203, %s5301 [#allocation2]
                %s5304 = scalar_lea.vmem %s5214, %s5302
              $region65: #{kkkc_forward.5} parent=59 // loop_footer
                %s5228 = sadd.s32 %s5226, 1
              $region66: #{kkkc_forward.5} parent=59 // loop_footer_branch
                %5225 = sbr.rel target = $region62
              $region67: #{kkkc_forward.5} parent=59 // loop_exit
                _
              %s5305 = sshrl.u32 %s5210, 5
              %s5306 = sand.u32 %s5210, 31
              %s5307 = smul.u32 %s5305, 32
              %s5308 = smul.u32 4, %s5307
              %s5309 = scalar_lea.vmem %s5203, %s5308 [#allocation2]
              %s5310 = smul.u32 4, %s5307
              %s5311 = scalar_lea.vmem %s5214, %s5310
              // While loop
              $region68: #{kkkc_forward.5} parent=59 // loop_pre_header
                _
              $region69: #{kkkc_forward.5} parent=59 // loop_header
                %s5313 = sphi 0, %s5315
                %p5314 = scmp.ge.s32.totalorder %s5313, %s5306
                %s5318 = sphi 0, %s5325
                %s5319 = sphi %s5309, %s5328
                %s5320 = sphi %s5311, %s5329
              $region70: #{kkkc_forward.5} parent=59 // loop_header_branch
                %5317 = sbr.rel (%p5314) target = $region74
              $region71: #{kkkc_forward.5} parent=59 // loop_body
                %v5321 = vld [vmem:[%s5319] sm:%s5223]
                %5322 = vst [vmem:[%s5320] sm:%s5223] %v5321
                %s5323 = sadd.s32 1, %s5318
                %p5324 = scmp.ge.s32.totalorder %s5323, %s5306
                %s5325 = scalar_select %p5324, 0, %s5323
                %s5326 = smul.u32 %s5325, 4
                %s5327 = smul.u32 %s5325, 4
                %s5328 = scalar_lea.vmem %s5309, %s5326 [#allocation2]
                %s5329 = scalar_lea.vmem %s5311, %s5327
              $region72: #{kkkc_forward.5} parent=59 // loop_footer
                %s5315 = sadd.s32 %s5313, 1
              $region73: #{kkkc_forward.5} parent=59 // loop_footer_branch
                %5312 = sbr.rel target = $region69
              $region74: #{kkkc_forward.5} parent=59 // loop_exit
                _
            $region60: #{kkkc_forward.5} parent=51 // pred_fallthru
              _
          $region52: #{kkkc_forward.5} parent=47 // pred_fallthru
            _
          %5440 = vnop
        $region48: #{kkkc_forward.5} parent=43 // pred_fallthru
          _
      $region44: #{kkkc_forward.5} parent=5 // pred_fallthru
        _
      %p5441 = scmp.le.s32.totalorder 2, %s12
      // Predicated region
      $region93: #{kkkc_forward.5} parent=5 // pred_check
        %p5442 = pneg %p5441
      $region94: #{kkkc_forward.5} parent=5 // pred_check_branch
        %5444 = sbr.rel (%p5442) target = $region96
      $region95: #{kkkc_forward.5} parent=5 // pred_region
        %s5445 = ssub.s32 %s12, 2
        // Predicated region
        $region97: #{kkkc_forward.5} parent=95 // pred_check
          %p5446 = pneg %p187
        $region98: #{kkkc_forward.5} parent=95 // pred_check_branch
          %5448 = sbr.rel (%p5446) target = $region100
        $region99: #{kkkc_forward.5} parent=95 // pred_region
          %s5449 = sand.u32 %s172, 1
          %s5450 = sand.u32 %s172, 1
          %s5451 = smul.addr %s5450, 512
          %s5452 = scalar_lea.vmem [#allocation2], %s5451
        $region100: #{kkkc_forward.5} parent=95 // pred_fallthru
          _
      $region96: #{kkkc_forward.5} parent=5 // pred_fallthru
        _
    $region6: #{kkkc_forward.5} parent=1 // loop_footer
      %s16 = sadd.s32 1, %s12
    $region7: #{kkkc_forward.5} parent=1 // loop_footer_branch
      %11 = sbr.rel target = $region3
    $region8: #{kkkc_forward.5} parent=1 // loop_exit
      _

// kernel: kkkc_forward.6
$region0: #{kkkc_forward.6}
  #allocation0 [shape = 'u32[]', space=smem, size = 0x4, offset = 0x4, fixed_abs, tag = 'smem constant byte address 0x4 - core index']
  #allocation1 [shape = 'u32[72,128]{1,0:T(1,128)}', space=vmem, size = 0x9000, scoped, tag = 'internal scratch']
  %s0 = inlined_call_operand.vmem [shape: bf16[392,288], index: 0, kind: input, shape index: {}]
  %s1 = inlined_call_operand.vmem [shape: bf16[392,288], index: 1, kind: input, shape index: {}]
  %s2 = inlined_call_operand.vmem [shape: bf16[392,288], index: 2, kind: input, shape index: {}]
  %s3 = inlined_call_operand.vmem [shape: bf16[392,288], index: 3, kind: input, shape index: {}]
  %s4 = inlined_call_operand.vmem [shape: bf16[288,64], index: 4, kind: input, shape index: {}]
  %s5 = inlined_call_operand.vmem [shape: f32[1,64], index: 5, kind: input, shape index: {}]
  %s6 = inlined_call_operand.vmem [shape: bf16[392,64], index: 6, kind: output, shape index: {}]
  %s7 = sld [smem:[#allocation0]]
  $region34: #{kkkc_forward.6} parent=0
    _
  %s9 = ssub.s32 1, %s7
  %s10 = scalar_select 0, %s9, %s7
  // Predicated region
  $region2: #{kkkc_forward.6} parent=0 // pred_check
    _
  $region3: #{kkkc_forward.6} parent=0 // pred_check_branch
    %12 = sbr.rel (0) target = $region5
  $region4: #{kkkc_forward.6} parent=0 // pred_region
    _
  $region5: #{kkkc_forward.6} parent=0 // pred_fallthru
    _
  // Predicated region
  $region6: #{kkkc_forward.6} parent=0 // pred_check
    _
  $region7: #{kkkc_forward.6} parent=0 // pred_check_branch
    %14 = sbr.rel (0) target = $region9
  $region8: #{kkkc_forward.6} parent=0 // pred_region
    _
  $region9: #{kkkc_forward.6} parent=0 // pred_fallthru
    _
  // Predicated region
  $region10: #{kkkc_forward.6} parent=0 // pred_check
    _
  $region11: #{kkkc_forward.6} parent=0 // pred_check_branch
    %16 = sbr.rel (0) target = $region13
  $region12: #{kkkc_forward.6} parent=0 // pred_region
    _
  $region13: #{kkkc_forward.6} parent=0 // pred_fallthru
    _
  // Predicated region
  $region14: #{kkkc_forward.6} parent=0 // pred_check
    _
  $region15: #{kkkc_forward.6} parent=0 // pred_check_branch
    %18 = sbr.rel (0) target = $region17
  $region16: #{kkkc_forward.6} parent=0 // pred_region
    _
  $region17: #{kkkc_forward.6} parent=0 // pred_fallthru
    _
  // Predicated region
  $region18: #{kkkc_forward.6} parent=0 // pred_check
    _
  $region19: #{kkkc_forward.6} parent=0 // pred_check_branch
    %20 = sbr.rel (0) target = $region21
  $region20: #{kkkc_forward.6} parent=0 // pred_region
    _
  $region21: #{kkkc_forward.6} parent=0 // pred_fallthru
    _
  // Predicated region
  $region22: #{kkkc_forward.6} parent=0 // pred_check
    _
  $region23: #{kkkc_forward.6} parent=0 // pred_check_branch
    %22 = sbr.rel (0) target = $region25
  $region24: #{kkkc_forward.6} parent=0 // pred_region
    _
  $region25: #{kkkc_forward.6} parent=0 // pred_fallthru
    _
  %v24 = vld [vmem:[%s4] sm:$0xf]
  %v25 = vld [vmem:[%s4 + $0x4] sm:$0xf]
  %v26 = vld [vmem:[%s4 + $0x8] sm:$0xf]
  %v27 = vld [vmem:[%s4 + $0xc] sm:$0xf]
  %v28 = vld [vmem:[%s4 + $0x10] sm:$0xf]
  %v29 = vld [vmem:[%s4 + $0x14] sm:$0xf]
  %v30 = vld [vmem:[%s4 + $0x18] sm:$0xf]
  %v31 = vld [vmem:[%s4 + $0x1c] sm:$0xf]
  %v32 = vld [vmem:[%s4 + $0x20] sm:$0xf]
  %v33 = vld [vmem:[%s4 + $0x24] sm:$0xf]
  %v34 = vld [vmem:[%s4 + $0x28] sm:$0xf]
  %v35 = vld [vmem:[%s4 + $0x2c] sm:$0xf]
  %v36 = vld [vmem:[%s4 + $0x30] sm:$0xf]
  %v37 = vld [vmem:[%s4 + $0x34] sm:$0xf]
  %v38 = vld [vmem:[%s4 + $0x38] sm:$0xf]
  %v39 = vld [vmem:[%s4 + $0x3c] sm:$0xf]
  %v40 = vld [vmem:[%s4 + $0x40] sm:$0xf]
  %v41 = vld [vmem:[%s4 + $0x44] sm:$0xf]
  %v42 = vld [vmem:[%s4 + $0x48] sm:$0xf]
  %v43 = vld [vmem:[%s4 + $0x4c] sm:$0xf]
  %v44 = vld [vmem:[%s4 + $0x50] sm:$0xf]
  %v45 = vld [vmem:[%s4 + $0x54] sm:$0xf]
  %v46 = vld [vmem:[%s4 + $0x58] sm:$0xf]
  %v47 = vld [vmem:[%s4 + $0x5c] sm:$0xf]
  %v48 = vld [vmem:[%s4 + $0x60] sm:$0xf]
  %v49 = vld [vmem:[%s4 + $0x64] sm:$0xf]
  %v50 = vld [vmem:[%s4 + $0x68] sm:$0xf]
  %v51 = vld [vmem:[%s4 + $0x6c] sm:$0xf]
  %v52 = vld [vmem:[%s4 + $0x70] sm:$0xf]
  %v53 = vld [vmem:[%s4 + $0x74] sm:$0xf]
  %v54 = vld [vmem:[%s4 + $0x78] sm:$0xf]
  %v55 = vld [vmem:[%s4 + $0x7c] sm:$0xf]
  %v56 = vld [vmem:[%s4 + $0x80] sm:$0xf]
  %v57 = vld [vmem:[%s4 + $0x84] sm:$0xf]
  %v58 = vld [vmem:[%s4 + $0x88] sm:$0xf]
  %v59 = vld [vmem:[%s4 + $0x8c] sm:$0xf]
  %v60 = vld [vmem:[%s0] sm:$0xff]
  %v61 = vld [vmem:[%s0 + $0x8] sm:$0xf]
  %v62 = vld [vmem:[%s0 + $0xc] sm:$0xff]
  %v63 = vld [vmem:[%s0 + $0x14] sm:$0xf]
  %v64 = vld [vmem:[%s0 + $0x18] sm:$0xff]
  %v65 = vld [vmem:[%s0 + $0x20] sm:$0xf]
  %v66 = vld [vmem:[%s0 + $0x24] sm:$0xff]
  %v67 = vld [vmem:[%s0 + $0x2c] sm:$0xf]
  %v68 = vld [vmem:[%s0 + $0x30] sm:$0xff]
  %v69 = vld [vmem:[%s0 + $0x38] sm:$0xf]
  %v70 = vld [vmem:[%s0 + $0x3c] sm:$0xff]
  %v71 = vld [vmem:[%s0 + $0x44] sm:$0xf]
  %v72 = vld [vmem:[%s0 + $0x48] sm:$0xff]
  %v73 = vld [vmem:[%s0 + $0x50] sm:$0xf]
  %v74 = vld [vmem:[%s0 + $0x54] sm:$0xff]
  %v75 = vld [vmem:[%s0 + $0x5c] sm:$0xf]
  %v76 = vld [vmem:[%s0 + $0x60] sm:$0xff]
  %v77 = vld [vmem:[%s0 + $0x68] sm:$0xf]
  %v78 = vld [vmem:[%s0 + $0x6c] sm:$0xff]
  %v79 = vld [vmem:[%s0 + $0x74] sm:$0xf]
  %v80 = vld [vmem:[%s0 + $0x78] sm:$0xff]
  %v81 = vld [vmem:[%s0 + $0x80] sm:$0xf]
  %v82 = vld [vmem:[%s0 + $0x84] sm:$0xff]
  %v83 = vld [vmem:[%s0 + $0x8c] sm:$0xf]
  %v84 = vld [vmem:[%s0 + $0x90] sm:$0xff]
  %v85 = vld [vmem:[%s0 + $0x98] sm:$0xf]
  %v86 = vld [vmem:[%s0 + $0x9c] sm:$0xff]
  %v87 = vld [vmem:[%s0 + $0xa4] sm:$0xf]
  %v88 = vld [vmem:[%s0 + $0xa8] sm:$0xff]
  %v89 = vld [vmem:[%s0 + $0xb0] sm:$0xf]
  %v90 = vld [vmem:[%s0 + $0xb4] sm:$0xff]
  %v91 = vld [vmem:[%s0 + $0xbc] sm:$0xf]
  %v92 = vld [vmem:[%s0 + $0xc0] sm:$0xff]
  %v93 = vld [vmem:[%s0 + $0xc8] sm:$0xf]
  %v94 = vld [vmem:[%s0 + $0xcc] sm:$0xff]
  %v95 = vld [vmem:[%s0 + $0xd4] sm:$0xf]
  %v96 = vld [vmem:[%s0 + $0xd8] sm:$0xff]
  %v97 = vld [vmem:[%s0 + $0xe0] sm:$0xf]
  %v98 = vld [vmem:[%s0 + $0xe4] sm:$0xff]
  %v99 = vld [vmem:[%s0 + $0xec] sm:$0xf]
  %v100 = vld [vmem:[%s0 + $0xf0] sm:$0xff]
  %v101 = vld [vmem:[%s0 + $0xf8] sm:$0xf]
  %v102 = vld [vmem:[%s0 + $0xfc] sm:$0xff]
  %v103 = vld [vmem:[%s0 + $0x104] sm:$0xf]
  %v104 = vld [vmem:[%s0 + $0x108] sm:$0xff]
  %v105 = vld [vmem:[%s0 + $0x110] sm:$0xf]
  %v106 = vld [vmem:[%s0 + $0x114] sm:$0xff]
  %v107 = vld [vmem:[%s0 + $0x11c] sm:$0xf]
  %v108 = vld [vmem:[%s0 + $0x120] sm:$0xff]
  %v109 = vld [vmem:[%s0 + $0x128] sm:$0xf]
  %v110 = vld [vmem:[%s0 + $0x12c] sm:$0xff]
  %v111 = vld [vmem:[%s0 + $0x134] sm:$0xf]
  %v112 = vld [vmem:[%s0 + $0x138] sm:$0xff]
  %v113 = vld [vmem:[%s0 + $0x140] sm:$0xf]
  %v114 = vld [vmem:[%s0 + $0x144] sm:$0xff]
  %v115 = vld [vmem:[%s0 + $0x14c] sm:$0xf]
  %v116 = vld [vmem:[%s0 + $0x150] sm:$0xff]
  %v117 = vld [vmem:[%s0 + $0x158] sm:$0xf]
  %v118 = vld [vmem:[%s0 + $0x15c] sm:$0xff]
  %v119 = vld [vmem:[%s0 + $0x164] sm:$0xf]
  %v120 = vld [vmem:[%s0 + $0x168] sm:$0xff]
  %v121 = vld [vmem:[%s0 + $0x170] sm:$0xf]
  %v122 = vld [vmem:[%s0 + $0x174] sm:$0xff]
  %v123 = vld [vmem:[%s0 + $0x17c] sm:$0xf]
  %v124 = vld [vmem:[%s0 + $0x180] sm:$0xff]
  %v125 = vld [vmem:[%s0 + $0x188] sm:$0xf]
  %v126 = vld [vmem:[%s0 + $0x18c] sm:$0xff]
  %v127 = vld [vmem:[%s0 + $0x194] sm:$0xf]
  %v128 = vld [vmem:[%s0 + $0x198] sm:$0xff]
  %v129 = vld [vmem:[%s0 + $0x1a0] sm:$0xf]
  %v130 = vld [vmem:[%s0 + $0x1a4] sm:$0xff]
  %v131 = vld [vmem:[%s0 + $0x1ac] sm:$0xf]
  %v132 = vld [vmem:[%s0 + $0x1b0] sm:$0xff]
  %v133 = vld [vmem:[%s0 + $0x1b8] sm:$0xf]
  %v134 = vld [vmem:[%s0 + $0x1bc] sm:$0xff]
  %v135 = vld [vmem:[%s0 + $0x1c4] sm:$0xf]
  %v136 = vld [vmem:[%s0 + $0x1c8] sm:$0xff]
  %v137 = vld [vmem:[%s0 + $0x1d0] sm:$0xf]
  %v138 = vld [vmem:[%s0 + $0x1d4] sm:$0xff]
  %v139 = vld [vmem:[%s0 + $0x1dc] sm:$0xf]
  %v140 = vld [vmem:[%s0 + $0x1e0] sm:$0xff]
  %v141 = vld [vmem:[%s0 + $0x1e8] sm:$0xf]
  %v142 = vld [vmem:[%s0 + $0x1ec] sm:$0xff]
  %v143 = vld [vmem:[%s0 + $0x1f4] sm:$0xf]
  %v144 = vld [vmem:[%s0 + $0x1f8] sm:$0xff]
  %v145 = vld [vmem:[%s0 + $0x200] sm:$0xf]
  %v146 = vld [vmem:[%s0 + $0x204] sm:$0xff]
  %v147 = vld [vmem:[%s0 + $0x20c] sm:$0xf]
  %v148 = vld [vmem:[%s0 + $0x210] sm:$0xff]
  %v149 = vld [vmem:[%s0 + $0x218] sm:$0xf]
  %v150 = vld [vmem:[%s0 + $0x21c] sm:$0xff]
  %v151 = vld [vmem:[%s0 + $0x224] sm:$0xf]
  %v152 = vld [vmem:[%s0 + $0x228] sm:$0xff]
  %v153 = vld [vmem:[%s0 + $0x230] sm:$0xf]
  %v154 = vld [vmem:[%s0 + $0x234] sm:$0xff]
  %v155 = vld [vmem:[%s0 + $0x23c] sm:$0xf]
  %v156 = vld [vmem:[%s0 + $0x240] sm:$0xff]
  %v157 = vld [vmem:[%s0 + $0x248] sm:$0xf]
  %v256 = vunpack.c.l.b16 %v60
  %v257 = vunpack.c.h.b16 %v60
  %v258 = vunpack.c.l.b16 %v61
  %v259 = vunpack.c.l.b16 %v62
  %v260 = vunpack.c.h.b16 %v62
  %v261 = vunpack.c.l.b16 %v63
  %v262 = vunpack.c.l.b16 %v64
  %v263 = vunpack.c.h.b16 %v64
  %v264 = vunpack.c.l.b16 %v65
  %v265 = vunpack.c.l.b16 %v66
  %v266 = vunpack.c.h.b16 %v66
  %v267 = vunpack.c.l.b16 %v67
  %v268 = vunpack.c.l.b16 %v68
  %v269 = vunpack.c.h.b16 %v68
  %v270 = vunpack.c.l.b16 %v69
  %v271 = vunpack.c.l.b16 %v70
  %v272 = vunpack.c.h.b16 %v70
  %v273 = vunpack.c.l.b16 %v71
  %v274 = vunpack.c.l.b16 %v72
  %v275 = vunpack.c.h.b16 %v72
  %v276 = vunpack.c.l.b16 %v73
  %v277 = vunpack.c.l.b16 %v74
  %v278 = vunpack.c.h.b16 %v74
  %v279 = vunpack.c.l.b16 %v75
  %v280 = vunpack.c.l.b16 %v76
  %v281 = vunpack.c.h.b16 %v76
  %v282 = vunpack.c.l.b16 %v77
  %v283 = vunpack.c.l.b16 %v78
  %v284 = vunpack.c.h.b16 %v78
  %v285 = vunpack.c.l.b16 %v79
  %v286 = vunpack.c.l.b16 %v80
  %v287 = vunpack.c.h.b16 %v80
  %v288 = vunpack.c.l.b16 %v81
  %v289 = vunpack.c.l.b16 %v82
  %v290 = vunpack.c.h.b16 %v82
  %v291 = vunpack.c.l.b16 %v83
  %v292 = vunpack.c.l.b16 %v84
  %v293 = vunpack.c.h.b16 %v84
  %v294 = vunpack.c.l.b16 %v85
  %v295 = vunpack.c.l.b16 %v86
  %v296 = vunpack.c.h.b16 %v86
  %v297 = vunpack.c.l.b16 %v87
  %v298 = vunpack.c.l.b16 %v88
  %v299 = vunpack.c.h.b16 %v88
  %v300 = vunpack.c.l.b16 %v89
  %v301 = vunpack.c.l.b16 %v90
  %v302 = vunpack.c.h.b16 %v90
  %v303 = vunpack.c.l.b16 %v91
  %v304 = vunpack.c.l.b16 %v92
  %v305 = vunpack.c.h.b16 %v92
  %v306 = vunpack.c.l.b16 %v93
  %v307 = vunpack.c.l.b16 %v94
  %v308 = vunpack.c.h.b16 %v94
  %v309 = vunpack.c.l.b16 %v95
  %v310 = vunpack.c.l.b16 %v96
  %v311 = vunpack.c.h.b16 %v96
  %v312 = vunpack.c.l.b16 %v97
  %v313 = vunpack.c.l.b16 %v98
  %v314 = vunpack.c.h.b16 %v98
  %v315 = vunpack.c.l.b16 %v99
  %v316 = vunpack.c.l.b16 %v100
  %v317 = vunpack.c.h.b16 %v100
  %v318 = vunpack.c.l.b16 %v101
  %v319 = vunpack.c.l.b16 %v102
  %v320 = vunpack.c.h.b16 %v102
  %v321 = vunpack.c.l.b16 %v103
  %v322 = vunpack.c.l.b16 %v104
  %v323 = vunpack.c.h.b16 %v104
  %v324 = vunpack.c.l.b16 %v105
  %v325 = vunpack.c.l.b16 %v106
  %v326 = vunpack.c.h.b16 %v106
  %v327 = vunpack.c.l.b16 %v107
  %v328 = vunpack.c.l.b16 %v108
  %v329 = vunpack.c.h.b16 %v108
  %v330 = vunpack.c.l.b16 %v109
  %v331 = vunpack.c.l.b16 %v110
  %v332 = vunpack.c.h.b16 %v110
  %v333 = vunpack.c.l.b16 %v111
  %v334 = vunpack.c.l.b16 %v112
  %v335 = vunpack.c.h.b16 %v112
  %v336 = vunpack.c.l.b16 %v113
  %v337 = vunpack.c.l.b16 %v114
  %v338 = vunpack.c.h.b16 %v114
  %v339 = vunpack.c.l.b16 %v115
  %v340 = vunpack.c.l.b16 %v116
  %v341 = vunpack.c.h.b16 %v116
  %v342 = vunpack.c.l.b16 %v117
  %v343 = vunpack.c.l.b16 %v118
  %v344 = vunpack.c.h.b16 %v118
  %v345 = vunpack.c.l.b16 %v119
  %v346 = vunpack.c.l.b16 %v120
  %v347 = vunpack.c.h.b16 %v120
  %v348 = vunpack.c.l.b16 %v121
  %v349 = vunpack.c.l.b16 %v122
  %v350 = vunpack.c.h.b16 %v122
  %v351 = vunpack.c.l.b16 %v123
  %v352 = vunpack.c.l.b16 %v124
  %v353 = vunpack.c.h.b16 %v124
  %v354 = vunpack.c.l.b16 %v125
  %v355 = vunpack.c.l.b16 %v126
  %v356 = vunpack.c.h.b16 %v126
  %v357 = vunpack.c.l.b16 %v127
  %v358 = vunpack.c.l.b16 %v128
  %v359 = vunpack.c.h.b16 %v128
  %v360 = vunpack.c.l.b16 %v129
  %v361 = vunpack.c.l.b16 %v130
  %v362 = vunpack.c.h.b16 %v130
  %v363 = vunpack.c.l.b16 %v131
  %v364 = vunpack.c.l.b16 %v132
  %v365 = vunpack.c.h.b16 %v132
  %v366 = vunpack.c.l.b16 %v133
  %v367 = vunpack.c.l.b16 %v134
  %v368 = vunpack.c.h.b16 %v134
  %v369 = vunpack.c.l.b16 %v135
  %v370 = vunpack.c.l.b16 %v136
  %v371 = vunpack.c.h.b16 %v136
  %v372 = vunpack.c.l.b16 %v137
  %v373 = vunpack.c.l.b16 %v138
  %v374 = vunpack.c.h.b16 %v138
  %v375 = vunpack.c.l.b16 %v139
  %v376 = vunpack.c.l.b16 %v140
  %v377 = vunpack.c.h.b16 %v140
  %v378 = vunpack.c.l.b16 %v141
  %v379 = vunpack.c.l.b16 %v142
  %v380 = vunpack.c.h.b16 %v142
  %v381 = vunpack.c.l.b16 %v143
  %v382 = vunpack.c.l.b16 %v144
  %v383 = vunpack.c.h.b16 %v144
  %v384 = vunpack.c.l.b16 %v145
  %v385 = vunpack.c.l.b16 %v146
  %v386 = vunpack.c.h.b16 %v146
  %v387 = vunpack.c.l.b16 %v147
  %v388 = vunpack.c.l.b16 %v148
  %v389 = vunpack.c.h.b16 %v148
  %v390 = vunpack.c.l.b16 %v149
  %v391 = vunpack.c.l.b16 %v150
  %v392 = vunpack.c.h.b16 %v150
  %v393 = vunpack.c.l.b16 %v151
  %v394 = vunpack.c.l.b16 %v152
  %v395 = vunpack.c.h.b16 %v152
  %v396 = vunpack.c.l.b16 %v153
  %v397 = vunpack.c.l.b16 %v154
  %v398 = vunpack.c.h.b16 %v154
  %v399 = vunpack.c.l.b16 %v155
  %v400 = vunpack.c.l.b16 %v156
  %v401 = vunpack.c.h.b16 %v156
  %v402 = vunpack.c.l.b16 %v157
  %v403 = vpack.c.b16 %v259, %v256
  %v404 = vpack.c.b16 %v260, %v257
  %v405 = vpack.c.b16 %v261, %v258
  %v406 = vpack.c.b16 %v265, %v262
  %v407 = vpack.c.b16 %v266, %v263
  %v408 = vpack.c.b16 %v267, %v264
  %v409 = vpack.c.b16 %v271, %v268
  %v410 = vpack.c.b16 %v272, %v269
  %v411 = vpack.c.b16 %v273, %v270
  %v412 = vpack.c.b16 %v277, %v274
  %v413 = vpack.c.b16 %v278, %v275
  %v414 = vpack.c.b16 %v279, %v276
  %v415 = vpack.c.b16 %v283, %v280
  %v416 = vpack.c.b16 %v284, %v281
  %v417 = vpack.c.b16 %v285, %v282
  %v418 = vpack.c.b16 %v289, %v286
  %v419 = vpack.c.b16 %v290, %v287
  %v420 = vpack.c.b16 %v291, %v288
  %v421 = vpack.c.b16 %v295, %v292
  %v422 = vpack.c.b16 %v296, %v293
  %v423 = vpack.c.b16 %v297, %v294
  %v424 = vpack.c.b16 %v301, %v298
  %v425 = vpack.c.b16 %v302, %v299
  %v426 = vpack.c.b16 %v303, %v300
  %v427 = vpack.c.b16 %v307, %v304
  %v428 = vpack.c.b16 %v308, %v305
  %v429 = vpack.c.b16 %v309, %v306
  %v430 = vpack.c.b16 %v313, %v310
  %v431 = vpack.c.b16 %v314, %v311
  %v432 = vpack.c.b16 %v315, %v312
  %v433 = vpack.c.b16 %v319, %v316
  %v434 = vpack.c.b16 %v320, %v317
  %v435 = vpack.c.b16 %v321, %v318
  %v436 = vpack.c.b16 %v325, %v322
  %v437 = vpack.c.b16 %v326, %v323
  %v438 = vpack.c.b16 %v327, %v324
  %v439 = vpack.c.b16 %v331, %v328
  %v440 = vpack.c.b16 %v332, %v329
  %v441 = vpack.c.b16 %v333, %v330
  %v442 = vpack.c.b16 %v337, %v334
  %v443 = vpack.c.b16 %v338, %v335
  %v444 = vpack.c.b16 %v339, %v336
  %v445 = vpack.c.b16 %v343, %v340
  %v446 = vpack.c.b16 %v344, %v341
  %v447 = vpack.c.b16 %v345, %v342
  %v448 = vpack.c.b16 %v349, %v346
  %v449 = vpack.c.b16 %v350, %v347
  %v450 = vpack.c.b16 %v351, %v348
  %v451 = vpack.c.b16 %v355, %v352
  %v452 = vpack.c.b16 %v356, %v353
  %v453 = vpack.c.b16 %v357, %v354
  %v454 = vpack.c.b16 %v361, %v358
  %v455 = vpack.c.b16 %v362, %v359
  %v456 = vpack.c.b16 %v363, %v360
  %v457 = vpack.c.b16 %v367, %v364
  %v458 = vpack.c.b16 %v368, %v365
  %v459 = vpack.c.b16 %v369, %v366
  %v460 = vpack.c.b16 %v373, %v370
  %v461 = vpack.c.b16 %v374, %v371
  %v462 = vpack.c.b16 %v375, %v372
  %v463 = vpack.c.b16 %v379, %v376
  %v464 = vpack.c.b16 %v380, %v377
  %v465 = vpack.c.b16 %v381, %v378
  %v466 = vpack.c.b16 %v385, %v382
  %v467 = vpack.c.b16 %v386, %v383
  %v468 = vpack.c.b16 %v387, %v384
  %v469 = vpack.c.b16 %v391, %v388
  %v470 = vpack.c.b16 %v392, %v389
  %v471 = vpack.c.b16 %v393, %v390
  %v472 = vpack.c.b16 %v397, %v394
  %v473 = vpack.c.b16 %v398, %v395
  %v474 = vpack.c.b16 %v399, %v396
  %v475 = vpack.c.b16 %v400, %v400
  %v476 = vpack.c.b16 %v401, %v401
  %v477 = vpack.c.b16 %v402, %v402
  %v564 = vunpack.c.l.b16 %v24
  %v565 = vunpack.c.l.b16 %v25
  %v566 = vunpack.c.l.b16 %v26
  %v567 = vunpack.c.l.b16 %v27
  %v568 = vunpack.c.l.b16 %v28
  %v569 = vunpack.c.l.b16 %v29
  %v570 = vunpack.c.l.b16 %v30
  %v571 = vunpack.c.l.b16 %v31
  %v572 = vunpack.c.l.b16 %v32
  %v573 = vunpack.c.l.b16 %v33
  %v574 = vunpack.c.l.b16 %v34
  %v575 = vunpack.c.l.b16 %v35
  %v576 = vunpack.c.l.b16 %v36
  %v577 = vunpack.c.l.b16 %v37
  %v578 = vunpack.c.l.b16 %v38
  %v579 = vunpack.c.l.b16 %v39
  %v580 = vunpack.c.l.b16 %v40
  %v581 = vunpack.c.l.b16 %v41
  %v582 = vunpack.c.l.b16 %v42
  %v583 = vunpack.c.l.b16 %v43
  %v584 = vunpack.c.l.b16 %v44
  %v585 = vunpack.c.l.b16 %v45
  %v586 = vunpack.c.l.b16 %v46
  %v587 = vunpack.c.l.b16 %v47
  %v588 = vunpack.c.l.b16 %v48
  %v589 = vunpack.c.l.b16 %v49
  %v590 = vunpack.c.l.b16 %v50
  %v591 = vunpack.c.l.b16 %v51
  %v592 = vunpack.c.l.b16 %v52
  %v593 = vunpack.c.l.b16 %v53
  %v594 = vunpack.c.l.b16 %v54
  %v595 = vunpack.c.l.b16 %v55
  %v596 = vunpack.c.l.b16 %v56
  %v597 = vunpack.c.l.b16 %v57
  %v598 = vunpack.c.l.b16 %v58
  %v599 = vunpack.c.l.b16 %v59
  %v600 = vpack.c.b16 %v565, %v564
  %v601 = vpack.c.b16 %v567, %v566
  %v602 = vpack.c.b16 %v569, %v568
  %v603 = vpack.c.b16 %v571, %v570
  %v604 = vpack.c.b16 %v573, %v572
  %v605 = vpack.c.b16 %v575, %v574
  %v606 = vpack.c.b16 %v577, %v576
  %v607 = vpack.c.b16 %v579, %v578
  %v608 = vpack.c.b16 %v581, %v580
  %v609 = vpack.c.b16 %v583, %v582
  %v610 = vpack.c.b16 %v585, %v584
  %v611 = vpack.c.b16 %v587, %v586
  %v612 = vpack.c.b16 %v589, %v588
  %v613 = vpack.c.b16 %v591, %v590
  %v614 = vpack.c.b16 %v593, %v592
  %v615 = vpack.c.b16 %v595, %v594
  %v616 = vpack.c.b16 %v597, %v596
  %v617 = vpack.c.b16 %v599, %v598
  %vm636 = vcmask 261120
  %v638 = vsel %vm636, %v405, 0
  %v641 = vsel %vm636, %v408, 0
  %v644 = vsel %vm636, %v411, 0
  %v647 = vsel %vm636, %v414, 0
  %v650 = vsel %vm636, %v417, 0
  %v653 = vsel %vm636, %v420, 0
  %v656 = vsel %vm636, %v423, 0
  %v659 = vsel %vm636, %v426, 0
  %v662 = vsel %vm636, %v429, 0
  %v665 = vsel %vm636, %v432, 0
  %v668 = vsel %vm636, %v435, 0
  %v671 = vsel %vm636, %v438, 0
  %v674 = vsel %vm636, %v441, 0
  %v677 = vsel %vm636, %v444, 0
  %v680 = vsel %vm636, %v447, 0
  %v683 = vsel %vm636, %v450, 0
  %v686 = vsel %vm636, %v453, 0
  %v689 = vsel %vm636, %v456, 0
  %v692 = vsel %vm636, %v459, 0
  %v695 = vsel %vm636, %v462, 0
  %v698 = vsel %vm636, %v465, 0
  %v701 = vsel %vm636, %v468, 0
  %v704 = vsel %vm636, %v471, 0
  %v707 = vsel %vm636, %v474, 0
  %v710 = vsel %vm636, %v477, 0
  %712 = vmatpush.bf16.msra.mxu0 %v607
  %713 = vmatpush.bf16.msra.mxu0 %v606
  %714 = vmatpush.bf16.msra.mxu0 %v605
  %715 = vmatpush.bf16.msra.mxu0 %v604
  %716 = vmatpush.bf16.msra.mxu0 %v603
  %717 = vmatpush.bf16.msra.mxu0 %v602
  %718 = vmatpush.bf16.msra.mxu0 %v601
  %719 = vmatpush.bf16.msra.mxu0 %v600
  %720 = vmatmul.bf16.gmra.mxu0 %v403
  %v721 = vpop.f32.mrf.mxu0
  %v722 = vadd.f32 0.0, %v721
  %v723 = vpop.f32.mrf.mxu0
  %v724 = vadd.f32 0.0, %v723
  %725 = vmatmul.bf16.gmra.mxu0 %v406
  %v726 = vpop.f32.mrf.mxu0
  %v727 = vadd.f32 0.0, %v726
  %v728 = vpop.f32.mrf.mxu0
  %v729 = vadd.f32 0.0, %v728
  %730 = vmatmul.bf16.gmra.mxu0 %v409
  %v731 = vpop.f32.mrf.mxu0
  %v732 = vadd.f32 0.0, %v731
  %v733 = vpop.f32.mrf.mxu0
  %v734 = vadd.f32 0.0, %v733
  %735 = vmatmul.bf16.gmra.mxu0 %v412
  %v736 = vpop.f32.mrf.mxu0
  %v737 = vadd.f32 0.0, %v736
  %v738 = vpop.f32.mrf.mxu0
  %v739 = vadd.f32 0.0, %v738
  %740 = vmatmul.bf16.gmra.mxu0 %v415
  %v741 = vpop.f32.mrf.mxu0
  %v742 = vadd.f32 0.0, %v741
  %v743 = vpop.f32.mrf.mxu0
  %v744 = vadd.f32 0.0, %v743
  %745 = vmatmul.bf16.gmra.mxu0 %v418
  %v746 = vpop.f32.mrf.mxu0
  %v747 = vadd.f32 0.0, %v746
  %v748 = vpop.f32.mrf.mxu0
  %v749 = vadd.f32 0.0, %v748
  %750 = vmatmul.bf16.gmra.mxu0 %v421
  %v751 = vpop.f32.mrf.mxu0
  %v752 = vadd.f32 0.0, %v751
  %v753 = vpop.f32.mrf.mxu0
  %v754 = vadd.f32 0.0, %v753
  %755 = vmatmul.bf16.gmra.mxu0 %v424
  %v756 = vpop.f32.mrf.mxu0
  %v757 = vadd.f32 0.0, %v756
  %v758 = vpop.f32.mrf.mxu0
  %v759 = vadd.f32 0.0, %v758
  %760 = vmatmul.bf16.gmra.mxu0 %v427
  %v761 = vpop.f32.mrf.mxu0
  %v762 = vadd.f32 0.0, %v761
  %v763 = vpop.f32.mrf.mxu0
  %v764 = vadd.f32 0.0, %v763
  %765 = vmatmul.bf16.gmra.mxu0 %v430
  %v766 = vpop.f32.mrf.mxu0
  %v767 = vadd.f32 0.0, %v766
  %v768 = vpop.f32.mrf.mxu0
  %v769 = vadd.f32 0.0, %v768
  %770 = vmatmul.bf16.gmra.mxu0 %v433
  %v771 = vpop.f32.mrf.mxu0
  %v772 = vadd.f32 0.0, %v771
  %v773 = vpop.f32.mrf.mxu0
  %v774 = vadd.f32 0.0, %v773
  %775 = vmatmul.bf16.gmra.mxu0 %v436
  %v776 = vpop.f32.mrf.mxu0
  %v777 = vadd.f32 0.0, %v776
  %v778 = vpop.f32.mrf.mxu0
  %v779 = vadd.f32 0.0, %v778
  %780 = vmatmul.bf16.gmra.mxu0 %v439
  %v781 = vpop.f32.mrf.mxu0
  %v782 = vadd.f32 0.0, %v781
  %v783 = vpop.f32.mrf.mxu0
  %v784 = vadd.f32 0.0, %v783
  %785 = vmatmul.bf16.gmra.mxu0 %v442
  %v786 = vpop.f32.mrf.mxu0
  %v787 = vadd.f32 0.0, %v786
  %v788 = vpop.f32.mrf.mxu0
  %v789 = vadd.f32 0.0, %v788
  %790 = vmatmul.bf16.gmra.mxu0 %v445
  %v791 = vpop.f32.mrf.mxu0
  %v792 = vadd.f32 0.0, %v791
  %v793 = vpop.f32.mrf.mxu0
  %v794 = vadd.f32 0.0, %v793
  %795 = vmatmul.bf16.gmra.mxu0 %v448
  %v796 = vpop.f32.mrf.mxu0
  %v797 = vadd.f32 0.0, %v796
  %v798 = vpop.f32.mrf.mxu0
  %v799 = vadd.f32 0.0, %v798
  %800 = vmatmul.bf16.gmra.mxu0 %v451
  %v801 = vpop.f32.mrf.mxu0
  %v802 = vadd.f32 0.0, %v801
  %v803 = vpop.f32.mrf.mxu0
  %v804 = vadd.f32 0.0, %v803
  %805 = vmatmul.bf16.gmra.mxu0 %v454
  %v806 = vpop.f32.mrf.mxu0
  %v807 = vadd.f32 0.0, %v806
  %v808 = vpop.f32.mrf.mxu0
  %v809 = vadd.f32 0.0, %v808
  %810 = vmatmul.bf16.gmra.mxu0 %v457
  %v811 = vpop.f32.mrf.mxu0
  %v812 = vadd.f32 0.0, %v811
  %v813 = vpop.f32.mrf.mxu0
  %v814 = vadd.f32 0.0, %v813
  %815 = vmatmul.bf16.gmra.mxu0 %v460
  %v816 = vpop.f32.mrf.mxu0
  %v817 = vadd.f32 0.0, %v816
  %v818 = vpop.f32.mrf.mxu0
  %v819 = vadd.f32 0.0, %v818
  %820 = vmatmul.bf16.gmra.mxu0 %v463
  %v821 = vpop.f32.mrf.mxu0
  %v822 = vadd.f32 0.0, %v821
  %v823 = vpop.f32.mrf.mxu0
  %v824 = vadd.f32 0.0, %v823
  %825 = vmatmul.bf16.gmra.mxu0 %v466
  %v826 = vpop.f32.mrf.mxu0
  %v827 = vadd.f32 0.0, %v826
  %v828 = vpop.f32.mrf.mxu0
  %v829 = vadd.f32 0.0, %v828
  %830 = vmatmul.bf16.gmra.mxu0 %v469
  %v831 = vpop.f32.mrf.mxu0
  %v832 = vadd.f32 0.0, %v831
  %v833 = vpop.f32.mrf.mxu0
  %v834 = vadd.f32 0.0, %v833
  %835 = vmatmul.bf16.gmra.mxu0 %v472
  %v836 = vpop.f32.mrf.mxu0
  %v837 = vadd.f32 0.0, %v836
  %v838 = vpop.f32.mrf.mxu0
  %v839 = vadd.f32 0.0, %v838
  %840 = vmatmul.bf16.gmra.mxu0 %v475
  %v841 = vpop.f32.mrf.mxu0
  %v842 = vadd.f32 0.0, %v841
  %v843 = vpop.f32.mrf.mxu0
  %844 = vdwg.mxu0
  %845 = vmatpush.bf16.msra.mxu0 %v615
  %846 = vmatpush.bf16.msra.mxu0 %v614
  %847 = vmatpush.bf16.msra.mxu0 %v613
  %848 = vmatpush.bf16.msra.mxu0 %v612
  %849 = vmatpush.bf16.msra.mxu0 %v611
  %850 = vmatpush.bf16.msra.mxu0 %v610
  %851 = vmatpush.bf16.msra.mxu0 %v609
  %852 = vmatpush.bf16.msra.mxu0 %v608
  %853 = vmatmul.bf16.gmra.mxu0 %v404
  %v854 = vpop.f32.mrf.mxu0
  %v855 = vadd.f32 %v722, %v854
  %v856 = vpop.f32.mrf.mxu0
  %v857 = vadd.f32 %v724, %v856
  %858 = vmatmul.bf16.gmra.mxu0 %v407
  %v859 = vpop.f32.mrf.mxu0
  %v860 = vadd.f32 %v727, %v859
  %v861 = vpop.f32.mrf.mxu0
  %v862 = vadd.f32 %v729, %v861
  %863 = vmatmul.bf16.gmra.mxu0 %v410
  %v864 = vpop.f32.mrf.mxu0
  %v865 = vadd.f32 %v732, %v864
  %v866 = vpop.f32.mrf.mxu0
  %v867 = vadd.f32 %v734, %v866
  %868 = vmatmul.bf16.gmra.mxu0 %v413
  %v869 = vpop.f32.mrf.mxu0
  %v870 = vadd.f32 %v737, %v869
  %v871 = vpop.f32.mrf.mxu0
  %v872 = vadd.f32 %v739, %v871
  %873 = vmatmul.bf16.gmra.mxu0 %v416
  %v874 = vpop.f32.mrf.mxu0
  %v875 = vadd.f32 %v742, %v874
  %v876 = vpop.f32.mrf.mxu0
  %v877 = vadd.f32 %v744, %v876
  %878 = vmatmul.bf16.gmra.mxu0 %v419
  %v879 = vpop.f32.mrf.mxu0
  %v880 = vadd.f32 %v747, %v879
  %v881 = vpop.f32.mrf.mxu0
  %v882 = vadd.f32 %v749, %v881
  %883 = vmatmul.bf16.gmra.mxu0 %v422
  %v884 = vpop.f32.mrf.mxu0
  %v885 = vadd.f32 %v752, %v884
  %v886 = vpop.f32.mrf.mxu0
  %v887 = vadd.f32 %v754, %v886
  %888 = vmatmul.bf16.gmra.mxu0 %v425
  %v889 = vpop.f32.mrf.mxu0
  %v890 = vadd.f32 %v757, %v889
  %v891 = vpop.f32.mrf.mxu0
  %v892 = vadd.f32 %v759, %v891
  %893 = vmatmul.bf16.gmra.mxu0 %v428
  %v894 = vpop.f32.mrf.mxu0
  %v895 = vadd.f32 %v762, %v894
  %v896 = vpop.f32.mrf.mxu0
  %v897 = vadd.f32 %v764, %v896
  %898 = vmatmul.bf16.gmra.mxu0 %v431
  %v899 = vpop.f32.mrf.mxu0
  %v900 = vadd.f32 %v767, %v899
  %v901 = vpop.f32.mrf.mxu0
  %v902 = vadd.f32 %v769, %v901
  %903 = vmatmul.bf16.gmra.mxu0 %v434
  %v904 = vpop.f32.mrf.mxu0
  %v905 = vadd.f32 %v772, %v904
  %v906 = vpop.f32.mrf.mxu0
  %v907 = vadd.f32 %v774, %v906
  %908 = vmatmul.bf16.gmra.mxu0 %v437
  %v909 = vpop.f32.mrf.mxu0
  %v910 = vadd.f32 %v777, %v909
  %v911 = vpop.f32.mrf.mxu0
  %v912 = vadd.f32 %v779, %v911
  %913 = vmatmul.bf16.gmra.mxu0 %v440
  %v914 = vpop.f32.mrf.mxu0
  %v915 = vadd.f32 %v782, %v914
  %v916 = vpop.f32.mrf.mxu0
  %v917 = vadd.f32 %v784, %v916
  %918 = vmatmul.bf16.gmra.mxu0 %v443
  %v919 = vpop.f32.mrf.mxu0
  %v920 = vadd.f32 %v787, %v919
  %v921 = vpop.f32.mrf.mxu0
  %v922 = vadd.f32 %v789, %v921
  %923 = vmatmul.bf16.gmra.mxu0 %v446
  %v924 = vpop.f32.mrf.mxu0
  %v925 = vadd.f32 %v792, %v924
  %v926 = vpop.f32.mrf.mxu0
  %v927 = vadd.f32 %v794, %v926
  %928 = vmatmul.bf16.gmra.mxu0 %v449
  %v929 = vpop.f32.mrf.mxu0
  %v930 = vadd.f32 %v797, %v929
  %v931 = vpop.f32.mrf.mxu0
  %v932 = vadd.f32 %v799, %v931
  %933 = vmatmul.bf16.gmra.mxu0 %v452
  %v934 = vpop.f32.mrf.mxu0
  %v935 = vadd.f32 %v802, %v934
  %v936 = vpop.f32.mrf.mxu0
  %v937 = vadd.f32 %v804, %v936
  %938 = vmatmul.bf16.gmra.mxu0 %v455
  %v939 = vpop.f32.mrf.mxu0
  %v940 = vadd.f32 %v807, %v939
  %v941 = vpop.f32.mrf.mxu0
  %v942 = vadd.f32 %v809, %v941
  %943 = vmatmul.bf16.gmra.mxu0 %v458
  %v944 = vpop.f32.mrf.mxu0
  %v945 = vadd.f32 %v812, %v944
  %v946 = vpop.f32.mrf.mxu0
  %v947 = vadd.f32 %v814, %v946
  %948 = vmatmul.bf16.gmra.mxu0 %v461
  %v949 = vpop.f32.mrf.mxu0
  %v950 = vadd.f32 %v817, %v949
  %v951 = vpop.f32.mrf.mxu0
  %v952 = vadd.f32 %v819, %v951
  %953 = vmatmul.bf16.gmra.mxu0 %v464
  %v954 = vpop.f32.mrf.mxu0
  %v955 = vadd.f32 %v822, %v954
  %v956 = vpop.f32.mrf.mxu0
  %v957 = vadd.f32 %v824, %v956
  %958 = vmatmul.bf16.gmra.mxu0 %v467
  %v959 = vpop.f32.mrf.mxu0
  %v960 = vadd.f32 %v827, %v959
  %v961 = vpop.f32.mrf.mxu0
  %v962 = vadd.f32 %v829, %v961
  %963 = vmatmul.bf16.gmra.mxu0 %v470
  %v964 = vpop.f32.mrf.mxu0
  %v965 = vadd.f32 %v832, %v964
  %v966 = vpop.f32.mrf.mxu0
  %v967 = vadd.f32 %v834, %v966
  %968 = vmatmul.bf16.gmra.mxu0 %v473
  %v969 = vpop.f32.mrf.mxu0
  %v970 = vadd.f32 %v837, %v969
  %v971 = vpop.f32.mrf.mxu0
  %v972 = vadd.f32 %v839, %v971
  %973 = vmatmul.bf16.gmra.mxu0 %v476
  %v974 = vpop.f32.mrf.mxu0
  %v975 = vadd.f32 %v842, %v974
  %v976 = vpop.f32.mrf.mxu0
  %977 = vdwg.mxu0
  %978 = vmatpush.bf16.msra.mxu0 0
  %979 = vmatpush.bf16.msra.mxu0 0
  %980 = vmatpush.bf16.msra.mxu0 0
  %981 = vmatpush.bf16.msra.mxu0 0
  %982 = vmatpush.bf16.msra.mxu0 0
  %983 = vmatpush.bf16.msra.mxu0 0
  %984 = vmatpush.bf16.msra.mxu0 %v617
  %985 = vmatpush.bf16.msra.mxu0 %v616
  %986 = vmatmul.bf16.gmra.mxu0 %v638
  %v987 = vpop.f32.mrf.mxu0
  %v988 = vadd.f32 %v855, %v987
  %v989 = vpop.f32.mrf.mxu0
  %v990 = vadd.f32 %v857, %v989
  %991 = vmatmul.bf16.gmra.mxu0 %v641
  %v992 = vpop.f32.mrf.mxu0
  %v993 = vadd.f32 %v860, %v992
  %v994 = vpop.f32.mrf.mxu0
  %v995 = vadd.f32 %v862, %v994
  %996 = vmatmul.bf16.gmra.mxu0 %v644
  %v997 = vpop.f32.mrf.mxu0
  %v998 = vadd.f32 %v865, %v997
  %v999 = vpop.f32.mrf.mxu0
  %v1000 = vadd.f32 %v867, %v999
  %1001 = vmatmul.bf16.gmra.mxu0 %v647
  %v1002 = vpop.f32.mrf.mxu0
  %v1003 = vadd.f32 %v870, %v1002
  %v1004 = vpop.f32.mrf.mxu0
  %v1005 = vadd.f32 %v872, %v1004
  %1006 = vmatmul.bf16.gmra.mxu0 %v650
  %v1007 = vpop.f32.mrf.mxu0
  %v1008 = vadd.f32 %v875, %v1007
  %v1009 = vpop.f32.mrf.mxu0
  %v1010 = vadd.f32 %v877, %v1009
  %1011 = vmatmul.bf16.gmra.mxu0 %v653
  %v1012 = vpop.f32.mrf.mxu0
  %v1013 = vadd.f32 %v880, %v1012
  %v1014 = vpop.f32.mrf.mxu0
  %v1015 = vadd.f32 %v882, %v1014
  %1016 = vmatmul.bf16.gmra.mxu0 %v656
  %v1017 = vpop.f32.mrf.mxu0
  %v1018 = vadd.f32 %v885, %v1017
  %v1019 = vpop.f32.mrf.mxu0
  %v1020 = vadd.f32 %v887, %v1019
  %1021 = vmatmul.bf16.gmra.mxu0 %v659
  %v1022 = vpop.f32.mrf.mxu0
  %v1023 = vadd.f32 %v890, %v1022
  %v1024 = vpop.f32.mrf.mxu0
  %v1025 = vadd.f32 %v892, %v1024
  %1026 = vmatmul.bf16.gmra.mxu0 %v662
  %v1027 = vpop.f32.mrf.mxu0
  %v1028 = vadd.f32 %v895, %v1027
  %v1029 = vpop.f32.mrf.mxu0
  %v1030 = vadd.f32 %v897, %v1029
  %1031 = vmatmul.bf16.gmra.mxu0 %v665
  %v1032 = vpop.f32.mrf.mxu0
  %v1033 = vadd.f32 %v900, %v1032
  %v1034 = vpop.f32.mrf.mxu0
  %v1035 = vadd.f32 %v902, %v1034
  %1036 = vmatmul.bf16.gmra.mxu0 %v668
  %v1037 = vpop.f32.mrf.mxu0
  %v1038 = vadd.f32 %v905, %v1037
  %v1039 = vpop.f32.mrf.mxu0
  %v1040 = vadd.f32 %v907, %v1039
  %1041 = vmatmul.bf16.gmra.mxu0 %v671
  %v1042 = vpop.f32.mrf.mxu0
  %v1043 = vadd.f32 %v910, %v1042
  %v1044 = vpop.f32.mrf.mxu0
  %v1045 = vadd.f32 %v912, %v1044
  %1046 = vmatmul.bf16.gmra.mxu0 %v674
  %v1047 = vpop.f32.mrf.mxu0
  %v1048 = vadd.f32 %v915, %v1047
  %v1049 = vpop.f32.mrf.mxu0
  %v1050 = vadd.f32 %v917, %v1049
  %1051 = vmatmul.bf16.gmra.mxu0 %v677
  %v1052 = vpop.f32.mrf.mxu0
  %v1053 = vadd.f32 %v920, %v1052
  %v1054 = vpop.f32.mrf.mxu0
  %v1055 = vadd.f32 %v922, %v1054
  %1056 = vmatmul.bf16.gmra.mxu0 %v680
  %v1057 = vpop.f32.mrf.mxu0
  %v1058 = vadd.f32 %v925, %v1057
  %v1059 = vpop.f32.mrf.mxu0
  %v1060 = vadd.f32 %v927, %v1059
  %1061 = vmatmul.bf16.gmra.mxu0 %v683
  %v1062 = vpop.f32.mrf.mxu0
  %v1063 = vadd.f32 %v930, %v1062
  %v1064 = vpop.f32.mrf.mxu0
  %v1065 = vadd.f32 %v932, %v1064
  %1066 = vmatmul.bf16.gmra.mxu0 %v686
  %v1067 = vpop.f32.mrf.mxu0
  %v1068 = vadd.f32 %v935, %v1067
  %v1069 = vpop.f32.mrf.mxu0
  %v1070 = vadd.f32 %v937, %v1069
  %1071 = vmatmul.bf16.gmra.mxu0 %v689
  %v1072 = vpop.f32.mrf.mxu0
  %v1073 = vadd.f32 %v940, %v1072
  %v1074 = vpop.f32.mrf.mxu0
  %v1075 = vadd.f32 %v942, %v1074
  %1076 = vmatmul.bf16.gmra.mxu0 %v692
  %v1077 = vpop.f32.mrf.mxu0
  %v1078 = vadd.f32 %v945, %v1077
  %v1079 = vpop.f32.mrf.mxu0
  %v1080 = vadd.f32 %v947, %v1079
  %1081 = vmatmul.bf16.gmra.mxu0 %v695
  %v1082 = vpop.f32.mrf.mxu0
  %v1083 = vadd.f32 %v950, %v1082
  %v1084 = vpop.f32.mrf.mxu0
  %v1085 = vadd.f32 %v952, %v1084
  %1086 = vmatmul.bf16.gmra.mxu0 %v698
  %v1087 = vpop.f32.mrf.mxu0
  %v1088 = vadd.f32 %v955, %v1087
  %v1089 = vpop.f32.mrf.mxu0
  %v1090 = vadd.f32 %v957, %v1089
  %1091 = vmatmul.bf16.gmra.mxu0 %v701
  %v1092 = vpop.f32.mrf.mxu0
  %v1093 = vadd.f32 %v960, %v1092
  %v1094 = vpop.f32.mrf.mxu0
  %v1095 = vadd.f32 %v962, %v1094
  %1096 = vmatmul.bf16.gmra.mxu0 %v704
  %v1097 = vpop.f32.mrf.mxu0
  %v1098 = vadd.f32 %v965, %v1097
  %v1099 = vpop.f32.mrf.mxu0
  %v1100 = vadd.f32 %v967, %v1099
  %1101 = vmatmul.bf16.gmra.mxu0 %v707
  %v1102 = vpop.f32.mrf.mxu0
  %v1103 = vadd.f32 %v970, %v1102
  %v1104 = vpop.f32.mrf.mxu0
  %v1105 = vadd.f32 %v972, %v1104
  %1106 = vmatmul.bf16.gmra.mxu0 %v710
  %v1107 = vpop.f32.mrf.mxu0
  %v1108 = vadd.f32 %v975, %v1107
  %v1109 = vpop.f32.mrf.mxu0
  %1110 = vdwg.mxu0
  %v1111 = vld [vmem:[%s1] sm:$0xff]
  %v1112 = vld [vmem:[%s1 + $0x8] sm:$0xf]
  %v1113 = vld [vmem:[%s1 + $0xc] sm:$0xff]
  %v1114 = vld [vmem:[%s1 + $0x14] sm:$0xf]
  %v1115 = vld [vmem:[%s1 + $0x18] sm:$0xff]
  %v1116 = vld [vmem:[%s1 + $0x20] sm:$0xf]
  %v1117 = vld [vmem:[%s1 + $0x24] sm:$0xff]
  %v1118 = vld [vmem:[%s1 + $0x2c] sm:$0xf]
  %v1119 = vld [vmem:[%s1 + $0x30] sm:$0xff]
  %v1120 = vld [vmem:[%s1 + $0x38] sm:$0xf]
  %v1121 = vld [vmem:[%s1 + $0x3c] sm:$0xff]
  %v1122 = vld [vmem:[%s1 + $0x44] sm:$0xf]
  %v1123 = vld [vmem:[%s1 + $0x48] sm:$0xff]
  %v1124 = vld [vmem:[%s1 + $0x50] sm:$0xf]
  %v1125 = vld [vmem:[%s1 + $0x54] sm:$0xff]
  %v1126 = vld [vmem:[%s1 + $0x5c] sm:$0xf]
  %v1127 = vld [vmem:[%s1 + $0x60] sm:$0xff]
  %v1128 = vld [vmem:[%s1 + $0x68] sm:$0xf]
  %v1129 = vld [vmem:[%s1 + $0x6c] sm:$0xff]
  %v1130 = vld [vmem:[%s1 + $0x74] sm:$0xf]
  %v1131 = vld [vmem:[%s1 + $0x78] sm:$0xff]
  %v1132 = vld [vmem:[%s1 + $0x80] sm:$0xf]
  %v1133 = vld [vmem:[%s1 + $0x84] sm:$0xff]
  %v1134 = vld [vmem:[%s1 + $0x8c] sm:$0xf]
  %v1135 = vld [vmem:[%s1 + $0x90] sm:$0xff]
  %v1136 = vld [vmem:[%s1 + $0x98] sm:$0xf]
  %v1137 = vld [vmem:[%s1 + $0x9c] sm:$0xff]
  %v1138 = vld [vmem:[%s1 + $0xa4] sm:$0xf]
  %v1139 = vld [vmem:[%s1 + $0xa8] sm:$0xff]
  %v1140 = vld [vmem:[%s1 + $0xb0] sm:$0xf]
  %v1141 = vld [vmem:[%s1 + $0xb4] sm:$0xff]
  %v1142 = vld [vmem:[%s1 + $0xbc] sm:$0xf]
  %v1143 = vld [vmem:[%s1 + $0xc0] sm:$0xff]
  %v1144 = vld [vmem:[%s1 + $0xc8] sm:$0xf]
  %v1145 = vld [vmem:[%s1 + $0xcc] sm:$0xff]
  %v1146 = vld [vmem:[%s1 + $0xd4] sm:$0xf]
  %v1147 = vld [vmem:[%s1 + $0xd8] sm:$0xff]
  %v1148 = vld [vmem:[%s1 + $0xe0] sm:$0xf]
  %v1149 = vld [vmem:[%s1 + $0xe4] sm:$0xff]
  %v1150 = vld [vmem:[%s1 + $0xec] sm:$0xf]
  %v1151 = vld [vmem:[%s1 + $0xf0] sm:$0xff]
  %v1152 = vld [vmem:[%s1 + $0xf8] sm:$0xf]
  %v1153 = vld [vmem:[%s1 + $0xfc] sm:$0xff]
  %v1154 = vld [vmem:[%s1 + $0x104] sm:$0xf]
  %v1155 = vld [vmem:[%s1 + $0x108] sm:$0xff]
  %v1156 = vld [vmem:[%s1 + $0x110] sm:$0xf]
  %v1157 = vld [vmem:[%s1 + $0x114] sm:$0xff]
  %v1158 = vld [vmem:[%s1 + $0x11c] sm:$0xf]
  %v1159 = vld [vmem:[%s1 + $0x120] sm:$0xff]
  %v1160 = vld [vmem:[%s1 + $0x128] sm:$0xf]
  %v1161 = vld [vmem:[%s1 + $0x12c] sm:$0xff]
  %v1162 = vld [vmem:[%s1 + $0x134] sm:$0xf]
  %v1163 = vld [vmem:[%s1 + $0x138] sm:$0xff]
  %v1164 = vld [vmem:[%s1 + $0x140] sm:$0xf]
  %v1165 = vld [vmem:[%s1 + $0x144] sm:$0xff]
  %v1166 = vld [vmem:[%s1 + $0x14c] sm:$0xf]
  %v1167 = vld [vmem:[%s1 + $0x150] sm:$0xff]
  %v1168 = vld [vmem:[%s1 + $0x158] sm:$0xf]
  %v1169 = vld [vmem:[%s1 + $0x15c] sm:$0xff]
  %v1170 = vld [vmem:[%s1 + $0x164] sm:$0xf]
  %v1171 = vld [vmem:[%s1 + $0x168] sm:$0xff]
  %v1172 = vld [vmem:[%s1 + $0x170] sm:$0xf]
  %v1173 = vld [vmem:[%s1 + $0x174] sm:$0xff]
  %v1174 = vld [vmem:[%s1 + $0x17c] sm:$0xf]
  %v1175 = vld [vmem:[%s1 + $0x180] sm:$0xff]
  %v1176 = vld [vmem:[%s1 + $0x188] sm:$0xf]
  %v1177 = vld [vmem:[%s1 + $0x18c] sm:$0xff]
  %v1178 = vld [vmem:[%s1 + $0x194] sm:$0xf]
  %v1179 = vld [vmem:[%s1 + $0x198] sm:$0xff]
  %v1180 = vld [vmem:[%s1 + $0x1a0] sm:$0xf]
  %v1181 = vld [vmem:[%s1 + $0x1a4] sm:$0xff]
  %v1182 = vld [vmem:[%s1 + $0x1ac] sm:$0xf]
  %v1183 = vld [vmem:[%s1 + $0x1b0] sm:$0xff]
  %v1184 = vld [vmem:[%s1 + $0x1b8] sm:$0xf]
  %v1185 = vld [vmem:[%s1 + $0x1bc] sm:$0xff]
  %v1186 = vld [vmem:[%s1 + $0x1c4] sm:$0xf]
  %v1187 = vld [vmem:[%s1 + $0x1c8] sm:$0xff]
  %v1188 = vld [vmem:[%s1 + $0x1d0] sm:$0xf]
  %v1189 = vld [vmem:[%s1 + $0x1d4] sm:$0xff]
  %v1190 = vld [vmem:[%s1 + $0x1dc] sm:$0xf]
  %v1191 = vld [vmem:[%s1 + $0x1e0] sm:$0xff]
  %v1192 = vld [vmem:[%s1 + $0x1e8] sm:$0xf]
  %v1193 = vld [vmem:[%s1 + $0x1ec] sm:$0xff]
  %v1194 = vld [vmem:[%s1 + $0x1f4] sm:$0xf]
  %v1195 = vld [vmem:[%s1 + $0x1f8] sm:$0xff]
  %v1196 = vld [vmem:[%s1 + $0x200] sm:$0xf]
  %v1197 = vld [vmem:[%s1 + $0x204] sm:$0xff]
  %v1198 = vld [vmem:[%s1 + $0x20c] sm:$0xf]
  %v1199 = vld [vmem:[%s1 + $0x210] sm:$0xff]
  %v1200 = vld [vmem:[%s1 + $0x218] sm:$0xf]
  %v1201 = vld [vmem:[%s1 + $0x21c] sm:$0xff]
  %v1202 = vld [vmem:[%s1 + $0x224] sm:$0xf]
  %v1203 = vld [vmem:[%s1 + $0x228] sm:$0xff]
  %v1204 = vld [vmem:[%s1 + $0x230] sm:$0xf]
  %v1205 = vld [vmem:[%s1 + $0x234] sm:$0xff]
  %v1206 = vld [vmem:[%s1 + $0x23c] sm:$0xf]
  %v1207 = vld [vmem:[%s1 + $0x240] sm:$0xff]
  %v1208 = vld [vmem:[%s1 + $0x248] sm:$0xf]
  %v1307 = vunpack.c.l.b16 %v1111
  %v1308 = vunpack.c.h.b16 %v1111
  %v1309 = vunpack.c.l.b16 %v1112
  %v1310 = vunpack.c.l.b16 %v1113
  %v1311 = vunpack.c.h.b16 %v1113
  %v1312 = vunpack.c.l.b16 %v1114
  %v1313 = vunpack.c.l.b16 %v1115
  %v1314 = vunpack.c.h.b16 %v1115
  %v1315 = vunpack.c.l.b16 %v1116
  %v1316 = vunpack.c.l.b16 %v1117
  %v1317 = vunpack.c.h.b16 %v1117
  %v1318 = vunpack.c.l.b16 %v1118
  %v1319 = vunpack.c.l.b16 %v1119
  %v1320 = vunpack.c.h.b16 %v1119
  %v1321 = vunpack.c.l.b16 %v1120
  %v1322 = vunpack.c.l.b16 %v1121
  %v1323 = vunpack.c.h.b16 %v1121
  %v1324 = vunpack.c.l.b16 %v1122
  %v1325 = vunpack.c.l.b16 %v1123
  %v1326 = vunpack.c.h.b16 %v1123
  %v1327 = vunpack.c.l.b16 %v1124
  %v1328 = vunpack.c.l.b16 %v1125
  %v1329 = vunpack.c.h.b16 %v1125
  %v1330 = vunpack.c.l.b16 %v1126
  %v1331 = vunpack.c.l.b16 %v1127
  %v1332 = vunpack.c.h.b16 %v1127
  %v1333 = vunpack.c.l.b16 %v1128
  %v1334 = vunpack.c.l.b16 %v1129
  %v1335 = vunpack.c.h.b16 %v1129
  %v1336 = vunpack.c.l.b16 %v1130
  %v1337 = vunpack.c.l.b16 %v1131
  %v1338 = vunpack.c.h.b16 %v1131
  %v1339 = vunpack.c.l.b16 %v1132
  %v1340 = vunpack.c.l.b16 %v1133
  %v1341 = vunpack.c.h.b16 %v1133
  %v1342 = vunpack.c.l.b16 %v1134
  %v1343 = vunpack.c.l.b16 %v1135
  %v1344 = vunpack.c.h.b16 %v1135
  %v1345 = vunpack.c.l.b16 %v1136
  %v1346 = vunpack.c.l.b16 %v1137
  %v1347 = vunpack.c.h.b16 %v1137
  %v1348 = vunpack.c.l.b16 %v1138
  %v1349 = vunpack.c.l.b16 %v1139
  %v1350 = vunpack.c.h.b16 %v1139
  %v1351 = vunpack.c.l.b16 %v1140
  %v1352 = vunpack.c.l.b16 %v1141
  %v1353 = vunpack.c.h.b16 %v1141
  %v1354 = vunpack.c.l.b16 %v1142
  %v1355 = vunpack.c.l.b16 %v1143
  %v1356 = vunpack.c.h.b16 %v1143
  %v1357 = vunpack.c.l.b16 %v1144
  %v1358 = vunpack.c.l.b16 %v1145
  %v1359 = vunpack.c.h.b16 %v1145
  %v1360 = vunpack.c.l.b16 %v1146
  %v1361 = vunpack.c.l.b16 %v1147
  %v1362 = vunpack.c.h.b16 %v1147
  %v1363 = vunpack.c.l.b16 %v1148
  %v1364 = vunpack.c.l.b16 %v1149
  %v1365 = vunpack.c.h.b16 %v1149
  %v1366 = vunpack.c.l.b16 %v1150
  %v1367 = vunpack.c.l.b16 %v1151
  %v1368 = vunpack.c.h.b16 %v1151
  %v1369 = vunpack.c.l.b16 %v1152
  %v1370 = vunpack.c.l.b16 %v1153
  %v1371 = vunpack.c.h.b16 %v1153
  %v1372 = vunpack.c.l.b16 %v1154
  %v1373 = vunpack.c.l.b16 %v1155
  %v1374 = vunpack.c.h.b16 %v1155
  %v1375 = vunpack.c.l.b16 %v1156
  %v1376 = vunpack.c.l.b16 %v1157
  %v1377 = vunpack.c.h.b16 %v1157
  %v1378 = vunpack.c.l.b16 %v1158
  %v1379 = vunpack.c.l.b16 %v1159
  %v1380 = vunpack.c.h.b16 %v1159
  %v1381 = vunpack.c.l.b16 %v1160
  %v1382 = vunpack.c.l.b16 %v1161
  %v1383 = vunpack.c.h.b16 %v1161
  %v1384 = vunpack.c.l.b16 %v1162
  %v1385 = vunpack.c.l.b16 %v1163
  %v1386 = vunpack.c.h.b16 %v1163
  %v1387 = vunpack.c.l.b16 %v1164
  %v1388 = vunpack.c.l.b16 %v1165
  %v1389 = vunpack.c.h.b16 %v1165
  %v1390 = vunpack.c.l.b16 %v1166
  %v1391 = vunpack.c.l.b16 %v1167
  %v1392 = vunpack.c.h.b16 %v1167
  %v1393 = vunpack.c.l.b16 %v1168
  %v1394 = vunpack.c.l.b16 %v1169
  %v1395 = vunpack.c.h.b16 %v1169
  %v1396 = vunpack.c.l.b16 %v1170
  %v1397 = vunpack.c.l.b16 %v1171
  %v1398 = vunpack.c.h.b16 %v1171
  %v1399 = vunpack.c.l.b16 %v1172
  %v1400 = vunpack.c.l.b16 %v1173
  %v1401 = vunpack.c.h.b16 %v1173
  %v1402 = vunpack.c.l.b16 %v1174
  %v1403 = vunpack.c.l.b16 %v1175
  %v1404 = vunpack.c.h.b16 %v1175
  %v1405 = vunpack.c.l.b16 %v1176
  %v1406 = vunpack.c.l.b16 %v1177
  %v1407 = vunpack.c.h.b16 %v1177
  %v1408 = vunpack.c.l.b16 %v1178
  %v1409 = vunpack.c.l.b16 %v1179
  %v1410 = vunpack.c.h.b16 %v1179
  %v1411 = vunpack.c.l.b16 %v1180
  %v1412 = vunpack.c.l.b16 %v1181
  %v1413 = vunpack.c.h.b16 %v1181
  %v1414 = vunpack.c.l.b16 %v1182
  %v1415 = vunpack.c.l.b16 %v1183
  %v1416 = vunpack.c.h.b16 %v1183
  %v1417 = vunpack.c.l.b16 %v1184
  %v1418 = vunpack.c.l.b16 %v1185
  %v1419 = vunpack.c.h.b16 %v1185
  %v1420 = vunpack.c.l.b16 %v1186
  %v1421 = vunpack.c.l.b16 %v1187
  %v1422 = vunpack.c.h.b16 %v1187
  %v1423 = vunpack.c.l.b16 %v1188
  %v1424 = vunpack.c.l.b16 %v1189
  %v1425 = vunpack.c.h.b16 %v1189
  %v1426 = vunpack.c.l.b16 %v1190
  %v1427 = vunpack.c.l.b16 %v1191
  %v1428 = vunpack.c.h.b16 %v1191
  %v1429 = vunpack.c.l.b16 %v1192
  %v1430 = vunpack.c.l.b16 %v1193
  %v1431 = vunpack.c.h.b16 %v1193
  %v1432 = vunpack.c.l.b16 %v1194
  %v1433 = vunpack.c.l.b16 %v1195
  %v1434 = vunpack.c.h.b16 %v1195
  %v1435 = vunpack.c.l.b16 %v1196
  %v1436 = vunpack.c.l.b16 %v1197
  %v1437 = vunpack.c.h.b16 %v1197
  %v1438 = vunpack.c.l.b16 %v1198
  %v1439 = vunpack.c.l.b16 %v1199
  %v1440 = vunpack.c.h.b16 %v1199
  %v1441 = vunpack.c.l.b16 %v1200
  %v1442 = vunpack.c.l.b16 %v1201
  %v1443 = vunpack.c.h.b16 %v1201
  %v1444 = vunpack.c.l.b16 %v1202
  %v1445 = vunpack.c.l.b16 %v1203
  %v1446 = vunpack.c.h.b16 %v1203
  %v1447 = vunpack.c.l.b16 %v1204
  %v1448 = vunpack.c.l.b16 %v1205
  %v1449 = vunpack.c.h.b16 %v1205
  %v1450 = vunpack.c.l.b16 %v1206
  %v1451 = vunpack.c.l.b16 %v1207
  %v1452 = vunpack.c.h.b16 %v1207
  %v1453 = vunpack.c.l.b16 %v1208
  %v1454 = vpack.c.b16 %v1310, %v1307
  %v1455 = vpack.c.b16 %v1311, %v1308
  %v1456 = vpack.c.b16 %v1312, %v1309
  %v1457 = vpack.c.b16 %v1316, %v1313
  %v1458 = vpack.c.b16 %v1317, %v1314
  %v1459 = vpack.c.b16 %v1318, %v1315
  %v1460 = vpack.c.b16 %v1322, %v1319
  %v1461 = vpack.c.b16 %v1323, %v1320
  %v1462 = vpack.c.b16 %v1324, %v1321
  %v1463 = vpack.c.b16 %v1328, %v1325
  %v1464 = vpack.c.b16 %v1329, %v1326
  %v1465 = vpack.c.b16 %v1330, %v1327
  %v1466 = vpack.c.b16 %v1334, %v1331
  %v1467 = vpack.c.b16 %v1335, %v1332
  %v1468 = vpack.c.b16 %v1336, %v1333
  %v1469 = vpack.c.b16 %v1340, %v1337
  %v1470 = vpack.c.b16 %v1341, %v1338
  %v1471 = vpack.c.b16 %v1342, %v1339
  %v1472 = vpack.c.b16 %v1346, %v1343
  %v1473 = vpack.c.b16 %v1347, %v1344
  %v1474 = vpack.c.b16 %v1348, %v1345
  %v1475 = vpack.c.b16 %v1352, %v1349
  %v1476 = vpack.c.b16 %v1353, %v1350
  %v1477 = vpack.c.b16 %v1354, %v1351
  %v1478 = vpack.c.b16 %v1358, %v1355
  %v1479 = vpack.c.b16 %v1359, %v1356
  %v1480 = vpack.c.b16 %v1360, %v1357
  %v1481 = vpack.c.b16 %v1364, %v1361
  %v1482 = vpack.c.b16 %v1365, %v1362
  %v1483 = vpack.c.b16 %v1366, %v1363
  %v1484 = vpack.c.b16 %v1370, %v1367
  %v1485 = vpack.c.b16 %v1371, %v1368
  %v1486 = vpack.c.b16 %v1372, %v1369
  %v1487 = vpack.c.b16 %v1376, %v1373
  %v1488 = vpack.c.b16 %v1377, %v1374
  %v1489 = vpack.c.b16 %v1378, %v1375
  %v1490 = vpack.c.b16 %v1382, %v1379
  %v1491 = vpack.c.b16 %v1383, %v1380
  %v1492 = vpack.c.b16 %v1384, %v1381
  %v1493 = vpack.c.b16 %v1388, %v1385
  %v1494 = vpack.c.b16 %v1389, %v1386
  %v1495 = vpack.c.b16 %v1390, %v1387
  %v1496 = vpack.c.b16 %v1394, %v1391
  %v1497 = vpack.c.b16 %v1395, %v1392
  %v1498 = vpack.c.b16 %v1396, %v1393
  %v1499 = vpack.c.b16 %v1400, %v1397
  %v1500 = vpack.c.b16 %v1401, %v1398
  %v1501 = vpack.c.b16 %v1402, %v1399
  %v1502 = vpack.c.b16 %v1406, %v1403
  %v1503 = vpack.c.b16 %v1407, %v1404
  %v1504 = vpack.c.b16 %v1408, %v1405
  %v1505 = vpack.c.b16 %v1412, %v1409
  %v1506 = vpack.c.b16 %v1413, %v1410
  %v1507 = vpack.c.b16 %v1414, %v1411
  %v1508 = vpack.c.b16 %v1418, %v1415
  %v1509 = vpack.c.b16 %v1419, %v1416
  %v1510 = vpack.c.b16 %v1420, %v1417
  %v1511 = vpack.c.b16 %v1424, %v1421
  %v1512 = vpack.c.b16 %v1425, %v1422
  %v1513 = vpack.c.b16 %v1426, %v1423
  %v1514 = vpack.c.b16 %v1430, %v1427
  %v1515 = vpack.c.b16 %v1431, %v1428
  %v1516 = vpack.c.b16 %v1432, %v1429
  %v1517 = vpack.c.b16 %v1436, %v1433
  %v1518 = vpack.c.b16 %v1437, %v1434
  %v1519 = vpack.c.b16 %v1438, %v1435
  %v1520 = vpack.c.b16 %v1442, %v1439
  %v1521 = vpack.c.b16 %v1443, %v1440
  %v1522 = vpack.c.b16 %v1444, %v1441
  %v1523 = vpack.c.b16 %v1448, %v1445
  %v1524 = vpack.c.b16 %v1449, %v1446
  %v1525 = vpack.c.b16 %v1450, %v1447
  %v1526 = vpack.c.b16 %v1451, %v1451
  %v1527 = vpack.c.b16 %v1452, %v1452
  %v1528 = vpack.c.b16 %v1453, %v1453
  %v1580 = vsel %vm636, %v1456, 0
  %v1583 = vsel %vm636, %v1459, 0
  %v1586 = vsel %vm636, %v1462, 0
  %v1589 = vsel %vm636, %v1465, 0
  %v1592 = vsel %vm636, %v1468, 0
  %v1595 = vsel %vm636, %v1471, 0
  %v1598 = vsel %vm636, %v1474, 0
  %v1601 = vsel %vm636, %v1477, 0
  %v1604 = vsel %vm636, %v1480, 0
  %v1607 = vsel %vm636, %v1483, 0
  %v1610 = vsel %vm636, %v1486, 0
  %v1613 = vsel %vm636, %v1489, 0
  %v1616 = vsel %vm636, %v1492, 0
  %v1619 = vsel %vm636, %v1495, 0
  %v1622 = vsel %vm636, %v1498, 0
  %v1625 = vsel %vm636, %v1501, 0
  %v1628 = vsel %vm636, %v1504, 0
  %v1631 = vsel %vm636, %v1507, 0
  %v1634 = vsel %vm636, %v1510, 0
  %v1637 = vsel %vm636, %v1513, 0
  %v1640 = vsel %vm636, %v1516, 0
  %v1643 = vsel %vm636, %v1519, 0
  %v1646 = vsel %vm636, %v1522, 0
  %v1649 = vsel %vm636, %v1525, 0
  %v1652 = vsel %vm636, %v1528, 0
  %1654 = vmatpush.bf16.msra.mxu0 %v607
  %1655 = vmatpush.bf16.msra.mxu0 %v606
  %1656 = vmatpush.bf16.msra.mxu0 %v605
  %1657 = vmatpush.bf16.msra.mxu0 %v604
  %1658 = vmatpush.bf16.msra.mxu0 %v603
  %1659 = vmatpush.bf16.msra.mxu0 %v602
  %1660 = vmatpush.bf16.msra.mxu0 %v601
  %1661 = vmatpush.bf16.msra.mxu0 %v600
  %1662 = vmatmul.bf16.gmra.mxu0 %v1454
  %v1663 = vpop.f32.mrf.mxu0
  %v1664 = vadd.f32 0.0, %v1663
  %v1665 = vpop.f32.mrf.mxu0
  %v1666 = vadd.f32 0.0, %v1665
  %1667 = vmatmul.bf16.gmra.mxu0 %v1457
  %v1668 = vpop.f32.mrf.mxu0
  %v1669 = vadd.f32 0.0, %v1668
  %v1670 = vpop.f32.mrf.mxu0
  %v1671 = vadd.f32 0.0, %v1670
  %1672 = vmatmul.bf16.gmra.mxu0 %v1460
  %v1673 = vpop.f32.mrf.mxu0
  %v1674 = vadd.f32 0.0, %v1673
  %v1675 = vpop.f32.mrf.mxu0
  %v1676 = vadd.f32 0.0, %v1675
  %1677 = vmatmul.bf16.gmra.mxu0 %v1463
  %v1678 = vpop.f32.mrf.mxu0
  %v1679 = vadd.f32 0.0, %v1678
  %v1680 = vpop.f32.mrf.mxu0
  %v1681 = vadd.f32 0.0, %v1680
  %1682 = vmatmul.bf16.gmra.mxu0 %v1466
  %v1683 = vpop.f32.mrf.mxu0
  %v1684 = vadd.f32 0.0, %v1683
  %v1685 = vpop.f32.mrf.mxu0
  %v1686 = vadd.f32 0.0, %v1685
  %1687 = vmatmul.bf16.gmra.mxu0 %v1469
  %v1688 = vpop.f32.mrf.mxu0
  %v1689 = vadd.f32 0.0, %v1688
  %v1690 = vpop.f32.mrf.mxu0
  %v1691 = vadd.f32 0.0, %v1690
  %1692 = vmatmul.bf16.gmra.mxu0 %v1472
  %v1693 = vpop.f32.mrf.mxu0
  %v1694 = vadd.f32 0.0, %v1693
  %v1695 = vpop.f32.mrf.mxu0
  %v1696 = vadd.f32 0.0, %v1695
  %1697 = vmatmul.bf16.gmra.mxu0 %v1475
  %v1698 = vpop.f32.mrf.mxu0
  %v1699 = vadd.f32 0.0, %v1698
  %v1700 = vpop.f32.mrf.mxu0
  %v1701 = vadd.f32 0.0, %v1700
  %1702 = vmatmul.bf16.gmra.mxu0 %v1478
  %v1703 = vpop.f32.mrf.mxu0
  %v1704 = vadd.f32 0.0, %v1703
  %v1705 = vpop.f32.mrf.mxu0
  %v1706 = vadd.f32 0.0, %v1705
  %1707 = vmatmul.bf16.gmra.mxu0 %v1481
  %v1708 = vpop.f32.mrf.mxu0
  %v1709 = vadd.f32 0.0, %v1708
  %v1710 = vpop.f32.mrf.mxu0
  %v1711 = vadd.f32 0.0, %v1710
  %1712 = vmatmul.bf16.gmra.mxu0 %v1484
  %v1713 = vpop.f32.mrf.mxu0
  %v1714 = vadd.f32 0.0, %v1713
  %v1715 = vpop.f32.mrf.mxu0
  %v1716 = vadd.f32 0.0, %v1715
  %1717 = vmatmul.bf16.gmra.mxu0 %v1487
  %v1718 = vpop.f32.mrf.mxu0
  %v1719 = vadd.f32 0.0, %v1718
  %v1720 = vpop.f32.mrf.mxu0
  %v1721 = vadd.f32 0.0, %v1720
  %1722 = vmatmul.bf16.gmra.mxu0 %v1490
  %v1723 = vpop.f32.mrf.mxu0
  %v1724 = vadd.f32 0.0, %v1723
  %v1725 = vpop.f32.mrf.mxu0
  %v1726 = vadd.f32 0.0, %v1725
  %1727 = vmatmul.bf16.gmra.mxu0 %v1493
  %v1728 = vpop.f32.mrf.mxu0
  %v1729 = vadd.f32 0.0, %v1728
  %v1730 = vpop.f32.mrf.mxu0
  %v1731 = vadd.f32 0.0, %v1730
  %1732 = vmatmul.bf16.gmra.mxu0 %v1496
  %v1733 = vpop.f32.mrf.mxu0
  %v1734 = vadd.f32 0.0, %v1733
  %v1735 = vpop.f32.mrf.mxu0
  %v1736 = vadd.f32 0.0, %v1735
  %1737 = vmatmul.bf16.gmra.mxu0 %v1499
  %v1738 = vpop.f32.mrf.mxu0
  %v1739 = vadd.f32 0.0, %v1738
  %v1740 = vpop.f32.mrf.mxu0
  %v1741 = vadd.f32 0.0, %v1740
  %1742 = vmatmul.bf16.gmra.mxu0 %v1502
  %v1743 = vpop.f32.mrf.mxu0
  %v1744 = vadd.f32 0.0, %v1743
  %v1745 = vpop.f32.mrf.mxu0
  %v1746 = vadd.f32 0.0, %v1745
  %1747 = vmatmul.bf16.gmra.mxu0 %v1505
  %v1748 = vpop.f32.mrf.mxu0
  %v1749 = vadd.f32 0.0, %v1748
  %v1750 = vpop.f32.mrf.mxu0
  %v1751 = vadd.f32 0.0, %v1750
  %1752 = vmatmul.bf16.gmra.mxu0 %v1508
  %v1753 = vpop.f32.mrf.mxu0
  %v1754 = vadd.f32 0.0, %v1753
  %v1755 = vpop.f32.mrf.mxu0
  %v1756 = vadd.f32 0.0, %v1755
  %1757 = vmatmul.bf16.gmra.mxu0 %v1511
  %v1758 = vpop.f32.mrf.mxu0
  %v1759 = vadd.f32 0.0, %v1758
  %v1760 = vpop.f32.mrf.mxu0
  %v1761 = vadd.f32 0.0, %v1760
  %1762 = vmatmul.bf16.gmra.mxu0 %v1514
  %v1763 = vpop.f32.mrf.mxu0
  %v1764 = vadd.f32 0.0, %v1763
  %v1765 = vpop.f32.mrf.mxu0
  %v1766 = vadd.f32 0.0, %v1765
  %1767 = vmatmul.bf16.gmra.mxu0 %v1517
  %v1768 = vpop.f32.mrf.mxu0
  %v1769 = vadd.f32 0.0, %v1768
  %v1770 = vpop.f32.mrf.mxu0
  %v1771 = vadd.f32 0.0, %v1770
  %1772 = vmatmul.bf16.gmra.mxu0 %v1520
  %v1773 = vpop.f32.mrf.mxu0
  %v1774 = vadd.f32 0.0, %v1773
  %v1775 = vpop.f32.mrf.mxu0
  %v1776 = vadd.f32 0.0, %v1775
  %1777 = vmatmul.bf16.gmra.mxu0 %v1523
  %v1778 = vpop.f32.mrf.mxu0
  %v1779 = vadd.f32 0.0, %v1778
  %v1780 = vpop.f32.mrf.mxu0
  %v1781 = vadd.f32 0.0, %v1780
  %1782 = vmatmul.bf16.gmra.mxu0 %v1526
  %v1783 = vpop.f32.mrf.mxu0
  %v1784 = vadd.f32 0.0, %v1783
  %v1785 = vpop.f32.mrf.mxu0
  %1786 = vdwg.mxu0
  %1787 = vmatpush.bf16.msra.mxu0 %v615
  %1788 = vmatpush.bf16.msra.mxu0 %v614
  %1789 = vmatpush.bf16.msra.mxu0 %v613
  %1790 = vmatpush.bf16.msra.mxu0 %v612
  %1791 = vmatpush.bf16.msra.mxu0 %v611
  %1792 = vmatpush.bf16.msra.mxu0 %v610
  %1793 = vmatpush.bf16.msra.mxu0 %v609
  %1794 = vmatpush.bf16.msra.mxu0 %v608
  %1795 = vmatmul.bf16.gmra.mxu0 %v1455
  %v1796 = vpop.f32.mrf.mxu0
  %v1797 = vadd.f32 %v1664, %v1796
  %v1798 = vpop.f32.mrf.mxu0
  %v1799 = vadd.f32 %v1666, %v1798
  %1800 = vmatmul.bf16.gmra.mxu0 %v1458
  %v1801 = vpop.f32.mrf.mxu0
  %v1802 = vadd.f32 %v1669, %v1801
  %v1803 = vpop.f32.mrf.mxu0
  %v1804 = vadd.f32 %v1671, %v1803
  %1805 = vmatmul.bf16.gmra.mxu0 %v1461
  %v1806 = vpop.f32.mrf.mxu0
  %v1807 = vadd.f32 %v1674, %v1806
  %v1808 = vpop.f32.mrf.mxu0
  %v1809 = vadd.f32 %v1676, %v1808
  %1810 = vmatmul.bf16.gmra.mxu0 %v1464
  %v1811 = vpop.f32.mrf.mxu0
  %v1812 = vadd.f32 %v1679, %v1811
  %v1813 = vpop.f32.mrf.mxu0
  %v1814 = vadd.f32 %v1681, %v1813
  %1815 = vmatmul.bf16.gmra.mxu0 %v1467
  %v1816 = vpop.f32.mrf.mxu0
  %v1817 = vadd.f32 %v1684, %v1816
  %v1818 = vpop.f32.mrf.mxu0
  %v1819 = vadd.f32 %v1686, %v1818
  %1820 = vmatmul.bf16.gmra.mxu0 %v1470
  %v1821 = vpop.f32.mrf.mxu0
  %v1822 = vadd.f32 %v1689, %v1821
  %v1823 = vpop.f32.mrf.mxu0
  %v1824 = vadd.f32 %v1691, %v1823
  %1825 = vmatmul.bf16.gmra.mxu0 %v1473
  %v1826 = vpop.f32.mrf.mxu0
  %v1827 = vadd.f32 %v1694, %v1826
  %v1828 = vpop.f32.mrf.mxu0
  %v1829 = vadd.f32 %v1696, %v1828
  %1830 = vmatmul.bf16.gmra.mxu0 %v1476
  %v1831 = vpop.f32.mrf.mxu0
  %v1832 = vadd.f32 %v1699, %v1831
  %v1833 = vpop.f32.mrf.mxu0
  %v1834 = vadd.f32 %v1701, %v1833
  %1835 = vmatmul.bf16.gmra.mxu0 %v1479
  %v1836 = vpop.f32.mrf.mxu0
  %v1837 = vadd.f32 %v1704, %v1836
  %v1838 = vpop.f32.mrf.mxu0
  %v1839 = vadd.f32 %v1706, %v1838
  %1840 = vmatmul.bf16.gmra.mxu0 %v1482
  %v1841 = vpop.f32.mrf.mxu0
  %v1842 = vadd.f32 %v1709, %v1841
  %v1843 = vpop.f32.mrf.mxu0
  %v1844 = vadd.f32 %v1711, %v1843
  %1845 = vmatmul.bf16.gmra.mxu0 %v1485
  %v1846 = vpop.f32.mrf.mxu0
  %v1847 = vadd.f32 %v1714, %v1846
  %v1848 = vpop.f32.mrf.mxu0
  %v1849 = vadd.f32 %v1716, %v1848
  %1850 = vmatmul.bf16.gmra.mxu0 %v1488
  %v1851 = vpop.f32.mrf.mxu0
  %v1852 = vadd.f32 %v1719, %v1851
  %v1853 = vpop.f32.mrf.mxu0
  %v1854 = vadd.f32 %v1721, %v1853
  %1855 = vmatmul.bf16.gmra.mxu0 %v1491
  %v1856 = vpop.f32.mrf.mxu0
  %v1857 = vadd.f32 %v1724, %v1856
  %v1858 = vpop.f32.mrf.mxu0
  %v1859 = vadd.f32 %v1726, %v1858
  %1860 = vmatmul.bf16.gmra.mxu0 %v1494
  %v1861 = vpop.f32.mrf.mxu0
  %v1862 = vadd.f32 %v1729, %v1861
  %v1863 = vpop.f32.mrf.mxu0
  %v1864 = vadd.f32 %v1731, %v1863
  %1865 = vmatmul.bf16.gmra.mxu0 %v1497
  %v1866 = vpop.f32.mrf.mxu0
  %v1867 = vadd.f32 %v1734, %v1866
  %v1868 = vpop.f32.mrf.mxu0
  %v1869 = vadd.f32 %v1736, %v1868
  %1870 = vmatmul.bf16.gmra.mxu0 %v1500
  %v1871 = vpop.f32.mrf.mxu0
  %v1872 = vadd.f32 %v1739, %v1871
  %v1873 = vpop.f32.mrf.mxu0
  %v1874 = vadd.f32 %v1741, %v1873
  %1875 = vmatmul.bf16.gmra.mxu0 %v1503
  %v1876 = vpop.f32.mrf.mxu0
  %v1877 = vadd.f32 %v1744, %v1876
  %v1878 = vpop.f32.mrf.mxu0
  %v1879 = vadd.f32 %v1746, %v1878
  %1880 = vmatmul.bf16.gmra.mxu0 %v1506
  %v1881 = vpop.f32.mrf.mxu0
  %v1882 = vadd.f32 %v1749, %v1881
  %v1883 = vpop.f32.mrf.mxu0
  %v1884 = vadd.f32 %v1751, %v1883
  %1885 = vmatmul.bf16.gmra.mxu0 %v1509
  %v1886 = vpop.f32.mrf.mxu0
  %v1887 = vadd.f32 %v1754, %v1886
  %v1888 = vpop.f32.mrf.mxu0
  %v1889 = vadd.f32 %v1756, %v1888
  %1890 = vmatmul.bf16.gmra.mxu0 %v1512
  %v1891 = vpop.f32.mrf.mxu0
  %v1892 = vadd.f32 %v1759, %v1891
  %v1893 = vpop.f32.mrf.mxu0
  %v1894 = vadd.f32 %v1761, %v1893
  %1895 = vmatmul.bf16.gmra.mxu0 %v1515
  %v1896 = vpop.f32.mrf.mxu0
  %v1897 = vadd.f32 %v1764, %v1896
  %v1898 = vpop.f32.mrf.mxu0
  %v1899 = vadd.f32 %v1766, %v1898
  %1900 = vmatmul.bf16.gmra.mxu0 %v1518
  %v1901 = vpop.f32.mrf.mxu0
  %v1902 = vadd.f32 %v1769, %v1901
  %v1903 = vpop.f32.mrf.mxu0
  %v1904 = vadd.f32 %v1771, %v1903
  %1905 = vmatmul.bf16.gmra.mxu0 %v1521
  %v1906 = vpop.f32.mrf.mxu0
  %v1907 = vadd.f32 %v1774, %v1906
  %v1908 = vpop.f32.mrf.mxu0
  %v1909 = vadd.f32 %v1776, %v1908
  %1910 = vmatmul.bf16.gmra.mxu0 %v1524
  %v1911 = vpop.f32.mrf.mxu0
  %v1912 = vadd.f32 %v1779, %v1911
  %v1913 = vpop.f32.mrf.mxu0
  %v1914 = vadd.f32 %v1781, %v1913
  %1915 = vmatmul.bf16.gmra.mxu0 %v1527
  %v1916 = vpop.f32.mrf.mxu0
  %v1917 = vadd.f32 %v1784, %v1916
  %v1918 = vpop.f32.mrf.mxu0
  %1919 = vdwg.mxu0
  %1920 = vmatpush.bf16.msra.mxu0 0
  %1921 = vmatpush.bf16.msra.mxu0 0
  %1922 = vmatpush.bf16.msra.mxu0 0
  %1923 = vmatpush.bf16.msra.mxu0 0
  %1924 = vmatpush.bf16.msra.mxu0 0
  %1925 = vmatpush.bf16.msra.mxu0 0
  %1926 = vmatpush.bf16.msra.mxu0 %v617
  %1927 = vmatpush.bf16.msra.mxu0 %v616
  %1928 = vmatmul.bf16.gmra.mxu0 %v1580
  %v1929 = vpop.f32.mrf.mxu0
  %v1930 = vadd.f32 %v1797, %v1929
  %v1931 = vpop.f32.mrf.mxu0
  %v1932 = vadd.f32 %v1799, %v1931
  %1933 = vmatmul.bf16.gmra.mxu0 %v1583
  %v1934 = vpop.f32.mrf.mxu0
  %v1935 = vadd.f32 %v1802, %v1934
  %v1936 = vpop.f32.mrf.mxu0
  %v1937 = vadd.f32 %v1804, %v1936
  %1938 = vmatmul.bf16.gmra.mxu0 %v1586
  %v1939 = vpop.f32.mrf.mxu0
  %v1940 = vadd.f32 %v1807, %v1939
  %v1941 = vpop.f32.mrf.mxu0
  %v1942 = vadd.f32 %v1809, %v1941
  %1943 = vmatmul.bf16.gmra.mxu0 %v1589
  %v1944 = vpop.f32.mrf.mxu0
  %v1945 = vadd.f32 %v1812, %v1944
  %v1946 = vpop.f32.mrf.mxu0
  %v1947 = vadd.f32 %v1814, %v1946
  %1948 = vmatmul.bf16.gmra.mxu0 %v1592
  %v1949 = vpop.f32.mrf.mxu0
  %v1950 = vadd.f32 %v1817, %v1949
  %v1951 = vpop.f32.mrf.mxu0
  %v1952 = vadd.f32 %v1819, %v1951
  %1953 = vmatmul.bf16.gmra.mxu0 %v1595
  %v1954 = vpop.f32.mrf.mxu0
  %v1955 = vadd.f32 %v1822, %v1954
  %v1956 = vpop.f32.mrf.mxu0
  %v1957 = vadd.f32 %v1824, %v1956
  %1958 = vmatmul.bf16.gmra.mxu0 %v1598
  %v1959 = vpop.f32.mrf.mxu0
  %v1960 = vadd.f32 %v1827, %v1959
  %v1961 = vpop.f32.mrf.mxu0
  %v1962 = vadd.f32 %v1829, %v1961
  %1963 = vmatmul.bf16.gmra.mxu0 %v1601
  %v1964 = vpop.f32.mrf.mxu0
  %v1965 = vadd.f32 %v1832, %v1964
  %v1966 = vpop.f32.mrf.mxu0
  %v1967 = vadd.f32 %v1834, %v1966
  %1968 = vmatmul.bf16.gmra.mxu0 %v1604
  %v1969 = vpop.f32.mrf.mxu0
  %v1970 = vadd.f32 %v1837, %v1969
  %v1971 = vpop.f32.mrf.mxu0
  %v1972 = vadd.f32 %v1839, %v1971
  %1973 = vmatmul.bf16.gmra.mxu0 %v1607
  %v1974 = vpop.f32.mrf.mxu0
  %v1975 = vadd.f32 %v1842, %v1974
  %v1976 = vpop.f32.mrf.mxu0
  %v1977 = vadd.f32 %v1844, %v1976
  %1978 = vmatmul.bf16.gmra.mxu0 %v1610
  %v1979 = vpop.f32.mrf.mxu0
  %v1980 = vadd.f32 %v1847, %v1979
  %v1981 = vpop.f32.mrf.mxu0
  %v1982 = vadd.f32 %v1849, %v1981
  %1983 = vmatmul.bf16.gmra.mxu0 %v1613
  %v1984 = vpop.f32.mrf.mxu0
  %v1985 = vadd.f32 %v1852, %v1984
  %v1986 = vpop.f32.mrf.mxu0
  %v1987 = vadd.f32 %v1854, %v1986
  %1988 = vmatmul.bf16.gmra.mxu0 %v1616
  %v1989 = vpop.f32.mrf.mxu0
  %v1990 = vadd.f32 %v1857, %v1989
  %v1991 = vpop.f32.mrf.mxu0
  %v1992 = vadd.f32 %v1859, %v1991
  %1993 = vmatmul.bf16.gmra.mxu0 %v1619
  %v1994 = vpop.f32.mrf.mxu0
  %v1995 = vadd.f32 %v1862, %v1994
  %v1996 = vpop.f32.mrf.mxu0
  %v1997 = vadd.f32 %v1864, %v1996
  %1998 = vmatmul.bf16.gmra.mxu0 %v1622
  %v1999 = vpop.f32.mrf.mxu0
  %v2000 = vadd.f32 %v1867, %v1999
  %v2001 = vpop.f32.mrf.mxu0
  %v2002 = vadd.f32 %v1869, %v2001
  %2003 = vmatmul.bf16.gmra.mxu0 %v1625
  %v2004 = vpop.f32.mrf.mxu0
  %v2005 = vadd.f32 %v1872, %v2004
  %v2006 = vpop.f32.mrf.mxu0
  %v2007 = vadd.f32 %v1874, %v2006
  %2008 = vmatmul.bf16.gmra.mxu0 %v1628
  %v2009 = vpop.f32.mrf.mxu0
  %v2010 = vadd.f32 %v1877, %v2009
  %v2011 = vpop.f32.mrf.mxu0
  %v2012 = vadd.f32 %v1879, %v2011
  %2013 = vmatmul.bf16.gmra.mxu0 %v1631
  %v2014 = vpop.f32.mrf.mxu0
  %v2015 = vadd.f32 %v1882, %v2014
  %v2016 = vpop.f32.mrf.mxu0
  %v2017 = vadd.f32 %v1884, %v2016
  %2018 = vmatmul.bf16.gmra.mxu0 %v1634
  %v2019 = vpop.f32.mrf.mxu0
  %v2020 = vadd.f32 %v1887, %v2019
  %v2021 = vpop.f32.mrf.mxu0
  %v2022 = vadd.f32 %v1889, %v2021
  %2023 = vmatmul.bf16.gmra.mxu0 %v1637
  %v2024 = vpop.f32.mrf.mxu0
  %v2025 = vadd.f32 %v1892, %v2024
  %v2026 = vpop.f32.mrf.mxu0
  %v2027 = vadd.f32 %v1894, %v2026
  %2028 = vmatmul.bf16.gmra.mxu0 %v1640
  %v2029 = vpop.f32.mrf.mxu0
  %v2030 = vadd.f32 %v1897, %v2029
  %v2031 = vpop.f32.mrf.mxu0
  %v2032 = vadd.f32 %v1899, %v2031
  %2033 = vmatmul.bf16.gmra.mxu0 %v1643
  %v2034 = vpop.f32.mrf.mxu0
  %v2035 = vadd.f32 %v1902, %v2034
  %v2036 = vpop.f32.mrf.mxu0
  %v2037 = vadd.f32 %v1904, %v2036
  %2038 = vmatmul.bf16.gmra.mxu0 %v1646
  %v2039 = vpop.f32.mrf.mxu0
  %v2040 = vadd.f32 %v1907, %v2039
  %v2041 = vpop.f32.mrf.mxu0
  %v2042 = vadd.f32 %v1909, %v2041
  %2043 = vmatmul.bf16.gmra.mxu0 %v1649
  %v2044 = vpop.f32.mrf.mxu0
  %v2045 = vadd.f32 %v1912, %v2044
  %v2046 = vpop.f32.mrf.mxu0
  %v2047 = vadd.f32 %v1914, %v2046
  %2048 = vmatmul.bf16.gmra.mxu0 %v1652
  %v2049 = vpop.f32.mrf.mxu0
  %v2050 = vadd.f32 %v1917, %v2049
  %v2051 = vpop.f32.mrf.mxu0
  %2052 = vdwg.mxu0
  %v2053 = vmax.f32 %v988, %v1930
  %v2054 = vmax.f32 %v990, %v1932
  %v2055 = vmax.f32 %v993, %v1935
  %v2056 = vmax.f32 %v995, %v1937
  %v2057 = vmax.f32 %v998, %v1940
  %v2058 = vmax.f32 %v1000, %v1942
  %v2059 = vmax.f32 %v1003, %v1945
  %v2060 = vmax.f32 %v1005, %v1947
  %v2061 = vmax.f32 %v1008, %v1950
  %v2062 = vmax.f32 %v1010, %v1952
  %v2063 = vmax.f32 %v1013, %v1955
  %v2064 = vmax.f32 %v1015, %v1957
  %v2065 = vmax.f32 %v1018, %v1960
  %v2066 = vmax.f32 %v1020, %v1962
  %v2067 = vmax.f32 %v1023, %v1965
  %v2068 = vmax.f32 %v1025, %v1967
  %v2069 = vmax.f32 %v1028, %v1970
  %v2070 = vmax.f32 %v1030, %v1972
  %v2071 = vmax.f32 %v1033, %v1975
  %v2072 = vmax.f32 %v1035, %v1977
  %v2073 = vmax.f32 %v1038, %v1980
  %v2074 = vmax.f32 %v1040, %v1982
  %v2075 = vmax.f32 %v1043, %v1985
  %v2076 = vmax.f32 %v1045, %v1987
  %v2077 = vmax.f32 %v1048, %v1990
  %v2078 = vmax.f32 %v1050, %v1992
  %v2079 = vmax.f32 %v1053, %v1995
  %v2080 = vmax.f32 %v1055, %v1997
  %v2081 = vmax.f32 %v1058, %v2000
  %v2082 = vmax.f32 %v1060, %v2002
  %v2083 = vmax.f32 %v1063, %v2005
  %v2084 = vmax.f32 %v1065, %v2007
  %v2085 = vmax.f32 %v1068, %v2010
  %v2086 = vmax.f32 %v1070, %v2012
  %v2087 = vmax.f32 %v1073, %v2015
  %v2088 = vmax.f32 %v1075, %v2017
  %v2089 = vmax.f32 %v1078, %v2020
  %v2090 = vmax.f32 %v1080, %v2022
  %v2091 = vmax.f32 %v1083, %v2025
  %v2092 = vmax.f32 %v1085, %v2027
  %v2093 = vmax.f32 %v1088, %v2030
  %v2094 = vmax.f32 %v1090, %v2032
  %v2095 = vmax.f32 %v1093, %v2035
  %v2096 = vmax.f32 %v1095, %v2037
  %v2097 = vmax.f32 %v1098, %v2040
  %v2098 = vmax.f32 %v1100, %v2042
  %v2099 = vmax.f32 %v1103, %v2045
  %v2100 = vmax.f32 %v1105, %v2047
  %v2101 = vmax.f32 %v1108, %v2050
  %v2102 = vld [vmem:[%s2] sm:$0xff]
  %v2103 = vld [vmem:[%s2 + $0x8] sm:$0xf]
  %v2104 = vld [vmem:[%s2 + $0xc] sm:$0xff]
  %v2105 = vld [vmem:[%s2 + $0x14] sm:$0xf]
  %v2106 = vld [vmem:[%s2 + $0x18] sm:$0xff]
  %v2107 = vld [vmem:[%s2 + $0x20] sm:$0xf]
  %v2108 = vld [vmem:[%s2 + $0x24] sm:$0xff]
  %v2109 = vld [vmem:[%s2 + $0x2c] sm:$0xf]
  %v2110 = vld [vmem:[%s2 + $0x30] sm:$0xff]
  %v2111 = vld [vmem:[%s2 + $0x38] sm:$0xf]
  %v2112 = vld [vmem:[%s2 + $0x3c] sm:$0xff]
  %v2113 = vld [vmem:[%s2 + $0x44] sm:$0xf]
  %v2114 = vld [vmem:[%s2 + $0x48] sm:$0xff]
  %v2115 = vld [vmem:[%s2 + $0x50] sm:$0xf]
  %v2116 = vld [vmem:[%s2 + $0x54] sm:$0xff]
  %v2117 = vld [vmem:[%s2 + $0x5c] sm:$0xf]
  %v2118 = vld [vmem:[%s2 + $0x60] sm:$0xff]
  %v2119 = vld [vmem:[%s2 + $0x68] sm:$0xf]
  %v2120 = vld [vmem:[%s2 + $0x6c] sm:$0xff]
  %v2121 = vld [vmem:[%s2 + $0x74] sm:$0xf]
  %v2122 = vld [vmem:[%s2 + $0x78] sm:$0xff]
  %v2123 = vld [vmem:[%s2 + $0x80] sm:$0xf]
  %v2124 = vld [vmem:[%s2 + $0x84] sm:$0xff]
  %v2125 = vld [vmem:[%s2 + $0x8c] sm:$0xf]
  %v2126 = vld [vmem:[%s2 + $0x90] sm:$0xff]
  %v2127 = vld [vmem:[%s2 + $0x98] sm:$0xf]
  %v2128 = vld [vmem:[%s2 + $0x9c] sm:$0xff]
  %v2129 = vld [vmem:[%s2 + $0xa4] sm:$0xf]
  %v2130 = vld [vmem:[%s2 + $0xa8] sm:$0xff]
  %v2131 = vld [vmem:[%s2 + $0xb0] sm:$0xf]
  %v2132 = vld [vmem:[%s2 + $0xb4] sm:$0xff]
  %v2133 = vld [vmem:[%s2 + $0xbc] sm:$0xf]
  %v2134 = vld [vmem:[%s2 + $0xc0] sm:$0xff]
  %v2135 = vld [vmem:[%s2 + $0xc8] sm:$0xf]
  %v2136 = vld [vmem:[%s2 + $0xcc] sm:$0xff]
  %v2137 = vld [vmem:[%s2 + $0xd4] sm:$0xf]
  %v2138 = vld [vmem:[%s2 + $0xd8] sm:$0xff]
  %v2139 = vld [vmem:[%s2 + $0xe0] sm:$0xf]
  %v2140 = vld [vmem:[%s2 + $0xe4] sm:$0xff]
  %v2141 = vld [vmem:[%s2 + $0xec] sm:$0xf]
  %v2142 = vld [vmem:[%s2 + $0xf0] sm:$0xff]
  %v2143 = vld [vmem:[%s2 + $0xf8] sm:$0xf]
  %v2144 = vld [vmem:[%s2 + $0xfc] sm:$0xff]
  %v2145 = vld [vmem:[%s2 + $0x104] sm:$0xf]
  %v2146 = vld [vmem:[%s2 + $0x108] sm:$0xff]
  %v2147 = vld [vmem:[%s2 + $0x110] sm:$0xf]
  %v2148 = vld [vmem:[%s2 + $0x114] sm:$0xff]
  %v2149 = vld [vmem:[%s2 + $0x11c] sm:$0xf]
  %v2150 = vld [vmem:[%s2 + $0x120] sm:$0xff]
  %v2151 = vld [vmem:[%s2 + $0x128] sm:$0xf]
  %v2152 = vld [vmem:[%s2 + $0x12c] sm:$0xff]
  %v2153 = vld [vmem:[%s2 + $0x134] sm:$0xf]
  %v2154 = vld [vmem:[%s2 + $0x138] sm:$0xff]
  %v2155 = vld [vmem:[%s2 + $0x140] sm:$0xf]
  %v2156 = vld [vmem:[%s2 + $0x144] sm:$0xff]
  %v2157 = vld [vmem:[%s2 + $0x14c] sm:$0xf]
  %v2158 = vld [vmem:[%s2 + $0x150] sm:$0xff]
  %v2159 = vld [vmem:[%s2 + $0x158] sm:$0xf]
  %v2160 = vld [vmem:[%s2 + $0x15c] sm:$0xff]
  %v2161 = vld [vmem:[%s2 + $0x164] sm:$0xf]
  %v2162 = vld [vmem:[%s2 + $0x168] sm:$0xff]
  %v2163 = vld [vmem:[%s2 + $0x170] sm:$0xf]
  %v2164 = vld [vmem:[%s2 + $0x174] sm:$0xff]
  %v2165 = vld [vmem:[%s2 + $0x17c] sm:$0xf]
  %v2166 = vld [vmem:[%s2 + $0x180] sm:$0xff]
  %v2167 = vld [vmem:[%s2 + $0x188] sm:$0xf]
  %v2168 = vld [vmem:[%s2 + $0x18c] sm:$0xff]
  %v2169 = vld [vmem:[%s2 + $0x194] sm:$0xf]
  %v2170 = vld [vmem:[%s2 + $0x198] sm:$0xff]
  %v2171 = vld [vmem:[%s2 + $0x1a0] sm:$0xf]
  %v2172 = vld [vmem:[%s2 + $0x1a4] sm:$0xff]
  %v2173 = vld [vmem:[%s2 + $0x1ac] sm:$0xf]
  %v2174 = vld [vmem:[%s2 + $0x1b0] sm:$0xff]
  %v2175 = vld [vmem:[%s2 + $0x1b8] sm:$0xf]
  %v2176 = vld [vmem:[%s2 + $0x1bc] sm:$0xff]
  %v2177 = vld [vmem:[%s2 + $0x1c4] sm:$0xf]
  %v2178 = vld [vmem:[%s2 + $0x1c8] sm:$0xff]
  %v2179 = vld [vmem:[%s2 + $0x1d0] sm:$0xf]
  %v2180 = vld [vmem:[%s2 + $0x1d4] sm:$0xff]
  %v2181 = vld [vmem:[%s2 + $0x1dc] sm:$0xf]
  %v2182 = vld [vmem:[%s2 + $0x1e0] sm:$0xff]
  %v2183 = vld [vmem:[%s2 + $0x1e8] sm:$0xf]
  %v2184 = vld [vmem:[%s2 + $0x1ec] sm:$0xff]
  %v2185 = vld [vmem:[%s2 + $0x1f4] sm:$0xf]
  %v2186 = vld [vmem:[%s2 + $0x1f8] sm:$0xff]
  %v2187 = vld [vmem:[%s2 + $0x200] sm:$0xf]
  %v2188 = vld [vmem:[%s2 + $0x204] sm:$0xff]
  %v2189 = vld [vmem:[%s2 + $0x20c] sm:$0xf]
  %v2190 = vld [vmem:[%s2 + $0x210] sm:$0xff]
  %v2191 = vld [vmem:[%s2 + $0x218] sm:$0xf]
  %v2192 = vld [vmem:[%s2 + $0x21c] sm:$0xff]
  %v2193 = vld [vmem:[%s2 + $0x224] sm:$0xf]
  %v2194 = vld [vmem:[%s2 + $0x228] sm:$0xff]
  %v2195 = vld [vmem:[%s2 + $0x230] sm:$0xf]
  %v2196 = vld [vmem:[%s2 + $0x234] sm:$0xff]
  %v2197 = vld [vmem:[%s2 + $0x23c] sm:$0xf]
  %v2198 = vld [vmem:[%s2 + $0x240] sm:$0xff]
  %v2199 = vld [vmem:[%s2 + $0x248] sm:$0xf]
  %v2298 = vunpack.c.l.b16 %v2102
  %v2299 = vunpack.c.h.b16 %v2102
  %v2300 = vunpack.c.l.b16 %v2103
  %v2301 = vunpack.c.l.b16 %v2104
  %v2302 = vunpack.c.h.b16 %v2104
  %v2303 = vunpack.c.l.b16 %v2105
  %v2304 = vunpack.c.l.b16 %v2106
  %v2305 = vunpack.c.h.b16 %v2106
  %v2306 = vunpack.c.l.b16 %v2107
  %v2307 = vunpack.c.l.b16 %v2108
  %v2308 = vunpack.c.h.b16 %v2108
  %v2309 = vunpack.c.l.b16 %v2109
  %v2310 = vunpack.c.l.b16 %v2110
  %v2311 = vunpack.c.h.b16 %v2110
  %v2312 = vunpack.c.l.b16 %v2111
  %v2313 = vunpack.c.l.b16 %v2112
  %v2314 = vunpack.c.h.b16 %v2112
  %v2315 = vunpack.c.l.b16 %v2113
  %v2316 = vunpack.c.l.b16 %v2114
  %v2317 = vunpack.c.h.b16 %v2114
  %v2318 = vunpack.c.l.b16 %v2115
  %v2319 = vunpack.c.l.b16 %v2116
  %v2320 = vunpack.c.h.b16 %v2116
  %v2321 = vunpack.c.l.b16 %v2117
  %v2322 = vunpack.c.l.b16 %v2118
  %v2323 = vunpack.c.h.b16 %v2118
  %v2324 = vunpack.c.l.b16 %v2119
  %v2325 = vunpack.c.l.b16 %v2120
  %v2326 = vunpack.c.h.b16 %v2120
  %v2327 = vunpack.c.l.b16 %v2121
  %v2328 = vunpack.c.l.b16 %v2122
  %v2329 = vunpack.c.h.b16 %v2122
  %v2330 = vunpack.c.l.b16 %v2123
  %v2331 = vunpack.c.l.b16 %v2124
  %v2332 = vunpack.c.h.b16 %v2124
  %v2333 = vunpack.c.l.b16 %v2125
  %v2334 = vunpack.c.l.b16 %v2126
  %v2335 = vunpack.c.h.b16 %v2126
  %v2336 = vunpack.c.l.b16 %v2127
  %v2337 = vunpack.c.l.b16 %v2128
  %v2338 = vunpack.c.h.b16 %v2128
  %v2339 = vunpack.c.l.b16 %v2129
  %v2340 = vunpack.c.l.b16 %v2130
  %v2341 = vunpack.c.h.b16 %v2130
  %v2342 = vunpack.c.l.b16 %v2131
  %v2343 = vunpack.c.l.b16 %v2132
  %v2344 = vunpack.c.h.b16 %v2132
  %v2345 = vunpack.c.l.b16 %v2133
  %v2346 = vunpack.c.l.b16 %v2134
  %v2347 = vunpack.c.h.b16 %v2134
  %v2348 = vunpack.c.l.b16 %v2135
  %v2349 = vunpack.c.l.b16 %v2136
  %v2350 = vunpack.c.h.b16 %v2136
  %v2351 = vunpack.c.l.b16 %v2137
  %v2352 = vunpack.c.l.b16 %v2138
  %v2353 = vunpack.c.h.b16 %v2138
  %v2354 = vunpack.c.l.b16 %v2139
  %v2355 = vunpack.c.l.b16 %v2140
  %v2356 = vunpack.c.h.b16 %v2140
  %v2357 = vunpack.c.l.b16 %v2141
  %v2358 = vunpack.c.l.b16 %v2142
  %v2359 = vunpack.c.h.b16 %v2142
  %v2360 = vunpack.c.l.b16 %v2143
  %v2361 = vunpack.c.l.b16 %v2144
  %v2362 = vunpack.c.h.b16 %v2144
  %v2363 = vunpack.c.l.b16 %v2145
  %v2364 = vunpack.c.l.b16 %v2146
  %v2365 = vunpack.c.h.b16 %v2146
  %v2366 = vunpack.c.l.b16 %v2147
  %v2367 = vunpack.c.l.b16 %v2148
  %v2368 = vunpack.c.h.b16 %v2148
  %v2369 = vunpack.c.l.b16 %v2149
  %v2370 = vunpack.c.l.b16 %v2150
  %v2371 = vunpack.c.h.b16 %v2150
  %v2372 = vunpack.c.l.b16 %v2151
  %v2373 = vunpack.c.l.b16 %v2152
  %v2374 = vunpack.c.h.b16 %v2152
  %v2375 = vunpack.c.l.b16 %v2153
  %v2376 = vunpack.c.l.b16 %v2154
  %v2377 = vunpack.c.h.b16 %v2154
  %v2378 = vunpack.c.l.b16 %v2155
  %v2379 = vunpack.c.l.b16 %v2156
  %v2380 = vunpack.c.h.b16 %v2156
  %v2381 = vunpack.c.l.b16 %v2157
  %v2382 = vunpack.c.l.b16 %v2158
  %v2383 = vunpack.c.h.b16 %v2158
  %v2384 = vunpack.c.l.b16 %v2159
  %v2385 = vunpack.c.l.b16 %v2160
  %v2386 = vunpack.c.h.b16 %v2160
  %v2387 = vunpack.c.l.b16 %v2161
  %v2388 = vunpack.c.l.b16 %v2162
  %v2389 = vunpack.c.h.b16 %v2162
  %v2390 = vunpack.c.l.b16 %v2163
  %v2391 = vunpack.c.l.b16 %v2164
  %v2392 = vunpack.c.h.b16 %v2164
  %v2393 = vunpack.c.l.b16 %v2165
  %v2394 = vunpack.c.l.b16 %v2166
  %v2395 = vunpack.c.h.b16 %v2166
  %v2396 = vunpack.c.l.b16 %v2167
  %v2397 = vunpack.c.l.b16 %v2168
  %v2398 = vunpack.c.h.b16 %v2168
  %v2399 = vunpack.c.l.b16 %v2169
  %v2400 = vunpack.c.l.b16 %v2170
  %v2401 = vunpack.c.h.b16 %v2170
  %v2402 = vunpack.c.l.b16 %v2171
  %v2403 = vunpack.c.l.b16 %v2172
  %v2404 = vunpack.c.h.b16 %v2172
  %v2405 = vunpack.c.l.b16 %v2173
  %v2406 = vunpack.c.l.b16 %v2174
  %v2407 = vunpack.c.h.b16 %v2174
  %v2408 = vunpack.c.l.b16 %v2175
  %v2409 = vunpack.c.l.b16 %v2176
  %v2410 = vunpack.c.h.b16 %v2176
  %v2411 = vunpack.c.l.b16 %v2177
  %v2412 = vunpack.c.l.b16 %v2178
  %v2413 = vunpack.c.h.b16 %v2178
  %v2414 = vunpack.c.l.b16 %v2179
  %v2415 = vunpack.c.l.b16 %v2180
  %v2416 = vunpack.c.h.b16 %v2180
  %v2417 = vunpack.c.l.b16 %v2181
  %v2418 = vunpack.c.l.b16 %v2182
  %v2419 = vunpack.c.h.b16 %v2182
  %v2420 = vunpack.c.l.b16 %v2183
  %v2421 = vunpack.c.l.b16 %v2184
  %v2422 = vunpack.c.h.b16 %v2184
  %v2423 = vunpack.c.l.b16 %v2185
  %v2424 = vunpack.c.l.b16 %v2186
  %v2425 = vunpack.c.h.b16 %v2186
  %v2426 = vunpack.c.l.b16 %v2187
  %v2427 = vunpack.c.l.b16 %v2188
  %v2428 = vunpack.c.h.b16 %v2188
  %v2429 = vunpack.c.l.b16 %v2189
  %v2430 = vunpack.c.l.b16 %v2190
  %v2431 = vunpack.c.h.b16 %v2190
  %v2432 = vunpack.c.l.b16 %v2191
  %v2433 = vunpack.c.l.b16 %v2192
  %v2434 = vunpack.c.h.b16 %v2192
  %v2435 = vunpack.c.l.b16 %v2193
  %v2436 = vunpack.c.l.b16 %v2194
  %v2437 = vunpack.c.h.b16 %v2194
  %v2438 = vunpack.c.l.b16 %v2195
  %v2439 = vunpack.c.l.b16 %v2196
  %v2440 = vunpack.c.h.b16 %v2196
  %v2441 = vunpack.c.l.b16 %v2197
  %v2442 = vunpack.c.l.b16 %v2198
  %v2443 = vunpack.c.h.b16 %v2198
  %v2444 = vunpack.c.l.b16 %v2199
  %v2445 = vpack.c.b16 %v2301, %v2298
  %v2446 = vpack.c.b16 %v2302, %v2299
  %v2447 = vpack.c.b16 %v2303, %v2300
  %v2448 = vpack.c.b16 %v2307, %v2304
  %v2449 = vpack.c.b16 %v2308, %v2305
  %v2450 = vpack.c.b16 %v2309, %v2306
  %v2451 = vpack.c.b16 %v2313, %v2310
  %v2452 = vpack.c.b16 %v2314, %v2311
  %v2453 = vpack.c.b16 %v2315, %v2312
  %v2454 = vpack.c.b16 %v2319, %v2316
  %v2455 = vpack.c.b16 %v2320, %v2317
  %v2456 = vpack.c.b16 %v2321, %v2318
  %v2457 = vpack.c.b16 %v2325, %v2322
  %v2458 = vpack.c.b16 %v2326, %v2323
  %v2459 = vpack.c.b16 %v2327, %v2324
  %v2460 = vpack.c.b16 %v2331, %v2328
  %v2461 = vpack.c.b16 %v2332, %v2329
  %v2462 = vpack.c.b16 %v2333, %v2330
  %v2463 = vpack.c.b16 %v2337, %v2334
  %v2464 = vpack.c.b16 %v2338, %v2335
  %v2465 = vpack.c.b16 %v2339, %v2336
  %v2466 = vpack.c.b16 %v2343, %v2340
  %v2467 = vpack.c.b16 %v2344, %v2341
  %v2468 = vpack.c.b16 %v2345, %v2342
  %v2469 = vpack.c.b16 %v2349, %v2346
  %v2470 = vpack.c.b16 %v2350, %v2347
  %v2471 = vpack.c.b16 %v2351, %v2348
  %v2472 = vpack.c.b16 %v2355, %v2352
  %v2473 = vpack.c.b16 %v2356, %v2353
  %v2474 = vpack.c.b16 %v2357, %v2354
  %v2475 = vpack.c.b16 %v2361, %v2358
  %v2476 = vpack.c.b16 %v2362, %v2359
  %v2477 = vpack.c.b16 %v2363, %v2360
  %v2478 = vpack.c.b16 %v2367, %v2364
  %v2479 = vpack.c.b16 %v2368, %v2365
  %v2480 = vpack.c.b16 %v2369, %v2366
  %v2481 = vpack.c.b16 %v2373, %v2370
  %v2482 = vpack.c.b16 %v2374, %v2371
  %v2483 = vpack.c.b16 %v2375, %v2372
  %v2484 = vpack.c.b16 %v2379, %v2376
  %v2485 = vpack.c.b16 %v2380, %v2377
  %v2486 = vpack.c.b16 %v2381, %v2378
  %v2487 = vpack.c.b16 %v2385, %v2382
  %v2488 = vpack.c.b16 %v2386, %v2383
  %v2489 = vpack.c.b16 %v2387, %v2384
  %v2490 = vpack.c.b16 %v2391, %v2388
  %v2491 = vpack.c.b16 %v2392, %v2389
  %v2492 = vpack.c.b16 %v2393, %v2390
  %v2493 = vpack.c.b16 %v2397, %v2394
  %v2494 = vpack.c.b16 %v2398, %v2395
  %v2495 = vpack.c.b16 %v2399, %v2396
  %v2496 = vpack.c.b16 %v2403, %v2400
  %v2497 = vpack.c.b16 %v2404, %v2401
  %v2498 = vpack.c.b16 %v2405, %v2402
  %v2499 = vpack.c.b16 %v2409, %v2406
  %v2500 = vpack.c.b16 %v2410, %v2407
  %v2501 = vpack.c.b16 %v2411, %v2408
  %v2502 = vpack.c.b16 %v2415, %v2412
  %v2503 = vpack.c.b16 %v2416, %v2413
  %v2504 = vpack.c.b16 %v2417, %v2414
  %v2505 = vpack.c.b16 %v2421, %v2418
  %v2506 = vpack.c.b16 %v2422, %v2419
  %v2507 = vpack.c.b16 %v2423, %v2420
  %v2508 = vpack.c.b16 %v2427, %v2424
  %v2509 = vpack.c.b16 %v2428, %v2425
  %v2510 = vpack.c.b16 %v2429, %v2426
  %v2511 = vpack.c.b16 %v2433, %v2430
  %v2512 = vpack.c.b16 %v2434, %v2431
  %v2513 = vpack.c.b16 %v2435, %v2432
  %v2514 = vpack.c.b16 %v2439, %v2436
  %v2515 = vpack.c.b16 %v2440, %v2437
  %v2516 = vpack.c.b16 %v2441, %v2438
  %v2517 = vpack.c.b16 %v2442, %v2442
  %v2518 = vpack.c.b16 %v2443, %v2443
  %v2519 = vpack.c.b16 %v2444, %v2444
  %v2571 = vsel %vm636, %v2447, 0
  %v2574 = vsel %vm636, %v2450, 0
  %v2577 = vsel %vm636, %v2453, 0
  %v2580 = vsel %vm636, %v2456, 0
  %v2583 = vsel %vm636, %v2459, 0
  %v2586 = vsel %vm636, %v2462, 0
  %v2589 = vsel %vm636, %v2465, 0
  %v2592 = vsel %vm636, %v2468, 0
  %v2595 = vsel %vm636, %v2471, 0
  %v2598 = vsel %vm636, %v2474, 0
  %v2601 = vsel %vm636, %v2477, 0
  %v2604 = vsel %vm636, %v2480, 0
  %v2607 = vsel %vm636, %v2483, 0
  %v2610 = vsel %vm636, %v2486, 0
  %v2613 = vsel %vm636, %v2489, 0
  %v2616 = vsel %vm636, %v2492, 0
  %v2619 = vsel %vm636, %v2495, 0
  %v2622 = vsel %vm636, %v2498, 0
  %v2625 = vsel %vm636, %v2501, 0
  %v2628 = vsel %vm636, %v2504, 0
  %v2631 = vsel %vm636, %v2507, 0
  %v2634 = vsel %vm636, %v2510, 0
  %v2637 = vsel %vm636, %v2513, 0
  %v2640 = vsel %vm636, %v2516, 0
  %v2643 = vsel %vm636, %v2519, 0
  %2645 = vmatpush.bf16.msra.mxu0 %v607
  %2646 = vmatpush.bf16.msra.mxu0 %v606
  %2647 = vmatpush.bf16.msra.mxu0 %v605
  %2648 = vmatpush.bf16.msra.mxu0 %v604
  %2649 = vmatpush.bf16.msra.mxu0 %v603
  %2650 = vmatpush.bf16.msra.mxu0 %v602
  %2651 = vmatpush.bf16.msra.mxu0 %v601
  %2652 = vmatpush.bf16.msra.mxu0 %v600
  %2653 = vmatmul.bf16.gmra.mxu0 %v2445
  %v2654 = vpop.f32.mrf.mxu0
  %v2655 = vadd.f32 0.0, %v2654
  %v2656 = vpop.f32.mrf.mxu0
  %v2657 = vadd.f32 0.0, %v2656
  %2658 = vmatmul.bf16.gmra.mxu0 %v2448
  %v2659 = vpop.f32.mrf.mxu0
  %v2660 = vadd.f32 0.0, %v2659
  %v2661 = vpop.f32.mrf.mxu0
  %v2662 = vadd.f32 0.0, %v2661
  %2663 = vmatmul.bf16.gmra.mxu0 %v2451
  %v2664 = vpop.f32.mrf.mxu0
  %v2665 = vadd.f32 0.0, %v2664
  %v2666 = vpop.f32.mrf.mxu0
  %v2667 = vadd.f32 0.0, %v2666
  %2668 = vmatmul.bf16.gmra.mxu0 %v2454
  %v2669 = vpop.f32.mrf.mxu0
  %v2670 = vadd.f32 0.0, %v2669
  %v2671 = vpop.f32.mrf.mxu0
  %v2672 = vadd.f32 0.0, %v2671
  %2673 = vmatmul.bf16.gmra.mxu0 %v2457
  %v2674 = vpop.f32.mrf.mxu0
  %v2675 = vadd.f32 0.0, %v2674
  %v2676 = vpop.f32.mrf.mxu0
  %v2677 = vadd.f32 0.0, %v2676
  %2678 = vmatmul.bf16.gmra.mxu0 %v2460
  %v2679 = vpop.f32.mrf.mxu0
  %v2680 = vadd.f32 0.0, %v2679
  %v2681 = vpop.f32.mrf.mxu0
  %v2682 = vadd.f32 0.0, %v2681
  %2683 = vmatmul.bf16.gmra.mxu0 %v2463
  %v2684 = vpop.f32.mrf.mxu0
  %v2685 = vadd.f32 0.0, %v2684
  %v2686 = vpop.f32.mrf.mxu0
  %v2687 = vadd.f32 0.0, %v2686
  %2688 = vmatmul.bf16.gmra.mxu0 %v2466
  %v2689 = vpop.f32.mrf.mxu0
  %v2690 = vadd.f32 0.0, %v2689
  %v2691 = vpop.f32.mrf.mxu0
  %v2692 = vadd.f32 0.0, %v2691
  %2693 = vmatmul.bf16.gmra.mxu0 %v2469
  %v2694 = vpop.f32.mrf.mxu0
  %v2695 = vadd.f32 0.0, %v2694
  %v2696 = vpop.f32.mrf.mxu0
  %v2697 = vadd.f32 0.0, %v2696
  %2698 = vmatmul.bf16.gmra.mxu0 %v2472
  %v2699 = vpop.f32.mrf.mxu0
  %v2700 = vadd.f32 0.0, %v2699
  %v2701 = vpop.f32.mrf.mxu0
  %v2702 = vadd.f32 0.0, %v2701
  %2703 = vmatmul.bf16.gmra.mxu0 %v2475
  %v2704 = vpop.f32.mrf.mxu0
  %v2705 = vadd.f32 0.0, %v2704
  %v2706 = vpop.f32.mrf.mxu0
  %v2707 = vadd.f32 0.0, %v2706
  %2708 = vmatmul.bf16.gmra.mxu0 %v2478
  %v2709 = vpop.f32.mrf.mxu0
  %v2710 = vadd.f32 0.0, %v2709
  %v2711 = vpop.f32.mrf.mxu0
  %v2712 = vadd.f32 0.0, %v2711
  %2713 = vmatmul.bf16.gmra.mxu0 %v2481
  %v2714 = vpop.f32.mrf.mxu0
  %v2715 = vadd.f32 0.0, %v2714
  %v2716 = vpop.f32.mrf.mxu0
  %v2717 = vadd.f32 0.0, %v2716
  %2718 = vmatmul.bf16.gmra.mxu0 %v2484
  %v2719 = vpop.f32.mrf.mxu0
  %v2720 = vadd.f32 0.0, %v2719
  %v2721 = vpop.f32.mrf.mxu0
  %v2722 = vadd.f32 0.0, %v2721
  %2723 = vmatmul.bf16.gmra.mxu0 %v2487
  %v2724 = vpop.f32.mrf.mxu0
  %v2725 = vadd.f32 0.0, %v2724
  %v2726 = vpop.f32.mrf.mxu0
  %v2727 = vadd.f32 0.0, %v2726
  %2728 = vmatmul.bf16.gmra.mxu0 %v2490
  %v2729 = vpop.f32.mrf.mxu0
  %v2730 = vadd.f32 0.0, %v2729
  %v2731 = vpop.f32.mrf.mxu0
  %v2732 = vadd.f32 0.0, %v2731
  %2733 = vmatmul.bf16.gmra.mxu0 %v2493
  %v2734 = vpop.f32.mrf.mxu0
  %v2735 = vadd.f32 0.0, %v2734
  %v2736 = vpop.f32.mrf.mxu0
  %v2737 = vadd.f32 0.0, %v2736
  %2738 = vmatmul.bf16.gmra.mxu0 %v2496
  %v2739 = vpop.f32.mrf.mxu0
  %v2740 = vadd.f32 0.0, %v2739
  %v2741 = vpop.f32.mrf.mxu0
  %v2742 = vadd.f32 0.0, %v2741
  %2743 = vmatmul.bf16.gmra.mxu0 %v2499
  %v2744 = vpop.f32.mrf.mxu0
  %v2745 = vadd.f32 0.0, %v2744
  %v2746 = vpop.f32.mrf.mxu0
  %v2747 = vadd.f32 0.0, %v2746
  %2748 = vmatmul.bf16.gmra.mxu0 %v2502
  %v2749 = vpop.f32.mrf.mxu0
  %v2750 = vadd.f32 0.0, %v2749
  %v2751 = vpop.f32.mrf.mxu0
  %v2752 = vadd.f32 0.0, %v2751
  %2753 = vmatmul.bf16.gmra.mxu0 %v2505
  %v2754 = vpop.f32.mrf.mxu0
  %v2755 = vadd.f32 0.0, %v2754
  %v2756 = vpop.f32.mrf.mxu0
  %v2757 = vadd.f32 0.0, %v2756
  %2758 = vmatmul.bf16.gmra.mxu0 %v2508
  %v2759 = vpop.f32.mrf.mxu0
  %v2760 = vadd.f32 0.0, %v2759
  %v2761 = vpop.f32.mrf.mxu0
  %v2762 = vadd.f32 0.0, %v2761
  %2763 = vmatmul.bf16.gmra.mxu0 %v2511
  %v2764 = vpop.f32.mrf.mxu0
  %v2765 = vadd.f32 0.0, %v2764
  %v2766 = vpop.f32.mrf.mxu0
  %v2767 = vadd.f32 0.0, %v2766
  %2768 = vmatmul.bf16.gmra.mxu0 %v2514
  %v2769 = vpop.f32.mrf.mxu0
  %v2770 = vadd.f32 0.0, %v2769
  %v2771 = vpop.f32.mrf.mxu0
  %v2772 = vadd.f32 0.0, %v2771
  %2773 = vmatmul.bf16.gmra.mxu0 %v2517
  %v2774 = vpop.f32.mrf.mxu0
  %v2775 = vadd.f32 0.0, %v2774
  %v2776 = vpop.f32.mrf.mxu0
  %2777 = vdwg.mxu0
  %2778 = vmatpush.bf16.msra.mxu0 %v615
  %2779 = vmatpush.bf16.msra.mxu0 %v614
  %2780 = vmatpush.bf16.msra.mxu0 %v613
  %2781 = vmatpush.bf16.msra.mxu0 %v612
  %2782 = vmatpush.bf16.msra.mxu0 %v611
  %2783 = vmatpush.bf16.msra.mxu0 %v610
  %2784 = vmatpush.bf16.msra.mxu0 %v609
  %2785 = vmatpush.bf16.msra.mxu0 %v608
  %2786 = vmatmul.bf16.gmra.mxu0 %v2446
  %v2787 = vpop.f32.mrf.mxu0
  %v2788 = vadd.f32 %v2655, %v2787
  %v2789 = vpop.f32.mrf.mxu0
  %v2790 = vadd.f32 %v2657, %v2789
  %2791 = vmatmul.bf16.gmra.mxu0 %v2449
  %v2792 = vpop.f32.mrf.mxu0
  %v2793 = vadd.f32 %v2660, %v2792
  %v2794 = vpop.f32.mrf.mxu0
  %v2795 = vadd.f32 %v2662, %v2794
  %2796 = vmatmul.bf16.gmra.mxu0 %v2452
  %v2797 = vpop.f32.mrf.mxu0
  %v2798 = vadd.f32 %v2665, %v2797
  %v2799 = vpop.f32.mrf.mxu0
  %v2800 = vadd.f32 %v2667, %v2799
  %2801 = vmatmul.bf16.gmra.mxu0 %v2455
  %v2802 = vpop.f32.mrf.mxu0
  %v2803 = vadd.f32 %v2670, %v2802
  %v2804 = vpop.f32.mrf.mxu0
  %v2805 = vadd.f32 %v2672, %v2804
  %2806 = vmatmul.bf16.gmra.mxu0 %v2458
  %v2807 = vpop.f32.mrf.mxu0
  %v2808 = vadd.f32 %v2675, %v2807
  %v2809 = vpop.f32.mrf.mxu0
  %v2810 = vadd.f32 %v2677, %v2809
  %2811 = vmatmul.bf16.gmra.mxu0 %v2461
  %v2812 = vpop.f32.mrf.mxu0
  %v2813 = vadd.f32 %v2680, %v2812
  %v2814 = vpop.f32.mrf.mxu0
  %v2815 = vadd.f32 %v2682, %v2814
  %2816 = vmatmul.bf16.gmra.mxu0 %v2464
  %v2817 = vpop.f32.mrf.mxu0
  %v2818 = vadd.f32 %v2685, %v2817
  %v2819 = vpop.f32.mrf.mxu0
  %v2820 = vadd.f32 %v2687, %v2819
  %2821 = vmatmul.bf16.gmra.mxu0 %v2467
  %v2822 = vpop.f32.mrf.mxu0
  %v2823 = vadd.f32 %v2690, %v2822
  %v2824 = vpop.f32.mrf.mxu0
  %v2825 = vadd.f32 %v2692, %v2824
  %2826 = vmatmul.bf16.gmra.mxu0 %v2470
  %v2827 = vpop.f32.mrf.mxu0
  %v2828 = vadd.f32 %v2695, %v2827
  %v2829 = vpop.f32.mrf.mxu0
  %v2830 = vadd.f32 %v2697, %v2829
  %2831 = vmatmul.bf16.gmra.mxu0 %v2473
  %v2832 = vpop.f32.mrf.mxu0
  %v2833 = vadd.f32 %v2700, %v2832
  %v2834 = vpop.f32.mrf.mxu0
  %v2835 = vadd.f32 %v2702, %v2834
  %2836 = vmatmul.bf16.gmra.mxu0 %v2476
  %v2837 = vpop.f32.mrf.mxu0
  %v2838 = vadd.f32 %v2705, %v2837
  %v2839 = vpop.f32.mrf.mxu0
  %v2840 = vadd.f32 %v2707, %v2839
  %2841 = vmatmul.bf16.gmra.mxu0 %v2479
  %v2842 = vpop.f32.mrf.mxu0
  %v2843 = vadd.f32 %v2710, %v2842
  %v2844 = vpop.f32.mrf.mxu0
  %v2845 = vadd.f32 %v2712, %v2844
  %2846 = vmatmul.bf16.gmra.mxu0 %v2482
  %v2847 = vpop.f32.mrf.mxu0
  %v2848 = vadd.f32 %v2715, %v2847
  %v2849 = vpop.f32.mrf.mxu0
  %v2850 = vadd.f32 %v2717, %v2849
  %2851 = vmatmul.bf16.gmra.mxu0 %v2485
  %v2852 = vpop.f32.mrf.mxu0
  %v2853 = vadd.f32 %v2720, %v2852
  %v2854 = vpop.f32.mrf.mxu0
  %v2855 = vadd.f32 %v2722, %v2854
  %2856 = vmatmul.bf16.gmra.mxu0 %v2488
  %v2857 = vpop.f32.mrf.mxu0
  %v2858 = vadd.f32 %v2725, %v2857
  %v2859 = vpop.f32.mrf.mxu0
  %v2860 = vadd.f32 %v2727, %v2859
  %2861 = vmatmul.bf16.gmra.mxu0 %v2491
  %v2862 = vpop.f32.mrf.mxu0
  %v2863 = vadd.f32 %v2730, %v2862
  %v2864 = vpop.f32.mrf.mxu0
  %v2865 = vadd.f32 %v2732, %v2864
  %2866 = vmatmul.bf16.gmra.mxu0 %v2494
  %v2867 = vpop.f32.mrf.mxu0
  %v2868 = vadd.f32 %v2735, %v2867
  %v2869 = vpop.f32.mrf.mxu0
  %v2870 = vadd.f32 %v2737, %v2869
  %2871 = vmatmul.bf16.gmra.mxu0 %v2497
  %v2872 = vpop.f32.mrf.mxu0
  %v2873 = vadd.f32 %v2740, %v2872
  %v2874 = vpop.f32.mrf.mxu0
  %v2875 = vadd.f32 %v2742, %v2874
  %2876 = vmatmul.bf16.gmra.mxu0 %v2500
  %v2877 = vpop.f32.mrf.mxu0
  %v2878 = vadd.f32 %v2745, %v2877
  %v2879 = vpop.f32.mrf.mxu0
  %v2880 = vadd.f32 %v2747, %v2879
  %2881 = vmatmul.bf16.gmra.mxu0 %v2503
  %v2882 = vpop.f32.mrf.mxu0
  %v2883 = vadd.f32 %v2750, %v2882
  %v2884 = vpop.f32.mrf.mxu0
  %v2885 = vadd.f32 %v2752, %v2884
  %2886 = vmatmul.bf16.gmra.mxu0 %v2506
  %v2887 = vpop.f32.mrf.mxu0
  %v2888 = vadd.f32 %v2755, %v2887
  %v2889 = vpop.f32.mrf.mxu0
  %v2890 = vadd.f32 %v2757, %v2889
  %2891 = vmatmul.bf16.gmra.mxu0 %v2509
  %v2892 = vpop.f32.mrf.mxu0
  %v2893 = vadd.f32 %v2760, %v2892
  %v2894 = vpop.f32.mrf.mxu0
  %v2895 = vadd.f32 %v2762, %v2894
  %2896 = vmatmul.bf16.gmra.mxu0 %v2512
  %v2897 = vpop.f32.mrf.mxu0
  %v2898 = vadd.f32 %v2765, %v2897
  %v2899 = vpop.f32.mrf.mxu0
  %v2900 = vadd.f32 %v2767, %v2899
  %2901 = vmatmul.bf16.gmra.mxu0 %v2515
  %v2902 = vpop.f32.mrf.mxu0
  %v2903 = vadd.f32 %v2770, %v2902
  %v2904 = vpop.f32.mrf.mxu0
  %v2905 = vadd.f32 %v2772, %v2904
  %2906 = vmatmul.bf16.gmra.mxu0 %v2518
  %v2907 = vpop.f32.mrf.mxu0
  %v2908 = vadd.f32 %v2775, %v2907
  %v2909 = vpop.f32.mrf.mxu0
  %2910 = vdwg.mxu0
  %2911 = vmatpush.bf16.msra.mxu0 0
  %2912 = vmatpush.bf16.msra.mxu0 0
  %2913 = vmatpush.bf16.msra.mxu0 0
  %2914 = vmatpush.bf16.msra.mxu0 0
  %2915 = vmatpush.bf16.msra.mxu0 0
  %2916 = vmatpush.bf16.msra.mxu0 0
  %2917 = vmatpush.bf16.msra.mxu0 %v617
  %2918 = vmatpush.bf16.msra.mxu0 %v616
  %2919 = vmatmul.bf16.gmra.mxu0 %v2571
  %v2920 = vpop.f32.mrf.mxu0
  %v2921 = vadd.f32 %v2788, %v2920
  %v2922 = vpop.f32.mrf.mxu0
  %v2923 = vadd.f32 %v2790, %v2922
  %2924 = vmatmul.bf16.gmra.mxu0 %v2574
  %v2925 = vpop.f32.mrf.mxu0
  %v2926 = vadd.f32 %v2793, %v2925
  %v2927 = vpop.f32.mrf.mxu0
  %v2928 = vadd.f32 %v2795, %v2927
  %2929 = vmatmul.bf16.gmra.mxu0 %v2577
  %v2930 = vpop.f32.mrf.mxu0
  %v2931 = vadd.f32 %v2798, %v2930
  %v2932 = vpop.f32.mrf.mxu0
  %v2933 = vadd.f32 %v2800, %v2932
  %2934 = vmatmul.bf16.gmra.mxu0 %v2580
  %v2935 = vpop.f32.mrf.mxu0
  %v2936 = vadd.f32 %v2803, %v2935
  %v2937 = vpop.f32.mrf.mxu0
  %v2938 = vadd.f32 %v2805, %v2937
  %2939 = vmatmul.bf16.gmra.mxu0 %v2583
  %v2940 = vpop.f32.mrf.mxu0
  %v2941 = vadd.f32 %v2808, %v2940
  %v2942 = vpop.f32.mrf.mxu0
  %v2943 = vadd.f32 %v2810, %v2942
  %2944 = vmatmul.bf16.gmra.mxu0 %v2586
  %v2945 = vpop.f32.mrf.mxu0
  %v2946 = vadd.f32 %v2813, %v2945
  %v2947 = vpop.f32.mrf.mxu0
  %v2948 = vadd.f32 %v2815, %v2947
  %2949 = vmatmul.bf16.gmra.mxu0 %v2589
  %v2950 = vpop.f32.mrf.mxu0
  %v2951 = vadd.f32 %v2818, %v2950
  %v2952 = vpop.f32.mrf.mxu0
  %v2953 = vadd.f32 %v2820, %v2952
  %2954 = vmatmul.bf16.gmra.mxu0 %v2592
  %v2955 = vpop.f32.mrf.mxu0
  %v2956 = vadd.f32 %v2823, %v2955
  %v2957 = vpop.f32.mrf.mxu0
  %v2958 = vadd.f32 %v2825, %v2957
  %2959 = vmatmul.bf16.gmra.mxu0 %v2595
  %v2960 = vpop.f32.mrf.mxu0
  %v2961 = vadd.f32 %v2828, %v2960
  %v2962 = vpop.f32.mrf.mxu0
  %v2963 = vadd.f32 %v2830, %v2962
  %2964 = vmatmul.bf16.gmra.mxu0 %v2598
  %v2965 = vpop.f32.mrf.mxu0
  %v2966 = vadd.f32 %v2833, %v2965
  %v2967 = vpop.f32.mrf.mxu0
  %v2968 = vadd.f32 %v2835, %v2967
  %2969 = vmatmul.bf16.gmra.mxu0 %v2601
  %v2970 = vpop.f32.mrf.mxu0
  %v2971 = vadd.f32 %v2838, %v2970
  %v2972 = vpop.f32.mrf.mxu0
  %v2973 = vadd.f32 %v2840, %v2972
  %2974 = vmatmul.bf16.gmra.mxu0 %v2604
  %v2975 = vpop.f32.mrf.mxu0
  %v2976 = vadd.f32 %v2843, %v2975
  %v2977 = vpop.f32.mrf.mxu0
  %v2978 = vadd.f32 %v2845, %v2977
  %2979 = vmatmul.bf16.gmra.mxu0 %v2607
  %v2980 = vpop.f32.mrf.mxu0
  %v2981 = vadd.f32 %v2848, %v2980
  %v2982 = vpop.f32.mrf.mxu0
  %v2983 = vadd.f32 %v2850, %v2982
  %2984 = vmatmul.bf16.gmra.mxu0 %v2610
  %v2985 = vpop.f32.mrf.mxu0
  %v2986 = vadd.f32 %v2853, %v2985
  %v2987 = vpop.f32.mrf.mxu0
  %v2988 = vadd.f32 %v2855, %v2987
  %2989 = vmatmul.bf16.gmra.mxu0 %v2613
  %v2990 = vpop.f32.mrf.mxu0
  %v2991 = vadd.f32 %v2858, %v2990
  %v2992 = vpop.f32.mrf.mxu0
  %v2993 = vadd.f32 %v2860, %v2992
  %2994 = vmatmul.bf16.gmra.mxu0 %v2616
  %v2995 = vpop.f32.mrf.mxu0
  %v2996 = vadd.f32 %v2863, %v2995
  %v2997 = vpop.f32.mrf.mxu0
  %v2998 = vadd.f32 %v2865, %v2997
  %2999 = vmatmul.bf16.gmra.mxu0 %v2619
  %v3000 = vpop.f32.mrf.mxu0
  %v3001 = vadd.f32 %v2868, %v3000
  %v3002 = vpop.f32.mrf.mxu0
  %v3003 = vadd.f32 %v2870, %v3002
  %3004 = vmatmul.bf16.gmra.mxu0 %v2622
  %v3005 = vpop.f32.mrf.mxu0
  %v3006 = vadd.f32 %v2873, %v3005
  %v3007 = vpop.f32.mrf.mxu0
  %v3008 = vadd.f32 %v2875, %v3007
  %3009 = vmatmul.bf16.gmra.mxu0 %v2625
  %v3010 = vpop.f32.mrf.mxu0
  %v3011 = vadd.f32 %v2878, %v3010
  %v3012 = vpop.f32.mrf.mxu0
  %v3013 = vadd.f32 %v2880, %v3012
  %3014 = vmatmul.bf16.gmra.mxu0 %v2628
  %v3015 = vpop.f32.mrf.mxu0
  %v3016 = vadd.f32 %v2883, %v3015
  %v3017 = vpop.f32.mrf.mxu0
  %v3018 = vadd.f32 %v2885, %v3017
  %3019 = vmatmul.bf16.gmra.mxu0 %v2631
  %v3020 = vpop.f32.mrf.mxu0
  %v3021 = vadd.f32 %v2888, %v3020
  %v3022 = vpop.f32.mrf.mxu0
  %v3023 = vadd.f32 %v2890, %v3022
  %3024 = vmatmul.bf16.gmra.mxu0 %v2634
  %v3025 = vpop.f32.mrf.mxu0
  %v3026 = vadd.f32 %v2893, %v3025
  %v3027 = vpop.f32.mrf.mxu0
  %v3028 = vadd.f32 %v2895, %v3027
  %3029 = vmatmul.bf16.gmra.mxu0 %v2637
  %v3030 = vpop.f32.mrf.mxu0
  %v3031 = vadd.f32 %v2898, %v3030
  %v3032 = vpop.f32.mrf.mxu0
  %v3033 = vadd.f32 %v2900, %v3032
  %3034 = vmatmul.bf16.gmra.mxu0 %v2640
  %v3035 = vpop.f32.mrf.mxu0
  %v3036 = vadd.f32 %v2903, %v3035
  %v3037 = vpop.f32.mrf.mxu0
  %v3038 = vadd.f32 %v2905, %v3037
  %3039 = vmatmul.bf16.gmra.mxu0 %v2643
  %v3040 = vpop.f32.mrf.mxu0
  %v3041 = vadd.f32 %v2908, %v3040
  %v3042 = vpop.f32.mrf.mxu0
  %3043 = vdwg.mxu0
  %v3044 = vmax.f32 %v2053, %v2921
  %v3045 = vmax.f32 %v2054, %v2923
  %v3046 = vmax.f32 %v2055, %v2926
  %v3047 = vmax.f32 %v2056, %v2928
  %v3048 = vmax.f32 %v2057, %v2931
  %v3049 = vmax.f32 %v2058, %v2933
  %v3050 = vmax.f32 %v2059, %v2936
  %v3051 = vmax.f32 %v2060, %v2938
  %v3052 = vmax.f32 %v2061, %v2941
  %v3053 = vmax.f32 %v2062, %v2943
  %v3054 = vmax.f32 %v2063, %v2946
  %v3055 = vmax.f32 %v2064, %v2948
  %v3056 = vmax.f32 %v2065, %v2951
  %v3057 = vmax.f32 %v2066, %v2953
  %v3058 = vmax.f32 %v2067, %v2956
  %v3059 = vmax.f32 %v2068, %v2958
  %v3060 = vmax.f32 %v2069, %v2961
  %v3061 = vmax.f32 %v2070, %v2963
  %v3062 = vmax.f32 %v2071, %v2966
  %v3063 = vmax.f32 %v2072, %v2968
  %v3064 = vmax.f32 %v2073, %v2971
  %v3065 = vmax.f32 %v2074, %v2973
  %v3066 = vmax.f32 %v2075, %v2976
  %v3067 = vmax.f32 %v2076, %v2978
  %v3068 = vmax.f32 %v2077, %v2981
  %v3069 = vmax.f32 %v2078, %v2983
  %v3070 = vmax.f32 %v2079, %v2986
  %v3071 = vmax.f32 %v2080, %v2988
  %v3072 = vmax.f32 %v2081, %v2991
  %v3073 = vmax.f32 %v2082, %v2993
  %v3074 = vmax.f32 %v2083, %v2996
  %v3075 = vmax.f32 %v2084, %v2998
  %v3076 = vmax.f32 %v2085, %v3001
  %v3077 = vmax.f32 %v2086, %v3003
  %v3078 = vmax.f32 %v2087, %v3006
  %v3079 = vmax.f32 %v2088, %v3008
  %v3080 = vmax.f32 %v2089, %v3011
  %v3081 = vmax.f32 %v2090, %v3013
  %v3082 = vmax.f32 %v2091, %v3016
  %v3083 = vmax.f32 %v2092, %v3018
  %v3084 = vmax.f32 %v2093, %v3021
  %v3085 = vmax.f32 %v2094, %v3023
  %v3086 = vmax.f32 %v2095, %v3026
  %v3087 = vmax.f32 %v2096, %v3028
  %v3088 = vmax.f32 %v2097, %v3031
  %v3089 = vmax.f32 %v2098, %v3033
  %v3090 = vmax.f32 %v2099, %v3036
  %v3091 = vmax.f32 %v2100, %v3038
  %v3092 = vmax.f32 %v2101, %v3041
  %v3093 = vld [vmem:[%s3] sm:$0xff]
  %v3094 = vld [vmem:[%s3 + $0x8] sm:$0xf]
  %v3095 = vld [vmem:[%s3 + $0xc] sm:$0xff]
  %v3096 = vld [vmem:[%s3 + $0x14] sm:$0xf]
  %v3097 = vld [vmem:[%s3 + $0x18] sm:$0xff]
  %v3098 = vld [vmem:[%s3 + $0x20] sm:$0xf]
  %v3099 = vld [vmem:[%s3 + $0x24] sm:$0xff]
  %v3100 = vld [vmem:[%s3 + $0x2c] sm:$0xf]
  %v3101 = vld [vmem:[%s3 + $0x30] sm:$0xff]
  %v3102 = vld [vmem:[%s3 + $0x38] sm:$0xf]
  %v3103 = vld [vmem:[%s3 + $0x3c] sm:$0xff]
  %v3104 = vld [vmem:[%s3 + $0x44] sm:$0xf]
  %v3105 = vld [vmem:[%s3 + $0x48] sm:$0xff]
  %v3106 = vld [vmem:[%s3 + $0x50] sm:$0xf]
  %v3107 = vld [vmem:[%s3 + $0x54] sm:$0xff]
  %v3108 = vld [vmem:[%s3 + $0x5c] sm:$0xf]
  %v3109 = vld [vmem:[%s3 + $0x60] sm:$0xff]
  %v3110 = vld [vmem:[%s3 + $0x68] sm:$0xf]
  %v3111 = vld [vmem:[%s3 + $0x6c] sm:$0xff]
  %v3112 = vld [vmem:[%s3 + $0x74] sm:$0xf]
  %v3113 = vld [vmem:[%s3 + $0x78] sm:$0xff]
  %v3114 = vld [vmem:[%s3 + $0x80] sm:$0xf]
  %v3115 = vld [vmem:[%s3 + $0x84] sm:$0xff]
  %v3116 = vld [vmem:[%s3 + $0x8c] sm:$0xf]
  %v3117 = vld [vmem:[%s3 + $0x90] sm:$0xff]
  %v3118 = vld [vmem:[%s3 + $0x98] sm:$0xf]
  %v3119 = vld [vmem:[%s3 + $0x9c] sm:$0xff]
  %v3120 = vld [vmem:[%s3 + $0xa4] sm:$0xf]
  %v3121 = vld [vmem:[%s3 + $0xa8] sm:$0xff]
  %v3122 = vld [vmem:[%s3 + $0xb0] sm:$0xf]
  %v3123 = vld [vmem:[%s3 + $0xb4] sm:$0xff]
  %v3124 = vld [vmem:[%s3 + $0xbc] sm:$0xf]
  %v3125 = vld [vmem:[%s3 + $0xc0] sm:$0xff]
  %v3126 = vld [vmem:[%s3 + $0xc8] sm:$0xf]
  %v3127 = vld [vmem:[%s3 + $0xcc] sm:$0xff]
  %v3128 = vld [vmem:[%s3 + $0xd4] sm:$0xf]
  %v3129 = vld [vmem:[%s3 + $0xd8] sm:$0xff]
  %v3130 = vld [vmem:[%s3 + $0xe0] sm:$0xf]
  %v3131 = vld [vmem:[%s3 + $0xe4] sm:$0xff]
  %v3132 = vld [vmem:[%s3 + $0xec] sm:$0xf]
  %v3133 = vld [vmem:[%s3 + $0xf0] sm:$0xff]
  %v3134 = vld [vmem:[%s3 + $0xf8] sm:$0xf]
  %v3135 = vld [vmem:[%s3 + $0xfc] sm:$0xff]
  %v3136 = vld [vmem:[%s3 + $0x104] sm:$0xf]
  %v3137 = vld [vmem:[%s3 + $0x108] sm:$0xff]
  %v3138 = vld [vmem:[%s3 + $0x110] sm:$0xf]
  %v3139 = vld [vmem:[%s3 + $0x114] sm:$0xff]
  %v3140 = vld [vmem:[%s3 + $0x11c] sm:$0xf]
  %v3141 = vld [vmem:[%s3 + $0x120] sm:$0xff]
  %v3142 = vld [vmem:[%s3 + $0x128] sm:$0xf]
  %v3143 = vld [vmem:[%s3 + $0x12c] sm:$0xff]
  %v3144 = vld [vmem:[%s3 + $0x134] sm:$0xf]
  %v3145 = vld [vmem:[%s3 + $0x138] sm:$0xff]
  %v3146 = vld [vmem:[%s3 + $0x140] sm:$0xf]
  %v3147 = vld [vmem:[%s3 + $0x144] sm:$0xff]
  %v3148 = vld [vmem:[%s3 + $0x14c] sm:$0xf]
  %v3149 = vld [vmem:[%s3 + $0x150] sm:$0xff]
  %v3150 = vld [vmem:[%s3 + $0x158] sm:$0xf]
  %v3151 = vld [vmem:[%s3 + $0x15c] sm:$0xff]
  %v3152 = vld [vmem:[%s3 + $0x164] sm:$0xf]
  %v3153 = vld [vmem:[%s3 + $0x168] sm:$0xff]
  %v3154 = vld [vmem:[%s3 + $0x170] sm:$0xf]
  %v3155 = vld [vmem:[%s3 + $0x174] sm:$0xff]
  %v3156 = vld [vmem:[%s3 + $0x17c] sm:$0xf]
  %v3157 = vld [vmem:[%s3 + $0x180] sm:$0xff]
  %v3158 = vld [vmem:[%s3 + $0x188] sm:$0xf]
  %v3159 = vld [vmem:[%s3 + $0x18c] sm:$0xff]
  %v3160 = vld [vmem:[%s3 + $0x194] sm:$0xf]
  %v3161 = vld [vmem:[%s3 + $0x198] sm:$0xff]
  %v3162 = vld [vmem:[%s3 + $0x1a0] sm:$0xf]
  %v3163 = vld [vmem:[%s3 + $0x1a4] sm:$0xff]
  %v3164 = vld [vmem:[%s3 + $0x1ac] sm:$0xf]
  %v3165 = vld [vmem:[%s3 + $0x1b0] sm:$0xff]
  %v3166 = vld [vmem:[%s3 + $0x1b8] sm:$0xf]
  %v3167 = vld [vmem:[%s3 + $0x1bc] sm:$0xff]
  %v3168 = vld [vmem:[%s3 + $0x1c4] sm:$0xf]
  %v3169 = vld [vmem:[%s3 + $0x1c8] sm:$0xff]
  %v3170 = vld [vmem:[%s3 + $0x1d0] sm:$0xf]
  %v3171 = vld [vmem:[%s3 + $0x1d4] sm:$0xff]
  %v3172 = vld [vmem:[%s3 + $0x1dc] sm:$0xf]
  %v3173 = vld [vmem:[%s3 + $0x1e0] sm:$0xff]
  %v3174 = vld [vmem:[%s3 + $0x1e8] sm:$0xf]
  %v3175 = vld [vmem:[%s3 + $0x1ec] sm:$0xff]
  %v3176 = vld [vmem:[%s3 + $0x1f4] sm:$0xf]
  %v3177 = vld [vmem:[%s3 + $0x1f8] sm:$0xff]
  %v3178 = vld [vmem:[%s3 + $0x200] sm:$0xf]
  %v3179 = vld [vmem:[%s3 + $0x204] sm:$0xff]
  %v3180 = vld [vmem:[%s3 + $0x20c] sm:$0xf]
  %v3181 = vld [vmem:[%s3 + $0x210] sm:$0xff]
  %v3182 = vld [vmem:[%s3 + $0x218] sm:$0xf]
  %v3183 = vld [vmem:[%s3 + $0x21c] sm:$0xff]
  %v3184 = vld [vmem:[%s3 + $0x224] sm:$0xf]
  %v3185 = vld [vmem:[%s3 + $0x228] sm:$0xff]
  %v3186 = vld [vmem:[%s3 + $0x230] sm:$0xf]
  %v3187 = vld [vmem:[%s3 + $0x234] sm:$0xff]
  %v3188 = vld [vmem:[%s3 + $0x23c] sm:$0xf]
  %v3189 = vld [vmem:[%s3 + $0x240] sm:$0xff]
  %v3190 = vld [vmem:[%s3 + $0x248] sm:$0xf]
  %v3289 = vunpack.c.l.b16 %v3093
  %v3290 = vunpack.c.h.b16 %v3093
  %v3291 = vunpack.c.l.b16 %v3094
  %v3292 = vunpack.c.l.b16 %v3095
  %v3293 = vunpack.c.h.b16 %v3095
  %v3294 = vunpack.c.l.b16 %v3096
  %v3295 = vunpack.c.l.b16 %v3097
  %v3296 = vunpack.c.h.b16 %v3097
  %v3297 = vunpack.c.l.b16 %v3098
  %v3298 = vunpack.c.l.b16 %v3099
  %v3299 = vunpack.c.h.b16 %v3099
  %v3300 = vunpack.c.l.b16 %v3100
  %v3301 = vunpack.c.l.b16 %v3101
  %v3302 = vunpack.c.h.b16 %v3101
  %v3303 = vunpack.c.l.b16 %v3102
  %v3304 = vunpack.c.l.b16 %v3103
  %v3305 = vunpack.c.h.b16 %v3103
  %v3306 = vunpack.c.l.b16 %v3104
  %v3307 = vunpack.c.l.b16 %v3105
  %v3308 = vunpack.c.h.b16 %v3105
  %v3309 = vunpack.c.l.b16 %v3106
  %v3310 = vunpack.c.l.b16 %v3107
  %v3311 = vunpack.c.h.b16 %v3107
  %v3312 = vunpack.c.l.b16 %v3108
  %v3313 = vunpack.c.l.b16 %v3109
  %v3314 = vunpack.c.h.b16 %v3109
  %v3315 = vunpack.c.l.b16 %v3110
  %v3316 = vunpack.c.l.b16 %v3111
  %v3317 = vunpack.c.h.b16 %v3111
  %v3318 = vunpack.c.l.b16 %v3112
  %v3319 = vunpack.c.l.b16 %v3113
  %v3320 = vunpack.c.h.b16 %v3113
  %v3321 = vunpack.c.l.b16 %v3114
  %v3322 = vunpack.c.l.b16 %v3115
  %v3323 = vunpack.c.h.b16 %v3115
  %v3324 = vunpack.c.l.b16 %v3116
  %v3325 = vunpack.c.l.b16 %v3117
  %v3326 = vunpack.c.h.b16 %v3117
  %v3327 = vunpack.c.l.b16 %v3118
  %v3328 = vunpack.c.l.b16 %v3119
  %v3329 = vunpack.c.h.b16 %v3119
  %v3330 = vunpack.c.l.b16 %v3120
  %v3331 = vunpack.c.l.b16 %v3121
  %v3332 = vunpack.c.h.b16 %v3121
  %v3333 = vunpack.c.l.b16 %v3122
  %v3334 = vunpack.c.l.b16 %v3123
  %v3335 = vunpack.c.h.b16 %v3123
  %v3336 = vunpack.c.l.b16 %v3124
  %v3337 = vunpack.c.l.b16 %v3125
  %v3338 = vunpack.c.h.b16 %v3125
  %v3339 = vunpack.c.l.b16 %v3126
  %v3340 = vunpack.c.l.b16 %v3127
  %v3341 = vunpack.c.h.b16 %v3127
  %v3342 = vunpack.c.l.b16 %v3128
  %v3343 = vunpack.c.l.b16 %v3129
  %v3344 = vunpack.c.h.b16 %v3129
  %v3345 = vunpack.c.l.b16 %v3130
  %v3346 = vunpack.c.l.b16 %v3131
  %v3347 = vunpack.c.h.b16 %v3131
  %v3348 = vunpack.c.l.b16 %v3132
  %v3349 = vunpack.c.l.b16 %v3133
  %v3350 = vunpack.c.h.b16 %v3133
  %v3351 = vunpack.c.l.b16 %v3134
  %v3352 = vunpack.c.l.b16 %v3135
  %v3353 = vunpack.c.h.b16 %v3135
  %v3354 = vunpack.c.l.b16 %v3136
  %v3355 = vunpack.c.l.b16 %v3137
  %v3356 = vunpack.c.h.b16 %v3137
  %v3357 = vunpack.c.l.b16 %v3138
  %v3358 = vunpack.c.l.b16 %v3139
  %v3359 = vunpack.c.h.b16 %v3139
  %v3360 = vunpack.c.l.b16 %v3140
  %v3361 = vunpack.c.l.b16 %v3141
  %v3362 = vunpack.c.h.b16 %v3141
  %v3363 = vunpack.c.l.b16 %v3142
  %v3364 = vunpack.c.l.b16 %v3143
  %v3365 = vunpack.c.h.b16 %v3143
  %v3366 = vunpack.c.l.b16 %v3144
  %v3367 = vunpack.c.l.b16 %v3145
  %v3368 = vunpack.c.h.b16 %v3145
  %v3369 = vunpack.c.l.b16 %v3146
  %v3370 = vunpack.c.l.b16 %v3147
  %v3371 = vunpack.c.h.b16 %v3147
  %v3372 = vunpack.c.l.b16 %v3148
  %v3373 = vunpack.c.l.b16 %v3149
  %v3374 = vunpack.c.h.b16 %v3149
  %v3375 = vunpack.c.l.b16 %v3150
  %v3376 = vunpack.c.l.b16 %v3151
  %v3377 = vunpack.c.h.b16 %v3151
  %v3378 = vunpack.c.l.b16 %v3152
  %v3379 = vunpack.c.l.b16 %v3153
  %v3380 = vunpack.c.h.b16 %v3153
  %v3381 = vunpack.c.l.b16 %v3154
  %v3382 = vunpack.c.l.b16 %v3155
  %v3383 = vunpack.c.h.b16 %v3155
  %v3384 = vunpack.c.l.b16 %v3156
  %v3385 = vunpack.c.l.b16 %v3157
  %v3386 = vunpack.c.h.b16 %v3157
  %v3387 = vunpack.c.l.b16 %v3158
  %v3388 = vunpack.c.l.b16 %v3159
  %v3389 = vunpack.c.h.b16 %v3159
  %v3390 = vunpack.c.l.b16 %v3160
  %v3391 = vunpack.c.l.b16 %v3161
  %v3392 = vunpack.c.h.b16 %v3161
  %v3393 = vunpack.c.l.b16 %v3162
  %v3394 = vunpack.c.l.b16 %v3163
  %v3395 = vunpack.c.h.b16 %v3163
  %v3396 = vunpack.c.l.b16 %v3164
  %v3397 = vunpack.c.l.b16 %v3165
  %v3398 = vunpack.c.h.b16 %v3165
  %v3399 = vunpack.c.l.b16 %v3166
  %v3400 = vunpack.c.l.b16 %v3167
  %v3401 = vunpack.c.h.b16 %v3167
  %v3402 = vunpack.c.l.b16 %v3168
  %v3403 = vunpack.c.l.b16 %v3169
  %v3404 = vunpack.c.h.b16 %v3169
  %v3405 = vunpack.c.l.b16 %v3170
  %v3406 = vunpack.c.l.b16 %v3171
  %v3407 = vunpack.c.h.b16 %v3171
  %v3408 = vunpack.c.l.b16 %v3172
  %v3409 = vunpack.c.l.b16 %v3173
  %v3410 = vunpack.c.h.b16 %v3173
  %v3411 = vunpack.c.l.b16 %v3174
  %v3412 = vunpack.c.l.b16 %v3175
  %v3413 = vunpack.c.h.b16 %v3175
  %v3414 = vunpack.c.l.b16 %v3176
  %v3415 = vunpack.c.l.b16 %v3177
  %v3416 = vunpack.c.h.b16 %v3177
  %v3417 = vunpack.c.l.b16 %v3178
  %v3418 = vunpack.c.l.b16 %v3179
  %v3419 = vunpack.c.h.b16 %v3179
  %v3420 = vunpack.c.l.b16 %v3180
  %v3421 = vunpack.c.l.b16 %v3181
  %v3422 = vunpack.c.h.b16 %v3181
  %v3423 = vunpack.c.l.b16 %v3182
  %v3424 = vunpack.c.l.b16 %v3183
  %v3425 = vunpack.c.h.b16 %v3183
  %v3426 = vunpack.c.l.b16 %v3184
  %v3427 = vunpack.c.l.b16 %v3185
  %v3428 = vunpack.c.h.b16 %v3185
  %v3429 = vunpack.c.l.b16 %v3186
  %v3430 = vunpack.c.l.b16 %v3187
  %v3431 = vunpack.c.h.b16 %v3187
  %v3432 = vunpack.c.l.b16 %v3188
  %v3433 = vunpack.c.l.b16 %v3189
  %v3434 = vunpack.c.h.b16 %v3189
  %v3435 = vunpack.c.l.b16 %v3190
  %v3436 = vpack.c.b16 %v3292, %v3289
  %v3437 = vpack.c.b16 %v3293, %v3290
  %v3438 = vpack.c.b16 %v3294, %v3291
  %v3439 = vpack.c.b16 %v3298, %v3295
  %v3440 = vpack.c.b16 %v3299, %v3296
  %v3441 = vpack.c.b16 %v3300, %v3297
  %v3442 = vpack.c.b16 %v3304, %v3301
  %v3443 = vpack.c.b16 %v3305, %v3302
  %v3444 = vpack.c.b16 %v3306, %v3303
  %v3445 = vpack.c.b16 %v3310, %v3307
  %v3446 = vpack.c.b16 %v3311, %v3308
  %v3447 = vpack.c.b16 %v3312, %v3309
  %v3448 = vpack.c.b16 %v3316, %v3313
  %v3449 = vpack.c.b16 %v3317, %v3314
  %v3450 = vpack.c.b16 %v3318, %v3315
  %v3451 = vpack.c.b16 %v3322, %v3319
  %v3452 = vpack.c.b16 %v3323, %v3320
  %v3453 = vpack.c.b16 %v3324, %v3321
  %v3454 = vpack.c.b16 %v3328, %v3325
  %v3455 = vpack.c.b16 %v3329, %v3326
  %v3456 = vpack.c.b16 %v3330, %v3327
  %v3457 = vpack.c.b16 %v3334, %v3331
  %v3458 = vpack.c.b16 %v3335, %v3332
  %v3459 = vpack.c.b16 %v3336, %v3333
  %v3460 = vpack.c.b16 %v3340, %v3337
  %v3461 = vpack.c.b16 %v3341, %v3338
  %v3462 = vpack.c.b16 %v3342, %v3339
  %v3463 = vpack.c.b16 %v3346, %v3343
  %v3464 = vpack.c.b16 %v3347, %v3344
  %v3465 = vpack.c.b16 %v3348, %v3345
  %v3466 = vpack.c.b16 %v3352, %v3349
  %v3467 = vpack.c.b16 %v3353, %v3350
  %v3468 = vpack.c.b16 %v3354, %v3351
  %v3469 = vpack.c.b16 %v3358, %v3355
  %v3470 = vpack.c.b16 %v3359, %v3356
  %v3471 = vpack.c.b16 %v3360, %v3357
  %v3472 = vpack.c.b16 %v3364, %v3361
  %v3473 = vpack.c.b16 %v3365, %v3362
  %v3474 = vpack.c.b16 %v3366, %v3363
  %v3475 = vpack.c.b16 %v3370, %v3367
  %v3476 = vpack.c.b16 %v3371, %v3368
  %v3477 = vpack.c.b16 %v3372, %v3369
  %v3478 = vpack.c.b16 %v3376, %v3373
  %v3479 = vpack.c.b16 %v3377, %v3374
  %v3480 = vpack.c.b16 %v3378, %v3375
  %v3481 = vpack.c.b16 %v3382, %v3379
  %v3482 = vpack.c.b16 %v3383, %v3380
  %v3483 = vpack.c.b16 %v3384, %v3381
  %v3484 = vpack.c.b16 %v3388, %v3385
  %v3485 = vpack.c.b16 %v3389, %v3386
  %v3486 = vpack.c.b16 %v3390, %v3387
  %v3487 = vpack.c.b16 %v3394, %v3391
  %v3488 = vpack.c.b16 %v3395, %v3392
  %v3489 = vpack.c.b16 %v3396, %v3393
  %v3490 = vpack.c.b16 %v3400, %v3397
  %v3491 = vpack.c.b16 %v3401, %v3398
  %v3492 = vpack.c.b16 %v3402, %v3399
  %v3493 = vpack.c.b16 %v3406, %v3403
  %v3494 = vpack.c.b16 %v3407, %v3404
  %v3495 = vpack.c.b16 %v3408, %v3405
  %v3496 = vpack.c.b16 %v3412, %v3409
  %v3497 = vpack.c.b16 %v3413, %v3410
  %v3498 = vpack.c.b16 %v3414, %v3411
  %v3499 = vpack.c.b16 %v3418, %v3415
  %v3500 = vpack.c.b16 %v3419, %v3416
  %v3501 = vpack.c.b16 %v3420, %v3417
  %v3502 = vpack.c.b16 %v3424, %v3421
  %v3503 = vpack.c.b16 %v3425, %v3422
  %v3504 = vpack.c.b16 %v3426, %v3423
  %v3505 = vpack.c.b16 %v3430, %v3427
  %v3506 = vpack.c.b16 %v3431, %v3428
  %v3507 = vpack.c.b16 %v3432, %v3429
  %v3508 = vpack.c.b16 %v3433, %v3433
  %v3509 = vpack.c.b16 %v3434, %v3434
  %v3510 = vpack.c.b16 %v3435, %v3435
  %v3562 = vsel %vm636, %v3438, 0
  %v3565 = vsel %vm636, %v3441, 0
  %v3568 = vsel %vm636, %v3444, 0
  %v3571 = vsel %vm636, %v3447, 0
  %v3574 = vsel %vm636, %v3450, 0
  %v3577 = vsel %vm636, %v3453, 0
  %v3580 = vsel %vm636, %v3456, 0
  %v3583 = vsel %vm636, %v3459, 0
  %v3586 = vsel %vm636, %v3462, 0
  %v3589 = vsel %vm636, %v3465, 0
  %v3592 = vsel %vm636, %v3468, 0
  %v3595 = vsel %vm636, %v3471, 0
  %v3598 = vsel %vm636, %v3474, 0
  %v3601 = vsel %vm636, %v3477, 0
  %v3604 = vsel %vm636, %v3480, 0
  %v3607 = vsel %vm636, %v3483, 0
  %v3610 = vsel %vm636, %v3486, 0
  %v3613 = vsel %vm636, %v3489, 0
  %v3616 = vsel %vm636, %v3492, 0
  %v3619 = vsel %vm636, %v3495, 0
  %v3622 = vsel %vm636, %v3498, 0
  %v3625 = vsel %vm636, %v3501, 0
  %v3628 = vsel %vm636, %v3504, 0
  %v3631 = vsel %vm636, %v3507, 0
  %v3634 = vsel %vm636, %v3510, 0
  %3636 = vmatpush.bf16.msra.mxu0 %v607
  %3637 = vmatpush.bf16.msra.mxu0 %v606
  %3638 = vmatpush.bf16.msra.mxu0 %v605
  %3639 = vmatpush.bf16.msra.mxu0 %v604
  %3640 = vmatpush.bf16.msra.mxu0 %v603
  %3641 = vmatpush.bf16.msra.mxu0 %v602
  %3642 = vmatpush.bf16.msra.mxu0 %v601
  %3643 = vmatpush.bf16.msra.mxu0 %v600
  %3644 = vmatmul.bf16.gmra.mxu0 %v3436
  %v3645 = vpop.f32.mrf.mxu0
  %v3646 = vadd.f32 0.0, %v3645
  %v3647 = vpop.f32.mrf.mxu0
  %v3648 = vadd.f32 0.0, %v3647
  %3649 = vmatmul.bf16.gmra.mxu0 %v3439
  %v3650 = vpop.f32.mrf.mxu0
  %v3651 = vadd.f32 0.0, %v3650
  %v3652 = vpop.f32.mrf.mxu0
  %v3653 = vadd.f32 0.0, %v3652
  %3654 = vmatmul.bf16.gmra.mxu0 %v3442
  %v3655 = vpop.f32.mrf.mxu0
  %v3656 = vadd.f32 0.0, %v3655
  %v3657 = vpop.f32.mrf.mxu0
  %v3658 = vadd.f32 0.0, %v3657
  %3659 = vmatmul.bf16.gmra.mxu0 %v3445
  %v3660 = vpop.f32.mrf.mxu0
  %v3661 = vadd.f32 0.0, %v3660
  %v3662 = vpop.f32.mrf.mxu0
  %v3663 = vadd.f32 0.0, %v3662
  %3664 = vmatmul.bf16.gmra.mxu0 %v3448
  %v3665 = vpop.f32.mrf.mxu0
  %v3666 = vadd.f32 0.0, %v3665
  %v3667 = vpop.f32.mrf.mxu0
  %v3668 = vadd.f32 0.0, %v3667
  %3669 = vmatmul.bf16.gmra.mxu0 %v3451
  %v3670 = vpop.f32.mrf.mxu0
  %v3671 = vadd.f32 0.0, %v3670
  %v3672 = vpop.f32.mrf.mxu0
  %v3673 = vadd.f32 0.0, %v3672
  %3674 = vmatmul.bf16.gmra.mxu0 %v3454
  %v3675 = vpop.f32.mrf.mxu0
  %v3676 = vadd.f32 0.0, %v3675
  %v3677 = vpop.f32.mrf.mxu0
  %v3678 = vadd.f32 0.0, %v3677
  %3679 = vmatmul.bf16.gmra.mxu0 %v3457
  %v3680 = vpop.f32.mrf.mxu0
  %v3681 = vadd.f32 0.0, %v3680
  %v3682 = vpop.f32.mrf.mxu0
  %v3683 = vadd.f32 0.0, %v3682
  %3684 = vmatmul.bf16.gmra.mxu0 %v3460
  %v3685 = vpop.f32.mrf.mxu0
  %v3686 = vadd.f32 0.0, %v3685
  %v3687 = vpop.f32.mrf.mxu0
  %v3688 = vadd.f32 0.0, %v3687
  %3689 = vmatmul.bf16.gmra.mxu0 %v3463
  %v3690 = vpop.f32.mrf.mxu0
  %v3691 = vadd.f32 0.0, %v3690
  %v3692 = vpop.f32.mrf.mxu0
  %v3693 = vadd.f32 0.0, %v3692
  %3694 = vmatmul.bf16.gmra.mxu0 %v3466
  %v3695 = vpop.f32.mrf.mxu0
  %v3696 = vadd.f32 0.0, %v3695
  %v3697 = vpop.f32.mrf.mxu0
  %v3698 = vadd.f32 0.0, %v3697
  %3699 = vmatmul.bf16.gmra.mxu0 %v3469
  %v3700 = vpop.f32.mrf.mxu0
  %v3701 = vadd.f32 0.0, %v3700
  %v3702 = vpop.f32.mrf.mxu0
  %v3703 = vadd.f32 0.0, %v3702
  %3704 = vmatmul.bf16.gmra.mxu0 %v3472
  %v3705 = vpop.f32.mrf.mxu0
  %v3706 = vadd.f32 0.0, %v3705
  %v3707 = vpop.f32.mrf.mxu0
  %v3708 = vadd.f32 0.0, %v3707
  %3709 = vmatmul.bf16.gmra.mxu0 %v3475
  %v3710 = vpop.f32.mrf.mxu0
  %v3711 = vadd.f32 0.0, %v3710
  %v3712 = vpop.f32.mrf.mxu0
  %v3713 = vadd.f32 0.0, %v3712
  %3714 = vmatmul.bf16.gmra.mxu0 %v3478
  %v3715 = vpop.f32.mrf.mxu0
  %v3716 = vadd.f32 0.0, %v3715
  %v3717 = vpop.f32.mrf.mxu0
  %v3718 = vadd.f32 0.0, %v3717
  %3719 = vmatmul.bf16.gmra.mxu0 %v3481
  %v3720 = vpop.f32.mrf.mxu0
  %v3721 = vadd.f32 0.0, %v3720
  %v3722 = vpop.f32.mrf.mxu0
  %v3723 = vadd.f32 0.0, %v3722
  %3724 = vmatmul.bf16.gmra.mxu0 %v3484
  %v3725 = vpop.f32.mrf.mxu0
  %v3726 = vadd.f32 0.0, %v3725
  %v3727 = vpop.f32.mrf.mxu0
  %v3728 = vadd.f32 0.0, %v3727
  %3729 = vmatmul.bf16.gmra.mxu0 %v3487
  %v3730 = vpop.f32.mrf.mxu0
  %v3731 = vadd.f32 0.0, %v3730
  %v3732 = vpop.f32.mrf.mxu0
  %v3733 = vadd.f32 0.0, %v3732
  %3734 = vmatmul.bf16.gmra.mxu0 %v3490
  %v3735 = vpop.f32.mrf.mxu0
  %v3736 = vadd.f32 0.0, %v3735
  %v3737 = vpop.f32.mrf.mxu0
  %v3738 = vadd.f32 0.0, %v3737
  %3739 = vmatmul.bf16.gmra.mxu0 %v3493
  %v3740 = vpop.f32.mrf.mxu0
  %v3741 = vadd.f32 0.0, %v3740
  %v3742 = vpop.f32.mrf.mxu0
  %v3743 = vadd.f32 0.0, %v3742
  %3744 = vmatmul.bf16.gmra.mxu0 %v3496
  %v3745 = vpop.f32.mrf.mxu0
  %v3746 = vadd.f32 0.0, %v3745
  %v3747 = vpop.f32.mrf.mxu0
  %v3748 = vadd.f32 0.0, %v3747
  %3749 = vmatmul.bf16.gmra.mxu0 %v3499
  %v3750 = vpop.f32.mrf.mxu0
  %v3751 = vadd.f32 0.0, %v3750
  %v3752 = vpop.f32.mrf.mxu0
  %v3753 = vadd.f32 0.0, %v3752
  %3754 = vmatmul.bf16.gmra.mxu0 %v3502
  %v3755 = vpop.f32.mrf.mxu0
  %v3756 = vadd.f32 0.0, %v3755
  %v3757 = vpop.f32.mrf.mxu0
  %v3758 = vadd.f32 0.0, %v3757
  %3759 = vmatmul.bf16.gmra.mxu0 %v3505
  %v3760 = vpop.f32.mrf.mxu0
  %v3761 = vadd.f32 0.0, %v3760
  %v3762 = vpop.f32.mrf.mxu0
  %v3763 = vadd.f32 0.0, %v3762
  %3764 = vmatmul.bf16.gmra.mxu0 %v3508
  %v3765 = vpop.f32.mrf.mxu0
  %v3766 = vadd.f32 0.0, %v3765
  %v3767 = vpop.f32.mrf.mxu0
  %3768 = vdwg.mxu0
  %3769 = vmatpush.bf16.msra.mxu0 %v615
  %3770 = vmatpush.bf16.msra.mxu0 %v614
  %3771 = vmatpush.bf16.msra.mxu0 %v613
  %3772 = vmatpush.bf16.msra.mxu0 %v612
  %3773 = vmatpush.bf16.msra.mxu0 %v611
  %3774 = vmatpush.bf16.msra.mxu0 %v610
  %3775 = vmatpush.bf16.msra.mxu0 %v609
  %3776 = vmatpush.bf16.msra.mxu0 %v608
  %3777 = vmatmul.bf16.gmra.mxu0 %v3437
  %v3778 = vpop.f32.mrf.mxu0
  %v3779 = vadd.f32 %v3646, %v3778
  %v3780 = vpop.f32.mrf.mxu0
  %v3781 = vadd.f32 %v3648, %v3780
  %3782 = vmatmul.bf16.gmra.mxu0 %v3440
  %v3783 = vpop.f32.mrf.mxu0
  %v3784 = vadd.f32 %v3651, %v3783
  %v3785 = vpop.f32.mrf.mxu0
  %v3786 = vadd.f32 %v3653, %v3785
  %3787 = vmatmul.bf16.gmra.mxu0 %v3443
  %v3788 = vpop.f32.mrf.mxu0
  %v3789 = vadd.f32 %v3656, %v3788
  %v3790 = vpop.f32.mrf.mxu0
  %v3791 = vadd.f32 %v3658, %v3790
  %3792 = vmatmul.bf16.gmra.mxu0 %v3446
  %v3793 = vpop.f32.mrf.mxu0
  %v3794 = vadd.f32 %v3661, %v3793
  %v3795 = vpop.f32.mrf.mxu0
  %v3796 = vadd.f32 %v3663, %v3795
  %3797 = vmatmul.bf16.gmra.mxu0 %v3449
  %v3798 = vpop.f32.mrf.mxu0
  %v3799 = vadd.f32 %v3666, %v3798
  %v3800 = vpop.f32.mrf.mxu0
  %v3801 = vadd.f32 %v3668, %v3800
  %3802 = vmatmul.bf16.gmra.mxu0 %v3452
  %v3803 = vpop.f32.mrf.mxu0
  %v3804 = vadd.f32 %v3671, %v3803
  %v3805 = vpop.f32.mrf.mxu0
  %v3806 = vadd.f32 %v3673, %v3805
  %3807 = vmatmul.bf16.gmra.mxu0 %v3455
  %v3808 = vpop.f32.mrf.mxu0
  %v3809 = vadd.f32 %v3676, %v3808
  %v3810 = vpop.f32.mrf.mxu0
  %v3811 = vadd.f32 %v3678, %v3810
  %3812 = vmatmul.bf16.gmra.mxu0 %v3458
  %v3813 = vpop.f32.mrf.mxu0
  %v3814 = vadd.f32 %v3681, %v3813
  %v3815 = vpop.f32.mrf.mxu0
  %v3816 = vadd.f32 %v3683, %v3815
  %3817 = vmatmul.bf16.gmra.mxu0 %v3461
  %v3818 = vpop.f32.mrf.mxu0
  %v3819 = vadd.f32 %v3686, %v3818
  %v3820 = vpop.f32.mrf.mxu0
  %v3821 = vadd.f32 %v3688, %v3820
  %3822 = vmatmul.bf16.gmra.mxu0 %v3464
  %v3823 = vpop.f32.mrf.mxu0
  %v3824 = vadd.f32 %v3691, %v3823
  %v3825 = vpop.f32.mrf.mxu0
  %v3826 = vadd.f32 %v3693, %v3825
  %3827 = vmatmul.bf16.gmra.mxu0 %v3467
  %v3828 = vpop.f32.mrf.mxu0
  %v3829 = vadd.f32 %v3696, %v3828
  %v3830 = vpop.f32.mrf.mxu0
  %v3831 = vadd.f32 %v3698, %v3830
  %3832 = vmatmul.bf16.gmra.mxu0 %v3470
  %v3833 = vpop.f32.mrf.mxu0
  %v3834 = vadd.f32 %v3701, %v3833
  %v3835 = vpop.f32.mrf.mxu0
  %v3836 = vadd.f32 %v3703, %v3835
  %3837 = vmatmul.bf16.gmra.mxu0 %v3473
  %v3838 = vpop.f32.mrf.mxu0
  %v3839 = vadd.f32 %v3706, %v3838
  %v3840 = vpop.f32.mrf.mxu0
  %v3841 = vadd.f32 %v3708, %v3840
  %3842 = vmatmul.bf16.gmra.mxu0 %v3476
  %v3843 = vpop.f32.mrf.mxu0
  %v3844 = vadd.f32 %v3711, %v3843
  %v3845 = vpop.f32.mrf.mxu0
  %v3846 = vadd.f32 %v3713, %v3845
  %3847 = vmatmul.bf16.gmra.mxu0 %v3479
  %v3848 = vpop.f32.mrf.mxu0
  %v3849 = vadd.f32 %v3716, %v3848
  %v3850 = vpop.f32.mrf.mxu0
  %v3851 = vadd.f32 %v3718, %v3850
  %3852 = vmatmul.bf16.gmra.mxu0 %v3482
  %v3853 = vpop.f32.mrf.mxu0
  %v3854 = vadd.f32 %v3721, %v3853
  %v3855 = vpop.f32.mrf.mxu0
  %v3856 = vadd.f32 %v3723, %v3855
  %3857 = vmatmul.bf16.gmra.mxu0 %v3485
  %v3858 = vpop.f32.mrf.mxu0
  %v3859 = vadd.f32 %v3726, %v3858
  %v3860 = vpop.f32.mrf.mxu0
  %v3861 = vadd.f32 %v3728, %v3860
  %3862 = vmatmul.bf16.gmra.mxu0 %v3488
  %v3863 = vpop.f32.mrf.mxu0
  %v3864 = vadd.f32 %v3731, %v3863
  %v3865 = vpop.f32.mrf.mxu0
  %v3866 = vadd.f32 %v3733, %v3865
  %3867 = vmatmul.bf16.gmra.mxu0 %v3491
  %v3868 = vpop.f32.mrf.mxu0
  %v3869 = vadd.f32 %v3736, %v3868
  %v3870 = vpop.f32.mrf.mxu0
  %v3871 = vadd.f32 %v3738, %v3870
  %3872 = vmatmul.bf16.gmra.mxu0 %v3494
  %v3873 = vpop.f32.mrf.mxu0
  %v3874 = vadd.f32 %v3741, %v3873
  %v3875 = vpop.f32.mrf.mxu0
  %v3876 = vadd.f32 %v3743, %v3875
  %3877 = vmatmul.bf16.gmra.mxu0 %v3497
  %v3878 = vpop.f32.mrf.mxu0
  %v3879 = vadd.f32 %v3746, %v3878
  %v3880 = vpop.f32.mrf.mxu0
  %v3881 = vadd.f32 %v3748, %v3880
  %3882 = vmatmul.bf16.gmra.mxu0 %v3500
  %v3883 = vpop.f32.mrf.mxu0
  %v3884 = vadd.f32 %v3751, %v3883
  %v3885 = vpop.f32.mrf.mxu0
  %v3886 = vadd.f32 %v3753, %v3885
  %3887 = vmatmul.bf16.gmra.mxu0 %v3503
  %v3888 = vpop.f32.mrf.mxu0
  %v3889 = vadd.f32 %v3756, %v3888
  %v3890 = vpop.f32.mrf.mxu0
  %v3891 = vadd.f32 %v3758, %v3890
  %3892 = vmatmul.bf16.gmra.mxu0 %v3506
  %v3893 = vpop.f32.mrf.mxu0
  %v3894 = vadd.f32 %v3761, %v3893
  %v3895 = vpop.f32.mrf.mxu0
  %v3896 = vadd.f32 %v3763, %v3895
  %3897 = vmatmul.bf16.gmra.mxu0 %v3509
  %v3898 = vpop.f32.mrf.mxu0
  %v3899 = vadd.f32 %v3766, %v3898
  %v3900 = vpop.f32.mrf.mxu0
  %3901 = vdwg.mxu0
  %3902 = vmatpush.bf16.msra.mxu0 0
  %3903 = vmatpush.bf16.msra.mxu0 0
  %3904 = vmatpush.bf16.msra.mxu0 0
  %3905 = vmatpush.bf16.msra.mxu0 0
  %3906 = vmatpush.bf16.msra.mxu0 0
  %3907 = vmatpush.bf16.msra.mxu0 0
  %3908 = vmatpush.bf16.msra.mxu0 %v617
  %3909 = vmatpush.bf16.msra.mxu0 %v616
  %3910 = vmatmul.bf16.gmra.mxu0 %v3562
  %v3911 = vpop.f32.mrf.mxu0
  %v3912 = vadd.f32 %v3779, %v3911
  %v3913 = vpop.f32.mrf.mxu0
  %v3914 = vadd.f32 %v3781, %v3913
  %3915 = vmatmul.bf16.gmra.mxu0 %v3565
  %v3916 = vpop.f32.mrf.mxu0
  %v3917 = vadd.f32 %v3784, %v3916
  %v3918 = vpop.f32.mrf.mxu0
  %v3919 = vadd.f32 %v3786, %v3918
  %3920 = vmatmul.bf16.gmra.mxu0 %v3568
  %v3921 = vpop.f32.mrf.mxu0
  %v3922 = vadd.f32 %v3789, %v3921
  %v3923 = vpop.f32.mrf.mxu0
  %v3924 = vadd.f32 %v3791, %v3923
  %3925 = vmatmul.bf16.gmra.mxu0 %v3571
  %v3926 = vpop.f32.mrf.mxu0
  %v3927 = vadd.f32 %v3794, %v3926
  %v3928 = vpop.f32.mrf.mxu0
  %v3929 = vadd.f32 %v3796, %v3928
  %3930 = vmatmul.bf16.gmra.mxu0 %v3574
  %v3931 = vpop.f32.mrf.mxu0
  %v3932 = vadd.f32 %v3799, %v3931
  %v3933 = vpop.f32.mrf.mxu0
  %v3934 = vadd.f32 %v3801, %v3933
  %3935 = vmatmul.bf16.gmra.mxu0 %v3577
  %v3936 = vpop.f32.mrf.mxu0
  %v3937 = vadd.f32 %v3804, %v3936
  %v3938 = vpop.f32.mrf.mxu0
  %v3939 = vadd.f32 %v3806, %v3938
  %3940 = vmatmul.bf16.gmra.mxu0 %v3580
  %v3941 = vpop.f32.mrf.mxu0
  %v3942 = vadd.f32 %v3809, %v3941
  %v3943 = vpop.f32.mrf.mxu0
  %v3944 = vadd.f32 %v3811, %v3943
  %3945 = vmatmul.bf16.gmra.mxu0 %v3583
  %v3946 = vpop.f32.mrf.mxu0
  %v3947 = vadd.f32 %v3814, %v3946
  %v3948 = vpop.f32.mrf.mxu0
  %v3949 = vadd.f32 %v3816, %v3948
  %3950 = vmatmul.bf16.gmra.mxu0 %v3586
  %v3951 = vpop.f32.mrf.mxu0
  %v3952 = vadd.f32 %v3819, %v3951
  %v3953 = vpop.f32.mrf.mxu0
  %v3954 = vadd.f32 %v3821, %v3953
  %3955 = vmatmul.bf16.gmra.mxu0 %v3589
  %v3956 = vpop.f32.mrf.mxu0
  %v3957 = vadd.f32 %v3824, %v3956
  %v3958 = vpop.f32.mrf.mxu0
  %v3959 = vadd.f32 %v3826, %v3958
  %3960 = vmatmul.bf16.gmra.mxu0 %v3592
  %v3961 = vpop.f32.mrf.mxu0
  %v3962 = vadd.f32 %v3829, %v3961
  %v3963 = vpop.f32.mrf.mxu0
  %v3964 = vadd.f32 %v3831, %v3963
  %3965 = vmatmul.bf16.gmra.mxu0 %v3595
  %v3966 = vpop.f32.mrf.mxu0
  %v3967 = vadd.f32 %v3834, %v3966
  %v3968 = vpop.f32.mrf.mxu0
  %v3969 = vadd.f32 %v3836, %v3968
  %3970 = vmatmul.bf16.gmra.mxu0 %v3598
  %v3971 = vpop.f32.mrf.mxu0
  %v3972 = vadd.f32 %v3839, %v3971
  %v3973 = vpop.f32.mrf.mxu0
  %v3974 = vadd.f32 %v3841, %v3973
  %3975 = vmatmul.bf16.gmra.mxu0 %v3601
  %v3976 = vpop.f32.mrf.mxu0
  %v3977 = vadd.f32 %v3844, %v3976
  %v3978 = vpop.f32.mrf.mxu0
  %v3979 = vadd.f32 %v3846, %v3978
  %3980 = vmatmul.bf16.gmra.mxu0 %v3604
  %v3981 = vpop.f32.mrf.mxu0
  %v3982 = vadd.f32 %v3849, %v3981
  %v3983 = vpop.f32.mrf.mxu0
  %v3984 = vadd.f32 %v3851, %v3983
  %3985 = vmatmul.bf16.gmra.mxu0 %v3607
  %v3986 = vpop.f32.mrf.mxu0
  %v3987 = vadd.f32 %v3854, %v3986
  %v3988 = vpop.f32.mrf.mxu0
  %v3989 = vadd.f32 %v3856, %v3988
  %3990 = vmatmul.bf16.gmra.mxu0 %v3610
  %v3991 = vpop.f32.mrf.mxu0
  %v3992 = vadd.f32 %v3859, %v3991
  %v3993 = vpop.f32.mrf.mxu0
  %v3994 = vadd.f32 %v3861, %v3993
  %3995 = vmatmul.bf16.gmra.mxu0 %v3613
  %v3996 = vpop.f32.mrf.mxu0
  %v3997 = vadd.f32 %v3864, %v3996
  %v3998 = vpop.f32.mrf.mxu0
  %v3999 = vadd.f32 %v3866, %v3998
  %4000 = vmatmul.bf16.gmra.mxu0 %v3616
  %v4001 = vpop.f32.mrf.mxu0
  %v4002 = vadd.f32 %v3869, %v4001
  %v4003 = vpop.f32.mrf.mxu0
  %v4004 = vadd.f32 %v3871, %v4003
  %4005 = vmatmul.bf16.gmra.mxu0 %v3619
  %v4006 = vpop.f32.mrf.mxu0
  %v4007 = vadd.f32 %v3874, %v4006
  %v4008 = vpop.f32.mrf.mxu0
  %v4009 = vadd.f32 %v3876, %v4008
  %4010 = vmatmul.bf16.gmra.mxu0 %v3622
  %v4011 = vpop.f32.mrf.mxu0
  %v4012 = vadd.f32 %v3879, %v4011
  %v4013 = vpop.f32.mrf.mxu0
  %v4014 = vadd.f32 %v3881, %v4013
  %4015 = vmatmul.bf16.gmra.mxu0 %v3625
  %v4016 = vpop.f32.mrf.mxu0
  %v4017 = vadd.f32 %v3884, %v4016
  %v4018 = vpop.f32.mrf.mxu0
  %v4019 = vadd.f32 %v3886, %v4018
  %4020 = vmatmul.bf16.gmra.mxu0 %v3628
  %v4021 = vpop.f32.mrf.mxu0
  %v4022 = vadd.f32 %v3889, %v4021
  %v4023 = vpop.f32.mrf.mxu0
  %v4024 = vadd.f32 %v3891, %v4023
  %4025 = vmatmul.bf16.gmra.mxu0 %v3631
  %v4026 = vpop.f32.mrf.mxu0
  %v4027 = vadd.f32 %v3894, %v4026
  %v4028 = vpop.f32.mrf.mxu0
  %v4029 = vadd.f32 %v3896, %v4028
  %4030 = vmatmul.bf16.gmra.mxu0 %v3634
  %v4031 = vpop.f32.mrf.mxu0
  %v4032 = vadd.f32 %v3899, %v4031
  %v4033 = vpop.f32.mrf.mxu0
  %4034 = vdwg.mxu0
  %v4035 = vmax.f32 %v3044, %v3912
  %v4036 = vmax.f32 %v3045, %v3914
  %v4037 = vmax.f32 %v3046, %v3917
  %v4038 = vmax.f32 %v3047, %v3919
  %v4039 = vmax.f32 %v3048, %v3922
  %v4040 = vmax.f32 %v3049, %v3924
  %v4041 = vmax.f32 %v3050, %v3927
  %v4042 = vmax.f32 %v3051, %v3929
  %v4043 = vmax.f32 %v3052, %v3932
  %v4044 = vmax.f32 %v3053, %v3934
  %v4045 = vmax.f32 %v3054, %v3937
  %v4046 = vmax.f32 %v3055, %v3939
  %v4047 = vmax.f32 %v3056, %v3942
  %v4048 = vmax.f32 %v3057, %v3944
  %v4049 = vmax.f32 %v3058, %v3947
  %v4050 = vmax.f32 %v3059, %v3949
  %v4051 = vmax.f32 %v3060, %v3952
  %v4052 = vmax.f32 %v3061, %v3954
  %v4053 = vmax.f32 %v3062, %v3957
  %v4054 = vmax.f32 %v3063, %v3959
  %v4055 = vmax.f32 %v3064, %v3962
  %v4056 = vmax.f32 %v3065, %v3964
  %v4057 = vmax.f32 %v3066, %v3967
  %v4058 = vmax.f32 %v3067, %v3969
  %v4059 = vmax.f32 %v3068, %v3972
  %v4060 = vmax.f32 %v3069, %v3974
  %v4061 = vmax.f32 %v3070, %v3977
  %v4062 = vmax.f32 %v3071, %v3979
  %v4063 = vmax.f32 %v3072, %v3982
  %v4064 = vmax.f32 %v3073, %v3984
  %v4065 = vmax.f32 %v3074, %v3987
  %v4066 = vmax.f32 %v3075, %v3989
  %v4067 = vmax.f32 %v3076, %v3992
  %v4068 = vmax.f32 %v3077, %v3994
  %v4069 = vmax.f32 %v3078, %v3997
  %v4070 = vmax.f32 %v3079, %v3999
  %v4071 = vmax.f32 %v3080, %v4002
  %v4072 = vmax.f32 %v3081, %v4004
  %v4073 = vmax.f32 %v3082, %v4007
  %v4074 = vmax.f32 %v3083, %v4009
  %v4075 = vmax.f32 %v3084, %v4012
  %v4076 = vmax.f32 %v3085, %v4014
  %v4077 = vmax.f32 %v3086, %v4017
  %v4078 = vmax.f32 %v3087, %v4019
  %v4079 = vmax.f32 %v3088, %v4022
  %v4080 = vmax.f32 %v3089, %v4024
  %v4081 = vmax.f32 %v3090, %v4027
  %v4082 = vmax.f32 %v3091, %v4029
  %v4083 = vmax.f32 %v3092, %v4032
  %v4084 = vld [vmem:[%s5] sm:$0x1]
  %v4086 = vperm.slane %v4084, 0
  %v4088 = vadd.f32 %v4035, %v4086
  %v4089 = vadd.f32 %v4036, %v4086
  %v4090 = vadd.f32 %v4037, %v4086
  %v4091 = vadd.f32 %v4038, %v4086
  %v4092 = vadd.f32 %v4039, %v4086
  %v4093 = vadd.f32 %v4040, %v4086
  %v4094 = vadd.f32 %v4041, %v4086
  %v4095 = vadd.f32 %v4042, %v4086
  %v4096 = vadd.f32 %v4043, %v4086
  %v4097 = vadd.f32 %v4044, %v4086
  %v4098 = vadd.f32 %v4045, %v4086
  %v4099 = vadd.f32 %v4046, %v4086
  %v4100 = vadd.f32 %v4047, %v4086
  %v4101 = vadd.f32 %v4048, %v4086
  %v4102 = vadd.f32 %v4049, %v4086
  %v4103 = vadd.f32 %v4050, %v4086
  %v4104 = vadd.f32 %v4051, %v4086
  %v4105 = vadd.f32 %v4052, %v4086
  %v4106 = vadd.f32 %v4053, %v4086
  %v4107 = vadd.f32 %v4054, %v4086
  %v4108 = vadd.f32 %v4055, %v4086
  %v4109 = vadd.f32 %v4056, %v4086
  %v4110 = vadd.f32 %v4057, %v4086
  %v4111 = vadd.f32 %v4058, %v4086
  %v4112 = vadd.f32 %v4059, %v4086
  %v4113 = vadd.f32 %v4060, %v4086
  %v4114 = vadd.f32 %v4061, %v4086
  %v4115 = vadd.f32 %v4062, %v4086
  %v4116 = vadd.f32 %v4063, %v4086
  %v4117 = vadd.f32 %v4064, %v4086
  %v4118 = vadd.f32 %v4065, %v4086
  %v4119 = vadd.f32 %v4066, %v4086
  %v4120 = vadd.f32 %v4067, %v4086
  %v4121 = vadd.f32 %v4068, %v4086
  %v4122 = vadd.f32 %v4069, %v4086
  %v4123 = vadd.f32 %v4070, %v4086
  %v4124 = vadd.f32 %v4071, %v4086
  %v4125 = vadd.f32 %v4072, %v4086
  %v4126 = vadd.f32 %v4073, %v4086
  %v4127 = vadd.f32 %v4074, %v4086
  %v4128 = vadd.f32 %v4075, %v4086
  %v4129 = vadd.f32 %v4076, %v4086
  %v4130 = vadd.f32 %v4077, %v4086
  %v4131 = vadd.f32 %v4078, %v4086
  %v4132 = vadd.f32 %v4079, %v4086
  %v4133 = vadd.f32 %v4080, %v4086
  %v4134 = vadd.f32 %v4081, %v4086
  %v4135 = vadd.f32 %v4082, %v4086
  %v4136 = vadd.f32 %v4083, %v4086
  %v4137 = vmax.f32 %v4088, 0.0
  %v4138 = vmax.f32 %v4089, 0.0
  %v4139 = vmax.f32 %v4090, 0.0
  %v4140 = vmax.f32 %v4091, 0.0
  %v4141 = vmax.f32 %v4092, 0.0
  %v4142 = vmax.f32 %v4093, 0.0
  %v4143 = vmax.f32 %v4094, 0.0
  %v4144 = vmax.f32 %v4095, 0.0
  %v4145 = vmax.f32 %v4096, 0.0
  %v4146 = vmax.f32 %v4097, 0.0
  %v4147 = vmax.f32 %v4098, 0.0
  %v4148 = vmax.f32 %v4099, 0.0
  %v4149 = vmax.f32 %v4100, 0.0
  %v4150 = vmax.f32 %v4101, 0.0
  %v4151 = vmax.f32 %v4102, 0.0
  %v4152 = vmax.f32 %v4103, 0.0
  %v4153 = vmax.f32 %v4104, 0.0
  %v4154 = vmax.f32 %v4105, 0.0
  %v4155 = vmax.f32 %v4106, 0.0
  %v4156 = vmax.f32 %v4107, 0.0
  %v4157 = vmax.f32 %v4108, 0.0
  %v4158 = vmax.f32 %v4109, 0.0
  %v4159 = vmax.f32 %v4110, 0.0
  %v4160 = vmax.f32 %v4111, 0.0
  %v4161 = vmax.f32 %v4112, 0.0
  %v4162 = vmax.f32 %v4113, 0.0
  %v4163 = vmax.f32 %v4114, 0.0
  %v4164 = vmax.f32 %v4115, 0.0
  %v4165 = vmax.f32 %v4116, 0.0
  %v4166 = vmax.f32 %v4117, 0.0
  %v4167 = vmax.f32 %v4118, 0.0
  %v4168 = vmax.f32 %v4119, 0.0
  %v4169 = vmax.f32 %v4120, 0.0
  %v4170 = vmax.f32 %v4121, 0.0
  %v4171 = vmax.f32 %v4122, 0.0
  %v4172 = vmax.f32 %v4123, 0.0
  %v4173 = vmax.f32 %v4124, 0.0
  %v4174 = vmax.f32 %v4125, 0.0
  %v4175 = vmax.f32 %v4126, 0.0
  %v4176 = vmax.f32 %v4127, 0.0
  %v4177 = vmax.f32 %v4128, 0.0
  %v4178 = vmax.f32 %v4129, 0.0
  %v4179 = vmax.f32 %v4130, 0.0
  %v4180 = vmax.f32 %v4131, 0.0
  %v4181 = vmax.f32 %v4132, 0.0
  %v4182 = vmax.f32 %v4133, 0.0
  %v4183 = vmax.f32 %v4134, 0.0
  %v4184 = vmax.f32 %v4135, 0.0
  %v4185 = vmax.f32 %v4136, 0.0
  %v4186 = vpack.c.bf16 %v4137, %v4137
  %v4187 = vpack.c.bf16 %v4138, %v4138
  %v4188 = vpack.c.bf16 %v4139, %v4139
  %v4189 = vpack.c.bf16 %v4140, %v4140
  %v4190 = vpack.c.bf16 %v4141, %v4141
  %v4191 = vpack.c.bf16 %v4142, %v4142
  %v4192 = vpack.c.bf16 %v4143, %v4143
  %v4193 = vpack.c.bf16 %v4144, %v4144
  %v4194 = vpack.c.bf16 %v4145, %v4145
  %v4195 = vpack.c.bf16 %v4146, %v4146
  %v4196 = vpack.c.bf16 %v4147, %v4147
  %v4197 = vpack.c.bf16 %v4148, %v4148
  %v4198 = vpack.c.bf16 %v4149, %v4149
  %v4199 = vpack.c.bf16 %v4150, %v4150
  %v4200 = vpack.c.bf16 %v4151, %v4151
  %v4201 = vpack.c.bf16 %v4152, %v4152
  %v4202 = vpack.c.bf16 %v4153, %v4153
  %v4203 = vpack.c.bf16 %v4154, %v4154
  %v4204 = vpack.c.bf16 %v4155, %v4155
  %v4205 = vpack.c.bf16 %v4156, %v4156
  %v4206 = vpack.c.bf16 %v4157, %v4157
  %v4207 = vpack.c.bf16 %v4158, %v4158
  %v4208 = vpack.c.bf16 %v4159, %v4159
  %v4209 = vpack.c.bf16 %v4160, %v4160
  %v4210 = vpack.c.bf16 %v4161, %v4161
  %v4211 = vpack.c.bf16 %v4162, %v4162
  %v4212 = vpack.c.bf16 %v4163, %v4163
  %v4213 = vpack.c.bf16 %v4164, %v4164
  %v4214 = vpack.c.bf16 %v4165, %v4165
  %v4215 = vpack.c.bf16 %v4166, %v4166
  %v4216 = vpack.c.bf16 %v4167, %v4167
  %v4217 = vpack.c.bf16 %v4168, %v4168
  %v4218 = vpack.c.bf16 %v4169, %v4169
  %v4219 = vpack.c.bf16 %v4170, %v4170
  %v4220 = vpack.c.bf16 %v4171, %v4171
  %v4221 = vpack.c.bf16 %v4172, %v4172
  %v4222 = vpack.c.bf16 %v4173, %v4173
  %v4223 = vpack.c.bf16 %v4174, %v4174
  %v4224 = vpack.c.bf16 %v4175, %v4175
  %v4225 = vpack.c.bf16 %v4176, %v4176
  %v4226 = vpack.c.bf16 %v4177, %v4177
  %v4227 = vpack.c.bf16 %v4178, %v4178
  %v4228 = vpack.c.bf16 %v4179, %v4179
  %v4229 = vpack.c.bf16 %v4180, %v4180
  %v4230 = vpack.c.bf16 %v4181, %v4181
  %v4231 = vpack.c.bf16 %v4182, %v4182
  %v4232 = vpack.c.bf16 %v4183, %v4183
  %v4233 = vpack.c.bf16 %v4184, %v4184
  %v4234 = vpack.c.bf16 %v4185, %v4185
  %vm4235 = vcmask 519168
  %4236 = vst.msk [vmem:[%s6] sm:$0xf] %vm4235, %v4186
  %4237 = vst.msk [vmem:[%s6 + $0x4] sm:$0xf] %vm4235, %v4187
  %4238 = vst.msk [vmem:[%s6 + $0x8] sm:$0xf] %vm4235, %v4188
  %4239 = vst.msk [vmem:[%s6 + $0xc] sm:$0xf] %vm4235, %v4189
  %4240 = vst.msk [vmem:[%s6 + $0x10] sm:$0xf] %vm4235, %v4190
  %4241 = vst.msk [vmem:[%s6 + $0x14] sm:$0xf] %vm4235, %v4191
  %4242 = vst.msk [vmem:[%s6 + $0x18] sm:$0xf] %vm4235, %v4192
  %4243 = vst.msk [vmem:[%s6 + $0x1c] sm:$0xf] %vm4235, %v4193
  %4244 = vst.msk [vmem:[%s6 + $0x20] sm:$0xf] %vm4235, %v4194
  %4245 = vst.msk [vmem:[%s6 + $0x24] sm:$0xf] %vm4235, %v4195
  %4246 = vst.msk [vmem:[%s6 + $0x28] sm:$0xf] %vm4235, %v4196
  %4247 = vst.msk [vmem:[%s6 + $0x2c] sm:$0xf] %vm4235, %v4197
  %4248 = vst.msk [vmem:[%s6 + $0x30] sm:$0xf] %vm4235, %v4198
  %4249 = vst.msk [vmem:[%s6 + $0x34] sm:$0xf] %vm4235, %v4199
  %4250 = vst.msk [vmem:[%s6 + $0x38] sm:$0xf] %vm4235, %v4200
  %4251 = vst.msk [vmem:[%s6 + $0x3c] sm:$0xf] %vm4235, %v4201
  %4252 = vst.msk [vmem:[%s6 + $0x40] sm:$0xf] %vm4235, %v4202
  %4253 = vst.msk [vmem:[%s6 + $0x44] sm:$0xf] %vm4235, %v4203
  %4254 = vst.msk [vmem:[%s6 + $0x48] sm:$0xf] %vm4235, %v4204
  %4255 = vst.msk [vmem:[%s6 + $0x4c] sm:$0xf] %vm4235, %v4205
  %4256 = vst.msk [vmem:[%s6 + $0x50] sm:$0xf] %vm4235, %v4206
  %4257 = vst.msk [vmem:[%s6 + $0x54] sm:$0xf] %vm4235, %v4207
  %4258 = vst.msk [vmem:[%s6 + $0x58] sm:$0xf] %vm4235, %v4208
  %4259 = vst.msk [vmem:[%s6 + $0x5c] sm:$0xf] %vm4235, %v4209
  %4260 = vst.msk [vmem:[%s6 + $0x60] sm:$0xf] %vm4235, %v4210
  %4261 = vst.msk [vmem:[%s6 + $0x64] sm:$0xf] %vm4235, %v4211
  %4262 = vst.msk [vmem:[%s6 + $0x68] sm:$0xf] %vm4235, %v4212
  %4263 = vst.msk [vmem:[%s6 + $0x6c] sm:$0xf] %vm4235, %v4213
  %4264 = vst.msk [vmem:[%s6 + $0x70] sm:$0xf] %vm4235, %v4214
  %4265 = vst.msk [vmem:[%s6 + $0x74] sm:$0xf] %vm4235, %v4215
  %4266 = vst.msk [vmem:[%s6 + $0x78] sm:$0xf] %vm4235, %v4216
  %4267 = vst.msk [vmem:[%s6 + $0x7c] sm:$0xf] %vm4235, %v4217
  %4268 = vst.msk [vmem:[%s6 + $0x80] sm:$0xf] %vm4235, %v4218
  %4269 = vst.msk [vmem:[%s6 + $0x84] sm:$0xf] %vm4235, %v4219
  %4270 = vst.msk [vmem:[%s6 + $0x88] sm:$0xf] %vm4235, %v4220
  %4271 = vst.msk [vmem:[%s6 + $0x8c] sm:$0xf] %vm4235, %v4221
  %4272 = vst.msk [vmem:[%s6 + $0x90] sm:$0xf] %vm4235, %v4222
  %4273 = vst.msk [vmem:[%s6 + $0x94] sm:$0xf] %vm4235, %v4223
  %4274 = vst.msk [vmem:[%s6 + $0x98] sm:$0xf] %vm4235, %v4224
  %4275 = vst.msk [vmem:[%s6 + $0x9c] sm:$0xf] %vm4235, %v4225
  %4276 = vst.msk [vmem:[%s6 + $0xa0] sm:$0xf] %vm4235, %v4226
  %4277 = vst.msk [vmem:[%s6 + $0xa4] sm:$0xf] %vm4235, %v4227
  %4278 = vst.msk [vmem:[%s6 + $0xa8] sm:$0xf] %vm4235, %v4228
  %4279 = vst.msk [vmem:[%s6 + $0xac] sm:$0xf] %vm4235, %v4229
  %4280 = vst.msk [vmem:[%s6 + $0xb0] sm:$0xf] %vm4235, %v4230
  %4281 = vst.msk [vmem:[%s6 + $0xb4] sm:$0xf] %vm4235, %v4231
  %4282 = vst.msk [vmem:[%s6 + $0xb8] sm:$0xf] %vm4235, %v4232
  %4283 = vst.msk [vmem:[%s6 + $0xbc] sm:$0xf] %vm4235, %v4233
  %4284 = vst.msk [vmem:[%s6 + $0xc0] sm:$0xf] %vm4235, %v4234
  // Predicated region
  $region26: #{kkkc_forward.6} parent=0 // pred_check
    _
  $region27: #{kkkc_forward.6} parent=0 // pred_check_branch
    %4286 = sbr.rel (0) target = $region29
  $region28: #{kkkc_forward.6} parent=0 // pred_region
    _
  $region29: #{kkkc_forward.6} parent=0 // pred_fallthru
    _
  // Predicated region
  $region30: #{kkkc_forward.6} parent=0 // pred_check
    _
  $region31: #{kkkc_forward.6} parent=0 // pred_check_branch
    %4288 = sbr.rel (0) target = $region33
  $region32: #{kkkc_forward.6} parent=0 // pred_region
    _
  $region33: #{kkkc_forward.6} parent=0 // pred_fallthru
    _

// kernel: kkkc_forward.7
$region0: #{kkkc_forward.7}
  #allocation0 [shape = 'u32[]', space=smem, size = 0x4, offset = 0x4, fixed_abs, tag = 'smem constant byte address 0x4 - core index']
  #allocation1 [shape = 'u32[72,128]{1,0:T(1,128)}', space=vmem, size = 0x9000, scoped, tag = 'internal scratch']
  %s0 = inlined_call_operand.vmem [shape: bf16[72,576], index: 0, kind: input, shape index: {}]
  %s1 = inlined_call_operand.vmem [shape: bf16[72,576], index: 1, kind: input, shape index: {}]
  %s2 = inlined_call_operand.vmem [shape: bf16[72,576], index: 2, kind: input, shape index: {}]
  %s3 = inlined_call_operand.vmem [shape: bf16[72,576], index: 3, kind: input, shape index: {}]
  %s4 = inlined_call_operand.vmem [shape: bf16[576,96], index: 4, kind: input, shape index: {}]
  %s5 = inlined_call_operand.vmem [shape: f32[1,96], index: 5, kind: input, shape index: {}]
  %s6 = inlined_call_operand.vmem [shape: f32[1,96], index: 6, kind: input, shape index: {}]
  %s7 = inlined_call_operand.vmem [shape: bf16[72,96], index: 7, kind: output, shape index: {}]
  %s8 = sld [smem:[#allocation0]]
  $region38: #{kkkc_forward.7} parent=0
    _
  %s10 = ssub.s32 1, %s8
  %s11 = scalar_select 0, %s10, %s8
  // Predicated region
  $region2: #{kkkc_forward.7} parent=0 // pred_check
    _
  $region3: #{kkkc_forward.7} parent=0 // pred_check_branch
    %13 = sbr.rel (0) target = $region5
  $region4: #{kkkc_forward.7} parent=0 // pred_region
    _
  $region5: #{kkkc_forward.7} parent=0 // pred_fallthru
    _
  // Predicated region
  $region6: #{kkkc_forward.7} parent=0 // pred_check
    _
  $region7: #{kkkc_forward.7} parent=0 // pred_check_branch
    %15 = sbr.rel (0) target = $region9
  $region8: #{kkkc_forward.7} parent=0 // pred_region
    _
  $region9: #{kkkc_forward.7} parent=0 // pred_fallthru
    _
  // Predicated region
  $region10: #{kkkc_forward.7} parent=0 // pred_check
    _
  $region11: #{kkkc_forward.7} parent=0 // pred_check_branch
    %17 = sbr.rel (0) target = $region13
  $region12: #{kkkc_forward.7} parent=0 // pred_region
    _
  $region13: #{kkkc_forward.7} parent=0 // pred_fallthru
    _
  // Predicated region
  $region14: #{kkkc_forward.7} parent=0 // pred_check
    _
  $region15: #{kkkc_forward.7} parent=0 // pred_check_branch
    %19 = sbr.rel (0) target = $region17
  $region16: #{kkkc_forward.7} parent=0 // pred_region
    _
  $region17: #{kkkc_forward.7} parent=0 // pred_fallthru
    _
  // Predicated region
  $region18: #{kkkc_forward.7} parent=0 // pred_check
    _
  $region19: #{kkkc_forward.7} parent=0 // pred_check_branch
    %21 = sbr.rel (0) target = $region21
  $region20: #{kkkc_forward.7} parent=0 // pred_region
    _
  $region21: #{kkkc_forward.7} parent=0 // pred_fallthru
    _
  // Predicated region
  $region22: #{kkkc_forward.7} parent=0 // pred_check
    _
  $region23: #{kkkc_forward.7} parent=0 // pred_check_branch
    %23 = sbr.rel (0) target = $region25
  $region24: #{kkkc_forward.7} parent=0 // pred_region
    _
  $region25: #{kkkc_forward.7} parent=0 // pred_fallthru
    _
  // Predicated region
  $region26: #{kkkc_forward.7} parent=0 // pred_check
    _
  $region27: #{kkkc_forward.7} parent=0 // pred_check_branch
    %25 = sbr.rel (0) target = $region29
  $region28: #{kkkc_forward.7} parent=0 // pred_region
    _
  $region29: #{kkkc_forward.7} parent=0 // pred_fallthru
    _
  %v27 = vld [vmem:[%s4] sm:$0xf]
  %v28 = vld [vmem:[%s4 + $0x4] sm:$0xf]
  %v29 = vld [vmem:[%s4 + $0x8] sm:$0xf]
  %v30 = vld [vmem:[%s4 + $0xc] sm:$0xf]
  %v31 = vld [vmem:[%s4 + $0x10] sm:$0xf]
  %v32 = vld [vmem:[%s4 + $0x14] sm:$0xf]
  %v33 = vld [vmem:[%s4 + $0x18] sm:$0xf]
  %v34 = vld [vmem:[%s4 + $0x1c] sm:$0xf]
  %v35 = vld [vmem:[%s4 + $0x20] sm:$0xf]
  %v36 = vld [vmem:[%s4 + $0x24] sm:$0xf]
  %v37 = vld [vmem:[%s4 + $0x28] sm:$0xf]
  %v38 = vld [vmem:[%s4 + $0x2c] sm:$0xf]
  %v39 = vld [vmem:[%s4 + $0x30] sm:$0xf]
  %v40 = vld [vmem:[%s4 + $0x34] sm:$0xf]
  %v41 = vld [vmem:[%s4 + $0x38] sm:$0xf]
  %v42 = vld [vmem:[%s4 + $0x3c] sm:$0xf]
  %v43 = vld [vmem:[%s4 + $0x40] sm:$0xf]
  %v44 = vld [vmem:[%s4 + $0x44] sm:$0xf]
  %v45 = vld [vmem:[%s4 + $0x48] sm:$0xf]
  %v46 = vld [vmem:[%s4 + $0x4c] sm:$0xf]
  %v47 = vld [vmem:[%s4 + $0x50] sm:$0xf]
  %v48 = vld [vmem:[%s4 + $0x54] sm:$0xf]
  %v49 = vld [vmem:[%s4 + $0x58] sm:$0xf]
  %v50 = vld [vmem:[%s4 + $0x5c] sm:$0xf]
  %v51 = vld [vmem:[%s4 + $0x60] sm:$0xf]
  %v52 = vld [vmem:[%s4 + $0x64] sm:$0xf]
  %v53 = vld [vmem:[%s4 + $0x68] sm:$0xf]
  %v54 = vld [vmem:[%s4 + $0x6c] sm:$0xf]
  %v55 = vld [vmem:[%s4 + $0x70] sm:$0xf]
  %v56 = vld [vmem:[%s4 + $0x74] sm:$0xf]
  %v57 = vld [vmem:[%s4 + $0x78] sm:$0xf]
  %v58 = vld [vmem:[%s4 + $0x7c] sm:$0xf]
  %v59 = vld [vmem:[%s4 + $0x80] sm:$0xf]
  %v60 = vld [vmem:[%s4 + $0x84] sm:$0xf]
  %v61 = vld [vmem:[%s4 + $0x88] sm:$0xf]
  %v62 = vld [vmem:[%s4 + $0x8c] sm:$0xf]
  %v63 = vld [vmem:[%s4 + $0x90] sm:$0xf]
  %v64 = vld [vmem:[%s4 + $0x94] sm:$0xf]
  %v65 = vld [vmem:[%s4 + $0x98] sm:$0xf]
  %v66 = vld [vmem:[%s4 + $0x9c] sm:$0xf]
  %v67 = vld [vmem:[%s4 + $0xa0] sm:$0xf]
  %v68 = vld [vmem:[%s4 + $0xa4] sm:$0xf]
  %v69 = vld [vmem:[%s4 + $0xa8] sm:$0xf]
  %v70 = vld [vmem:[%s4 + $0xac] sm:$0xf]
  %v71 = vld [vmem:[%s4 + $0xb0] sm:$0xf]
  %v72 = vld [vmem:[%s4 + $0xb4] sm:$0xf]
  %v73 = vld [vmem:[%s4 + $0xb8] sm:$0xf]
  %v74 = vld [vmem:[%s4 + $0xbc] sm:$0xf]
  %v75 = vld [vmem:[%s4 + $0xc0] sm:$0xf]
  %v76 = vld [vmem:[%s4 + $0xc4] sm:$0xf]
  %v77 = vld [vmem:[%s4 + $0xc8] sm:$0xf]
  %v78 = vld [vmem:[%s4 + $0xcc] sm:$0xf]
  %v79 = vld [vmem:[%s4 + $0xd0] sm:$0xf]
  %v80 = vld [vmem:[%s4 + $0xd4] sm:$0xf]
  %v81 = vld [vmem:[%s4 + $0xd8] sm:$0xf]
  %v82 = vld [vmem:[%s4 + $0xdc] sm:$0xf]
  %v83 = vld [vmem:[%s4 + $0xe0] sm:$0xf]
  %v84 = vld [vmem:[%s4 + $0xe4] sm:$0xf]
  %v85 = vld [vmem:[%s4 + $0xe8] sm:$0xf]
  %v86 = vld [vmem:[%s4 + $0xec] sm:$0xf]
  %v87 = vld [vmem:[%s4 + $0xf0] sm:$0xf]
  %v88 = vld [vmem:[%s4 + $0xf4] sm:$0xf]
  %v89 = vld [vmem:[%s4 + $0xf8] sm:$0xf]
  %v90 = vld [vmem:[%s4 + $0xfc] sm:$0xf]
  %v91 = vld [vmem:[%s4 + $0x100] sm:$0xf]
  %v92 = vld [vmem:[%s4 + $0x104] sm:$0xf]
  %v93 = vld [vmem:[%s4 + $0x108] sm:$0xf]
  %v94 = vld [vmem:[%s4 + $0x10c] sm:$0xf]
  %v95 = vld [vmem:[%s4 + $0x110] sm:$0xf]
  %v96 = vld [vmem:[%s4 + $0x114] sm:$0xf]
  %v97 = vld [vmem:[%s4 + $0x118] sm:$0xf]
  %v98 = vld [vmem:[%s4 + $0x11c] sm:$0xf]
  %v99 = vld [vmem:[%s0] sm:$0xff]
  %v100 = vld [vmem:[%s0 + $0x8] sm:$0xff]
  %v101 = vld [vmem:[%s0 + $0x10] sm:$0xf]
  %v102 = vld [vmem:[%s0 + $0x14] sm:$0xff]
  %v103 = vld [vmem:[%s0 + $0x1c] sm:$0xff]
  %v104 = vld [vmem:[%s0 + $0x24] sm:$0xf]
  %v105 = vld [vmem:[%s0 + $0x28] sm:$0xff]
  %v106 = vld [vmem:[%s0 + $0x30] sm:$0xff]
  %v107 = vld [vmem:[%s0 + $0x38] sm:$0xf]
  %v108 = vld [vmem:[%s0 + $0x3c] sm:$0xff]
  %v109 = vld [vmem:[%s0 + $0x44] sm:$0xff]
  %v110 = vld [vmem:[%s0 + $0x4c] sm:$0xf]
  %v111 = vld [vmem:[%s0 + $0x50] sm:$0xff]
  %v112 = vld [vmem:[%s0 + $0x58] sm:$0xff]
  %v113 = vld [vmem:[%s0 + $0x60] sm:$0xf]
  %v114 = vld [vmem:[%s0 + $0x64] sm:$0xff]
  %v115 = vld [vmem:[%s0 + $0x6c] sm:$0xff]
  %v116 = vld [vmem:[%s0 + $0x74] sm:$0xf]
  %v117 = vld [vmem:[%s0 + $0x78] sm:$0xff]
  %v118 = vld [vmem:[%s0 + $0x80] sm:$0xff]
  %v119 = vld [vmem:[%s0 + $0x88] sm:$0xf]
  %v120 = vld [vmem:[%s0 + $0x8c] sm:$0xff]
  %v121 = vld [vmem:[%s0 + $0x94] sm:$0xff]
  %v122 = vld [vmem:[%s0 + $0x9c] sm:$0xf]
  %v123 = vld [vmem:[%s0 + $0xa0] sm:$0xff]
  %v124 = vld [vmem:[%s0 + $0xa8] sm:$0xff]
  %v125 = vld [vmem:[%s0 + $0xb0] sm:$0xf]
  %v153 = vunpack.c.l.b16 %v99
  %v154 = vunpack.c.h.b16 %v99
  %v155 = vunpack.c.l.b16 %v100
  %v156 = vunpack.c.h.b16 %v100
  %v157 = vunpack.c.l.b16 %v101
  %v158 = vunpack.c.l.b16 %v102
  %v159 = vunpack.c.h.b16 %v102
  %v160 = vunpack.c.l.b16 %v103
  %v161 = vunpack.c.h.b16 %v103
  %v162 = vunpack.c.l.b16 %v104
  %v163 = vunpack.c.l.b16 %v105
  %v164 = vunpack.c.h.b16 %v105
  %v165 = vunpack.c.l.b16 %v106
  %v166 = vunpack.c.h.b16 %v106
  %v167 = vunpack.c.l.b16 %v107
  %v168 = vunpack.c.l.b16 %v108
  %v169 = vunpack.c.h.b16 %v108
  %v170 = vunpack.c.l.b16 %v109
  %v171 = vunpack.c.h.b16 %v109
  %v172 = vunpack.c.l.b16 %v110
  %v173 = vunpack.c.l.b16 %v111
  %v174 = vunpack.c.h.b16 %v111
  %v175 = vunpack.c.l.b16 %v112
  %v176 = vunpack.c.h.b16 %v112
  %v177 = vunpack.c.l.b16 %v113
  %v178 = vunpack.c.l.b16 %v114
  %v179 = vunpack.c.h.b16 %v114
  %v180 = vunpack.c.l.b16 %v115
  %v181 = vunpack.c.h.b16 %v115
  %v182 = vunpack.c.l.b16 %v116
  %v183 = vunpack.c.l.b16 %v117
  %v184 = vunpack.c.h.b16 %v117
  %v185 = vunpack.c.l.b16 %v118
  %v186 = vunpack.c.h.b16 %v118
  %v187 = vunpack.c.l.b16 %v119
  %v188 = vunpack.c.l.b16 %v120
  %v189 = vunpack.c.h.b16 %v120
  %v190 = vunpack.c.l.b16 %v121
  %v191 = vunpack.c.h.b16 %v121
  %v192 = vunpack.c.l.b16 %v122
  %v193 = vunpack.c.l.b16 %v123
  %v194 = vunpack.c.h.b16 %v123
  %v195 = vunpack.c.l.b16 %v124
  %v196 = vunpack.c.h.b16 %v124
  %v197 = vunpack.c.l.b16 %v125
  %v198 = vpack.c.b16 %v158, %v153
  %v199 = vpack.c.b16 %v159, %v154
  %v200 = vpack.c.b16 %v160, %v155
  %v201 = vpack.c.b16 %v161, %v156
  %v202 = vpack.c.b16 %v162, %v157
  %v203 = vpack.c.b16 %v168, %v163
  %v204 = vpack.c.b16 %v169, %v164
  %v205 = vpack.c.b16 %v170, %v165
  %v206 = vpack.c.b16 %v171, %v166
  %v207 = vpack.c.b16 %v172, %v167
  %v208 = vpack.c.b16 %v178, %v173
  %v209 = vpack.c.b16 %v179, %v174
  %v210 = vpack.c.b16 %v180, %v175
  %v211 = vpack.c.b16 %v181, %v176
  %v212 = vpack.c.b16 %v182, %v177
  %v213 = vpack.c.b16 %v188, %v183
  %v214 = vpack.c.b16 %v189, %v184
  %v215 = vpack.c.b16 %v190, %v185
  %v216 = vpack.c.b16 %v191, %v186
  %v217 = vpack.c.b16 %v192, %v187
  %v218 = vpack.c.b16 %v193, %v193
  %v219 = vpack.c.b16 %v194, %v194
  %v220 = vpack.c.b16 %v195, %v195
  %v221 = vpack.c.b16 %v196, %v196
  %v222 = vpack.c.b16 %v197, %v197
  %v315 = vunpack.c.l.b16 %v27
  %v316 = vunpack.c.l.b16 %v28
  %v317 = vunpack.c.l.b16 %v29
  %v318 = vunpack.c.l.b16 %v30
  %v319 = vunpack.c.l.b16 %v31
  %v320 = vunpack.c.l.b16 %v32
  %v321 = vunpack.c.l.b16 %v33
  %v322 = vunpack.c.l.b16 %v34
  %v323 = vunpack.c.l.b16 %v35
  %v324 = vunpack.c.l.b16 %v36
  %v325 = vunpack.c.l.b16 %v37
  %v326 = vunpack.c.l.b16 %v38
  %v327 = vunpack.c.l.b16 %v39
  %v328 = vunpack.c.l.b16 %v40
  %v329 = vunpack.c.l.b16 %v41
  %v330 = vunpack.c.l.b16 %v42
  %v331 = vunpack.c.l.b16 %v43
  %v332 = vunpack.c.l.b16 %v44
  %v333 = vunpack.c.l.b16 %v45
  %v334 = vunpack.c.l.b16 %v46
  %v335 = vunpack.c.l.b16 %v47
  %v336 = vunpack.c.l.b16 %v48
  %v337 = vunpack.c.l.b16 %v49
  %v338 = vunpack.c.l.b16 %v50
  %v339 = vunpack.c.l.b16 %v51
  %v340 = vunpack.c.l.b16 %v52
  %v341 = vunpack.c.l.b16 %v53
  %v342 = vunpack.c.l.b16 %v54
  %v343 = vunpack.c.l.b16 %v55
  %v344 = vunpack.c.l.b16 %v56
  %v345 = vunpack.c.l.b16 %v57
  %v346 = vunpack.c.l.b16 %v58
  %v347 = vunpack.c.l.b16 %v59
  %v348 = vunpack.c.l.b16 %v60
  %v349 = vunpack.c.l.b16 %v61
  %v350 = vunpack.c.l.b16 %v62
  %v351 = vunpack.c.l.b16 %v63
  %v352 = vunpack.c.l.b16 %v64
  %v353 = vunpack.c.l.b16 %v65
  %v354 = vunpack.c.l.b16 %v66
  %v355 = vunpack.c.l.b16 %v67
  %v356 = vunpack.c.l.b16 %v68
  %v357 = vunpack.c.l.b16 %v69
  %v358 = vunpack.c.l.b16 %v70
  %v359 = vunpack.c.l.b16 %v71
  %v360 = vunpack.c.l.b16 %v72
  %v361 = vunpack.c.l.b16 %v73
  %v362 = vunpack.c.l.b16 %v74
  %v363 = vunpack.c.l.b16 %v75
  %v364 = vunpack.c.l.b16 %v76
  %v365 = vunpack.c.l.b16 %v77
  %v366 = vunpack.c.l.b16 %v78
  %v367 = vunpack.c.l.b16 %v79
  %v368 = vunpack.c.l.b16 %v80
  %v369 = vunpack.c.l.b16 %v81
  %v370 = vunpack.c.l.b16 %v82
  %v371 = vunpack.c.l.b16 %v83
  %v372 = vunpack.c.l.b16 %v84
  %v373 = vunpack.c.l.b16 %v85
  %v374 = vunpack.c.l.b16 %v86
  %v375 = vunpack.c.l.b16 %v87
  %v376 = vunpack.c.l.b16 %v88
  %v377 = vunpack.c.l.b16 %v89
  %v378 = vunpack.c.l.b16 %v90
  %v379 = vunpack.c.l.b16 %v91
  %v380 = vunpack.c.l.b16 %v92
  %v381 = vunpack.c.l.b16 %v93
  %v382 = vunpack.c.l.b16 %v94
  %v383 = vunpack.c.l.b16 %v95
  %v384 = vunpack.c.l.b16 %v96
  %v385 = vunpack.c.l.b16 %v97
  %v386 = vunpack.c.l.b16 %v98
  %v387 = vpack.c.b16 %v316, %v315
  %v388 = vpack.c.b16 %v318, %v317
  %v389 = vpack.c.b16 %v320, %v319
  %v390 = vpack.c.b16 %v322, %v321
  %v391 = vpack.c.b16 %v324, %v323
  %v392 = vpack.c.b16 %v326, %v325
  %v393 = vpack.c.b16 %v328, %v327
  %v394 = vpack.c.b16 %v330, %v329
  %v395 = vpack.c.b16 %v332, %v331
  %v396 = vpack.c.b16 %v334, %v333
  %v397 = vpack.c.b16 %v336, %v335
  %v398 = vpack.c.b16 %v338, %v337
  %v399 = vpack.c.b16 %v340, %v339
  %v400 = vpack.c.b16 %v342, %v341
  %v401 = vpack.c.b16 %v344, %v343
  %v402 = vpack.c.b16 %v346, %v345
  %v403 = vpack.c.b16 %v348, %v347
  %v404 = vpack.c.b16 %v350, %v349
  %v405 = vpack.c.b16 %v352, %v351
  %v406 = vpack.c.b16 %v354, %v353
  %v407 = vpack.c.b16 %v356, %v355
  %v408 = vpack.c.b16 %v358, %v357
  %v409 = vpack.c.b16 %v360, %v359
  %v410 = vpack.c.b16 %v362, %v361
  %v411 = vpack.c.b16 %v364, %v363
  %v412 = vpack.c.b16 %v366, %v365
  %v413 = vpack.c.b16 %v368, %v367
  %v414 = vpack.c.b16 %v370, %v369
  %v415 = vpack.c.b16 %v372, %v371
  %v416 = vpack.c.b16 %v374, %v373
  %v417 = vpack.c.b16 %v376, %v375
  %v418 = vpack.c.b16 %v378, %v377
  %v419 = vpack.c.b16 %v380, %v379
  %v420 = vpack.c.b16 %v382, %v381
  %v421 = vpack.c.b16 %v384, %v383
  %v422 = vpack.c.b16 %v386, %v385
  %vm459 = vcmask 523264
  %v461 = vsel %vm459, %v202, 0
  %v464 = vsel %vm459, %v207, 0
  %v467 = vsel %vm459, %v212, 0
  %v470 = vsel %vm459, %v217, 0
  %v473 = vsel %vm459, %v222, 0
  %475 = vmatpush.bf16.msra.mxu0 %v394
  %476 = vmatpush.bf16.msra.mxu0 %v393
  %477 = vmatpush.bf16.msra.mxu0 %v392
  %478 = vmatpush.bf16.msra.mxu0 %v391
  %479 = vmatpush.bf16.msra.mxu0 %v390
  %480 = vmatpush.bf16.msra.mxu0 %v389
  %481 = vmatpush.bf16.msra.mxu0 %v388
  %482 = vmatpush.bf16.msra.mxu0 %v387
  %483 = vmatmul.bf16.gmra.mxu0 %v198
  %v484 = vpop.f32.mrf.mxu0
  %v485 = vadd.f32 0.0, %v484
  %v486 = vpop.f32.mrf.mxu0
  %v487 = vadd.f32 0.0, %v486
  %488 = vmatmul.bf16.gmra.mxu0 %v203
  %v489 = vpop.f32.mrf.mxu0
  %v490 = vadd.f32 0.0, %v489
  %v491 = vpop.f32.mrf.mxu0
  %v492 = vadd.f32 0.0, %v491
  %493 = vmatmul.bf16.gmra.mxu0 %v208
  %v494 = vpop.f32.mrf.mxu0
  %v495 = vadd.f32 0.0, %v494
  %v496 = vpop.f32.mrf.mxu0
  %v497 = vadd.f32 0.0, %v496
  %498 = vmatmul.bf16.gmra.mxu0 %v213
  %v499 = vpop.f32.mrf.mxu0
  %v500 = vadd.f32 0.0, %v499
  %v501 = vpop.f32.mrf.mxu0
  %v502 = vadd.f32 0.0, %v501
  %503 = vmatmul.bf16.gmra.mxu0 %v218
  %v504 = vpop.f32.mrf.mxu0
  %v505 = vadd.f32 0.0, %v504
  %v506 = vpop.f32.mrf.mxu0
  %507 = vdwg.mxu0
  %508 = vmatpush.bf16.msra.mxu0 %v402
  %509 = vmatpush.bf16.msra.mxu0 %v401
  %510 = vmatpush.bf16.msra.mxu0 %v400
  %511 = vmatpush.bf16.msra.mxu0 %v399
  %512 = vmatpush.bf16.msra.mxu0 %v398
  %513 = vmatpush.bf16.msra.mxu0 %v397
  %514 = vmatpush.bf16.msra.mxu0 %v396
  %515 = vmatpush.bf16.msra.mxu0 %v395
  %516 = vmatmul.bf16.gmra.mxu0 %v199
  %v517 = vpop.f32.mrf.mxu0
  %v518 = vadd.f32 %v485, %v517
  %v519 = vpop.f32.mrf.mxu0
  %v520 = vadd.f32 %v487, %v519
  %521 = vmatmul.bf16.gmra.mxu0 %v204
  %v522 = vpop.f32.mrf.mxu0
  %v523 = vadd.f32 %v490, %v522
  %v524 = vpop.f32.mrf.mxu0
  %v525 = vadd.f32 %v492, %v524
  %526 = vmatmul.bf16.gmra.mxu0 %v209
  %v527 = vpop.f32.mrf.mxu0
  %v528 = vadd.f32 %v495, %v527
  %v529 = vpop.f32.mrf.mxu0
  %v530 = vadd.f32 %v497, %v529
  %531 = vmatmul.bf16.gmra.mxu0 %v214
  %v532 = vpop.f32.mrf.mxu0
  %v533 = vadd.f32 %v500, %v532
  %v534 = vpop.f32.mrf.mxu0
  %v535 = vadd.f32 %v502, %v534
  %536 = vmatmul.bf16.gmra.mxu0 %v219
  %v537 = vpop.f32.mrf.mxu0
  %v538 = vadd.f32 %v505, %v537
  %v539 = vpop.f32.mrf.mxu0
  %540 = vdwg.mxu0
  %541 = vmatpush.bf16.msra.mxu0 %v410
  %542 = vmatpush.bf16.msra.mxu0 %v409
  %543 = vmatpush.bf16.msra.mxu0 %v408
  %544 = vmatpush.bf16.msra.mxu0 %v407
  %545 = vmatpush.bf16.msra.mxu0 %v406
  %546 = vmatpush.bf16.msra.mxu0 %v405
  %547 = vmatpush.bf16.msra.mxu0 %v404
  %548 = vmatpush.bf16.msra.mxu0 %v403
  %549 = vmatmul.bf16.gmra.mxu0 %v200
  %v550 = vpop.f32.mrf.mxu0
  %v551 = vadd.f32 %v518, %v550
  %v552 = vpop.f32.mrf.mxu0
  %v553 = vadd.f32 %v520, %v552
  %554 = vmatmul.bf16.gmra.mxu0 %v205
  %v555 = vpop.f32.mrf.mxu0
  %v556 = vadd.f32 %v523, %v555
  %v557 = vpop.f32.mrf.mxu0
  %v558 = vadd.f32 %v525, %v557
  %559 = vmatmul.bf16.gmra.mxu0 %v210
  %v560 = vpop.f32.mrf.mxu0
  %v561 = vadd.f32 %v528, %v560
  %v562 = vpop.f32.mrf.mxu0
  %v563 = vadd.f32 %v530, %v562
  %564 = vmatmul.bf16.gmra.mxu0 %v215
  %v565 = vpop.f32.mrf.mxu0
  %v566 = vadd.f32 %v533, %v565
  %v567 = vpop.f32.mrf.mxu0
  %v568 = vadd.f32 %v535, %v567
  %569 = vmatmul.bf16.gmra.mxu0 %v220
  %v570 = vpop.f32.mrf.mxu0
  %v571 = vadd.f32 %v538, %v570
  %v572 = vpop.f32.mrf.mxu0
  %573 = vdwg.mxu0
  %574 = vmatpush.bf16.msra.mxu0 %v418
  %575 = vmatpush.bf16.msra.mxu0 %v417
  %576 = vmatpush.bf16.msra.mxu0 %v416
  %577 = vmatpush.bf16.msra.mxu0 %v415
  %578 = vmatpush.bf16.msra.mxu0 %v414
  %579 = vmatpush.bf16.msra.mxu0 %v413
  %580 = vmatpush.bf16.msra.mxu0 %v412
  %581 = vmatpush.bf16.msra.mxu0 %v411
  %582 = vmatmul.bf16.gmra.mxu0 %v201
  %v583 = vpop.f32.mrf.mxu0
  %v584 = vadd.f32 %v551, %v583
  %v585 = vpop.f32.mrf.mxu0
  %v586 = vadd.f32 %v553, %v585
  %587 = vmatmul.bf16.gmra.mxu0 %v206
  %v588 = vpop.f32.mrf.mxu0
  %v589 = vadd.f32 %v556, %v588
  %v590 = vpop.f32.mrf.mxu0
  %v591 = vadd.f32 %v558, %v590
  %592 = vmatmul.bf16.gmra.mxu0 %v211
  %v593 = vpop.f32.mrf.mxu0
  %v594 = vadd.f32 %v561, %v593
  %v595 = vpop.f32.mrf.mxu0
  %v596 = vadd.f32 %v563, %v595
  %597 = vmatmul.bf16.gmra.mxu0 %v216
  %v598 = vpop.f32.mrf.mxu0
  %v599 = vadd.f32 %v566, %v598
  %v600 = vpop.f32.mrf.mxu0
  %v601 = vadd.f32 %v568, %v600
  %602 = vmatmul.bf16.gmra.mxu0 %v221
  %v603 = vpop.f32.mrf.mxu0
  %v604 = vadd.f32 %v571, %v603
  %v605 = vpop.f32.mrf.mxu0
  %606 = vdwg.mxu0
  %607 = vmatpush.bf16.msra.mxu0 0
  %608 = vmatpush.bf16.msra.mxu0 0
  %609 = vmatpush.bf16.msra.mxu0 0
  %610 = vmatpush.bf16.msra.mxu0 0
  %611 = vmatpush.bf16.msra.mxu0 %v422
  %612 = vmatpush.bf16.msra.mxu0 %v421
  %613 = vmatpush.bf16.msra.mxu0 %v420
  %614 = vmatpush.bf16.msra.mxu0 %v419
  %615 = vmatmul.bf16.gmra.mxu0 %v461
  %v616 = vpop.f32.mrf.mxu0
  %v617 = vadd.f32 %v584, %v616
  %v618 = vpop.f32.mrf.mxu0
  %v619 = vadd.f32 %v586, %v618
  %620 = vmatmul.bf16.gmra.mxu0 %v464
  %v621 = vpop.f32.mrf.mxu0
  %v622 = vadd.f32 %v589, %v621
  %v623 = vpop.f32.mrf.mxu0
  %v624 = vadd.f32 %v591, %v623
  %625 = vmatmul.bf16.gmra.mxu0 %v467
  %v626 = vpop.f32.mrf.mxu0
  %v627 = vadd.f32 %v594, %v626
  %v628 = vpop.f32.mrf.mxu0
  %v629 = vadd.f32 %v596, %v628
  %630 = vmatmul.bf16.gmra.mxu0 %v470
  %v631 = vpop.f32.mrf.mxu0
  %v632 = vadd.f32 %v599, %v631
  %v633 = vpop.f32.mrf.mxu0
  %v634 = vadd.f32 %v601, %v633
  %635 = vmatmul.bf16.gmra.mxu0 %v473
  %v636 = vpop.f32.mrf.mxu0
  %v637 = vadd.f32 %v604, %v636
  %v638 = vpop.f32.mrf.mxu0
  %639 = vdwg.mxu0
  %v640 = vld [vmem:[%s1] sm:$0xff]
  %v641 = vld [vmem:[%s1 + $0x8] sm:$0xff]
  %v642 = vld [vmem:[%s1 + $0x10] sm:$0xf]
  %v643 = vld [vmem:[%s1 + $0x14] sm:$0xff]
  %v644 = vld [vmem:[%s1 + $0x1c] sm:$0xff]
  %v645 = vld [vmem:[%s1 + $0x24] sm:$0xf]
  %v646 = vld [vmem:[%s1 + $0x28] sm:$0xff]
  %v647 = vld [vmem:[%s1 + $0x30] sm:$0xff]
  %v648 = vld [vmem:[%s1 + $0x38] sm:$0xf]
  %v649 = vld [vmem:[%s1 + $0x3c] sm:$0xff]
  %v650 = vld [vmem:[%s1 + $0x44] sm:$0xff]
  %v651 = vld [vmem:[%s1 + $0x4c] sm:$0xf]
  %v652 = vld [vmem:[%s1 + $0x50] sm:$0xff]
  %v653 = vld [vmem:[%s1 + $0x58] sm:$0xff]
  %v654 = vld [vmem:[%s1 + $0x60] sm:$0xf]
  %v655 = vld [vmem:[%s1 + $0x64] sm:$0xff]
  %v656 = vld [vmem:[%s1 + $0x6c] sm:$0xff]
  %v657 = vld [vmem:[%s1 + $0x74] sm:$0xf]
  %v658 = vld [vmem:[%s1 + $0x78] sm:$0xff]
  %v659 = vld [vmem:[%s1 + $0x80] sm:$0xff]
  %v660 = vld [vmem:[%s1 + $0x88] sm:$0xf]
  %v661 = vld [vmem:[%s1 + $0x8c] sm:$0xff]
  %v662 = vld [vmem:[%s1 + $0x94] sm:$0xff]
  %v663 = vld [vmem:[%s1 + $0x9c] sm:$0xf]
  %v664 = vld [vmem:[%s1 + $0xa0] sm:$0xff]
  %v665 = vld [vmem:[%s1 + $0xa8] sm:$0xff]
  %v666 = vld [vmem:[%s1 + $0xb0] sm:$0xf]
  %v694 = vunpack.c.l.b16 %v640
  %v695 = vunpack.c.h.b16 %v640
  %v696 = vunpack.c.l.b16 %v641
  %v697 = vunpack.c.h.b16 %v641
  %v698 = vunpack.c.l.b16 %v642
  %v699 = vunpack.c.l.b16 %v643
  %v700 = vunpack.c.h.b16 %v643
  %v701 = vunpack.c.l.b16 %v644
  %v702 = vunpack.c.h.b16 %v644
  %v703 = vunpack.c.l.b16 %v645
  %v704 = vunpack.c.l.b16 %v646
  %v705 = vunpack.c.h.b16 %v646
  %v706 = vunpack.c.l.b16 %v647
  %v707 = vunpack.c.h.b16 %v647
  %v708 = vunpack.c.l.b16 %v648
  %v709 = vunpack.c.l.b16 %v649
  %v710 = vunpack.c.h.b16 %v649
  %v711 = vunpack.c.l.b16 %v650
  %v712 = vunpack.c.h.b16 %v650
  %v713 = vunpack.c.l.b16 %v651
  %v714 = vunpack.c.l.b16 %v652
  %v715 = vunpack.c.h.b16 %v652
  %v716 = vunpack.c.l.b16 %v653
  %v717 = vunpack.c.h.b16 %v653
  %v718 = vunpack.c.l.b16 %v654
  %v719 = vunpack.c.l.b16 %v655
  %v720 = vunpack.c.h.b16 %v655
  %v721 = vunpack.c.l.b16 %v656
  %v722 = vunpack.c.h.b16 %v656
  %v723 = vunpack.c.l.b16 %v657
  %v724 = vunpack.c.l.b16 %v658
  %v725 = vunpack.c.h.b16 %v658
  %v726 = vunpack.c.l.b16 %v659
  %v727 = vunpack.c.h.b16 %v659
  %v728 = vunpack.c.l.b16 %v660
  %v729 = vunpack.c.l.b16 %v661
  %v730 = vunpack.c.h.b16 %v661
  %v731 = vunpack.c.l.b16 %v662
  %v732 = vunpack.c.h.b16 %v662
  %v733 = vunpack.c.l.b16 %v663
  %v734 = vunpack.c.l.b16 %v664
  %v735 = vunpack.c.h.b16 %v664
  %v736 = vunpack.c.l.b16 %v665
  %v737 = vunpack.c.h.b16 %v665
  %v738 = vunpack.c.l.b16 %v666
  %v739 = vpack.c.b16 %v699, %v694
  %v740 = vpack.c.b16 %v700, %v695
  %v741 = vpack.c.b16 %v701, %v696
  %v742 = vpack.c.b16 %v702, %v697
  %v743 = vpack.c.b16 %v703, %v698
  %v744 = vpack.c.b16 %v709, %v704
  %v745 = vpack.c.b16 %v710, %v705
  %v746 = vpack.c.b16 %v711, %v706
  %v747 = vpack.c.b16 %v712, %v707
  %v748 = vpack.c.b16 %v713, %v708
  %v749 = vpack.c.b16 %v719, %v714
  %v750 = vpack.c.b16 %v720, %v715
  %v751 = vpack.c.b16 %v721, %v716
  %v752 = vpack.c.b16 %v722, %v717
  %v753 = vpack.c.b16 %v723, %v718
  %v754 = vpack.c.b16 %v729, %v724
  %v755 = vpack.c.b16 %v730, %v725
  %v756 = vpack.c.b16 %v731, %v726
  %v757 = vpack.c.b16 %v732, %v727
  %v758 = vpack.c.b16 %v733, %v728
  %v759 = vpack.c.b16 %v734, %v734
  %v760 = vpack.c.b16 %v735, %v735
  %v761 = vpack.c.b16 %v736, %v736
  %v762 = vpack.c.b16 %v737, %v737
  %v763 = vpack.c.b16 %v738, %v738
  %v785 = vsel %vm459, %v743, 0
  %v788 = vsel %vm459, %v748, 0
  %v791 = vsel %vm459, %v753, 0
  %v794 = vsel %vm459, %v758, 0
  %v797 = vsel %vm459, %v763, 0
  %799 = vmatpush.bf16.msra.mxu0 %v394
  %800 = vmatpush.bf16.msra.mxu0 %v393
  %801 = vmatpush.bf16.msra.mxu0 %v392
  %802 = vmatpush.bf16.msra.mxu0 %v391
  %803 = vmatpush.bf16.msra.mxu0 %v390
  %804 = vmatpush.bf16.msra.mxu0 %v389
  %805 = vmatpush.bf16.msra.mxu0 %v388
  %806 = vmatpush.bf16.msra.mxu0 %v387
  %807 = vmatmul.bf16.gmra.mxu0 %v739
  %v808 = vpop.f32.mrf.mxu0
  %v809 = vadd.f32 0.0, %v808
  %v810 = vpop.f32.mrf.mxu0
  %v811 = vadd.f32 0.0, %v810
  %812 = vmatmul.bf16.gmra.mxu0 %v744
  %v813 = vpop.f32.mrf.mxu0
  %v814 = vadd.f32 0.0, %v813
  %v815 = vpop.f32.mrf.mxu0
  %v816 = vadd.f32 0.0, %v815
  %817 = vmatmul.bf16.gmra.mxu0 %v749
  %v818 = vpop.f32.mrf.mxu0
  %v819 = vadd.f32 0.0, %v818
  %v820 = vpop.f32.mrf.mxu0
  %v821 = vadd.f32 0.0, %v820
  %822 = vmatmul.bf16.gmra.mxu0 %v754
  %v823 = vpop.f32.mrf.mxu0
  %v824 = vadd.f32 0.0, %v823
  %v825 = vpop.f32.mrf.mxu0
  %v826 = vadd.f32 0.0, %v825
  %827 = vmatmul.bf16.gmra.mxu0 %v759
  %v828 = vpop.f32.mrf.mxu0
  %v829 = vadd.f32 0.0, %v828
  %v830 = vpop.f32.mrf.mxu0
  %831 = vdwg.mxu0
  %832 = vmatpush.bf16.msra.mxu0 %v402
  %833 = vmatpush.bf16.msra.mxu0 %v401
  %834 = vmatpush.bf16.msra.mxu0 %v400
  %835 = vmatpush.bf16.msra.mxu0 %v399
  %836 = vmatpush.bf16.msra.mxu0 %v398
  %837 = vmatpush.bf16.msra.mxu0 %v397
  %838 = vmatpush.bf16.msra.mxu0 %v396
  %839 = vmatpush.bf16.msra.mxu0 %v395
  %840 = vmatmul.bf16.gmra.mxu0 %v740
  %v841 = vpop.f32.mrf.mxu0
  %v842 = vadd.f32 %v809, %v841
  %v843 = vpop.f32.mrf.mxu0
  %v844 = vadd.f32 %v811, %v843
  %845 = vmatmul.bf16.gmra.mxu0 %v745
  %v846 = vpop.f32.mrf.mxu0
  %v847 = vadd.f32 %v814, %v846
  %v848 = vpop.f32.mrf.mxu0
  %v849 = vadd.f32 %v816, %v848
  %850 = vmatmul.bf16.gmra.mxu0 %v750
  %v851 = vpop.f32.mrf.mxu0
  %v852 = vadd.f32 %v819, %v851
  %v853 = vpop.f32.mrf.mxu0
  %v854 = vadd.f32 %v821, %v853
  %855 = vmatmul.bf16.gmra.mxu0 %v755
  %v856 = vpop.f32.mrf.mxu0
  %v857 = vadd.f32 %v824, %v856
  %v858 = vpop.f32.mrf.mxu0
  %v859 = vadd.f32 %v826, %v858
  %860 = vmatmul.bf16.gmra.mxu0 %v760
  %v861 = vpop.f32.mrf.mxu0
  %v862 = vadd.f32 %v829, %v861
  %v863 = vpop.f32.mrf.mxu0
  %864 = vdwg.mxu0
  %865 = vmatpush.bf16.msra.mxu0 %v410
  %866 = vmatpush.bf16.msra.mxu0 %v409
  %867 = vmatpush.bf16.msra.mxu0 %v408
  %868 = vmatpush.bf16.msra.mxu0 %v407
  %869 = vmatpush.bf16.msra.mxu0 %v406
  %870 = vmatpush.bf16.msra.mxu0 %v405
  %871 = vmatpush.bf16.msra.mxu0 %v404
  %872 = vmatpush.bf16.msra.mxu0 %v403
  %873 = vmatmul.bf16.gmra.mxu0 %v741
  %v874 = vpop.f32.mrf.mxu0
  %v875 = vadd.f32 %v842, %v874
  %v876 = vpop.f32.mrf.mxu0
  %v877 = vadd.f32 %v844, %v876
  %878 = vmatmul.bf16.gmra.mxu0 %v746
  %v879 = vpop.f32.mrf.mxu0
  %v880 = vadd.f32 %v847, %v879
  %v881 = vpop.f32.mrf.mxu0
  %v882 = vadd.f32 %v849, %v881
  %883 = vmatmul.bf16.gmra.mxu0 %v751
  %v884 = vpop.f32.mrf.mxu0
  %v885 = vadd.f32 %v852, %v884
  %v886 = vpop.f32.mrf.mxu0
  %v887 = vadd.f32 %v854, %v886
  %888 = vmatmul.bf16.gmra.mxu0 %v756
  %v889 = vpop.f32.mrf.mxu0
  %v890 = vadd.f32 %v857, %v889
  %v891 = vpop.f32.mrf.mxu0
  %v892 = vadd.f32 %v859, %v891
  %893 = vmatmul.bf16.gmra.mxu0 %v761
  %v894 = vpop.f32.mrf.mxu0
  %v895 = vadd.f32 %v862, %v894
  %v896 = vpop.f32.mrf.mxu0
  %897 = vdwg.mxu0
  %898 = vmatpush.bf16.msra.mxu0 %v418
  %899 = vmatpush.bf16.msra.mxu0 %v417
  %900 = vmatpush.bf16.msra.mxu0 %v416
  %901 = vmatpush.bf16.msra.mxu0 %v415
  %902 = vmatpush.bf16.msra.mxu0 %v414
  %903 = vmatpush.bf16.msra.mxu0 %v413
  %904 = vmatpush.bf16.msra.mxu0 %v412
  %905 = vmatpush.bf16.msra.mxu0 %v411
  %906 = vmatmul.bf16.gmra.mxu0 %v742
  %v907 = vpop.f32.mrf.mxu0
  %v908 = vadd.f32 %v875, %v907
  %v909 = vpop.f32.mrf.mxu0
  %v910 = vadd.f32 %v877, %v909
  %911 = vmatmul.bf16.gmra.mxu0 %v747
  %v912 = vpop.f32.mrf.mxu0
  %v913 = vadd.f32 %v880, %v912
  %v914 = vpop.f32.mrf.mxu0
  %v915 = vadd.f32 %v882, %v914
  %916 = vmatmul.bf16.gmra.mxu0 %v752
  %v917 = vpop.f32.mrf.mxu0
  %v918 = vadd.f32 %v885, %v917
  %v919 = vpop.f32.mrf.mxu0
  %v920 = vadd.f32 %v887, %v919
  %921 = vmatmul.bf16.gmra.mxu0 %v757
  %v922 = vpop.f32.mrf.mxu0
  %v923 = vadd.f32 %v890, %v922
  %v924 = vpop.f32.mrf.mxu0
  %v925 = vadd.f32 %v892, %v924
  %926 = vmatmul.bf16.gmra.mxu0 %v762
  %v927 = vpop.f32.mrf.mxu0
  %v928 = vadd.f32 %v895, %v927
  %v929 = vpop.f32.mrf.mxu0
  %930 = vdwg.mxu0
  %931 = vmatpush.bf16.msra.mxu0 0
  %932 = vmatpush.bf16.msra.mxu0 0
  %933 = vmatpush.bf16.msra.mxu0 0
  %934 = vmatpush.bf16.msra.mxu0 0
  %935 = vmatpush.bf16.msra.mxu0 %v422
  %936 = vmatpush.bf16.msra.mxu0 %v421
  %937 = vmatpush.bf16.msra.mxu0 %v420
  %938 = vmatpush.bf16.msra.mxu0 %v419
  %939 = vmatmul.bf16.gmra.mxu0 %v785
  %v940 = vpop.f32.mrf.mxu0
  %v941 = vadd.f32 %v908, %v940
  %v942 = vpop.f32.mrf.mxu0
  %v943 = vadd.f32 %v910, %v942
  %944 = vmatmul.bf16.gmra.mxu0 %v788
  %v945 = vpop.f32.mrf.mxu0
  %v946 = vadd.f32 %v913, %v945
  %v947 = vpop.f32.mrf.mxu0
  %v948 = vadd.f32 %v915, %v947
  %949 = vmatmul.bf16.gmra.mxu0 %v791
  %v950 = vpop.f32.mrf.mxu0
  %v951 = vadd.f32 %v918, %v950
  %v952 = vpop.f32.mrf.mxu0
  %v953 = vadd.f32 %v920, %v952
  %954 = vmatmul.bf16.gmra.mxu0 %v794
  %v955 = vpop.f32.mrf.mxu0
  %v956 = vadd.f32 %v923, %v955
  %v957 = vpop.f32.mrf.mxu0
  %v958 = vadd.f32 %v925, %v957
  %959 = vmatmul.bf16.gmra.mxu0 %v797
  %v960 = vpop.f32.mrf.mxu0
  %v961 = vadd.f32 %v928, %v960
  %v962 = vpop.f32.mrf.mxu0
  %963 = vdwg.mxu0
  %v964 = vmax.f32 %v617, %v941
  %v965 = vmax.f32 %v619, %v943
  %v966 = vmax.f32 %v622, %v946
  %v967 = vmax.f32 %v624, %v948
  %v968 = vmax.f32 %v627, %v951
  %v969 = vmax.f32 %v629, %v953
  %v970 = vmax.f32 %v632, %v956
  %v971 = vmax.f32 %v634, %v958
  %v972 = vmax.f32 %v637, %v961
  %v973 = vld [vmem:[%s2] sm:$0xff]
  %v974 = vld [vmem:[%s2 + $0x8] sm:$0xff]
  %v975 = vld [vmem:[%s2 + $0x10] sm:$0xf]
  %v976 = vld [vmem:[%s2 + $0x14] sm:$0xff]
  %v977 = vld [vmem:[%s2 + $0x1c] sm:$0xff]
  %v978 = vld [vmem:[%s2 + $0x24] sm:$0xf]
  %v979 = vld [vmem:[%s2 + $0x28] sm:$0xff]
  %v980 = vld [vmem:[%s2 + $0x30] sm:$0xff]
  %v981 = vld [vmem:[%s2 + $0x38] sm:$0xf]
  %v982 = vld [vmem:[%s2 + $0x3c] sm:$0xff]
  %v983 = vld [vmem:[%s2 + $0x44] sm:$0xff]
  %v984 = vld [vmem:[%s2 + $0x4c] sm:$0xf]
  %v985 = vld [vmem:[%s2 + $0x50] sm:$0xff]
  %v986 = vld [vmem:[%s2 + $0x58] sm:$0xff]
  %v987 = vld [vmem:[%s2 + $0x60] sm:$0xf]
  %v988 = vld [vmem:[%s2 + $0x64] sm:$0xff]
  %v989 = vld [vmem:[%s2 + $0x6c] sm:$0xff]
  %v990 = vld [vmem:[%s2 + $0x74] sm:$0xf]
  %v991 = vld [vmem:[%s2 + $0x78] sm:$0xff]
  %v992 = vld [vmem:[%s2 + $0x80] sm:$0xff]
  %v993 = vld [vmem:[%s2 + $0x88] sm:$0xf]
  %v994 = vld [vmem:[%s2 + $0x8c] sm:$0xff]
  %v995 = vld [vmem:[%s2 + $0x94] sm:$0xff]
  %v996 = vld [vmem:[%s2 + $0x9c] sm:$0xf]
  %v997 = vld [vmem:[%s2 + $0xa0] sm:$0xff]
  %v998 = vld [vmem:[%s2 + $0xa8] sm:$0xff]
  %v999 = vld [vmem:[%s2 + $0xb0] sm:$0xf]
  %v1027 = vunpack.c.l.b16 %v973
  %v1028 = vunpack.c.h.b16 %v973
  %v1029 = vunpack.c.l.b16 %v974
  %v1030 = vunpack.c.h.b16 %v974
  %v1031 = vunpack.c.l.b16 %v975
  %v1032 = vunpack.c.l.b16 %v976
  %v1033 = vunpack.c.h.b16 %v976
  %v1034 = vunpack.c.l.b16 %v977
  %v1035 = vunpack.c.h.b16 %v977
  %v1036 = vunpack.c.l.b16 %v978
  %v1037 = vunpack.c.l.b16 %v979
  %v1038 = vunpack.c.h.b16 %v979
  %v1039 = vunpack.c.l.b16 %v980
  %v1040 = vunpack.c.h.b16 %v980
  %v1041 = vunpack.c.l.b16 %v981
  %v1042 = vunpack.c.l.b16 %v982
  %v1043 = vunpack.c.h.b16 %v982
  %v1044 = vunpack.c.l.b16 %v983
  %v1045 = vunpack.c.h.b16 %v983
  %v1046 = vunpack.c.l.b16 %v984
  %v1047 = vunpack.c.l.b16 %v985
  %v1048 = vunpack.c.h.b16 %v985
  %v1049 = vunpack.c.l.b16 %v986
  %v1050 = vunpack.c.h.b16 %v986
  %v1051 = vunpack.c.l.b16 %v987
  %v1052 = vunpack.c.l.b16 %v988
  %v1053 = vunpack.c.h.b16 %v988
  %v1054 = vunpack.c.l.b16 %v989
  %v1055 = vunpack.c.h.b16 %v989
  %v1056 = vunpack.c.l.b16 %v990
  %v1057 = vunpack.c.l.b16 %v991
  %v1058 = vunpack.c.h.b16 %v991
  %v1059 = vunpack.c.l.b16 %v992
  %v1060 = vunpack.c.h.b16 %v992
  %v1061 = vunpack.c.l.b16 %v993
  %v1062 = vunpack.c.l.b16 %v994
  %v1063 = vunpack.c.h.b16 %v994
  %v1064 = vunpack.c.l.b16 %v995
  %v1065 = vunpack.c.h.b16 %v995
  %v1066 = vunpack.c.l.b16 %v996
  %v1067 = vunpack.c.l.b16 %v997
  %v1068 = vunpack.c.h.b16 %v997
  %v1069 = vunpack.c.l.b16 %v998
  %v1070 = vunpack.c.h.b16 %v998
  %v1071 = vunpack.c.l.b16 %v999
  %v1072 = vpack.c.b16 %v1032, %v1027
  %v1073 = vpack.c.b16 %v1033, %v1028
  %v1074 = vpack.c.b16 %v1034, %v1029
  %v1075 = vpack.c.b16 %v1035, %v1030
  %v1076 = vpack.c.b16 %v1036, %v1031
  %v1077 = vpack.c.b16 %v1042, %v1037
  %v1078 = vpack.c.b16 %v1043, %v1038
  %v1079 = vpack.c.b16 %v1044, %v1039
  %v1080 = vpack.c.b16 %v1045, %v1040
  %v1081 = vpack.c.b16 %v1046, %v1041
  %v1082 = vpack.c.b16 %v1052, %v1047
  %v1083 = vpack.c.b16 %v1053, %v1048
  %v1084 = vpack.c.b16 %v1054, %v1049
  %v1085 = vpack.c.b16 %v1055, %v1050
  %v1086 = vpack.c.b16 %v1056, %v1051
  %v1087 = vpack.c.b16 %v1062, %v1057
  %v1088 = vpack.c.b16 %v1063, %v1058
  %v1089 = vpack.c.b16 %v1064, %v1059
  %v1090 = vpack.c.b16 %v1065, %v1060
  %v1091 = vpack.c.b16 %v1066, %v1061
  %v1092 = vpack.c.b16 %v1067, %v1067
  %v1093 = vpack.c.b16 %v1068, %v1068
  %v1094 = vpack.c.b16 %v1069, %v1069
  %v1095 = vpack.c.b16 %v1070, %v1070
  %v1096 = vpack.c.b16 %v1071, %v1071
  %v1118 = vsel %vm459, %v1076, 0
  %v1121 = vsel %vm459, %v1081, 0
  %v1124 = vsel %vm459, %v1086, 0
  %v1127 = vsel %vm459, %v1091, 0
  %v1130 = vsel %vm459, %v1096, 0
  %1132 = vmatpush.bf16.msra.mxu0 %v394
  %1133 = vmatpush.bf16.msra.mxu0 %v393
  %1134 = vmatpush.bf16.msra.mxu0 %v392
  %1135 = vmatpush.bf16.msra.mxu0 %v391
  %1136 = vmatpush.bf16.msra.mxu0 %v390
  %1137 = vmatpush.bf16.msra.mxu0 %v389
  %1138 = vmatpush.bf16.msra.mxu0 %v388
  %1139 = vmatpush.bf16.msra.mxu0 %v387
  %1140 = vmatmul.bf16.gmra.mxu0 %v1072
  %v1141 = vpop.f32.mrf.mxu0
  %v1142 = vadd.f32 0.0, %v1141
  %v1143 = vpop.f32.mrf.mxu0
  %v1144 = vadd.f32 0.0, %v1143
  %1145 = vmatmul.bf16.gmra.mxu0 %v1077
  %v1146 = vpop.f32.mrf.mxu0
  %v1147 = vadd.f32 0.0, %v1146
  %v1148 = vpop.f32.mrf.mxu0
  %v1149 = vadd.f32 0.0, %v1148
  %1150 = vmatmul.bf16.gmra.mxu0 %v1082
  %v1151 = vpop.f32.mrf.mxu0
  %v1152 = vadd.f32 0.0, %v1151
  %v1153 = vpop.f32.mrf.mxu0
  %v1154 = vadd.f32 0.0, %v1153
  %1155 = vmatmul.bf16.gmra.mxu0 %v1087
  %v1156 = vpop.f32.mrf.mxu0
  %v1157 = vadd.f32 0.0, %v1156
  %v1158 = vpop.f32.mrf.mxu0
  %v1159 = vadd.f32 0.0, %v1158
  %1160 = vmatmul.bf16.gmra.mxu0 %v1092
  %v1161 = vpop.f32.mrf.mxu0
  %v1162 = vadd.f32 0.0, %v1161
  %v1163 = vpop.f32.mrf.mxu0
  %1164 = vdwg.mxu0
  %1165 = vmatpush.bf16.msra.mxu0 %v402
  %1166 = vmatpush.bf16.msra.mxu0 %v401
  %1167 = vmatpush.bf16.msra.mxu0 %v400
  %1168 = vmatpush.bf16.msra.mxu0 %v399
  %1169 = vmatpush.bf16.msra.mxu0 %v398
  %1170 = vmatpush.bf16.msra.mxu0 %v397
  %1171 = vmatpush.bf16.msra.mxu0 %v396
  %1172 = vmatpush.bf16.msra.mxu0 %v395
  %1173 = vmatmul.bf16.gmra.mxu0 %v1073
  %v1174 = vpop.f32.mrf.mxu0
  %v1175 = vadd.f32 %v1142, %v1174
  %v1176 = vpop.f32.mrf.mxu0
  %v1177 = vadd.f32 %v1144, %v1176
  %1178 = vmatmul.bf16.gmra.mxu0 %v1078
  %v1179 = vpop.f32.mrf.mxu0
  %v1180 = vadd.f32 %v1147, %v1179
  %v1181 = vpop.f32.mrf.mxu0
  %v1182 = vadd.f32 %v1149, %v1181
  %1183 = vmatmul.bf16.gmra.mxu0 %v1083
  %v1184 = vpop.f32.mrf.mxu0
  %v1185 = vadd.f32 %v1152, %v1184
  %v1186 = vpop.f32.mrf.mxu0
  %v1187 = vadd.f32 %v1154, %v1186
  %1188 = vmatmul.bf16.gmra.mxu0 %v1088
  %v1189 = vpop.f32.mrf.mxu0
  %v1190 = vadd.f32 %v1157, %v1189
  %v1191 = vpop.f32.mrf.mxu0
  %v1192 = vadd.f32 %v1159, %v1191
  %1193 = vmatmul.bf16.gmra.mxu0 %v1093
  %v1194 = vpop.f32.mrf.mxu0
  %v1195 = vadd.f32 %v1162, %v1194
  %v1196 = vpop.f32.mrf.mxu0
  %1197 = vdwg.mxu0
  %1198 = vmatpush.bf16.msra.mxu0 %v410
  %1199 = vmatpush.bf16.msra.mxu0 %v409
  %1200 = vmatpush.bf16.msra.mxu0 %v408
  %1201 = vmatpush.bf16.msra.mxu0 %v407
  %1202 = vmatpush.bf16.msra.mxu0 %v406
  %1203 = vmatpush.bf16.msra.mxu0 %v405
  %1204 = vmatpush.bf16.msra.mxu0 %v404
  %1205 = vmatpush.bf16.msra.mxu0 %v403
  %1206 = vmatmul.bf16.gmra.mxu0 %v1074
  %v1207 = vpop.f32.mrf.mxu0
  %v1208 = vadd.f32 %v1175, %v1207
  %v1209 = vpop.f32.mrf.mxu0
  %v1210 = vadd.f32 %v1177, %v1209
  %1211 = vmatmul.bf16.gmra.mxu0 %v1079
  %v1212 = vpop.f32.mrf.mxu0
  %v1213 = vadd.f32 %v1180, %v1212
  %v1214 = vpop.f32.mrf.mxu0
  %v1215 = vadd.f32 %v1182, %v1214
  %1216 = vmatmul.bf16.gmra.mxu0 %v1084
  %v1217 = vpop.f32.mrf.mxu0
  %v1218 = vadd.f32 %v1185, %v1217
  %v1219 = vpop.f32.mrf.mxu0
  %v1220 = vadd.f32 %v1187, %v1219
  %1221 = vmatmul.bf16.gmra.mxu0 %v1089
  %v1222 = vpop.f32.mrf.mxu0
  %v1223 = vadd.f32 %v1190, %v1222
  %v1224 = vpop.f32.mrf.mxu0
  %v1225 = vadd.f32 %v1192, %v1224
  %1226 = vmatmul.bf16.gmra.mxu0 %v1094
  %v1227 = vpop.f32.mrf.mxu0
  %v1228 = vadd.f32 %v1195, %v1227
  %v1229 = vpop.f32.mrf.mxu0
  %1230 = vdwg.mxu0
  %1231 = vmatpush.bf16.msra.mxu0 %v418
  %1232 = vmatpush.bf16.msra.mxu0 %v417
  %1233 = vmatpush.bf16.msra.mxu0 %v416
  %1234 = vmatpush.bf16.msra.mxu0 %v415
  %1235 = vmatpush.bf16.msra.mxu0 %v414
  %1236 = vmatpush.bf16.msra.mxu0 %v413
  %1237 = vmatpush.bf16.msra.mxu0 %v412
  %1238 = vmatpush.bf16.msra.mxu0 %v411
  %1239 = vmatmul.bf16.gmra.mxu0 %v1075
  %v1240 = vpop.f32.mrf.mxu0
  %v1241 = vadd.f32 %v1208, %v1240
  %v1242 = vpop.f32.mrf.mxu0
  %v1243 = vadd.f32 %v1210, %v1242
  %1244 = vmatmul.bf16.gmra.mxu0 %v1080
  %v1245 = vpop.f32.mrf.mxu0
  %v1246 = vadd.f32 %v1213, %v1245
  %v1247 = vpop.f32.mrf.mxu0
  %v1248 = vadd.f32 %v1215, %v1247
  %1249 = vmatmul.bf16.gmra.mxu0 %v1085
  %v1250 = vpop.f32.mrf.mxu0
  %v1251 = vadd.f32 %v1218, %v1250
  %v1252 = vpop.f32.mrf.mxu0
  %v1253 = vadd.f32 %v1220, %v1252
  %1254 = vmatmul.bf16.gmra.mxu0 %v1090
  %v1255 = vpop.f32.mrf.mxu0
  %v1256 = vadd.f32 %v1223, %v1255
  %v1257 = vpop.f32.mrf.mxu0
  %v1258 = vadd.f32 %v1225, %v1257
  %1259 = vmatmul.bf16.gmra.mxu0 %v1095
  %v1260 = vpop.f32.mrf.mxu0
  %v1261 = vadd.f32 %v1228, %v1260
  %v1262 = vpop.f32.mrf.mxu0
  %1263 = vdwg.mxu0
  %1264 = vmatpush.bf16.msra.mxu0 0
  %1265 = vmatpush.bf16.msra.mxu0 0
  %1266 = vmatpush.bf16.msra.mxu0 0
  %1267 = vmatpush.bf16.msra.mxu0 0
  %1268 = vmatpush.bf16.msra.mxu0 %v422
  %1269 = vmatpush.bf16.msra.mxu0 %v421
  %1270 = vmatpush.bf16.msra.mxu0 %v420
  %1271 = vmatpush.bf16.msra.mxu0 %v419
  %1272 = vmatmul.bf16.gmra.mxu0 %v1118
  %v1273 = vpop.f32.mrf.mxu0
  %v1274 = vadd.f32 %v1241, %v1273
  %v1275 = vpop.f32.mrf.mxu0
  %v1276 = vadd.f32 %v1243, %v1275
  %1277 = vmatmul.bf16.gmra.mxu0 %v1121
  %v1278 = vpop.f32.mrf.mxu0
  %v1279 = vadd.f32 %v1246, %v1278
  %v1280 = vpop.f32.mrf.mxu0
  %v1281 = vadd.f32 %v1248, %v1280
  %1282 = vmatmul.bf16.gmra.mxu0 %v1124
  %v1283 = vpop.f32.mrf.mxu0
  %v1284 = vadd.f32 %v1251, %v1283
  %v1285 = vpop.f32.mrf.mxu0
  %v1286 = vadd.f32 %v1253, %v1285
  %1287 = vmatmul.bf16.gmra.mxu0 %v1127
  %v1288 = vpop.f32.mrf.mxu0
  %v1289 = vadd.f32 %v1256, %v1288
  %v1290 = vpop.f32.mrf.mxu0
  %v1291 = vadd.f32 %v1258, %v1290
  %1292 = vmatmul.bf16.gmra.mxu0 %v1130
  %v1293 = vpop.f32.mrf.mxu0
  %v1294 = vadd.f32 %v1261, %v1293
  %v1295 = vpop.f32.mrf.mxu0
  %1296 = vdwg.mxu0
  %v1297 = vmax.f32 %v964, %v1274
  %v1298 = vmax.f32 %v965, %v1276
  %v1299 = vmax.f32 %v966, %v1279
  %v1300 = vmax.f32 %v967, %v1281
  %v1301 = vmax.f32 %v968, %v1284
  %v1302 = vmax.f32 %v969, %v1286
  %v1303 = vmax.f32 %v970, %v1289
  %v1304 = vmax.f32 %v971, %v1291
  %v1305 = vmax.f32 %v972, %v1294
  %v1306 = vld [vmem:[%s3] sm:$0xff]
  %v1307 = vld [vmem:[%s3 + $0x8] sm:$0xff]
  %v1308 = vld [vmem:[%s3 + $0x10] sm:$0xf]
  %v1309 = vld [vmem:[%s3 + $0x14] sm:$0xff]
  %v1310 = vld [vmem:[%s3 + $0x1c] sm:$0xff]
  %v1311 = vld [vmem:[%s3 + $0x24] sm:$0xf]
  %v1312 = vld [vmem:[%s3 + $0x28] sm:$0xff]
  %v1313 = vld [vmem:[%s3 + $0x30] sm:$0xff]
  %v1314 = vld [vmem:[%s3 + $0x38] sm:$0xf]
  %v1315 = vld [vmem:[%s3 + $0x3c] sm:$0xff]
  %v1316 = vld [vmem:[%s3 + $0x44] sm:$0xff]
  %v1317 = vld [vmem:[%s3 + $0x4c] sm:$0xf]
  %v1318 = vld [vmem:[%s3 + $0x50] sm:$0xff]
  %v1319 = vld [vmem:[%s3 + $0x58] sm:$0xff]
  %v1320 = vld [vmem:[%s3 + $0x60] sm:$0xf]
  %v1321 = vld [vmem:[%s3 + $0x64] sm:$0xff]
  %v1322 = vld [vmem:[%s3 + $0x6c] sm:$0xff]
  %v1323 = vld [vmem:[%s3 + $0x74] sm:$0xf]
  %v1324 = vld [vmem:[%s3 + $0x78] sm:$0xff]
  %v1325 = vld [vmem:[%s3 + $0x80] sm:$0xff]
  %v1326 = vld [vmem:[%s3 + $0x88] sm:$0xf]
  %v1327 = vld [vmem:[%s3 + $0x8c] sm:$0xff]
  %v1328 = vld [vmem:[%s3 + $0x94] sm:$0xff]
  %v1329 = vld [vmem:[%s3 + $0x9c] sm:$0xf]
  %v1330 = vld [vmem:[%s3 + $0xa0] sm:$0xff]
  %v1331 = vld [vmem:[%s3 + $0xa8] sm:$0xff]
  %v1332 = vld [vmem:[%s3 + $0xb0] sm:$0xf]
  %v1360 = vunpack.c.l.b16 %v1306
  %v1361 = vunpack.c.h.b16 %v1306
  %v1362 = vunpack.c.l.b16 %v1307
  %v1363 = vunpack.c.h.b16 %v1307
  %v1364 = vunpack.c.l.b16 %v1308
  %v1365 = vunpack.c.l.b16 %v1309
  %v1366 = vunpack.c.h.b16 %v1309
  %v1367 = vunpack.c.l.b16 %v1310
  %v1368 = vunpack.c.h.b16 %v1310
  %v1369 = vunpack.c.l.b16 %v1311
  %v1370 = vunpack.c.l.b16 %v1312
  %v1371 = vunpack.c.h.b16 %v1312
  %v1372 = vunpack.c.l.b16 %v1313
  %v1373 = vunpack.c.h.b16 %v1313
  %v1374 = vunpack.c.l.b16 %v1314
  %v1375 = vunpack.c.l.b16 %v1315
  %v1376 = vunpack.c.h.b16 %v1315
  %v1377 = vunpack.c.l.b16 %v1316
  %v1378 = vunpack.c.h.b16 %v1316
  %v1379 = vunpack.c.l.b16 %v1317
  %v1380 = vunpack.c.l.b16 %v1318
  %v1381 = vunpack.c.h.b16 %v1318
  %v1382 = vunpack.c.l.b16 %v1319
  %v1383 = vunpack.c.h.b16 %v1319
  %v1384 = vunpack.c.l.b16 %v1320
  %v1385 = vunpack.c.l.b16 %v1321
  %v1386 = vunpack.c.h.b16 %v1321
  %v1387 = vunpack.c.l.b16 %v1322
  %v1388 = vunpack.c.h.b16 %v1322
  %v1389 = vunpack.c.l.b16 %v1323
  %v1390 = vunpack.c.l.b16 %v1324
  %v1391 = vunpack.c.h.b16 %v1324
  %v1392 = vunpack.c.l.b16 %v1325
  %v1393 = vunpack.c.h.b16 %v1325
  %v1394 = vunpack.c.l.b16 %v1326
  %v1395 = vunpack.c.l.b16 %v1327
  %v1396 = vunpack.c.h.b16 %v1327
  %v1397 = vunpack.c.l.b16 %v1328
  %v1398 = vunpack.c.h.b16 %v1328
  %v1399 = vunpack.c.l.b16 %v1329
  %v1400 = vunpack.c.l.b16 %v1330
  %v1401 = vunpack.c.h.b16 %v1330
  %v1402 = vunpack.c.l.b16 %v1331
  %v1403 = vunpack.c.h.b16 %v1331
  %v1404 = vunpack.c.l.b16 %v1332
  %v1405 = vpack.c.b16 %v1365, %v1360
  %v1406 = vpack.c.b16 %v1366, %v1361
  %v1407 = vpack.c.b16 %v1367, %v1362
  %v1408 = vpack.c.b16 %v1368, %v1363
  %v1409 = vpack.c.b16 %v1369, %v1364
  %v1410 = vpack.c.b16 %v1375, %v1370
  %v1411 = vpack.c.b16 %v1376, %v1371
  %v1412 = vpack.c.b16 %v1377, %v1372
  %v1413 = vpack.c.b16 %v1378, %v1373
  %v1414 = vpack.c.b16 %v1379, %v1374
  %v1415 = vpack.c.b16 %v1385, %v1380
  %v1416 = vpack.c.b16 %v1386, %v1381
  %v1417 = vpack.c.b16 %v1387, %v1382
  %v1418 = vpack.c.b16 %v1388, %v1383
  %v1419 = vpack.c.b16 %v1389, %v1384
  %v1420 = vpack.c.b16 %v1395, %v1390
  %v1421 = vpack.c.b16 %v1396, %v1391
  %v1422 = vpack.c.b16 %v1397, %v1392
  %v1423 = vpack.c.b16 %v1398, %v1393
  %v1424 = vpack.c.b16 %v1399, %v1394
  %v1425 = vpack.c.b16 %v1400, %v1400
  %v1426 = vpack.c.b16 %v1401, %v1401
  %v1427 = vpack.c.b16 %v1402, %v1402
  %v1428 = vpack.c.b16 %v1403, %v1403
  %v1429 = vpack.c.b16 %v1404, %v1404
  %v1451 = vsel %vm459, %v1409, 0
  %v1454 = vsel %vm459, %v1414, 0
  %v1457 = vsel %vm459, %v1419, 0
  %v1460 = vsel %vm459, %v1424, 0
  %v1463 = vsel %vm459, %v1429, 0
  %1465 = vmatpush.bf16.msra.mxu0 %v394
  %1466 = vmatpush.bf16.msra.mxu0 %v393
  %1467 = vmatpush.bf16.msra.mxu0 %v392
  %1468 = vmatpush.bf16.msra.mxu0 %v391
  %1469 = vmatpush.bf16.msra.mxu0 %v390
  %1470 = vmatpush.bf16.msra.mxu0 %v389
  %1471 = vmatpush.bf16.msra.mxu0 %v388
  %1472 = vmatpush.bf16.msra.mxu0 %v387
  %1473 = vmatmul.bf16.gmra.mxu0 %v1405
  %v1474 = vpop.f32.mrf.mxu0
  %v1475 = vadd.f32 0.0, %v1474
  %v1476 = vpop.f32.mrf.mxu0
  %v1477 = vadd.f32 0.0, %v1476
  %1478 = vmatmul.bf16.gmra.mxu0 %v1410
  %v1479 = vpop.f32.mrf.mxu0
  %v1480 = vadd.f32 0.0, %v1479
  %v1481 = vpop.f32.mrf.mxu0
  %v1482 = vadd.f32 0.0, %v1481
  %1483 = vmatmul.bf16.gmra.mxu0 %v1415
  %v1484 = vpop.f32.mrf.mxu0
  %v1485 = vadd.f32 0.0, %v1484
  %v1486 = vpop.f32.mrf.mxu0
  %v1487 = vadd.f32 0.0, %v1486
  %1488 = vmatmul.bf16.gmra.mxu0 %v1420
  %v1489 = vpop.f32.mrf.mxu0
  %v1490 = vadd.f32 0.0, %v1489
  %v1491 = vpop.f32.mrf.mxu0
  %v1492 = vadd.f32 0.0, %v1491
  %1493 = vmatmul.bf16.gmra.mxu0 %v1425
  %v1494 = vpop.f32.mrf.mxu0
  %v1495 = vadd.f32 0.0, %v1494
  %v1496 = vpop.f32.mrf.mxu0
  %1497 = vdwg.mxu0
  %1498 = vmatpush.bf16.msra.mxu0 %v402
  %1499 = vmatpush.bf16.msra.mxu0 %v401
  %1500 = vmatpush.bf16.msra.mxu0 %v400
  %1501 = vmatpush.bf16.msra.mxu0 %v399
  %1502 = vmatpush.bf16.msra.mxu0 %v398
  %1503 = vmatpush.bf16.msra.mxu0 %v397
  %1504 = vmatpush.bf16.msra.mxu0 %v396
  %1505 = vmatpush.bf16.msra.mxu0 %v395
  %1506 = vmatmul.bf16.gmra.mxu0 %v1406
  %v1507 = vpop.f32.mrf.mxu0
  %v1508 = vadd.f32 %v1475, %v1507
  %v1509 = vpop.f32.mrf.mxu0
  %v1510 = vadd.f32 %v1477, %v1509
  %1511 = vmatmul.bf16.gmra.mxu0 %v1411
  %v1512 = vpop.f32.mrf.mxu0
  %v1513 = vadd.f32 %v1480, %v1512
  %v1514 = vpop.f32.mrf.mxu0
  %v1515 = vadd.f32 %v1482, %v1514
  %1516 = vmatmul.bf16.gmra.mxu0 %v1416
  %v1517 = vpop.f32.mrf.mxu0
  %v1518 = vadd.f32 %v1485, %v1517
  %v1519 = vpop.f32.mrf.mxu0
  %v1520 = vadd.f32 %v1487, %v1519
  %1521 = vmatmul.bf16.gmra.mxu0 %v1421
  %v1522 = vpop.f32.mrf.mxu0
  %v1523 = vadd.f32 %v1490, %v1522
  %v1524 = vpop.f32.mrf.mxu0
  %v1525 = vadd.f32 %v1492, %v1524
  %1526 = vmatmul.bf16.gmra.mxu0 %v1426
  %v1527 = vpop.f32.mrf.mxu0
  %v1528 = vadd.f32 %v1495, %v1527
  %v1529 = vpop.f32.mrf.mxu0
  %1530 = vdwg.mxu0
  %1531 = vmatpush.bf16.msra.mxu0 %v410
  %1532 = vmatpush.bf16.msra.mxu0 %v409
  %1533 = vmatpush.bf16.msra.mxu0 %v408
  %1534 = vmatpush.bf16.msra.mxu0 %v407
  %1535 = vmatpush.bf16.msra.mxu0 %v406
  %1536 = vmatpush.bf16.msra.mxu0 %v405
  %1537 = vmatpush.bf16.msra.mxu0 %v404
  %1538 = vmatpush.bf16.msra.mxu0 %v403
  %1539 = vmatmul.bf16.gmra.mxu0 %v1407
  %v1540 = vpop.f32.mrf.mxu0
  %v1541 = vadd.f32 %v1508, %v1540
  %v1542 = vpop.f32.mrf.mxu0
  %v1543 = vadd.f32 %v1510, %v1542
  %1544 = vmatmul.bf16.gmra.mxu0 %v1412
  %v1545 = vpop.f32.mrf.mxu0
  %v1546 = vadd.f32 %v1513, %v1545
  %v1547 = vpop.f32.mrf.mxu0
  %v1548 = vadd.f32 %v1515, %v1547
  %1549 = vmatmul.bf16.gmra.mxu0 %v1417
  %v1550 = vpop.f32.mrf.mxu0
  %v1551 = vadd.f32 %v1518, %v1550
  %v1552 = vpop.f32.mrf.mxu0
  %v1553 = vadd.f32 %v1520, %v1552
  %1554 = vmatmul.bf16.gmra.mxu0 %v1422
  %v1555 = vpop.f32.mrf.mxu0
  %v1556 = vadd.f32 %v1523, %v1555
  %v1557 = vpop.f32.mrf.mxu0
  %v1558 = vadd.f32 %v1525, %v1557
  %1559 = vmatmul.bf16.gmra.mxu0 %v1427
  %v1560 = vpop.f32.mrf.mxu0
  %v1561 = vadd.f32 %v1528, %v1560
  %v1562 = vpop.f32.mrf.mxu0
  %1563 = vdwg.mxu0
  %1564 = vmatpush.bf16.msra.mxu0 %v418
  %1565 = vmatpush.bf16.msra.mxu0 %v417
  %1566 = vmatpush.bf16.msra.mxu0 %v416
  %1567 = vmatpush.bf16.msra.mxu0 %v415
  %1568 = vmatpush.bf16.msra.mxu0 %v414
  %1569 = vmatpush.bf16.msra.mxu0 %v413
  %1570 = vmatpush.bf16.msra.mxu0 %v412
  %1571 = vmatpush.bf16.msra.mxu0 %v411
  %1572 = vmatmul.bf16.gmra.mxu0 %v1408
  %v1573 = vpop.f32.mrf.mxu0
  %v1574 = vadd.f32 %v1541, %v1573
  %v1575 = vpop.f32.mrf.mxu0
  %v1576 = vadd.f32 %v1543, %v1575
  %1577 = vmatmul.bf16.gmra.mxu0 %v1413
  %v1578 = vpop.f32.mrf.mxu0
  %v1579 = vadd.f32 %v1546, %v1578
  %v1580 = vpop.f32.mrf.mxu0
  %v1581 = vadd.f32 %v1548, %v1580
  %1582 = vmatmul.bf16.gmra.mxu0 %v1418
  %v1583 = vpop.f32.mrf.mxu0
  %v1584 = vadd.f32 %v1551, %v1583
  %v1585 = vpop.f32.mrf.mxu0
  %v1586 = vadd.f32 %v1553, %v1585
  %1587 = vmatmul.bf16.gmra.mxu0 %v1423
  %v1588 = vpop.f32.mrf.mxu0
  %v1589 = vadd.f32 %v1556, %v1588
  %v1590 = vpop.f32.mrf.mxu0
  %v1591 = vadd.f32 %v1558, %v1590
  %1592 = vmatmul.bf16.gmra.mxu0 %v1428
  %v1593 = vpop.f32.mrf.mxu0
  %v1594 = vadd.f32 %v1561, %v1593
  %v1595 = vpop.f32.mrf.mxu0
  %1596 = vdwg.mxu0
  %1597 = vmatpush.bf16.msra.mxu0 0
  %1598 = vmatpush.bf16.msra.mxu0 0
  %1599 = vmatpush.bf16.msra.mxu0 0
  %1600 = vmatpush.bf16.msra.mxu0 0
  %1601 = vmatpush.bf16.msra.mxu0 %v422
  %1602 = vmatpush.bf16.msra.mxu0 %v421
  %1603 = vmatpush.bf16.msra.mxu0 %v420
  %1604 = vmatpush.bf16.msra.mxu0 %v419
  %1605 = vmatmul.bf16.gmra.mxu0 %v1451
  %v1606 = vpop.f32.mrf.mxu0
  %v1607 = vadd.f32 %v1574, %v1606
  %v1608 = vpop.f32.mrf.mxu0
  %v1609 = vadd.f32 %v1576, %v1608
  %1610 = vmatmul.bf16.gmra.mxu0 %v1454
  %v1611 = vpop.f32.mrf.mxu0
  %v1612 = vadd.f32 %v1579, %v1611
  %v1613 = vpop.f32.mrf.mxu0
  %v1614 = vadd.f32 %v1581, %v1613
  %1615 = vmatmul.bf16.gmra.mxu0 %v1457
  %v1616 = vpop.f32.mrf.mxu0
  %v1617 = vadd.f32 %v1584, %v1616
  %v1618 = vpop.f32.mrf.mxu0
  %v1619 = vadd.f32 %v1586, %v1618
  %1620 = vmatmul.bf16.gmra.mxu0 %v1460
  %v1621 = vpop.f32.mrf.mxu0
  %v1622 = vadd.f32 %v1589, %v1621
  %v1623 = vpop.f32.mrf.mxu0
  %v1624 = vadd.f32 %v1591, %v1623
  %1625 = vmatmul.bf16.gmra.mxu0 %v1463
  %v1626 = vpop.f32.mrf.mxu0
  %v1627 = vadd.f32 %v1594, %v1626
  %v1628 = vpop.f32.mrf.mxu0
  %1629 = vdwg.mxu0
  %v1630 = vmax.f32 %v1297, %v1607
  %v1631 = vmax.f32 %v1298, %v1609
  %v1632 = vmax.f32 %v1299, %v1612
  %v1633 = vmax.f32 %v1300, %v1614
  %v1634 = vmax.f32 %v1301, %v1617
  %v1635 = vmax.f32 %v1302, %v1619
  %v1636 = vmax.f32 %v1303, %v1622
  %v1637 = vmax.f32 %v1304, %v1624
  %v1638 = vmax.f32 %v1305, %v1627
  %v1639 = vld [vmem:[%s5] sm:$0x1]
  %v1641 = vperm.slane %v1639, 0
  %v1643 = vadd.f32 %v1630, %v1641
  %v1644 = vadd.f32 %v1631, %v1641
  %v1645 = vadd.f32 %v1632, %v1641
  %v1646 = vadd.f32 %v1633, %v1641
  %v1647 = vadd.f32 %v1634, %v1641
  %v1648 = vadd.f32 %v1635, %v1641
  %v1649 = vadd.f32 %v1636, %v1641
  %v1650 = vadd.f32 %v1637, %v1641
  %v1651 = vadd.f32 %v1638, %v1641
  %v1652 = vmax.f32 %v1643, 0.0
  %v1653 = vmax.f32 %v1644, 0.0
  %v1654 = vmax.f32 %v1645, 0.0
  %v1655 = vmax.f32 %v1646, 0.0
  %v1656 = vmax.f32 %v1647, 0.0
  %v1657 = vmax.f32 %v1648, 0.0
  %v1658 = vmax.f32 %v1649, 0.0
  %v1659 = vmax.f32 %v1650, 0.0
  %v1660 = vmax.f32 %v1651, 0.0
  %v1661 = vld [vmem:[%s6] sm:$0x1]
  %v1663 = vperm.slane %v1661, 0
  %v1665 = vadd.f32 %v1652, %v1663
  %v1666 = vadd.f32 %v1653, %v1663
  %v1667 = vadd.f32 %v1654, %v1663
  %v1668 = vadd.f32 %v1655, %v1663
  %v1669 = vadd.f32 %v1656, %v1663
  %v1670 = vadd.f32 %v1657, %v1663
  %v1671 = vadd.f32 %v1658, %v1663
  %v1672 = vadd.f32 %v1659, %v1663
  %v1673 = vadd.f32 %v1660, %v1663
  %v1674 = vpack.c.bf16 %v1665, %v1665
  %v1675 = vpack.c.bf16 %v1666, %v1666
  %v1676 = vpack.c.bf16 %v1667, %v1667
  %v1677 = vpack.c.bf16 %v1668, %v1668
  %v1678 = vpack.c.bf16 %v1669, %v1669
  %v1679 = vpack.c.bf16 %v1670, %v1670
  %v1680 = vpack.c.bf16 %v1671, %v1671
  %v1681 = vpack.c.bf16 %v1672, %v1672
  %v1682 = vpack.c.bf16 %v1673, %v1673
  %vm1683 = vcmask 781312
  %1684 = vst.msk [vmem:[%s7] sm:$0xf] %vm1683, %v1674
  %1685 = vst.msk [vmem:[%s7 + $0x4] sm:$0xf] %vm1683, %v1675
  %1686 = vst.msk [vmem:[%s7 + $0x8] sm:$0xf] %vm1683, %v1676
  %1687 = vst.msk [vmem:[%s7 + $0xc] sm:$0xf] %vm1683, %v1677
  %1688 = vst.msk [vmem:[%s7 + $0x10] sm:$0xf] %vm1683, %v1678
  %1689 = vst.msk [vmem:[%s7 + $0x14] sm:$0xf] %vm1683, %v1679
  %1690 = vst.msk [vmem:[%s7 + $0x18] sm:$0xf] %vm1683, %v1680
  %1691 = vst.msk [vmem:[%s7 + $0x1c] sm:$0xf] %vm1683, %v1681
  %1692 = vst.msk [vmem:[%s7 + $0x20] sm:$0xf] %vm1683, %v1682
  // Predicated region
  $region30: #{kkkc_forward.7} parent=0 // pred_check
    _
  $region31: #{kkkc_forward.7} parent=0 // pred_check_branch
    %1694 = sbr.rel (0) target = $region33
  $region32: #{kkkc_forward.7} parent=0 // pred_region
    _
  $region33: #{kkkc_forward.7} parent=0 // pred_fallthru
    _
  // Predicated region
  $region34: #{kkkc_forward.7} parent=0 // pred_check
    _
  $region35: #{kkkc_forward.7} parent=0 // pred_check_branch
    %1696 = sbr.rel (0) target = $region37
  $region36: #{kkkc_forward.7} parent=0 // pred_region
    _
  $region37: #{kkkc_forward.7} parent=0 // pred_fallthru
    _

// kernel: kkkc_forward.8
$region0: #{kkkc_forward.8}
  #allocation0 [shape = 'u32[]', space=smem, size = 0x4, offset = 0x4, fixed_abs, tag = 'smem constant byte address 0x4 - core index']
  #allocation1 [shape = 'u32[72,128]{1,0:T(1,128)}', space=vmem, size = 0x9000, scoped, tag = 'internal scratch']
  %s0 = inlined_call_operand.vmem [shape: bf16[32,864], index: 0, kind: input, shape index: {}]
  %s1 = inlined_call_operand.vmem [shape: bf16[864,128], index: 1, kind: input, shape index: {}]
  %s2 = inlined_call_operand.vmem [shape: f32[1,128], index: 2, kind: input, shape index: {}]
  %s3 = inlined_call_operand.vmem [shape: f32[1,128], index: 3, kind: input, shape index: {}]
  %s4 = inlined_call_operand.vmem [shape: f32[32,128], index: 4, kind: output, shape index: {}]
  %s5 = sld [smem:[#allocation0]]
  $region26: #{kkkc_forward.8} parent=0
    _
  %s7 = ssub.s32 1, %s5
  %s8 = scalar_select 0, %s7, %s5
  // Predicated region
  $region2: #{kkkc_forward.8} parent=0 // pred_check
    _
  $region3: #{kkkc_forward.8} parent=0 // pred_check_branch
    %10 = sbr.rel (0) target = $region5
  $region4: #{kkkc_forward.8} parent=0 // pred_region
    _
  $region5: #{kkkc_forward.8} parent=0 // pred_fallthru
    _
  // Predicated region
  $region6: #{kkkc_forward.8} parent=0 // pred_check
    _
  $region7: #{kkkc_forward.8} parent=0 // pred_check_branch
    %12 = sbr.rel (0) target = $region9
  $region8: #{kkkc_forward.8} parent=0 // pred_region
    _
  $region9: #{kkkc_forward.8} parent=0 // pred_fallthru
    _
  // Predicated region
  $region10: #{kkkc_forward.8} parent=0 // pred_check
    _
  $region11: #{kkkc_forward.8} parent=0 // pred_check_branch
    %14 = sbr.rel (0) target = $region13
  $region12: #{kkkc_forward.8} parent=0 // pred_region
    _
  $region13: #{kkkc_forward.8} parent=0 // pred_fallthru
    _
  // Predicated region
  $region14: #{kkkc_forward.8} parent=0 // pred_check
    _
  $region15: #{kkkc_forward.8} parent=0 // pred_check_branch
    %16 = sbr.rel (0) target = $region17
  $region16: #{kkkc_forward.8} parent=0 // pred_region
    _
  $region17: #{kkkc_forward.8} parent=0 // pred_fallthru
    _
  %v18 = vld [vmem:[%s0] sm:$0xff]
  %v19 = vld [vmem:[%s0 + $0x8] sm:$0xff]
  %v20 = vld [vmem:[%s0 + $0x10] sm:$0xff]
  %v21 = vld [vmem:[%s0 + $0x18] sm:$0xf]
  %v22 = vld [vmem:[%s0 + $0x1c] sm:$0xff]
  %v23 = vld [vmem:[%s0 + $0x24] sm:$0xff]
  %v24 = vld [vmem:[%s0 + $0x2c] sm:$0xff]
  %v25 = vld [vmem:[%s0 + $0x34] sm:$0xf]
  %v26 = vld [vmem:[%s0 + $0x38] sm:$0xff]
  %v27 = vld [vmem:[%s0 + $0x40] sm:$0xff]
  %v28 = vld [vmem:[%s0 + $0x48] sm:$0xff]
  %v29 = vld [vmem:[%s0 + $0x50] sm:$0xf]
  %v30 = vld [vmem:[%s0 + $0x54] sm:$0xff]
  %v31 = vld [vmem:[%s0 + $0x5c] sm:$0xff]
  %v32 = vld [vmem:[%s0 + $0x64] sm:$0xff]
  %v33 = vld [vmem:[%s0 + $0x6c] sm:$0xf]
  %v34 = vld [vmem:[%s1] sm:$0xf]
  %v35 = vld [vmem:[%s1 + $0x4] sm:$0xf]
  %v36 = vld [vmem:[%s1 + $0x8] sm:$0xf]
  %v37 = vld [vmem:[%s1 + $0xc] sm:$0xf]
  %v38 = vld [vmem:[%s1 + $0x10] sm:$0xf]
  %v39 = vld [vmem:[%s1 + $0x14] sm:$0xf]
  %v40 = vld [vmem:[%s1 + $0x18] sm:$0xf]
  %v41 = vld [vmem:[%s1 + $0x1c] sm:$0xf]
  %v42 = vld [vmem:[%s1 + $0x20] sm:$0xf]
  %v43 = vld [vmem:[%s1 + $0x24] sm:$0xf]
  %v44 = vld [vmem:[%s1 + $0x28] sm:$0xf]
  %v45 = vld [vmem:[%s1 + $0x2c] sm:$0xf]
  %v46 = vld [vmem:[%s1 + $0x30] sm:$0xf]
  %v47 = vld [vmem:[%s1 + $0x34] sm:$0xf]
  %v48 = vld [vmem:[%s1 + $0x38] sm:$0xf]
  %v49 = vld [vmem:[%s1 + $0x3c] sm:$0xf]
  %v50 = vld [vmem:[%s1 + $0x40] sm:$0xf]
  %v51 = vld [vmem:[%s1 + $0x44] sm:$0xf]
  %v52 = vld [vmem:[%s1 + $0x48] sm:$0xf]
  %v53 = vld [vmem:[%s1 + $0x4c] sm:$0xf]
  %v54 = vld [vmem:[%s1 + $0x50] sm:$0xf]
  %v55 = vld [vmem:[%s1 + $0x54] sm:$0xf]
  %v56 = vld [vmem:[%s1 + $0x58] sm:$0xf]
  %v57 = vld [vmem:[%s1 + $0x5c] sm:$0xf]
  %v58 = vld [vmem:[%s1 + $0x60] sm:$0xf]
  %v59 = vld [vmem:[%s1 + $0x64] sm:$0xf]
  %v60 = vld [vmem:[%s1 + $0x68] sm:$0xf]
  %v61 = vld [vmem:[%s1 + $0x6c] sm:$0xf]
  %v62 = vld [vmem:[%s1 + $0x70] sm:$0xf]
  %v63 = vld [vmem:[%s1 + $0x74] sm:$0xf]
  %v64 = vld [vmem:[%s1 + $0x78] sm:$0xf]
  %v65 = vld [vmem:[%s1 + $0x7c] sm:$0xf]
  %v66 = vld [vmem:[%s1 + $0x80] sm:$0xf]
  %v67 = vld [vmem:[%s1 + $0x84] sm:$0xf]
  %v68 = vld [vmem:[%s1 + $0x88] sm:$0xf]
  %v69 = vld [vmem:[%s1 + $0x8c] sm:$0xf]
  %v70 = vld [vmem:[%s1 + $0x90] sm:$0xf]
  %v71 = vld [vmem:[%s1 + $0x94] sm:$0xf]
  %v72 = vld [vmem:[%s1 + $0x98] sm:$0xf]
  %v73 = vld [vmem:[%s1 + $0x9c] sm:$0xf]
  %v74 = vld [vmem:[%s1 + $0xa0] sm:$0xf]
  %v75 = vld [vmem:[%s1 + $0xa4] sm:$0xf]
  %v76 = vld [vmem:[%s1 + $0xa8] sm:$0xf]
  %v77 = vld [vmem:[%s1 + $0xac] sm:$0xf]
  %v78 = vld [vmem:[%s1 + $0xb0] sm:$0xf]
  %v79 = vld [vmem:[%s1 + $0xb4] sm:$0xf]
  %v80 = vld [vmem:[%s1 + $0xb8] sm:$0xf]
  %v81 = vld [vmem:[%s1 + $0xbc] sm:$0xf]
  %v82 = vld [vmem:[%s1 + $0xc0] sm:$0xf]
  %v83 = vld [vmem:[%s1 + $0xc4] sm:$0xf]
  %v84 = vld [vmem:[%s1 + $0xc8] sm:$0xf]
  %v85 = vld [vmem:[%s1 + $0xcc] sm:$0xf]
  %v86 = vld [vmem:[%s1 + $0xd0] sm:$0xf]
  %v87 = vld [vmem:[%s1 + $0xd4] sm:$0xf]
  %v88 = vld [vmem:[%s1 + $0xd8] sm:$0xf]
  %v89 = vld [vmem:[%s1 + $0xdc] sm:$0xf]
  %v90 = vld [vmem:[%s1 + $0xe0] sm:$0xf]
  %v91 = vld [vmem:[%s1 + $0xe4] sm:$0xf]
  %v92 = vld [vmem:[%s1 + $0xe8] sm:$0xf]
  %v93 = vld [vmem:[%s1 + $0xec] sm:$0xf]
  %v94 = vld [vmem:[%s1 + $0xf0] sm:$0xf]
  %v95 = vld [vmem:[%s1 + $0xf4] sm:$0xf]
  %v96 = vld [vmem:[%s1 + $0xf8] sm:$0xf]
  %v97 = vld [vmem:[%s1 + $0xfc] sm:$0xf]
  %v98 = vld [vmem:[%s1 + $0x100] sm:$0xf]
  %v99 = vld [vmem:[%s1 + $0x104] sm:$0xf]
  %v100 = vld [vmem:[%s1 + $0x108] sm:$0xf]
  %v101 = vld [vmem:[%s1 + $0x10c] sm:$0xf]
  %v102 = vld [vmem:[%s1 + $0x110] sm:$0xf]
  %v103 = vld [vmem:[%s1 + $0x114] sm:$0xf]
  %v104 = vld [vmem:[%s1 + $0x118] sm:$0xf]
  %v105 = vld [vmem:[%s1 + $0x11c] sm:$0xf]
  %v106 = vld [vmem:[%s1 + $0x120] sm:$0xf]
  %v107 = vld [vmem:[%s1 + $0x124] sm:$0xf]
  %v108 = vld [vmem:[%s1 + $0x128] sm:$0xf]
  %v109 = vld [vmem:[%s1 + $0x12c] sm:$0xf]
  %v110 = vld [vmem:[%s1 + $0x130] sm:$0xf]
  %v111 = vld [vmem:[%s1 + $0x134] sm:$0xf]
  %v112 = vld [vmem:[%s1 + $0x138] sm:$0xf]
  %v113 = vld [vmem:[%s1 + $0x13c] sm:$0xf]
  %v114 = vld [vmem:[%s1 + $0x140] sm:$0xf]
  %v115 = vld [vmem:[%s1 + $0x144] sm:$0xf]
  %v116 = vld [vmem:[%s1 + $0x148] sm:$0xf]
  %v117 = vld [vmem:[%s1 + $0x14c] sm:$0xf]
  %v118 = vld [vmem:[%s1 + $0x150] sm:$0xf]
  %v119 = vld [vmem:[%s1 + $0x154] sm:$0xf]
  %v120 = vld [vmem:[%s1 + $0x158] sm:$0xf]
  %v121 = vld [vmem:[%s1 + $0x15c] sm:$0xf]
  %v122 = vld [vmem:[%s1 + $0x160] sm:$0xf]
  %v123 = vld [vmem:[%s1 + $0x164] sm:$0xf]
  %v124 = vld [vmem:[%s1 + $0x168] sm:$0xf]
  %v125 = vld [vmem:[%s1 + $0x16c] sm:$0xf]
  %v126 = vld [vmem:[%s1 + $0x170] sm:$0xf]
  %v127 = vld [vmem:[%s1 + $0x174] sm:$0xf]
  %v128 = vld [vmem:[%s1 + $0x178] sm:$0xf]
  %v129 = vld [vmem:[%s1 + $0x17c] sm:$0xf]
  %v130 = vld [vmem:[%s1 + $0x180] sm:$0xf]
  %v131 = vld [vmem:[%s1 + $0x184] sm:$0xf]
  %v132 = vld [vmem:[%s1 + $0x188] sm:$0xf]
  %v133 = vld [vmem:[%s1 + $0x18c] sm:$0xf]
  %v134 = vld [vmem:[%s1 + $0x190] sm:$0xf]
  %v135 = vld [vmem:[%s1 + $0x194] sm:$0xf]
  %v136 = vld [vmem:[%s1 + $0x198] sm:$0xf]
  %v137 = vld [vmem:[%s1 + $0x19c] sm:$0xf]
  %v138 = vld [vmem:[%s1 + $0x1a0] sm:$0xf]
  %v139 = vld [vmem:[%s1 + $0x1a4] sm:$0xf]
  %v140 = vld [vmem:[%s1 + $0x1a8] sm:$0xf]
  %v141 = vld [vmem:[%s1 + $0x1ac] sm:$0xf]
  %v142 = vld [vmem:[%s2] sm:$0x1]
  %v144 = vperm.slane %v142, 0
  %v162 = vunpack.c.l.b16 %v18
  %v163 = vunpack.c.h.b16 %v18
  %v164 = vunpack.c.l.b16 %v19
  %v165 = vunpack.c.h.b16 %v19
  %v166 = vunpack.c.l.b16 %v20
  %v167 = vunpack.c.h.b16 %v20
  %v168 = vunpack.c.l.b16 %v21
  %v169 = vunpack.c.l.b16 %v22
  %v170 = vunpack.c.h.b16 %v22
  %v171 = vunpack.c.l.b16 %v23
  %v172 = vunpack.c.h.b16 %v23
  %v173 = vunpack.c.l.b16 %v24
  %v174 = vunpack.c.h.b16 %v24
  %v175 = vunpack.c.l.b16 %v25
  %v176 = vunpack.c.l.b16 %v26
  %v177 = vunpack.c.h.b16 %v26
  %v178 = vunpack.c.l.b16 %v27
  %v179 = vunpack.c.h.b16 %v27
  %v180 = vunpack.c.l.b16 %v28
  %v181 = vunpack.c.h.b16 %v28
  %v182 = vunpack.c.l.b16 %v29
  %v183 = vunpack.c.l.b16 %v30
  %v184 = vunpack.c.h.b16 %v30
  %v185 = vunpack.c.l.b16 %v31
  %v186 = vunpack.c.h.b16 %v31
  %v187 = vunpack.c.l.b16 %v32
  %v188 = vunpack.c.h.b16 %v32
  %v189 = vunpack.c.l.b16 %v33
  %v190 = vpack.c.b16 %v169, %v162
  %v191 = vpack.c.b16 %v170, %v163
  %v192 = vpack.c.b16 %v171, %v164
  %v193 = vpack.c.b16 %v172, %v165
  %v194 = vpack.c.b16 %v173, %v166
  %v195 = vpack.c.b16 %v174, %v167
  %v196 = vpack.c.b16 %v175, %v168
  %v197 = vpack.c.b16 %v183, %v176
  %v198 = vpack.c.b16 %v184, %v177
  %v199 = vpack.c.b16 %v185, %v178
  %v200 = vpack.c.b16 %v186, %v179
  %v201 = vpack.c.b16 %v187, %v180
  %v202 = vpack.c.b16 %v188, %v181
  %v203 = vpack.c.b16 %v189, %v182
  %v324 = vunpack.c.l.b16 %v34
  %v325 = vunpack.c.l.b16 %v35
  %v326 = vunpack.c.l.b16 %v36
  %v327 = vunpack.c.l.b16 %v37
  %v328 = vunpack.c.l.b16 %v38
  %v329 = vunpack.c.l.b16 %v39
  %v330 = vunpack.c.l.b16 %v40
  %v331 = vunpack.c.l.b16 %v41
  %v332 = vunpack.c.l.b16 %v42
  %v333 = vunpack.c.l.b16 %v43
  %v334 = vunpack.c.l.b16 %v44
  %v335 = vunpack.c.l.b16 %v45
  %v336 = vunpack.c.l.b16 %v46
  %v337 = vunpack.c.l.b16 %v47
  %v338 = vunpack.c.l.b16 %v48
  %v339 = vunpack.c.l.b16 %v49
  %v340 = vunpack.c.l.b16 %v50
  %v341 = vunpack.c.l.b16 %v51
  %v342 = vunpack.c.l.b16 %v52
  %v343 = vunpack.c.l.b16 %v53
  %v344 = vunpack.c.l.b16 %v54
  %v345 = vunpack.c.l.b16 %v55
  %v346 = vunpack.c.l.b16 %v56
  %v347 = vunpack.c.l.b16 %v57
  %v348 = vunpack.c.l.b16 %v58
  %v349 = vunpack.c.l.b16 %v59
  %v350 = vunpack.c.l.b16 %v60
  %v351 = vunpack.c.l.b16 %v61
  %v352 = vunpack.c.l.b16 %v62
  %v353 = vunpack.c.l.b16 %v63
  %v354 = vunpack.c.l.b16 %v64
  %v355 = vunpack.c.l.b16 %v65
  %v356 = vunpack.c.l.b16 %v66
  %v357 = vunpack.c.l.b16 %v67
  %v358 = vunpack.c.l.b16 %v68
  %v359 = vunpack.c.l.b16 %v69
  %v360 = vunpack.c.l.b16 %v70
  %v361 = vunpack.c.l.b16 %v71
  %v362 = vunpack.c.l.b16 %v72
  %v363 = vunpack.c.l.b16 %v73
  %v364 = vunpack.c.l.b16 %v74
  %v365 = vunpack.c.l.b16 %v75
  %v366 = vunpack.c.l.b16 %v76
  %v367 = vunpack.c.l.b16 %v77
  %v368 = vunpack.c.l.b16 %v78
  %v369 = vunpack.c.l.b16 %v79
  %v370 = vunpack.c.l.b16 %v80
  %v371 = vunpack.c.l.b16 %v81
  %v372 = vunpack.c.l.b16 %v82
  %v373 = vunpack.c.l.b16 %v83
  %v374 = vunpack.c.l.b16 %v84
  %v375 = vunpack.c.l.b16 %v85
  %v376 = vunpack.c.l.b16 %v86
  %v377 = vunpack.c.l.b16 %v87
  %v378 = vunpack.c.l.b16 %v88
  %v379 = vunpack.c.l.b16 %v89
  %v380 = vunpack.c.l.b16 %v90
  %v381 = vunpack.c.l.b16 %v91
  %v382 = vunpack.c.l.b16 %v92
  %v383 = vunpack.c.l.b16 %v93
  %v384 = vunpack.c.l.b16 %v94
  %v385 = vunpack.c.l.b16 %v95
  %v386 = vunpack.c.l.b16 %v96
  %v387 = vunpack.c.l.b16 %v97
  %v388 = vunpack.c.l.b16 %v98
  %v389 = vunpack.c.l.b16 %v99
  %v390 = vunpack.c.l.b16 %v100
  %v391 = vunpack.c.l.b16 %v101
  %v392 = vunpack.c.l.b16 %v102
  %v393 = vunpack.c.l.b16 %v103
  %v394 = vunpack.c.l.b16 %v104
  %v395 = vunpack.c.l.b16 %v105
  %v396 = vunpack.c.l.b16 %v106
  %v397 = vunpack.c.l.b16 %v107
  %v398 = vunpack.c.l.b16 %v108
  %v399 = vunpack.c.l.b16 %v109
  %v400 = vunpack.c.l.b16 %v110
  %v401 = vunpack.c.l.b16 %v111
  %v402 = vunpack.c.l.b16 %v112
  %v403 = vunpack.c.l.b16 %v113
  %v404 = vunpack.c.l.b16 %v114
  %v405 = vunpack.c.l.b16 %v115
  %v406 = vunpack.c.l.b16 %v116
  %v407 = vunpack.c.l.b16 %v117
  %v408 = vunpack.c.l.b16 %v118
  %v409 = vunpack.c.l.b16 %v119
  %v410 = vunpack.c.l.b16 %v120
  %v411 = vunpack.c.l.b16 %v121
  %v412 = vunpack.c.l.b16 %v122
  %v413 = vunpack.c.l.b16 %v123
  %v414 = vunpack.c.l.b16 %v124
  %v415 = vunpack.c.l.b16 %v125
  %v416 = vunpack.c.l.b16 %v126
  %v417 = vunpack.c.l.b16 %v127
  %v418 = vunpack.c.l.b16 %v128
  %v419 = vunpack.c.l.b16 %v129
  %v420 = vunpack.c.l.b16 %v130
  %v421 = vunpack.c.l.b16 %v131
  %v422 = vunpack.c.l.b16 %v132
  %v423 = vunpack.c.l.b16 %v133
  %v424 = vunpack.c.l.b16 %v134
  %v425 = vunpack.c.l.b16 %v135
  %v426 = vunpack.c.l.b16 %v136
  %v427 = vunpack.c.l.b16 %v137
  %v428 = vunpack.c.l.b16 %v138
  %v429 = vunpack.c.l.b16 %v139
  %v430 = vunpack.c.l.b16 %v140
  %v431 = vunpack.c.l.b16 %v141
  %v432 = vpack.c.b16 %v325, %v324
  %v433 = vpack.c.b16 %v327, %v326
  %v434 = vpack.c.b16 %v329, %v328
  %v435 = vpack.c.b16 %v331, %v330
  %v436 = vpack.c.b16 %v333, %v332
  %v437 = vpack.c.b16 %v335, %v334
  %v438 = vpack.c.b16 %v337, %v336
  %v439 = vpack.c.b16 %v339, %v338
  %v440 = vpack.c.b16 %v341, %v340
  %v441 = vpack.c.b16 %v343, %v342
  %v442 = vpack.c.b16 %v345, %v344
  %v443 = vpack.c.b16 %v347, %v346
  %v444 = vpack.c.b16 %v349, %v348
  %v445 = vpack.c.b16 %v351, %v350
  %v446 = vpack.c.b16 %v353, %v352
  %v447 = vpack.c.b16 %v355, %v354
  %v448 = vpack.c.b16 %v357, %v356
  %v449 = vpack.c.b16 %v359, %v358
  %v450 = vpack.c.b16 %v361, %v360
  %v451 = vpack.c.b16 %v363, %v362
  %v452 = vpack.c.b16 %v365, %v364
  %v453 = vpack.c.b16 %v367, %v366
  %v454 = vpack.c.b16 %v369, %v368
  %v455 = vpack.c.b16 %v371, %v370
  %v456 = vpack.c.b16 %v373, %v372
  %v457 = vpack.c.b16 %v375, %v374
  %v458 = vpack.c.b16 %v377, %v376
  %v459 = vpack.c.b16 %v379, %v378
  %v460 = vpack.c.b16 %v381, %v380
  %v461 = vpack.c.b16 %v383, %v382
  %v462 = vpack.c.b16 %v385, %v384
  %v463 = vpack.c.b16 %v387, %v386
  %v464 = vpack.c.b16 %v389, %v388
  %v465 = vpack.c.b16 %v391, %v390
  %v466 = vpack.c.b16 %v393, %v392
  %v467 = vpack.c.b16 %v395, %v394
  %v468 = vpack.c.b16 %v397, %v396
  %v469 = vpack.c.b16 %v399, %v398
  %v470 = vpack.c.b16 %v401, %v400
  %v471 = vpack.c.b16 %v403, %v402
  %v472 = vpack.c.b16 %v405, %v404
  %v473 = vpack.c.b16 %v407, %v406
  %v474 = vpack.c.b16 %v409, %v408
  %v475 = vpack.c.b16 %v411, %v410
  %v476 = vpack.c.b16 %v413, %v412
  %v477 = vpack.c.b16 %v415, %v414
  %v478 = vpack.c.b16 %v417, %v416
  %v479 = vpack.c.b16 %v419, %v418
  %v480 = vpack.c.b16 %v421, %v420
  %v481 = vpack.c.b16 %v423, %v422
  %v482 = vpack.c.b16 %v425, %v424
  %v483 = vpack.c.b16 %v427, %v426
  %v484 = vpack.c.b16 %v429, %v428
  %v485 = vpack.c.b16 %v431, %v430
  %vm540 = vcmask 785408
  %v542 = vsel %vm540, %v196, 0
  %v545 = vsel %vm540, %v203, 0
  %547 = vmatpush.bf16.msra.mxu0 %v439
  %548 = vmatpush.bf16.msra.mxu0 %v438
  %549 = vmatpush.bf16.msra.mxu0 %v437
  %550 = vmatpush.bf16.msra.mxu0 %v436
  %551 = vmatpush.bf16.msra.mxu0 %v435
  %552 = vmatpush.bf16.msra.mxu0 %v434
  %553 = vmatpush.bf16.msra.mxu0 %v433
  %554 = vmatpush.bf16.msra.mxu0 %v432
  %555 = vmatmul.bf16.gmra.mxu0 %v190
  %v556 = vpop.f32.mrf.mxu0
  %v557 = vadd.f32 %v144, %v556
  %v558 = vpop.f32.mrf.mxu0
  %v559 = vadd.f32 %v144, %v558
  %560 = vmatmul.bf16.gmra.mxu0 %v197
  %v561 = vpop.f32.mrf.mxu0
  %v562 = vadd.f32 %v144, %v561
  %v563 = vpop.f32.mrf.mxu0
  %v564 = vadd.f32 %v144, %v563
  %565 = vdwg.mxu0
  %566 = vmatpush.bf16.msra.mxu0 %v447
  %567 = vmatpush.bf16.msra.mxu0 %v446
  %568 = vmatpush.bf16.msra.mxu0 %v445
  %569 = vmatpush.bf16.msra.mxu0 %v444
  %570 = vmatpush.bf16.msra.mxu0 %v443
  %571 = vmatpush.bf16.msra.mxu0 %v442
  %572 = vmatpush.bf16.msra.mxu0 %v441
  %573 = vmatpush.bf16.msra.mxu0 %v440
  %574 = vmatmul.bf16.gmra.mxu0 %v191
  %v575 = vpop.f32.mrf.mxu0
  %v576 = vadd.f32 %v557, %v575
  %v577 = vpop.f32.mrf.mxu0
  %v578 = vadd.f32 %v559, %v577
  %579 = vmatmul.bf16.gmra.mxu0 %v198
  %v580 = vpop.f32.mrf.mxu0
  %v581 = vadd.f32 %v562, %v580
  %v582 = vpop.f32.mrf.mxu0
  %v583 = vadd.f32 %v564, %v582
  %584 = vdwg.mxu0
  %585 = vmatpush.bf16.msra.mxu0 %v455
  %586 = vmatpush.bf16.msra.mxu0 %v454
  %587 = vmatpush.bf16.msra.mxu0 %v453
  %588 = vmatpush.bf16.msra.mxu0 %v452
  %589 = vmatpush.bf16.msra.mxu0 %v451
  %590 = vmatpush.bf16.msra.mxu0 %v450
  %591 = vmatpush.bf16.msra.mxu0 %v449
  %592 = vmatpush.bf16.msra.mxu0 %v448
  %593 = vmatmul.bf16.gmra.mxu0 %v192
  %v594 = vpop.f32.mrf.mxu0
  %v595 = vadd.f32 %v576, %v594
  %v596 = vpop.f32.mrf.mxu0
  %v597 = vadd.f32 %v578, %v596
  %598 = vmatmul.bf16.gmra.mxu0 %v199
  %v599 = vpop.f32.mrf.mxu0
  %v600 = vadd.f32 %v581, %v599
  %v601 = vpop.f32.mrf.mxu0
  %v602 = vadd.f32 %v583, %v601
  %603 = vdwg.mxu0
  %604 = vmatpush.bf16.msra.mxu0 %v463
  %605 = vmatpush.bf16.msra.mxu0 %v462
  %606 = vmatpush.bf16.msra.mxu0 %v461
  %607 = vmatpush.bf16.msra.mxu0 %v460
  %608 = vmatpush.bf16.msra.mxu0 %v459
  %609 = vmatpush.bf16.msra.mxu0 %v458
  %610 = vmatpush.bf16.msra.mxu0 %v457
  %611 = vmatpush.bf16.msra.mxu0 %v456
  %612 = vmatmul.bf16.gmra.mxu0 %v193
  %v613 = vpop.f32.mrf.mxu0
  %v614 = vadd.f32 %v595, %v613
  %v615 = vpop.f32.mrf.mxu0
  %v616 = vadd.f32 %v597, %v615
  %617 = vmatmul.bf16.gmra.mxu0 %v200
  %v618 = vpop.f32.mrf.mxu0
  %v619 = vadd.f32 %v600, %v618
  %v620 = vpop.f32.mrf.mxu0
  %v621 = vadd.f32 %v602, %v620
  %622 = vdwg.mxu0
  %623 = vmatpush.bf16.msra.mxu0 %v471
  %624 = vmatpush.bf16.msra.mxu0 %v470
  %625 = vmatpush.bf16.msra.mxu0 %v469
  %626 = vmatpush.bf16.msra.mxu0 %v468
  %627 = vmatpush.bf16.msra.mxu0 %v467
  %628 = vmatpush.bf16.msra.mxu0 %v466
  %629 = vmatpush.bf16.msra.mxu0 %v465
  %630 = vmatpush.bf16.msra.mxu0 %v464
  %631 = vmatmul.bf16.gmra.mxu0 %v194
  %v632 = vpop.f32.mrf.mxu0
  %v633 = vadd.f32 %v614, %v632
  %v634 = vpop.f32.mrf.mxu0
  %v635 = vadd.f32 %v616, %v634
  %636 = vmatmul.bf16.gmra.mxu0 %v201
  %v637 = vpop.f32.mrf.mxu0
  %v638 = vadd.f32 %v619, %v637
  %v639 = vpop.f32.mrf.mxu0
  %v640 = vadd.f32 %v621, %v639
  %641 = vdwg.mxu0
  %642 = vmatpush.bf16.msra.mxu0 %v479
  %643 = vmatpush.bf16.msra.mxu0 %v478
  %644 = vmatpush.bf16.msra.mxu0 %v477
  %645 = vmatpush.bf16.msra.mxu0 %v476
  %646 = vmatpush.bf16.msra.mxu0 %v475
  %647 = vmatpush.bf16.msra.mxu0 %v474
  %648 = vmatpush.bf16.msra.mxu0 %v473
  %649 = vmatpush.bf16.msra.mxu0 %v472
  %650 = vmatmul.bf16.gmra.mxu0 %v195
  %v651 = vpop.f32.mrf.mxu0
  %v652 = vadd.f32 %v633, %v651
  %v653 = vpop.f32.mrf.mxu0
  %v654 = vadd.f32 %v635, %v653
  %655 = vmatmul.bf16.gmra.mxu0 %v202
  %v656 = vpop.f32.mrf.mxu0
  %v657 = vadd.f32 %v638, %v656
  %v658 = vpop.f32.mrf.mxu0
  %v659 = vadd.f32 %v640, %v658
  %660 = vdwg.mxu0
  %661 = vmatpush.bf16.msra.mxu0 0
  %662 = vmatpush.bf16.msra.mxu0 0
  %663 = vmatpush.bf16.msra.mxu0 %v485
  %664 = vmatpush.bf16.msra.mxu0 %v484
  %665 = vmatpush.bf16.msra.mxu0 %v483
  %666 = vmatpush.bf16.msra.mxu0 %v482
  %667 = vmatpush.bf16.msra.mxu0 %v481
  %668 = vmatpush.bf16.msra.mxu0 %v480
  %669 = vmatmul.bf16.gmra.mxu0 %v542
  %v670 = vpop.f32.mrf.mxu0
  %v671 = vadd.f32 %v652, %v670
  %v672 = vpop.f32.mrf.mxu0
  %v673 = vadd.f32 %v654, %v672
  %674 = vmatmul.bf16.gmra.mxu0 %v545
  %v675 = vpop.f32.mrf.mxu0
  %v676 = vadd.f32 %v657, %v675
  %v677 = vpop.f32.mrf.mxu0
  %v678 = vadd.f32 %v659, %v677
  %679 = vdwg.mxu0
  %v680 = vmax.f32 %v671, 0.0
  %v681 = vmax.f32 %v673, 0.0
  %v682 = vmax.f32 %v676, 0.0
  %v683 = vmax.f32 %v678, 0.0
  %v684 = vld [vmem:[%s3] sm:$0x1]
  %v686 = vperm.slane %v684, 0
  %v688 = vadd.f32 %v680, %v686
  %v689 = vadd.f32 %v681, %v686
  %v690 = vadd.f32 %v682, %v686
  %v691 = vadd.f32 %v683, %v686
  %692 = vst [vmem:[%s4] sm:$0xff] %v688
  %693 = vst [vmem:[%s4 + $0x8] sm:$0xff] %v689
  %694 = vst [vmem:[%s4 + $0x10] sm:$0xff] %v690
  %695 = vst [vmem:[%s4 + $0x18] sm:$0xff] %v691
  // Predicated region
  $region18: #{kkkc_forward.8} parent=0 // pred_check
    _
  $region19: #{kkkc_forward.8} parent=0 // pred_check_branch
    %697 = sbr.rel (0) target = $region21
  $region20: #{kkkc_forward.8} parent=0 // pred_region
    _
  $region21: #{kkkc_forward.8} parent=0 // pred_fallthru
    _
  // Predicated region
  $region22: #{kkkc_forward.8} parent=0 // pred_check
    _
  $region23: #{kkkc_forward.8} parent=0 // pred_check_branch
    %699 = sbr.rel (0) target = $region25
  $region24: #{kkkc_forward.8} parent=0 // pred_region
    _
  $region25: #{kkkc_forward.8} parent=0 // pred_fallthru
    _

// kernel: kkkc_forward.9
$region0: #{kkkc_forward.9}
  #allocation0 [shape = 'u32[]', space=smem, size = 0x4, offset = 0x4, fixed_abs, tag = 'smem constant byte address 0x4 - core index']
  #allocation1 [shape = 'u32[72,128]{1,0:T(1,128)}', space=vmem, size = 0x9000, scoped, tag = 'internal scratch']
  %s0 = inlined_call_operand.vmem [shape: f32[2,2048], index: 0, kind: input, shape index: {}]
  %s1 = inlined_call_operand.vmem [shape: f32[2048,128], index: 1, kind: input, shape index: {}]
  %s2 = inlined_call_operand.vmem [shape: f32[1,128], index: 2, kind: input, shape index: {}]
  %s3 = inlined_call_operand.vmem [shape: f32[128,2], index: 3, kind: input, shape index: {}]
  %s4 = inlined_call_operand.vmem [shape: f32[1,2], index: 4, kind: input, shape index: {}]
  %s5 = inlined_call_operand.hbm [shape: f32[2,2], index: 5, kind: output, shape index: {}]
  %s6 = sld [smem:[#allocation0]]
  $region30: #{kkkc_forward.9} parent=0
    _
  %s8 = ssub.s32 1, %s6
  %s9 = scalar_select 0, %s8, %s6
  $region1: #{kkkc_forward.9} parent=0
    #allocation2 [shape = 'u8[1024]{0}', space=vmem, size = 0x400, scoped, tag = 'output window, operand 0, single buffered']
    #allocation3 [shape = 's32[1]{0}', space=sflag, size = 0x4, scoped, tag = 'scoped memory for kkkc_forward.9']
    %10 = vsyncpa [#allocation3], 0
    // Predicated region
    $region2: #{kkkc_forward.9} parent=1 // pred_check
      _
    $region3: #{kkkc_forward.9} parent=1 // pred_check_branch
      %12 = sbr.rel (0) target = $region5
    $region4: #{kkkc_forward.9} parent=1 // pred_region
      _
    $region5: #{kkkc_forward.9} parent=1 // pred_fallthru
      _
    // Predicated region
    $region6: #{kkkc_forward.9} parent=1 // pred_check
      _
    $region7: #{kkkc_forward.9} parent=1 // pred_check_branch
      %14 = sbr.rel (0) target = $region9
    $region8: #{kkkc_forward.9} parent=1 // pred_region
      _
    $region9: #{kkkc_forward.9} parent=1 // pred_fallthru
      _
    // Predicated region
    $region10: #{kkkc_forward.9} parent=1 // pred_check
      _
    $region11: #{kkkc_forward.9} parent=1 // pred_check_branch
      %16 = sbr.rel (0) target = $region13
    $region12: #{kkkc_forward.9} parent=1 // pred_region
      _
    $region13: #{kkkc_forward.9} parent=1 // pred_fallthru
      _
    // Predicated region
    $region14: #{kkkc_forward.9} parent=1 // pred_check
      _
    $region15: #{kkkc_forward.9} parent=1 // pred_check_branch
      %18 = sbr.rel (0) target = $region17
    $region16: #{kkkc_forward.9} parent=1 // pred_region
      _
    $region17: #{kkkc_forward.9} parent=1 // pred_fallthru
      _
    // Predicated region
    $region18: #{kkkc_forward.9} parent=1 // pred_check
      _
    $region19: #{kkkc_forward.9} parent=1 // pred_check_branch
      %20 = sbr.rel (0) target = $region21
    $region20: #{kkkc_forward.9} parent=1 // pred_region
      _
    $region21: #{kkkc_forward.9} parent=1 // pred_fallthru
      _
    %v21 = vld [vmem:[%s0] sm:$0xff]
    %v22 = vld [vmem:[%s0 + $0x8] sm:$0xff]
    %v23 = vld [vmem:[%s0 + $0x10] sm:$0xff]
    %v24 = vld [vmem:[%s0 + $0x18] sm:$0xff]
    %v25 = vld [vmem:[%s1] sm:$0xff]
    %v26 = vld [vmem:[%s1 + $0x8] sm:$0xff]
    %v27 = vld [vmem:[%s1 + $0x10] sm:$0xff]
    %v28 = vld [vmem:[%s1 + $0x18] sm:$0xff]
    %v29 = vld [vmem:[%s1 + $0x20] sm:$0xff]
    %v30 = vld [vmem:[%s1 + $0x28] sm:$0xff]
    %v31 = vld [vmem:[%s1 + $0x30] sm:$0xff]
    %v32 = vld [vmem:[%s1 + $0x38] sm:$0xff]
    %v33 = vld [vmem:[%s1 + $0x40] sm:$0xff]
    %v34 = vld [vmem:[%s1 + $0x48] sm:$0xff]
    %v35 = vld [vmem:[%s1 + $0x50] sm:$0xff]
    %v36 = vld [vmem:[%s1 + $0x58] sm:$0xff]
    %v37 = vld [vmem:[%s1 + $0x60] sm:$0xff]
    %v38 = vld [vmem:[%s1 + $0x68] sm:$0xff]
    %v39 = vld [vmem:[%s1 + $0x70] sm:$0xff]
    %v40 = vld [vmem:[%s1 + $0x78] sm:$0xff]
    %v41 = vld [vmem:[%s1 + $0x80] sm:$0xff]
    %v42 = vld [vmem:[%s1 + $0x88] sm:$0xff]
    %v43 = vld [vmem:[%s1 + $0x90] sm:$0xff]
    %v44 = vld [vmem:[%s1 + $0x98] sm:$0xff]
    %v45 = vld [vmem:[%s1 + $0xa0] sm:$0xff]
    %v46 = vld [vmem:[%s1 + $0xa8] sm:$0xff]
    %v47 = vld [vmem:[%s1 + $0xb0] sm:$0xff]
    %v48 = vld [vmem:[%s1 + $0xb8] sm:$0xff]
    %v49 = vld [vmem:[%s1 + $0xc0] sm:$0xff]
    %v50 = vld [vmem:[%s1 + $0xc8] sm:$0xff]
    %v51 = vld [vmem:[%s1 + $0xd0] sm:$0xff]
    %v52 = vld [vmem:[%s1 + $0xd8] sm:$0xff]
    %v53 = vld [vmem:[%s1 + $0xe0] sm:$0xff]
    %v54 = vld [vmem:[%s1 + $0xe8] sm:$0xff]
    %v55 = vld [vmem:[%s1 + $0xf0] sm:$0xff]
    %v56 = vld [vmem:[%s1 + $0xf8] sm:$0xff]
    %v57 = vld [vmem:[%s1 + $0x100] sm:$0xff]
    %v58 = vld [vmem:[%s1 + $0x108] sm:$0xff]
    %v59 = vld [vmem:[%s1 + $0x110] sm:$0xff]
    %v60 = vld [vmem:[%s1 + $0x118] sm:$0xff]
    %v61 = vld [vmem:[%s1 + $0x120] sm:$0xff]
    %v62 = vld [vmem:[%s1 + $0x128] sm:$0xff]
    %v63 = vld [vmem:[%s1 + $0x130] sm:$0xff]
    %v64 = vld [vmem:[%s1 + $0x138] sm:$0xff]
    %v65 = vld [vmem:[%s1 + $0x140] sm:$0xff]
    %v66 = vld [vmem:[%s1 + $0x148] sm:$0xff]
    %v67 = vld [vmem:[%s1 + $0x150] sm:$0xff]
    %v68 = vld [vmem:[%s1 + $0x158] sm:$0xff]
    %v69 = vld [vmem:[%s1 + $0x160] sm:$0xff]
    %v70 = vld [vmem:[%s1 + $0x168] sm:$0xff]
    %v71 = vld [vmem:[%s1 + $0x170] sm:$0xff]
    %v72 = vld [vmem:[%s1 + $0x178] sm:$0xff]
    %v73 = vld [vmem:[%s1 + $0x180] sm:$0xff]
    %v74 = vld [vmem:[%s1 + $0x188] sm:$0xff]
    %v75 = vld [vmem:[%s1 + $0x190] sm:$0xff]
    %v76 = vld [vmem:[%s1 + $0x198] sm:$0xff]
    %v77 = vld [vmem:[%s1 + $0x1a0] sm:$0xff]
    %v78 = vld [vmem:[%s1 + $0x1a8] sm:$0xff]
    %v79 = vld [vmem:[%s1 + $0x1b0] sm:$0xff]
    %v80 = vld [vmem:[%s1 + $0x1b8] sm:$0xff]
    %v81 = vld [vmem:[%s1 + $0x1c0] sm:$0xff]
    %v82 = vld [vmem:[%s1 + $0x1c8] sm:$0xff]
    %v83 = vld [vmem:[%s1 + $0x1d0] sm:$0xff]
    %v84 = vld [vmem:[%s1 + $0x1d8] sm:$0xff]
    %v85 = vld [vmem:[%s1 + $0x1e0] sm:$0xff]
    %v86 = vld [vmem:[%s1 + $0x1e8] sm:$0xff]
    %v87 = vld [vmem:[%s1 + $0x1f0] sm:$0xff]
    %v88 = vld [vmem:[%s1 + $0x1f8] sm:$0xff]
    %v89 = vld [vmem:[%s1 + $0x200] sm:$0xff]
    %v90 = vld [vmem:[%s1 + $0x208] sm:$0xff]
    %v91 = vld [vmem:[%s1 + $0x210] sm:$0xff]
    %v92 = vld [vmem:[%s1 + $0x218] sm:$0xff]
    %v93 = vld [vmem:[%s1 + $0x220] sm:$0xff]
    %v94 = vld [vmem:[%s1 + $0x228] sm:$0xff]
    %v95 = vld [vmem:[%s1 + $0x230] sm:$0xff]
    %v96 = vld [vmem:[%s1 + $0x238] sm:$0xff]
    %v97 = vld [vmem:[%s1 + $0x240] sm:$0xff]
    %v98 = vld [vmem:[%s1 + $0x248] sm:$0xff]
    %v99 = vld [vmem:[%s1 + $0x250] sm:$0xff]
    %v100 = vld [vmem:[%s1 + $0x258] sm:$0xff]
    %v101 = vld [vmem:[%s1 + $0x260] sm:$0xff]
    %v102 = vld [vmem:[%s1 + $0x268] sm:$0xff]
    %v103 = vld [vmem:[%s1 + $0x270] sm:$0xff]
    %v104 = vld [vmem:[%s1 + $0x278] sm:$0xff]
    %v105 = vld [vmem:[%s1 + $0x280] sm:$0xff]
    %v106 = vld [vmem:[%s1 + $0x288] sm:$0xff]
    %v107 = vld [vmem:[%s1 + $0x290] sm:$0xff]
    %v108 = vld [vmem:[%s1 + $0x298] sm:$0xff]
    %v109 = vld [vmem:[%s1 + $0x2a0] sm:$0xff]
    %v110 = vld [vmem:[%s1 + $0x2a8] sm:$0xff]
    %v111 = vld [vmem:[%s1 + $0x2b0] sm:$0xff]
    %v112 = vld [vmem:[%s1 + $0x2b8] sm:$0xff]
    %v113 = vld [vmem:[%s1 + $0x2c0] sm:$0xff]
    %v114 = vld [vmem:[%s1 + $0x2c8] sm:$0xff]
    %v115 = vld [vmem:[%s1 + $0x2d0] sm:$0xff]
    %v116 = vld [vmem:[%s1 + $0x2d8] sm:$0xff]
    %v117 = vld [vmem:[%s1 + $0x2e0] sm:$0xff]
    %v118 = vld [vmem:[%s1 + $0x2e8] sm:$0xff]
    %v119 = vld [vmem:[%s1 + $0x2f0] sm:$0xff]
    %v120 = vld [vmem:[%s1 + $0x2f8] sm:$0xff]
    %v121 = vld [vmem:[%s1 + $0x300] sm:$0xff]
    %v122 = vld [vmem:[%s1 + $0x308] sm:$0xff]
    %v123 = vld [vmem:[%s1 + $0x310] sm:$0xff]
    %v124 = vld [vmem:[%s1 + $0x318] sm:$0xff]
    %v125 = vld [vmem:[%s1 + $0x320] sm:$0xff]
    %v126 = vld [vmem:[%s1 + $0x328] sm:$0xff]
    %v127 = vld [vmem:[%s1 + $0x330] sm:$0xff]
    %v128 = vld [vmem:[%s1 + $0x338] sm:$0xff]
    %v129 = vld [vmem:[%s1 + $0x340] sm:$0xff]
    %v130 = vld [vmem:[%s1 + $0x348] sm:$0xff]
    %v131 = vld [vmem:[%s1 + $0x350] sm:$0xff]
    %v132 = vld [vmem:[%s1 + $0x358] sm:$0xff]
    %v133 = vld [vmem:[%s1 + $0x360] sm:$0xff]
    %v134 = vld [vmem:[%s1 + $0x368] sm:$0xff]
    %v135 = vld [vmem:[%s1 + $0x370] sm:$0xff]
    %v136 = vld [vmem:[%s1 + $0x378] sm:$0xff]
    %v137 = vld [vmem:[%s1 + $0x380] sm:$0xff]
    %v138 = vld [vmem:[%s1 + $0x388] sm:$0xff]
    %v139 = vld [vmem:[%s1 + $0x390] sm:$0xff]
    %v140 = vld [vmem:[%s1 + $0x398] sm:$0xff]
    %v141 = vld [vmem:[%s1 + $0x3a0] sm:$0xff]
    %v142 = vld [vmem:[%s1 + $0x3a8] sm:$0xff]
    %v143 = vld [vmem:[%s1 + $0x3b0] sm:$0xff]
    %v144 = vld [vmem:[%s1 + $0x3b8] sm:$0xff]
    %v145 = vld [vmem:[%s1 + $0x3c0] sm:$0xff]
    %v146 = vld [vmem:[%s1 + $0x3c8] sm:$0xff]
    %v147 = vld [vmem:[%s1 + $0x3d0] sm:$0xff]
    %v148 = vld [vmem:[%s1 + $0x3d8] sm:$0xff]
    %v149 = vld [vmem:[%s1 + $0x3e0] sm:$0xff]
    %v150 = vld [vmem:[%s1 + $0x3e8] sm:$0xff]
    %v151 = vld [vmem:[%s1 + $0x3f0] sm:$0xff]
    %v152 = vld [vmem:[%s1 + $0x3f8] sm:$0xff]
    %v153 = vld [vmem:[%s1 + $0x400] sm:$0xff]
    %v154 = vld [vmem:[%s1 + $0x408] sm:$0xff]
    %v155 = vld [vmem:[%s1 + $0x410] sm:$0xff]
    %v156 = vld [vmem:[%s1 + $0x418] sm:$0xff]
    %v157 = vld [vmem:[%s1 + $0x420] sm:$0xff]
    %v158 = vld [vmem:[%s1 + $0x428] sm:$0xff]
    %v159 = vld [vmem:[%s1 + $0x430] sm:$0xff]
    %v160 = vld [vmem:[%s1 + $0x438] sm:$0xff]
    %v161 = vld [vmem:[%s1 + $0x440] sm:$0xff]
    %v162 = vld [vmem:[%s1 + $0x448] sm:$0xff]
    %v163 = vld [vmem:[%s1 + $0x450] sm:$0xff]
    %v164 = vld [vmem:[%s1 + $0x458] sm:$0xff]
    %v165 = vld [vmem:[%s1 + $0x460] sm:$0xff]
    %v166 = vld [vmem:[%s1 + $0x468] sm:$0xff]
    %v167 = vld [vmem:[%s1 + $0x470] sm:$0xff]
    %v168 = vld [vmem:[%s1 + $0x478] sm:$0xff]
    %v169 = vld [vmem:[%s1 + $0x480] sm:$0xff]
    %v170 = vld [vmem:[%s1 + $0x488] sm:$0xff]
    %v171 = vld [vmem:[%s1 + $0x490] sm:$0xff]
    %v172 = vld [vmem:[%s1 + $0x498] sm:$0xff]
    %v173 = vld [vmem:[%s1 + $0x4a0] sm:$0xff]
    %v174 = vld [vmem:[%s1 + $0x4a8] sm:$0xff]
    %v175 = vld [vmem:[%s1 + $0x4b0] sm:$0xff]
    %v176 = vld [vmem:[%s1 + $0x4b8] sm:$0xff]
    %v177 = vld [vmem:[%s1 + $0x4c0] sm:$0xff]
    %v178 = vld [vmem:[%s1 + $0x4c8] sm:$0xff]
    %v179 = vld [vmem:[%s1 + $0x4d0] sm:$0xff]
    %v180 = vld [vmem:[%s1 + $0x4d8] sm:$0xff]
    %v181 = vld [vmem:[%s1 + $0x4e0] sm:$0xff]
    %v182 = vld [vmem:[%s1 + $0x4e8] sm:$0xff]
    %v183 = vld [vmem:[%s1 + $0x4f0] sm:$0xff]
    %v184 = vld [vmem:[%s1 + $0x4f8] sm:$0xff]
    %v185 = vld [vmem:[%s1 + $0x500] sm:$0xff]
    %v186 = vld [vmem:[%s1 + $0x508] sm:$0xff]
    %v187 = vld [vmem:[%s1 + $0x510] sm:$0xff]
    %v188 = vld [vmem:[%s1 + $0x518] sm:$0xff]
    %v189 = vld [vmem:[%s1 + $0x520] sm:$0xff]
    %v190 = vld [vmem:[%s1 + $0x528] sm:$0xff]
    %v191 = vld [vmem:[%s1 + $0x530] sm:$0xff]
    %v192 = vld [vmem:[%s1 + $0x538] sm:$0xff]
    %v193 = vld [vmem:[%s1 + $0x540] sm:$0xff]
    %v194 = vld [vmem:[%s1 + $0x548] sm:$0xff]
    %v195 = vld [vmem:[%s1 + $0x550] sm:$0xff]
    %v196 = vld [vmem:[%s1 + $0x558] sm:$0xff]
    %v197 = vld [vmem:[%s1 + $0x560] sm:$0xff]
    %v198 = vld [vmem:[%s1 + $0x568] sm:$0xff]
    %v199 = vld [vmem:[%s1 + $0x570] sm:$0xff]
    %v200 = vld [vmem:[%s1 + $0x578] sm:$0xff]
    %v201 = vld [vmem:[%s1 + $0x580] sm:$0xff]
    %v202 = vld [vmem:[%s1 + $0x588] sm:$0xff]
    %v203 = vld [vmem:[%s1 + $0x590] sm:$0xff]
    %v204 = vld [vmem:[%s1 + $0x598] sm:$0xff]
    %v205 = vld [vmem:[%s1 + $0x5a0] sm:$0xff]
    %v206 = vld [vmem:[%s1 + $0x5a8] sm:$0xff]
    %v207 = vld [vmem:[%s1 + $0x5b0] sm:$0xff]
    %v208 = vld [vmem:[%s1 + $0x5b8] sm:$0xff]
    %v209 = vld [vmem:[%s1 + $0x5c0] sm:$0xff]
    %v210 = vld [vmem:[%s1 + $0x5c8] sm:$0xff]
    %v211 = vld [vmem:[%s1 + $0x5d0] sm:$0xff]
    %v212 = vld [vmem:[%s1 + $0x5d8] sm:$0xff]
    %v213 = vld [vmem:[%s1 + $0x5e0] sm:$0xff]
    %v214 = vld [vmem:[%s1 + $0x5e8] sm:$0xff]
    %v215 = vld [vmem:[%s1 + $0x5f0] sm:$0xff]
    %v216 = vld [vmem:[%s1 + $0x5f8] sm:$0xff]
    %v217 = vld [vmem:[%s1 + $0x600] sm:$0xff]
    %v218 = vld [vmem:[%s1 + $0x608] sm:$0xff]
    %v219 = vld [vmem:[%s1 + $0x610] sm:$0xff]
    %v220 = vld [vmem:[%s1 + $0x618] sm:$0xff]
    %v221 = vld [vmem:[%s1 + $0x620] sm:$0xff]
    %v222 = vld [vmem:[%s1 + $0x628] sm:$0xff]
    %v223 = vld [vmem:[%s1 + $0x630] sm:$0xff]
    %v224 = vld [vmem:[%s1 + $0x638] sm:$0xff]
    %v225 = vld [vmem:[%s1 + $0x640] sm:$0xff]
    %v226 = vld [vmem:[%s1 + $0x648] sm:$0xff]
    %v227 = vld [vmem:[%s1 + $0x650] sm:$0xff]
    %v228 = vld [vmem:[%s1 + $0x658] sm:$0xff]
    %v229 = vld [vmem:[%s1 + $0x660] sm:$0xff]
    %v230 = vld [vmem:[%s1 + $0x668] sm:$0xff]
    %v231 = vld [vmem:[%s1 + $0x670] sm:$0xff]
    %v232 = vld [vmem:[%s1 + $0x678] sm:$0xff]
    %v233 = vld [vmem:[%s1 + $0x680] sm:$0xff]
    %v234 = vld [vmem:[%s1 + $0x688] sm:$0xff]
    %v235 = vld [vmem:[%s1 + $0x690] sm:$0xff]
    %v236 = vld [vmem:[%s1 + $0x698] sm:$0xff]
    %v237 = vld [vmem:[%s1 + $0x6a0] sm:$0xff]
    %v238 = vld [vmem:[%s1 + $0x6a8] sm:$0xff]
    %v239 = vld [vmem:[%s1 + $0x6b0] sm:$0xff]
    %v240 = vld [vmem:[%s1 + $0x6b8] sm:$0xff]
    %v241 = vld [vmem:[%s1 + $0x6c0] sm:$0xff]
    %v242 = vld [vmem:[%s1 + $0x6c8] sm:$0xff]
    %v243 = vld [vmem:[%s1 + $0x6d0] sm:$0xff]
    %v244 = vld [vmem:[%s1 + $0x6d8] sm:$0xff]
    %v245 = vld [vmem:[%s1 + $0x6e0] sm:$0xff]
    %v246 = vld [vmem:[%s1 + $0x6e8] sm:$0xff]
    %v247 = vld [vmem:[%s1 + $0x6f0] sm:$0xff]
    %v248 = vld [vmem:[%s1 + $0x6f8] sm:$0xff]
    %v249 = vld [vmem:[%s1 + $0x700] sm:$0xff]
    %v250 = vld [vmem:[%s1 + $0x708] sm:$0xff]
    %v251 = vld [vmem:[%s1 + $0x710] sm:$0xff]
    %v252 = vld [vmem:[%s1 + $0x718] sm:$0xff]
    %v253 = vld [vmem:[%s1 + $0x720] sm:$0xff]
    %v254 = vld [vmem:[%s1 + $0x728] sm:$0xff]
    %v255 = vld [vmem:[%s1 + $0x730] sm:$0xff]
    %v256 = vld [vmem:[%s1 + $0x738] sm:$0xff]
    %v257 = vld [vmem:[%s1 + $0x740] sm:$0xff]
    %v258 = vld [vmem:[%s1 + $0x748] sm:$0xff]
    %v259 = vld [vmem:[%s1 + $0x750] sm:$0xff]
    %v260 = vld [vmem:[%s1 + $0x758] sm:$0xff]
    %v261 = vld [vmem:[%s1 + $0x760] sm:$0xff]
    %v262 = vld [vmem:[%s1 + $0x768] sm:$0xff]
    %v263 = vld [vmem:[%s1 + $0x770] sm:$0xff]
    %v264 = vld [vmem:[%s1 + $0x778] sm:$0xff]
    %v265 = vld [vmem:[%s1 + $0x780] sm:$0xff]
    %v266 = vld [vmem:[%s1 + $0x788] sm:$0xff]
    %v267 = vld [vmem:[%s1 + $0x790] sm:$0xff]
    %v268 = vld [vmem:[%s1 + $0x798] sm:$0xff]
    %v269 = vld [vmem:[%s1 + $0x7a0] sm:$0xff]
    %v270 = vld [vmem:[%s1 + $0x7a8] sm:$0xff]
    %v271 = vld [vmem:[%s1 + $0x7b0] sm:$0xff]
    %v272 = vld [vmem:[%s1 + $0x7b8] sm:$0xff]
    %v273 = vld [vmem:[%s1 + $0x7c0] sm:$0xff]
    %v274 = vld [vmem:[%s1 + $0x7c8] sm:$0xff]
    %v275 = vld [vmem:[%s1 + $0x7d0] sm:$0xff]
    %v276 = vld [vmem:[%s1 + $0x7d8] sm:$0xff]
    %v277 = vld [vmem:[%s1 + $0x7e0] sm:$0xff]
    %v278 = vld [vmem:[%s1 + $0x7e8] sm:$0xff]
    %v279 = vld [vmem:[%s1 + $0x7f0] sm:$0xff]
    %v280 = vld [vmem:[%s1 + $0x7f8] sm:$0xff]
    %v281 = vld [vmem:[%s2] sm:$0x1]
    %v283 = vperm.slane %v281, 0
    %289 = vst [vmem:[#allocation1] ss:$4 sm:$0xff] %v21
    %s290 = scalar_lea.vmem [#allocation1], 32
    %291 = vst [vmem:[%s290] ss:$4 sm:$0xff] %v22
    %v292 = vld.sshfl [vmem:[#allocation1] sm:$0xff pattern:$0x73625140]
    %v293 = vld.sshfl [vmem:[#allocation1 + $0x8] sm:$0xff pattern:$0x73625140]
    %v294 = vld.sshfl [vmem:[#allocation1 + $0x10] sm:$0xff pattern:$0x73625140]
    %v295 = vld.sshfl [vmem:[#allocation1 + $0x18] sm:$0xff pattern:$0x73625140]
    %v296 = vld.sshfl [vmem:[#allocation1 + $0x20] sm:$0xff pattern:$0x73625140]
    %v297 = vld.sshfl [vmem:[#allocation1 + $0x28] sm:$0xff pattern:$0x73625140]
    %v298 = vld.sshfl [vmem:[#allocation1 + $0x30] sm:$0xff pattern:$0x73625140]
    %v299 = vld.sshfl [vmem:[#allocation1 + $0x38] sm:$0xff pattern:$0x73625140]
    %300 = vst [vmem:[#allocation1] ss:$4 sm:$0xff] %v23
    %301 = vst [vmem:[%s290] ss:$4 sm:$0xff] %v24
    %v302 = vld.sshfl [vmem:[#allocation1] sm:$0xff pattern:$0x73625140]
    %v303 = vld.sshfl [vmem:[#allocation1 + $0x8] sm:$0xff pattern:$0x73625140]
    %v304 = vld.sshfl [vmem:[#allocation1 + $0x10] sm:$0xff pattern:$0x73625140]
    %v305 = vld.sshfl [vmem:[#allocation1 + $0x18] sm:$0xff pattern:$0x73625140]
    %v306 = vld.sshfl [vmem:[#allocation1 + $0x20] sm:$0xff pattern:$0x73625140]
    %v307 = vld.sshfl [vmem:[#allocation1 + $0x28] sm:$0xff pattern:$0x73625140]
    %v308 = vld.sshfl [vmem:[#allocation1 + $0x30] sm:$0xff pattern:$0x73625140]
    %v309 = vld.sshfl [vmem:[#allocation1 + $0x38] sm:$0xff pattern:$0x73625140]
    %326 = vmatpush.msra.mxu0 %v40
    %327 = vmatpush.msra.mxu0 %v39
    %328 = vmatpush.msra.mxu0 %v38
    %329 = vmatpush.msra.mxu0 %v37
    %330 = vmatpush.msra.mxu0 %v36
    %331 = vmatpush.msra.mxu0 %v35
    %332 = vmatpush.msra.mxu0 %v34
    %333 = vmatpush.msra.mxu0 %v33
    %334 = vmatpush.msra.mxu0 %v32
    %335 = vmatpush.msra.mxu0 %v31
    %336 = vmatpush.msra.mxu0 %v30
    %337 = vmatpush.msra.mxu0 %v29
    %338 = vmatpush.msra.mxu0 %v28
    %339 = vmatpush.msra.mxu0 %v27
    %340 = vmatpush.msra.mxu0 %v26
    %341 = vmatpush.msra.mxu0 %v25
    %342 = vmatmul.f32.gmra.mxu0 %v292
    %v343 = vpop.f32.mrf.mxu0
    %v344 = vadd.f32 %v283, %v343
    %345 = vdwg.mxu0
    %346 = vmatpush.msra.mxu0 %v56
    %347 = vmatpush.msra.mxu0 %v55
    %348 = vmatpush.msra.mxu0 %v54
    %349 = vmatpush.msra.mxu0 %v53
    %350 = vmatpush.msra.mxu0 %v52
    %351 = vmatpush.msra.mxu0 %v51
    %352 = vmatpush.msra.mxu0 %v50
    %353 = vmatpush.msra.mxu0 %v49
    %354 = vmatpush.msra.mxu0 %v48
    %355 = vmatpush.msra.mxu0 %v47
    %356 = vmatpush.msra.mxu0 %v46
    %357 = vmatpush.msra.mxu0 %v45
    %358 = vmatpush.msra.mxu0 %v44
    %359 = vmatpush.msra.mxu0 %v43
    %360 = vmatpush.msra.mxu0 %v42
    %361 = vmatpush.msra.mxu0 %v41
    %362 = vmatmul.f32.gmra.mxu0 %v293
    %v363 = vpop.f32.mrf.mxu0
    %v364 = vadd.f32 %v344, %v363
    %365 = vdwg.mxu0
    %366 = vmatpush.msra.mxu0 %v72
    %367 = vmatpush.msra.mxu0 %v71
    %368 = vmatpush.msra.mxu0 %v70
    %369 = vmatpush.msra.mxu0 %v69
    %370 = vmatpush.msra.mxu0 %v68
    %371 = vmatpush.msra.mxu0 %v67
    %372 = vmatpush.msra.mxu0 %v66
    %373 = vmatpush.msra.mxu0 %v65
    %374 = vmatpush.msra.mxu0 %v64
    %375 = vmatpush.msra.mxu0 %v63
    %376 = vmatpush.msra.mxu0 %v62
    %377 = vmatpush.msra.mxu0 %v61
    %378 = vmatpush.msra.mxu0 %v60
    %379 = vmatpush.msra.mxu0 %v59
    %380 = vmatpush.msra.mxu0 %v58
    %381 = vmatpush.msra.mxu0 %v57
    %382 = vmatmul.f32.gmra.mxu0 %v294
    %v383 = vpop.f32.mrf.mxu0
    %v384 = vadd.f32 %v364, %v383
    %385 = vdwg.mxu0
    %386 = vmatpush.msra.mxu0 %v88
    %387 = vmatpush.msra.mxu0 %v87
    %388 = vmatpush.msra.mxu0 %v86
    %389 = vmatpush.msra.mxu0 %v85
    %390 = vmatpush.msra.mxu0 %v84
    %391 = vmatpush.msra.mxu0 %v83
    %392 = vmatpush.msra.mxu0 %v82
    %393 = vmatpush.msra.mxu0 %v81
    %394 = vmatpush.msra.mxu0 %v80
    %395 = vmatpush.msra.mxu0 %v79
    %396 = vmatpush.msra.mxu0 %v78
    %397 = vmatpush.msra.mxu0 %v77
    %398 = vmatpush.msra.mxu0 %v76
    %399 = vmatpush.msra.mxu0 %v75
    %400 = vmatpush.msra.mxu0 %v74
    %401 = vmatpush.msra.mxu0 %v73
    %402 = vmatmul.f32.gmra.mxu0 %v295
    %v403 = vpop.f32.mrf.mxu0
    %v404 = vadd.f32 %v384, %v403
    %405 = vdwg.mxu0
    %406 = vmatpush.msra.mxu0 %v104
    %407 = vmatpush.msra.mxu0 %v103
    %408 = vmatpush.msra.mxu0 %v102
    %409 = vmatpush.msra.mxu0 %v101
    %410 = vmatpush.msra.mxu0 %v100
    %411 = vmatpush.msra.mxu0 %v99
    %412 = vmatpush.msra.mxu0 %v98
    %413 = vmatpush.msra.mxu0 %v97
    %414 = vmatpush.msra.mxu0 %v96
    %415 = vmatpush.msra.mxu0 %v95
    %416 = vmatpush.msra.mxu0 %v94
    %417 = vmatpush.msra.mxu0 %v93
    %418 = vmatpush.msra.mxu0 %v92
    %419 = vmatpush.msra.mxu0 %v91
    %420 = vmatpush.msra.mxu0 %v90
    %421 = vmatpush.msra.mxu0 %v89
    %422 = vmatmul.f32.gmra.mxu0 %v296
    %v423 = vpop.f32.mrf.mxu0
    %v424 = vadd.f32 %v404, %v423
    %425 = vdwg.mxu0
    %426 = vmatpush.msra.mxu0 %v120
    %427 = vmatpush.msra.mxu0 %v119
    %428 = vmatpush.msra.mxu0 %v118
    %429 = vmatpush.msra.mxu0 %v117
    %430 = vmatpush.msra.mxu0 %v116
    %431 = vmatpush.msra.mxu0 %v115
    %432 = vmatpush.msra.mxu0 %v114
    %433 = vmatpush.msra.mxu0 %v113
    %434 = vmatpush.msra.mxu0 %v112
    %435 = vmatpush.msra.mxu0 %v111
    %436 = vmatpush.msra.mxu0 %v110
    %437 = vmatpush.msra.mxu0 %v109
    %438 = vmatpush.msra.mxu0 %v108
    %439 = vmatpush.msra.mxu0 %v107
    %440 = vmatpush.msra.mxu0 %v106
    %441 = vmatpush.msra.mxu0 %v105
    %442 = vmatmul.f32.gmra.mxu0 %v297
    %v443 = vpop.f32.mrf.mxu0
    %v444 = vadd.f32 %v424, %v443
    %445 = vdwg.mxu0
    %446 = vmatpush.msra.mxu0 %v136
    %447 = vmatpush.msra.mxu0 %v135
    %448 = vmatpush.msra.mxu0 %v134
    %449 = vmatpush.msra.mxu0 %v133
    %450 = vmatpush.msra.mxu0 %v132
    %451 = vmatpush.msra.mxu0 %v131
    %452 = vmatpush.msra.mxu0 %v130
    %453 = vmatpush.msra.mxu0 %v129
    %454 = vmatpush.msra.mxu0 %v128
    %455 = vmatpush.msra.mxu0 %v127
    %456 = vmatpush.msra.mxu0 %v126
    %457 = vmatpush.msra.mxu0 %v125
    %458 = vmatpush.msra.mxu0 %v124
    %459 = vmatpush.msra.mxu0 %v123
    %460 = vmatpush.msra.mxu0 %v122
    %461 = vmatpush.msra.mxu0 %v121
    %462 = vmatmul.f32.gmra.mxu0 %v298
    %v463 = vpop.f32.mrf.mxu0
    %v464 = vadd.f32 %v444, %v463
    %465 = vdwg.mxu0
    %466 = vmatpush.msra.mxu0 %v152
    %467 = vmatpush.msra.mxu0 %v151
    %468 = vmatpush.msra.mxu0 %v150
    %469 = vmatpush.msra.mxu0 %v149
    %470 = vmatpush.msra.mxu0 %v148
    %471 = vmatpush.msra.mxu0 %v147
    %472 = vmatpush.msra.mxu0 %v146
    %473 = vmatpush.msra.mxu0 %v145
    %474 = vmatpush.msra.mxu0 %v144
    %475 = vmatpush.msra.mxu0 %v143
    %476 = vmatpush.msra.mxu0 %v142
    %477 = vmatpush.msra.mxu0 %v141
    %478 = vmatpush.msra.mxu0 %v140
    %479 = vmatpush.msra.mxu0 %v139
    %480 = vmatpush.msra.mxu0 %v138
    %481 = vmatpush.msra.mxu0 %v137
    %482 = vmatmul.f32.gmra.mxu0 %v299
    %v483 = vpop.f32.mrf.mxu0
    %v484 = vadd.f32 %v464, %v483
    %485 = vdwg.mxu0
    %486 = vmatpush.msra.mxu0 %v168
    %487 = vmatpush.msra.mxu0 %v167
    %488 = vmatpush.msra.mxu0 %v166
    %489 = vmatpush.msra.mxu0 %v165
    %490 = vmatpush.msra.mxu0 %v164
    %491 = vmatpush.msra.mxu0 %v163
    %492 = vmatpush.msra.mxu0 %v162
    %493 = vmatpush.msra.mxu0 %v161
    %494 = vmatpush.msra.mxu0 %v160
    %495 = vmatpush.msra.mxu0 %v159
    %496 = vmatpush.msra.mxu0 %v158
    %497 = vmatpush.msra.mxu0 %v157
    %498 = vmatpush.msra.mxu0 %v156
    %499 = vmatpush.msra.mxu0 %v155
    %500 = vmatpush.msra.mxu0 %v154
    %501 = vmatpush.msra.mxu0 %v153
    %502 = vmatmul.f32.gmra.mxu0 %v302
    %v503 = vpop.f32.mrf.mxu0
    %v504 = vadd.f32 %v484, %v503
    %505 = vdwg.mxu0
    %506 = vmatpush.msra.mxu0 %v184
    %507 = vmatpush.msra.mxu0 %v183
    %508 = vmatpush.msra.mxu0 %v182
    %509 = vmatpush.msra.mxu0 %v181
    %510 = vmatpush.msra.mxu0 %v180
    %511 = vmatpush.msra.mxu0 %v179
    %512 = vmatpush.msra.mxu0 %v178
    %513 = vmatpush.msra.mxu0 %v177
    %514 = vmatpush.msra.mxu0 %v176
    %515 = vmatpush.msra.mxu0 %v175
    %516 = vmatpush.msra.mxu0 %v174
    %517 = vmatpush.msra.mxu0 %v173
    %518 = vmatpush.msra.mxu0 %v172
    %519 = vmatpush.msra.mxu0 %v171
    %520 = vmatpush.msra.mxu0 %v170
    %521 = vmatpush.msra.mxu0 %v169
    %522 = vmatmul.f32.gmra.mxu0 %v303
    %v523 = vpop.f32.mrf.mxu0
    %v524 = vadd.f32 %v504, %v523
    %525 = vdwg.mxu0
    %526 = vmatpush.msra.mxu0 %v200
    %527 = vmatpush.msra.mxu0 %v199
    %528 = vmatpush.msra.mxu0 %v198
    %529 = vmatpush.msra.mxu0 %v197
    %530 = vmatpush.msra.mxu0 %v196
    %531 = vmatpush.msra.mxu0 %v195
    %532 = vmatpush.msra.mxu0 %v194
    %533 = vmatpush.msra.mxu0 %v193
    %534 = vmatpush.msra.mxu0 %v192
    %535 = vmatpush.msra.mxu0 %v191
    %536 = vmatpush.msra.mxu0 %v190
    %537 = vmatpush.msra.mxu0 %v189
    %538 = vmatpush.msra.mxu0 %v188
    %539 = vmatpush.msra.mxu0 %v187
    %540 = vmatpush.msra.mxu0 %v186
    %541 = vmatpush.msra.mxu0 %v185
    %542 = vmatmul.f32.gmra.mxu0 %v304
    %v543 = vpop.f32.mrf.mxu0
    %v544 = vadd.f32 %v524, %v543
    %545 = vdwg.mxu0
    %546 = vmatpush.msra.mxu0 %v216
    %547 = vmatpush.msra.mxu0 %v215
    %548 = vmatpush.msra.mxu0 %v214
    %549 = vmatpush.msra.mxu0 %v213
    %550 = vmatpush.msra.mxu0 %v212
    %551 = vmatpush.msra.mxu0 %v211
    %552 = vmatpush.msra.mxu0 %v210
    %553 = vmatpush.msra.mxu0 %v209
    %554 = vmatpush.msra.mxu0 %v208
    %555 = vmatpush.msra.mxu0 %v207
    %556 = vmatpush.msra.mxu0 %v206
    %557 = vmatpush.msra.mxu0 %v205
    %558 = vmatpush.msra.mxu0 %v204
    %559 = vmatpush.msra.mxu0 %v203
    %560 = vmatpush.msra.mxu0 %v202
    %561 = vmatpush.msra.mxu0 %v201
    %562 = vmatmul.f32.gmra.mxu0 %v305
    %v563 = vpop.f32.mrf.mxu0
    %v564 = vadd.f32 %v544, %v563
    %565 = vdwg.mxu0
    %566 = vmatpush.msra.mxu0 %v232
    %567 = vmatpush.msra.mxu0 %v231
    %568 = vmatpush.msra.mxu0 %v230
    %569 = vmatpush.msra.mxu0 %v229
    %570 = vmatpush.msra.mxu0 %v228
    %571 = vmatpush.msra.mxu0 %v227
    %572 = vmatpush.msra.mxu0 %v226
    %573 = vmatpush.msra.mxu0 %v225
    %574 = vmatpush.msra.mxu0 %v224
    %575 = vmatpush.msra.mxu0 %v223
    %576 = vmatpush.msra.mxu0 %v222
    %577 = vmatpush.msra.mxu0 %v221
    %578 = vmatpush.msra.mxu0 %v220
    %579 = vmatpush.msra.mxu0 %v219
    %580 = vmatpush.msra.mxu0 %v218
    %581 = vmatpush.msra.mxu0 %v217
    %582 = vmatmul.f32.gmra.mxu0 %v306
    %v583 = vpop.f32.mrf.mxu0
    %v584 = vadd.f32 %v564, %v583
    %585 = vdwg.mxu0
    %586 = vmatpush.msra.mxu0 %v248
    %587 = vmatpush.msra.mxu0 %v247
    %588 = vmatpush.msra.mxu0 %v246
    %589 = vmatpush.msra.mxu0 %v245
    %590 = vmatpush.msra.mxu0 %v244
    %591 = vmatpush.msra.mxu0 %v243
    %592 = vmatpush.msra.mxu0 %v242
    %593 = vmatpush.msra.mxu0 %v241
    %594 = vmatpush.msra.mxu0 %v240
    %595 = vmatpush.msra.mxu0 %v239
    %596 = vmatpush.msra.mxu0 %v238
    %597 = vmatpush.msra.mxu0 %v237
    %598 = vmatpush.msra.mxu0 %v236
    %599 = vmatpush.msra.mxu0 %v235
    %600 = vmatpush.msra.mxu0 %v234
    %601 = vmatpush.msra.mxu0 %v233
    %602 = vmatmul.f32.gmra.mxu0 %v307
    %v603 = vpop.f32.mrf.mxu0
    %v604 = vadd.f32 %v584, %v603
    %605 = vdwg.mxu0
    %606 = vmatpush.msra.mxu0 %v264
    %607 = vmatpush.msra.mxu0 %v263
    %608 = vmatpush.msra.mxu0 %v262
    %609 = vmatpush.msra.mxu0 %v261
    %610 = vmatpush.msra.mxu0 %v260
    %611 = vmatpush.msra.mxu0 %v259
    %612 = vmatpush.msra.mxu0 %v258
    %613 = vmatpush.msra.mxu0 %v257
    %614 = vmatpush.msra.mxu0 %v256
    %615 = vmatpush.msra.mxu0 %v255
    %616 = vmatpush.msra.mxu0 %v254
    %617 = vmatpush.msra.mxu0 %v253
    %618 = vmatpush.msra.mxu0 %v252
    %619 = vmatpush.msra.mxu0 %v251
    %620 = vmatpush.msra.mxu0 %v250
    %621 = vmatpush.msra.mxu0 %v249
    %622 = vmatmul.f32.gmra.mxu0 %v308
    %v623 = vpop.f32.mrf.mxu0
    %v624 = vadd.f32 %v604, %v623
    %625 = vdwg.mxu0
    %626 = vmatpush.msra.mxu0 %v280
    %627 = vmatpush.msra.mxu0 %v279
    %628 = vmatpush.msra.mxu0 %v278
    %629 = vmatpush.msra.mxu0 %v277
    %630 = vmatpush.msra.mxu0 %v276
    %631 = vmatpush.msra.mxu0 %v275
    %632 = vmatpush.msra.mxu0 %v274
    %633 = vmatpush.msra.mxu0 %v273
    %634 = vmatpush.msra.mxu0 %v272
    %635 = vmatpush.msra.mxu0 %v271
    %636 = vmatpush.msra.mxu0 %v270
    %637 = vmatpush.msra.mxu0 %v269
    %638 = vmatpush.msra.mxu0 %v268
    %639 = vmatpush.msra.mxu0 %v267
    %640 = vmatpush.msra.mxu0 %v266
    %641 = vmatpush.msra.mxu0 %v265
    %642 = vmatmul.f32.gmra.mxu0 %v309
    %v643 = vpop.f32.mrf.mxu0
    %v644 = vadd.f32 %v624, %v643
    %645 = vdwg.mxu0
    %v646 = vld [vmem:[%s3] sm:$0xff]
    %v647 = vld [vmem:[%s3 + $0x8] sm:$0xff]
    %v648 = vld [vmem:[%s3 + $0x10] sm:$0xff]
    %v649 = vld [vmem:[%s3 + $0x18] sm:$0xff]
    %v650 = vld [vmem:[%s3 + $0x20] sm:$0xff]
    %v651 = vld [vmem:[%s3 + $0x28] sm:$0xff]
    %v652 = vld [vmem:[%s3 + $0x30] sm:$0xff]
    %v653 = vld [vmem:[%s3 + $0x38] sm:$0xff]
    %v654 = vld [vmem:[%s3 + $0x40] sm:$0xff]
    %v655 = vld [vmem:[%s3 + $0x48] sm:$0xff]
    %v656 = vld [vmem:[%s3 + $0x50] sm:$0xff]
    %v657 = vld [vmem:[%s3 + $0x58] sm:$0xff]
    %v658 = vld [vmem:[%s3 + $0x60] sm:$0xff]
    %v659 = vld [vmem:[%s3 + $0x68] sm:$0xff]
    %v660 = vld [vmem:[%s3 + $0x70] sm:$0xff]
    %v661 = vld [vmem:[%s3 + $0x78] sm:$0xff]
    %v662 = vld [vmem:[%s4] sm:$0x1]
    %v664 = vperm.slane %v662, 0
    %666 = vmatpush.msra.mxu0 %v661
    %667 = vmatpush.msra.mxu0 %v660
    %668 = vmatpush.msra.mxu0 %v659
    %669 = vmatpush.msra.mxu0 %v658
    %670 = vmatpush.msra.mxu0 %v657
    %671 = vmatpush.msra.mxu0 %v656
    %672 = vmatpush.msra.mxu0 %v655
    %673 = vmatpush.msra.mxu0 %v654
    %674 = vmatpush.msra.mxu0 %v653
    %675 = vmatpush.msra.mxu0 %v652
    %676 = vmatpush.msra.mxu0 %v651
    %677 = vmatpush.msra.mxu0 %v650
    %678 = vmatpush.msra.mxu0 %v649
    %679 = vmatpush.msra.mxu0 %v648
    %680 = vmatpush.msra.mxu0 %v647
    %681 = vmatpush.msra.mxu0 %v646
    %682 = vmatmul.f32.gmra.mxu0 %v644
    %v683 = vpop.f32.mrf.mxu0
    %v684 = vadd.f32 %v664, %v683
    %685 = vdwg.mxu0
    %vm686 = vcmask 9216
    %v687 = vsel %vm686, %v684, -inf
    %688 = vmax.xlane.f32.xlu0 %v687
    %v689 = vpop.xlane.xlu0 %688
    %v690 = vsub.f32 %v684, %v689
    %v691 = vmul.f32 %v690, 1.442695
    %v692 = vpow.pop %v691
    %v693 = vsel %vm686, %v692, 0.0
    %694 = vadd.xlane.f32.xlu0 %v693
    %v695 = vpop.xlane.xlu0 %694
    %v696 = vrcp.pop %v695
    %v697 = vmul.f32 %v695, %v696
    %v698 = vsub.f32 1.0, %v697
    %v699 = vmul.f32 %v696, %v698
    %v700 = vadd.f32 %v696, %v699
    %vm701 = vweird.f32 %v695
    %vm702 = vweird.f32 %v696
    %vm703 = vmor %vm701, %vm702
    %v704 = vsel %vm703, %v696, %v700
    %v705 = vand.u32 2147483647, %v695
    %vm706 = vcmp.eq.f32.partialorder %v705, 8.507059e+37
    %v707 = vand.u32 %v695, 2147483648
    %v708 = vor.u32 1.1754944e-38, %v707
    %v709 = vsel %vm706, %v708, %v704
    %v710 = vmul.f32 %v692, %v709
    %711 = vst.msk [vmem:[#allocation2] sm:$0x3] %vm686, %v710
    // Predicated region
    $region22: #{kkkc_forward.9} parent=1 // pred_check
      _
    $region23: #{kkkc_forward.9} parent=1 // pred_check_branch
      %713 = sbr.rel (0) target = $region25
    $region24: #{kkkc_forward.9} parent=1 // pred_region
      %715 = vsyncadd [#allocation3], 0
      %s717 = sshll.u32 [#allocation2], 4
      %s718 = int_to_ptr.vmem [resolvable:$true] %s717
      %s719 = sshll.u32 %s5, 4
      %s720 = int_to_ptr.hbm [resolvable:$true] %s719
      %722 = dma.vmem_to_hbm [thread:$0]  %s718, 32, %s720, [#allocation3]
    $region25: #{kkkc_forward.9} parent=1 // pred_fallthru
      _
    // Predicated region
    $region26: #{kkkc_forward.9} parent=1 // pred_check
      _
    $region27: #{kkkc_forward.9} parent=1 // pred_check_branch
      %724 = sbr.rel (0) target = $region29
    $region28: #{kkkc_forward.9} parent=1 // pred_region
      %726 = dma.done [#allocation3], 32
    $region29: #{kkkc_forward.9} parent=1 // pred_fallthru
      _
    %727 = vsyncpa [#allocation3], 1

</llo_original>
